<compile_context>
chip_gen: v7x
topology: tpu7x:2x2x1
jax: 0.10.0
libtpu: 0.0.40
codegen_flags: <defaults>
</compile_context>

<pallas_src>
import jax
import jax.numpy as jnp
from jax.experimental import pallas as pl
from jax.experimental.pallas import tpu as pltpu

# --- small synthetic GPT-2 config --------------------------------------------
VOCAB = 128
HIDDEN = 32
N_HEAD = 2
HEAD_DIM = HIDDEN // N_HEAD
N_LAYER = 2
MAX_POS = 64
LN_EPS = 1e-5
EOS_ID = 127                  # stands in for GPT-2's 50256 eos/pad id at small vocab
LABEL_WORD_LIST = [[10, 11], [20, 21]]
MAX_GEN_LEN = len(LABEL_WORD_LIST[0])   # = label_word_list.shape[-1]
NEG_INF = -1e9
C_GELU = 0.7978845608028654             # sqrt(2/pi), GPT-2 "gelu_new"


# =========================== fused Pallas kernel ==============================
def _make_kernel(prompt_len: int, total_len: int, s_pad: int):
    """Build the fully fused generate+classify kernel for static sizes."""

    def kernel(ids0c_ref, ids0r_ref, pmask_ref, posdec_ref,
               ln1_g_ref, ln1_b_ref, attn_w_ref, attn_b_ref,
               proj_w_ref, proj_b_ref, ln2_g_ref, ln2_b_ref,
               fc_w_ref, fc_b_ref, mproj_w_ref, mproj_b_ref,
               lnf_g_ref, lnf_b_ref, wte_ref, wpe_ref,
               logits_ref, ids_out_ref):
        f32, bf16 = jnp.float32, jnp.bfloat16
        S = s_pad

        # --- iotas / constant masks, built once and reused by every pass ------
        row = jax.lax.broadcasted_iota(jnp.int32, (S, S), 0)
        col = jax.lax.broadcasted_iota(jnp.int32, (S, S), 1)
        causal = col <= row                                  # [S,S] bool
        tri_f = causal.astype(f32)                           # inclusive lower tri
        vocab_iota = jax.lax.broadcasted_iota(jnp.int32, (S, VOCAB), 1)
        pos_iota = jax.lax.broadcasted_iota(jnp.int32, (S, MAX_POS), 1)
        key_iota = jax.lax.broadcasted_iota(jnp.int32, (1, S), 1)
        sub_iota = jax.lax.broadcasted_iota(jnp.int32, (S, 1), 0)
        lane_iota = jax.lax.broadcasted_iota(jnp.int32, (1, VOCAB), 1)

        # --- VMEM-resident tensors (read once) --------------------------------
        wte = wte_ref[...]                                   # [V,H] bf16
        wpe = wpe_ref[...]                                   # [P,H] bf16
        lnf_g = lnf_g_ref[...]
        lnf_b = lnf_b_ref[...]
        pmask_valid = pmask_ref[...] > 0.5                   # [1,S] bool
        pos_dec = posdec_ref[...]                            # [S,1] i32
        scale = 1.0 / float(HEAD_DIM) ** 0.5

        def ln(x, g, b):
            mu = jnp.mean(x, axis=-1, keepdims=True)
            var = jnp.mean((x - mu) ** 2, axis=-1, keepdims=True)
            return (x - mu) * jax.lax.rsqrt(var + LN_EPS) * g + b

        def lm_head(hf):                                     # [*,H] f32 -> [*,V] f32
            return jax.lax.dot_general(hf.astype(bf16), wte,
                                       (((1,), (1,)), ((), ())),
                                       preferred_element_type=f32)

        def forward(ids_col, pos_col, key_valid_row):
            # In-kernel embedding: one-hot @ wte / wpe (VOCAB == lane width).
            tok_oh = (ids_col == vocab_iota).astype(bf16)    # [S,V]
            pos_oh = (pos_col == pos_iota).astype(bf16)      # [S,P]
            h = (jnp.dot(tok_oh, wte, preferred_element_type=f32)
                 + jnp.dot(pos_oh, wpe, preferred_element_type=f32))
            # Additive causal + key-padding mask (f32, built on the VPU).
            add_mask = jnp.where(causal & key_valid_row, 0.0, NEG_INF).astype(f32)

            for layer in range(N_LAYER):                     # static unroll
                # --- attention block ---
                a = ln(h, ln1_g_ref[layer], ln1_b_ref[layer])
                qkv = (jnp.dot(a.astype(bf16), attn_w_ref[layer],
                               preferred_element_type=f32) + attn_b_ref[layer])
                proj_w = proj_w_ref[layer]                   # [H,H] bf16
                attn_out = None
                for hh in range(N_HEAD):                     # static unroll
                    q_h = qkv[:, hh * HEAD_DIM:(hh + 1) * HEAD_DIM].astype(bf16)
                    k_h = qkv[:, HIDDEN + hh * HEAD_DIM:
                              HIDDEN + (hh + 1) * HEAD_DIM].astype(bf16)
                    v_h = qkv[:, 2 * HIDDEN + hh * HEAD_DIM:
                              2 * HIDDEN + (hh + 1) * HEAD_DIM].astype(bf16)
                    s = jax.lax.dot_general(
                        q_h, k_h, (((1,), (1,)), ((), ())),
                        preferred_element_type=f32) * scale              # [S,S]
                    s = s + add_mask
                    s = s - jnp.max(s, axis=-1, keepdims=True)
                    p = jnp.exp(s)
                    p = p / jnp.sum(p, axis=-1, keepdims=True)  # exact (argmax downstream)
                    o_h = jnp.dot(p.astype(bf16), v_h,
                                  preferred_element_type=f32)             # [S,D]
                    contrib = jnp.dot(o_h.astype(bf16),
                                      proj_w[hh * HEAD_DIM:(hh + 1) * HEAD_DIM, :],
                                      preferred_element_type=f32)
                    attn_out = contrib if attn_out is None else attn_out + contrib
                h = h + attn_out + proj_b_ref[layer]

                # --- MLP block ---
                m = ln(h, ln2_g_ref[layer], ln2_b_ref[layer])
                f = (jnp.dot(m.astype(bf16), fc_w_ref[layer],
                             preferred_element_type=f32) + fc_b_ref[layer])
                f = 0.5 * f * (1.0 + jnp.tanh(C_GELU * (f + 0.044715 * f * f * f)))
                h = h + (jnp.dot(f.astype(bf16), mproj_w_ref[layer],
                                 preferred_element_type=f32) + mproj_b_ref[layer])
            return h

        # ---- greedy decode, fully in-kernel (static unroll over MAX_GEN_LEN) ----
        # TODO(synk): HF generate stops early at EOS and pads; fixed-length
        #             greedy decode here (no data-dependent early exit).
        ids_col = ids0c_ref[...]                             # [S,1] i32
        ids_row = ids0r_ref[...]                             # [1,S] i32
        for t in range(MAX_GEN_LEN):
            cur = prompt_len + t
            gen_valid = (key_iota >= prompt_len) & (key_iota < cur)
            key_valid = pmask_valid | gen_valid              # [1,S] bool
            h = forward(ids_col, pos_dec, key_valid)
            h_last = h[cur - 1:cur, :]                       # only this row hits LM head
            logits_last = lm_head(ln(h_last, lnf_g, lnf_b))  # [1,V] f32
            mx = jnp.max(logits_last, axis=-1, keepdims=True)
            next_tok = jnp.min(
                jnp.where(logits_last >= mx, lane_iota, VOCAB),
                axis=-1, keepdims=True)                      # [1,1] i32, first argmax
            ids_col = jnp.where(sub_iota == cur, next_tok, ids_col)
            ids_row = jnp.where(key_iota == cur, next_tok, ids_row)

        # ---- classification pass: mask / positions rebuilt from generated ids ----
        key_valid_cls = (ids_row != EOS_ID) & (key_iota < total_len)    # [1,S]
        cls_col = ((ids_col != EOS_ID) & (sub_iota < total_len)).astype(f32)  # [S,1]
        cls_row_f = key_valid_cls.astype(f32)                           # [1,S]
        # cumsum(mask)-1 via lower-triangular row reduction (no scan primitive)
        pos_cls = jnp.sum(tri_f * cls_row_f, axis=-1, keepdims=True) - 1.0
        pos_cls = jnp.where(cls_col > 0.5, pos_cls, 1.0).astype(jnp.int32)

        h = forward(ids_col, pos_cls, key_valid_cls)
        logits_ref[...] = lm_head(ln(h, lnf_g, lnf_b))       # [S,V] lane-dense store
        ids_out_ref[...] = ids_col

    return kernel


# =========================== params / model glue ==============================
def init_params(key):
    def normal(k, shape, scale=0.02):
        return scale * jax.random.normal(k, shape, jnp.float32)

    keys = jax.random.split(key, 6)
    return {
        "wte": normal(keys[0], (VOCAB, HIDDEN)),
        "wpe": normal(keys[1], (MAX_POS, HIDDEN)),
        "lnf_g": jnp.ones((1, HIDDEN), jnp.float32),
        "lnf_b": jnp.zeros((1, HIDDEN), jnp.float32),
        # layer-stacked weights: leading axis = layer, biases kept [L, 1, X]
        "ln1_g": jnp.ones((N_LAYER, 1, HIDDEN), jnp.float32),
        "ln1_b": jnp.zeros((N_LAYER, 1, HIDDEN), jnp.float32),
        "attn_w": normal(keys[2], (N_LAYER, HIDDEN, 3 * HIDDEN)),
        "attn_b": jnp.zeros((N_LAYER, 1, 3 * HIDDEN), jnp.float32),
        "proj_w": normal(keys[3], (N_LAYER, HIDDEN, HIDDEN)),
        "proj_b": jnp.zeros((N_LAYER, 1, HIDDEN), jnp.float32),
        "ln2_g": jnp.ones((N_LAYER, 1, HIDDEN), jnp.float32),
        "ln2_b": jnp.zeros((N_LAYER, 1, HIDDEN), jnp.float32),
        "fc_w": normal(keys[4], (N_LAYER, HIDDEN, 4 * HIDDEN)),
        "fc_b": jnp.zeros((N_LAYER, 1, 4 * HIDDEN), jnp.float32),
        "mproj_w": normal(keys[5], (N_LAYER, 4 * HIDDEN, HIDDEN)),
        "mproj_b": jnp.zeros((N_LAYER, 1, HIDDEN), jnp.float32),
    }


def prompt_gpt2_forward(params, input_ids, attention_mask):
    """PromptGPT2ForSequenceClassification.forward (batch size must be 1)."""
    assert input_ids.shape[0] == 1, \
        "Generation model only need one example, not a batch size > 1"
    prompt_len = input_ids.shape[1]
    total_len = prompt_len + MAX_GEN_LEN
    s_pad = max(8, ((total_len + 7) // 8) * 8)   # 8-aligned fixed decode buffer

    ids1d = input_ids[0].astype(jnp.int32)
    pmask1d = attention_mask[0].astype(jnp.float32)

    ids0_col = jnp.zeros((s_pad, 1), jnp.int32).at[:prompt_len, 0].set(ids1d)
    ids0_row = jnp.zeros((1, s_pad), jnp.int32).at[0, :prompt_len].set(ids1d)
    pmask_row = jnp.zeros((1, s_pad), jnp.float32).at[0, :prompt_len].set(pmask1d)

    # Decode-time position ids (HF generate semantics), fixed across steps:
    # prompt: cumsum(mask)-1 with masked positions forced to 1;
    # generated token i (at index prompt_len+i): (#valid prompt tokens) + i.
    ppos = jnp.cumsum(pmask1d.astype(jnp.int32)) - 1
    ppos = jnp.where(pmask1d == 0, 1, ppos).astype(jnp.int32)
    n_valid = jnp.sum(pmask1d.astype(jnp.int32))
    gpos = n_valid + jnp.arange(s_pad - prompt_len, dtype=jnp.int32)
    pos_dec = jnp.concatenate([ppos, gpos]).reshape(s_pad, 1)

    bf = jnp.bfloat16
    args = (
        ids0_col, ids0_row, pmask_row, pos_dec,
        params["ln1_g"], params["ln1_b"],
        params["attn_w"].astype(bf), params["attn_b"],
        params["proj_w"].astype(bf), params["proj_b"],
        params["ln2_g"], params["ln2_b"],
        params["fc_w"].astype(bf), params["fc_b"],
        params["mproj_w"].astype(bf), params["mproj_b"],
        params["lnf_g"], params["lnf_b"],
        params["wte"].astype(bf), params["wpe"].astype(bf),
    )

    kernel = _make_kernel(prompt_len, total_len, s_pad)
    logits, out_ids = pl.pallas_call(
        kernel,
        out_shape=(jax.ShapeDtypeStruct((s_pad, VOCAB), jnp.float32),
                   jax.ShapeDtypeStruct((s_pad, 1), jnp.int32)),
        in_specs=[pl.BlockSpec(memory_space=pltpu.MemorySpace.VMEM)] * len(args),
        out_specs=(pl.BlockSpec(memory_space=pltpu.MemorySpace.VMEM),
                   pl.BlockSpec(memory_space=pltpu.MemorySpace.VMEM)),
    )(*args)

    return logits[None, :total_len, :], out_ids[:total_len, 0][None, :]


# ==================================== main ====================================
if __name__ == "__main__":
    key = jax.random.PRNGKey(0)
    pkey, ikey = jax.random.split(key)
    params = init_params(pkey)

    prompt_len = 8
    input_ids = jax.random.randint(ikey, (1, prompt_len), 0, 100, dtype=jnp.int32)
    attention_mask = jnp.ones((1, prompt_len), jnp.float32)

    fwd = jax.jit(prompt_gpt2_forward)
    logits, output_ids = fwd(params, input_ids, attention_mask)
    logits = jax.block_until_ready(logits)
    output_ids = jax.block_until_ready(output_ids)

    assert logits.shape == (1, prompt_len + MAX_GEN_LEN, VOCAB)
    assert output_ids.shape == (1, prompt_len + MAX_GEN_LEN)
    assert bool(jnp.all(jnp.isfinite(logits)))
    print("KERNEL_OK")
</pallas_src>

<mosaic_0001>
module attributes {stable_mosaic.version = 11 : i64} {
  func.func @kernel(%arg0: memref<16x1xi32, #tpu.memory_space<vmem>>, %arg1: memref<1x16xi32, #tpu.memory_space<vmem>>, %arg2: memref<1x16xf32, #tpu.memory_space<vmem>>, %arg3: memref<16x1xi32, #tpu.memory_space<vmem>>, %arg4: memref<2x1x32xf32, #tpu.memory_space<vmem>>, %arg5: memref<2x1x32xf32, #tpu.memory_space<vmem>>, %arg6: memref<2x32x96xbf16, #tpu.memory_space<vmem>>, %arg7: memref<2x1x96xf32, #tpu.memory_space<vmem>>, %arg8: memref<2x32x32xbf16, #tpu.memory_space<vmem>>, %arg9: memref<2x1x32xf32, #tpu.memory_space<vmem>>, %arg10: memref<2x1x32xf32, #tpu.memory_space<vmem>>, %arg11: memref<2x1x32xf32, #tpu.memory_space<vmem>>, %arg12: memref<2x32x128xbf16, #tpu.memory_space<vmem>>, %arg13: memref<2x1x128xf32, #tpu.memory_space<vmem>>, %arg14: memref<2x128x32xbf16, #tpu.memory_space<vmem>>, %arg15: memref<2x1x32xf32, #tpu.memory_space<vmem>>, %arg16: memref<1x32xf32, #tpu.memory_space<vmem>>, %arg17: memref<1x32xf32, #tpu.memory_space<vmem>>, %arg18: memref<128x32xbf16, #tpu.memory_space<vmem>>, %arg19: memref<64x32xbf16, #tpu.memory_space<vmem>>, %arg20: memref<16x128xf32, #tpu.memory_space<vmem>>, %arg21: memref<16x1xi32, #tpu.memory_space<vmem>>) attributes {dimension_semantics = [], scalar_prefetch = 0 : i64, scratch_operands = 0 : i64, tpu.core_type = #tpu.core_type<tc>} {
    %0 = tpu.iota {dimensions = array<i32: 0>} : vector<16x16xi32>
    %1 = tpu.iota {dimensions = array<i32: 1>} : vector<16x16xi32>
    %2 = arith.cmpi sle, %1, %0 : vector<16x16xi32>
    %3 = arith.extui %2 : vector<16x16xi1> to vector<16x16xi32>
    %4 = arith.sitofp %3 : vector<16x16xi32> to vector<16x16xf32>
    %5 = tpu.iota {dimensions = array<i32: 1>} : vector<16x128xi32>
    %6 = tpu.iota {dimensions = array<i32: 1>} : vector<16x64xi32>
    %7 = tpu.iota {dimensions = array<i32: 1>} : vector<1x16xi32>
    %8 = tpu.iota {dimensions = array<i32: 0>} : vector<16x1xi32>
    %9 = tpu.iota {dimensions = array<i32: 1>} : vector<1x128xi32>
    %c0 = arith.constant 0 : index
    %c0_0 = arith.constant 0 : index
    %10 = vector.load %arg18[%c0, %c0_0] : memref<128x32xbf16, #tpu.memory_space<vmem>>, vector<128x32xbf16>
    %c0_1 = arith.constant 0 : index
    %c0_2 = arith.constant 0 : index
    %11 = vector.load %arg19[%c0_1, %c0_2] : memref<64x32xbf16, #tpu.memory_space<vmem>>, vector<64x32xbf16>
    %c0_3 = arith.constant 0 : index
    %c0_4 = arith.constant 0 : index
    %12 = vector.load %arg16[%c0_3, %c0_4] : memref<1x32xf32, #tpu.memory_space<vmem>>, vector<1x32xf32>
    %c0_5 = arith.constant 0 : index
    %c0_6 = arith.constant 0 : index
    %13 = vector.load %arg17[%c0_5, %c0_6] : memref<1x32xf32, #tpu.memory_space<vmem>>, vector<1x32xf32>
    %c0_7 = arith.constant 0 : index
    %c0_8 = arith.constant 0 : index
    %14 = vector.load %arg2[%c0_7, %c0_8] : memref<1x16xf32, #tpu.memory_space<vmem>>, vector<1x16xf32>
    %cst = arith.constant 5.000000e-01 : f32
    %15 = vector.broadcast %cst : f32 to vector<1x16xf32>
    %16 = arith.cmpf ogt, %14, %15 : vector<1x16xf32>
    %c0_9 = arith.constant 0 : index
    %c0_10 = arith.constant 0 : index
    %17 = vector.load %arg3[%c0_9, %c0_10] : memref<16x1xi32, #tpu.memory_space<vmem>>, vector<16x1xi32>
    %c0_11 = arith.constant 0 : index
    %c0_12 = arith.constant 0 : index
    %18 = vector.load %arg0[%c0_11, %c0_12] : memref<16x1xi32, #tpu.memory_space<vmem>>, vector<16x1xi32>
    %c0_13 = arith.constant 0 : index
    %c0_14 = arith.constant 0 : index
    %19 = vector.load %arg1[%c0_13, %c0_14] : memref<1x16xi32, #tpu.memory_space<vmem>>, vector<1x16xi32>
    %c8_i32 = arith.constant 8 : i32
    %20 = vector.broadcast %c8_i32 : i32 to vector<1x16xi32>
    %21 = arith.cmpi sge, %7, %20 : vector<1x16xi32>
    %c8_i32_15 = arith.constant 8 : i32
    %22 = vector.broadcast %c8_i32_15 : i32 to vector<1x16xi32>
    %23 = arith.cmpi slt, %7, %22 : vector<1x16xi32>
    %24 = arith.andi %21, %23 : vector<1x16xi1>
    %25 = arith.ori %16, %24 : vector<1x16xi1>
    %26 = vector.broadcast %18 : vector<16x1xi32> to vector<16x128xi32>
    %27 = arith.cmpi eq, %26, %5 : vector<16x128xi32>
    %28 = arith.extui %27 : vector<16x128xi1> to vector<16x128xi32>
    %29 = arith.sitofp %28 : vector<16x128xi32> to vector<16x128xf32>
    %30 = arith.truncf %29 : vector<16x128xf32> to vector<16x128xbf16>
    %31 = vector.broadcast %17 : vector<16x1xi32> to vector<16x64xi32>
    %32 = arith.cmpi eq, %31, %6 : vector<16x64xi32>
    %33 = arith.extui %32 : vector<16x64xi1> to vector<16x64xi32>
    %34 = arith.sitofp %33 : vector<16x64xi32> to vector<16x64xf32>
    %35 = arith.truncf %34 : vector<16x64xf32> to vector<16x64xbf16>
    %cst_16 = arith.constant dense<0.000000e+00> : vector<16x32xf32>
    %36 = tpu.matmul %30, %10, %cst_16 {dimension_numbers = #tpu.dot_dimension_numbers<[1], [0], [0], [1], [0, 0, 1, 1], [], []>} : vector<16x128xbf16>, vector<128x32xbf16>, vector<16x32xf32> -> vector<16x32xf32>
    %cst_17 = arith.constant dense<0.000000e+00> : vector<16x32xf32>
    %37 = tpu.matmul %35, %11, %cst_17 {dimension_numbers = #tpu.dot_dimension_numbers<[1], [0], [0], [1], [0, 0, 1, 1], [], []>} : vector<16x64xbf16>, vector<64x32xbf16>, vector<16x32xf32> -> vector<16x32xf32>
    %38 = arith.addf %36, %37 : vector<16x32xf32>
    %39 = vector.broadcast %25 : vector<1x16xi1> to vector<16x16xi1>
    %40 = arith.andi %2, %39 : vector<16x16xi1>
    %cst_18 = arith.constant 0.000000e+00 : f32
    %cst_19 = arith.constant -1.000000e+09 : f32
    %41 = vector.broadcast %cst_18 : f32 to vector<16x16xf32>
    %42 = vector.broadcast %cst_19 : f32 to vector<16x16xf32>
    %43 = arith.select %40, %41, %42 : vector<16x16xi1>, vector<16x16xf32>
    %c0_20 = arith.constant 0 : index
    %c0_21 = arith.constant 0 : index
    %c0_22 = arith.constant 0 : index
    %44 = vector.load %arg4[%c0_20, %c0_21, %c0_22] : memref<2x1x32xf32, #tpu.memory_space<vmem>>, vector<1x1x32xf32>
    %45 = vector.shape_cast %44 : vector<1x1x32xf32> to vector<1x32xf32>
    %c0_23 = arith.constant 0 : index
    %c0_24 = arith.constant 0 : index
    %c0_25 = arith.constant 0 : index
    %46 = vector.load %arg5[%c0_23, %c0_24, %c0_25] : memref<2x1x32xf32, #tpu.memory_space<vmem>>, vector<1x1x32xf32>
    %47 = vector.shape_cast %46 : vector<1x1x32xf32> to vector<1x32xf32>
    %cst_26 = arith.constant dense<0.000000e+00> : vector<16xf32>
    %48 = vector.multi_reduction <add>, %38, %cst_26 [1] : vector<16x32xf32> to vector<16xf32>
    %49 = vector.shape_cast %48 : vector<16xf32> to vector<16x1xf32>
    %cst_27 = arith.constant 3.200000e+01 : f32
    %50 = vector.broadcast %cst_27 : f32 to vector<16x1xf32>
    %51 = arith.divf %49, %50 : vector<16x1xf32>
    %52 = vector.broadcast %51 : vector<16x1xf32> to vector<16x32xf32>
    %53 = arith.subf %38, %52 : vector<16x32xf32>
    %54 = arith.mulf %53, %53 : vector<16x32xf32>
    %cst_28 = arith.constant dense<0.000000e+00> : vector<16xf32>
    %55 = vector.multi_reduction <add>, %54, %cst_28 [1] : vector<16x32xf32> to vector<16xf32>
    %56 = vector.shape_cast %55 : vector<16xf32> to vector<16x1xf32>
    %cst_29 = arith.constant 3.200000e+01 : f32
    %57 = vector.broadcast %cst_29 : f32 to vector<16x1xf32>
    %58 = arith.divf %56, %57 : vector<16x1xf32>
    %59 = vector.broadcast %51 : vector<16x1xf32> to vector<16x32xf32>
    %60 = arith.subf %38, %59 : vector<16x32xf32>
    %cst_30 = arith.constant 9.99999974E-6 : f32
    %61 = vector.broadcast %cst_30 : f32 to vector<16x1xf32>
    %62 = arith.addf %58, %61 : vector<16x1xf32>
    %63 = math.rsqrt %62 : vector<16x1xf32>
    %64 = vector.broadcast %63 : vector<16x1xf32> to vector<16x32xf32>
    %65 = arith.mulf %60, %64 : vector<16x32xf32>
    %66 = vector.broadcast %45 : vector<1x32xf32> to vector<16x32xf32>
    %67 = arith.mulf %65, %66 : vector<16x32xf32>
    %68 = vector.broadcast %47 : vector<1x32xf32> to vector<16x32xf32>
    %69 = arith.addf %67, %68 : vector<16x32xf32>
    %70 = arith.truncf %69 : vector<16x32xf32> to vector<16x32xbf16>
    %c0_31 = arith.constant 0 : index
    %c0_32 = arith.constant 0 : index
    %c0_33 = arith.constant 0 : index
    %71 = vector.load %arg6[%c0_31, %c0_32, %c0_33] : memref<2x32x96xbf16, #tpu.memory_space<vmem>>, vector<1x32x96xbf16>
    %72 = vector.shape_cast %71 : vector<1x32x96xbf16> to vector<32x96xbf16>
    %cst_34 = arith.constant dense<0.000000e+00> : vector<16x96xf32>
    %73 = tpu.matmul %70, %72, %cst_34 {dimension_numbers = #tpu.dot_dimension_numbers<[1], [0], [0], [1], [0, 0, 1, 1], [], []>} : vector<16x32xbf16>, vector<32x96xbf16>, vector<16x96xf32> -> vector<16x96xf32>
    %c0_35 = arith.constant 0 : index
    %c0_36 = arith.constant 0 : index
    %c0_37 = arith.constant 0 : index
    %74 = vector.load %arg7[%c0_35, %c0_36, %c0_37] : memref<2x1x96xf32, #tpu.memory_space<vmem>>, vector<1x1x96xf32>
    %75 = vector.shape_cast %74 : vector<1x1x96xf32> to vector<1x96xf32>
    %76 = vector.broadcast %75 : vector<1x96xf32> to vector<16x96xf32>
    %77 = arith.addf %73, %76 : vector<16x96xf32>
    %c0_38 = arith.constant 0 : index
    %c0_39 = arith.constant 0 : index
    %c0_40 = arith.constant 0 : index
    %78 = vector.load %arg8[%c0_38, %c0_39, %c0_40] : memref<2x32x32xbf16, #tpu.memory_space<vmem>>, vector<1x32x32xbf16>
    %79 = vector.shape_cast %78 : vector<1x32x32xbf16> to vector<32x32xbf16>
    %80 = vector.extract_strided_slice %77 {offsets = [0, 0], sizes = [16, 16], strides = [1, 1]} : vector<16x96xf32> to vector<16x16xf32>
    %81 = arith.truncf %80 : vector<16x16xf32> to vector<16x16xbf16>
    %82 = vector.extract_strided_slice %77 {offsets = [0, 32], sizes = [16, 16], strides = [1, 1]} : vector<16x96xf32> to vector<16x16xf32>
    %83 = arith.truncf %82 : vector<16x16xf32> to vector<16x16xbf16>
    %84 = vector.extract_strided_slice %77 {offsets = [0, 64], sizes = [16, 16], strides = [1, 1]} : vector<16x96xf32> to vector<16x16xf32>
    %85 = arith.truncf %84 : vector<16x16xf32> to vector<16x16xbf16>
    %cst_41 = arith.constant dense<0.000000e+00> : vector<16x16xf32>
    %86 = tpu.matmul %81, %83, %cst_41 {dimension_numbers = #tpu.dot_dimension_numbers<[1], [1], [0], [0], [0, 0, 1, 0], [], []>} : vector<16x16xbf16>, vector<16x16xbf16>, vector<16x16xf32> -> vector<16x16xf32>
    %cst_42 = arith.constant 2.500000e-01 : f32
    %87 = vector.broadcast %cst_42 : f32 to vector<16x16xf32>
    %88 = arith.mulf %86, %87 : vector<16x16xf32>
    %89 = arith.addf %88, %43 : vector<16x16xf32>
    %cst_43 = arith.constant dense<0xFF800000> : vector<16xf32>
    %90 = vector.multi_reduction <maximumf>, %89, %cst_43 [1] : vector<16x16xf32> to vector<16xf32>
    %91 = vector.shape_cast %90 : vector<16xf32> to vector<16x1xf32>
    %92 = vector.broadcast %91 : vector<16x1xf32> to vector<16x16xf32>
    %93 = arith.subf %89, %92 : vector<16x16xf32>
    %94 = math.exp %93 : vector<16x16xf32>
    %cst_44 = arith.constant dense<0.000000e+00> : vector<16xf32>
    %95 = vector.multi_reduction <add>, %94, %cst_44 [1] : vector<16x16xf32> to vector<16xf32>
    %96 = vector.shape_cast %95 : vector<16xf32> to vector<16x1xf32>
    %97 = vector.broadcast %96 : vector<16x1xf32> to vector<16x16xf32>
    %98 = arith.divf %94, %97 : vector<16x16xf32>
    %99 = arith.truncf %98 : vector<16x16xf32> to vector<16x16xbf16>
    %cst_45 = arith.constant dense<0.000000e+00> : vector<16x16xf32>
    %100 = tpu.matmul %99, %85, %cst_45 {dimension_numbers = #tpu.dot_dimension_numbers<[1], [0], [0], [1], [0, 0, 1, 1], [], []>} : vector<16x16xbf16>, vector<16x16xbf16>, vector<16x16xf32> -> vector<16x16xf32>
    %101 = arith.truncf %100 : vector<16x16xf32> to vector<16x16xbf16>
    %102 = vector.extract_strided_slice %79 {offsets = [0, 0], sizes = [16, 32], strides = [1, 1]} : vector<32x32xbf16> to vector<16x32xbf16>
    %cst_46 = arith.constant dense<0.000000e+00> : vector<16x32xf32>
    %103 = tpu.matmul %101, %102, %cst_46 {dimension_numbers = #tpu.dot_dimension_numbers<[1], [0], [0], [1], [0, 0, 1, 1], [], []>} : vector<16x16xbf16>, vector<16x32xbf16>, vector<16x32xf32> -> vector<16x32xf32>
    %104 = vector.extract_strided_slice %77 {offsets = [0, 16], sizes = [16, 16], strides = [1, 1]} : vector<16x96xf32> to vector<16x16xf32>
    %105 = arith.truncf %104 : vector<16x16xf32> to vector<16x16xbf16>
    %106 = vector.extract_strided_slice %77 {offsets = [0, 48], sizes = [16, 16], strides = [1, 1]} : vector<16x96xf32> to vector<16x16xf32>
    %107 = arith.truncf %106 : vector<16x16xf32> to vector<16x16xbf16>
    %108 = vector.extract_strided_slice %77 {offsets = [0, 80], sizes = [16, 16], strides = [1, 1]} : vector<16x96xf32> to vector<16x16xf32>
    %109 = arith.truncf %108 : vector<16x16xf32> to vector<16x16xbf16>
    %cst_47 = arith.constant dense<0.000000e+00> : vector<16x16xf32>
    %110 = tpu.matmul %105, %107, %cst_47 {dimension_numbers = #tpu.dot_dimension_numbers<[1], [1], [0], [0], [0, 0, 1, 0], [], []>} : vector<16x16xbf16>, vector<16x16xbf16>, vector<16x16xf32> -> vector<16x16xf32>
    %cst_48 = arith.constant 2.500000e-01 : f32
    %111 = vector.broadcast %cst_48 : f32 to vector<16x16xf32>
    %112 = arith.mulf %110, %111 : vector<16x16xf32>
    %113 = arith.addf %112, %43 : vector<16x16xf32>
    %cst_49 = arith.constant dense<0xFF800000> : vector<16xf32>
    %114 = vector.multi_reduction <maximumf>, %113, %cst_49 [1] : vector<16x16xf32> to vector<16xf32>
    %115 = vector.shape_cast %114 : vector<16xf32> to vector<16x1xf32>
    %116 = vector.broadcast %115 : vector<16x1xf32> to vector<16x16xf32>
    %117 = arith.subf %113, %116 : vector<16x16xf32>
    %118 = math.exp %117 : vector<16x16xf32>
    %cst_50 = arith.constant dense<0.000000e+00> : vector<16xf32>
    %119 = vector.multi_reduction <add>, %118, %cst_50 [1] : vector<16x16xf32> to vector<16xf32>
    %120 = vector.shape_cast %119 : vector<16xf32> to vector<16x1xf32>
    %121 = vector.broadcast %120 : vector<16x1xf32> to vector<16x16xf32>
    %122 = arith.divf %118, %121 : vector<16x16xf32>
    %123 = arith.truncf %122 : vector<16x16xf32> to vector<16x16xbf16>
    %cst_51 = arith.constant dense<0.000000e+00> : vector<16x16xf32>
    %124 = tpu.matmul %123, %109, %cst_51 {dimension_numbers = #tpu.dot_dimension_numbers<[1], [0], [0], [1], [0, 0, 1, 1], [], []>} : vector<16x16xbf16>, vector<16x16xbf16>, vector<16x16xf32> -> vector<16x16xf32>
    %125 = arith.truncf %124 : vector<16x16xf32> to vector<16x16xbf16>
    %126 = vector.extract_strided_slice %79 {offsets = [16, 0], sizes = [16, 32], strides = [1, 1]} : vector<32x32xbf16> to vector<16x32xbf16>
    %cst_52 = arith.constant dense<0.000000e+00> : vector<16x32xf32>
    %127 = tpu.matmul %125, %126, %cst_52 {dimension_numbers = #tpu.dot_dimension_numbers<[1], [0], [0], [1], [0, 0, 1, 1], [], []>} : vector<16x16xbf16>, vector<16x32xbf16>, vector<16x32xf32> -> vector<16x32xf32>
    %128 = arith.addf %103, %127 : vector<16x32xf32>
    %129 = arith.addf %38, %128 : vector<16x32xf32>
    %c0_53 = arith.constant 0 : index
    %c0_54 = arith.constant 0 : index
    %c0_55 = arith.constant 0 : index
    %130 = vector.load %arg9[%c0_53, %c0_54, %c0_55] : memref<2x1x32xf32, #tpu.memory_space<vmem>>, vector<1x1x32xf32>
    %131 = vector.shape_cast %130 : vector<1x1x32xf32> to vector<1x32xf32>
    %132 = vector.broadcast %131 : vector<1x32xf32> to vector<16x32xf32>
    %133 = arith.addf %129, %132 : vector<16x32xf32>
    %c0_56 = arith.constant 0 : index
    %c0_57 = arith.constant 0 : index
    %c0_58 = arith.constant 0 : index
    %134 = vector.load %arg10[%c0_56, %c0_57, %c0_58] : memref<2x1x32xf32, #tpu.memory_space<vmem>>, vector<1x1x32xf32>
    %135 = vector.shape_cast %134 : vector<1x1x32xf32> to vector<1x32xf32>
    %c0_59 = arith.constant 0 : index
    %c0_60 = arith.constant 0 : index
    %c0_61 = arith.constant 0 : index
    %136 = vector.load %arg11[%c0_59, %c0_60, %c0_61] : memref<2x1x32xf32, #tpu.memory_space<vmem>>, vector<1x1x32xf32>
    %137 = vector.shape_cast %136 : vector<1x1x32xf32> to vector<1x32xf32>
    %cst_62 = arith.constant dense<0.000000e+00> : vector<16xf32>
    %138 = vector.multi_reduction <add>, %133, %cst_62 [1] : vector<16x32xf32> to vector<16xf32>
    %139 = vector.shape_cast %138 : vector<16xf32> to vector<16x1xf32>
    %cst_63 = arith.constant 3.200000e+01 : f32
    %140 = vector.broadcast %cst_63 : f32 to vector<16x1xf32>
    %141 = arith.divf %139, %140 : vector<16x1xf32>
    %142 = vector.broadcast %141 : vector<16x1xf32> to vector<16x32xf32>
    %143 = arith.subf %133, %142 : vector<16x32xf32>
    %144 = arith.mulf %143, %143 : vector<16x32xf32>
    %cst_64 = arith.constant dense<0.000000e+00> : vector<16xf32>
    %145 = vector.multi_reduction <add>, %144, %cst_64 [1] : vector<16x32xf32> to vector<16xf32>
    %146 = vector.shape_cast %145 : vector<16xf32> to vector<16x1xf32>
    %cst_65 = arith.constant 3.200000e+01 : f32
    %147 = vector.broadcast %cst_65 : f32 to vector<16x1xf32>
    %148 = arith.divf %146, %147 : vector<16x1xf32>
    %149 = vector.broadcast %141 : vector<16x1xf32> to vector<16x32xf32>
    %150 = arith.subf %133, %149 : vector<16x32xf32>
    %cst_66 = arith.constant 9.99999974E-6 : f32
    %151 = vector.broadcast %cst_66 : f32 to vector<16x1xf32>
    %152 = arith.addf %148, %151 : vector<16x1xf32>
    %153 = math.rsqrt %152 : vector<16x1xf32>
    %154 = vector.broadcast %153 : vector<16x1xf32> to vector<16x32xf32>
    %155 = arith.mulf %150, %154 : vector<16x32xf32>
    %156 = vector.broadcast %135 : vector<1x32xf32> to vector<16x32xf32>
    %157 = arith.mulf %155, %156 : vector<16x32xf32>
    %158 = vector.broadcast %137 : vector<1x32xf32> to vector<16x32xf32>
    %159 = arith.addf %157, %158 : vector<16x32xf32>
    %160 = arith.truncf %159 : vector<16x32xf32> to vector<16x32xbf16>
    %c0_67 = arith.constant 0 : index
    %c0_68 = arith.constant 0 : index
    %c0_69 = arith.constant 0 : index
    %161 = vector.load %arg12[%c0_67, %c0_68, %c0_69] : memref<2x32x128xbf16, #tpu.memory_space<vmem>>, vector<1x32x128xbf16>
    %162 = vector.shape_cast %161 : vector<1x32x128xbf16> to vector<32x128xbf16>
    %cst_70 = arith.constant dense<0.000000e+00> : vector<16x128xf32>
    %163 = tpu.matmul %160, %162, %cst_70 {dimension_numbers = #tpu.dot_dimension_numbers<[1], [0], [0], [1], [0, 0, 1, 1], [], []>} : vector<16x32xbf16>, vector<32x128xbf16>, vector<16x128xf32> -> vector<16x128xf32>
    %c0_71 = arith.constant 0 : index
    %c0_72 = arith.constant 0 : index
    %c0_73 = arith.constant 0 : index
    %164 = vector.load %arg13[%c0_71, %c0_72, %c0_73] : memref<2x1x128xf32, #tpu.memory_space<vmem>>, vector<1x1x128xf32>
    %165 = vector.shape_cast %164 : vector<1x1x128xf32> to vector<1x128xf32>
    %166 = vector.broadcast %165 : vector<1x128xf32> to vector<16x128xf32>
    %167 = arith.addf %163, %166 : vector<16x128xf32>
    %cst_74 = arith.constant 5.000000e-01 : f32
    %168 = vector.broadcast %cst_74 : f32 to vector<16x128xf32>
    %169 = arith.mulf %168, %167 : vector<16x128xf32>
    %cst_75 = arith.constant 4.471500e-02 : f32
    %170 = vector.broadcast %cst_75 : f32 to vector<16x128xf32>
    %171 = arith.mulf %170, %167 : vector<16x128xf32>
    %172 = arith.mulf %171, %167 : vector<16x128xf32>
    %173 = arith.mulf %172, %167 : vector<16x128xf32>
    %174 = arith.addf %167, %173 : vector<16x128xf32>
    %cst_76 = arith.constant 0.797884583 : f32
    %175 = vector.broadcast %cst_76 : f32 to vector<16x128xf32>
    %176 = arith.mulf %175, %174 : vector<16x128xf32>
    %177 = math.tanh %176 : vector<16x128xf32>
    %cst_77 = arith.constant 1.000000e+00 : f32
    %178 = vector.broadcast %cst_77 : f32 to vector<16x128xf32>
    %179 = arith.addf %178, %177 : vector<16x128xf32>
    %180 = arith.mulf %169, %179 : vector<16x128xf32>
    %181 = arith.truncf %180 : vector<16x128xf32> to vector<16x128xbf16>
    %c0_78 = arith.constant 0 : index
    %c0_79 = arith.constant 0 : index
    %c0_80 = arith.constant 0 : index
    %182 = vector.load %arg14[%c0_78, %c0_79, %c0_80] : memref<2x128x32xbf16, #tpu.memory_space<vmem>>, vector<1x128x32xbf16>
    %183 = vector.shape_cast %182 : vector<1x128x32xbf16> to vector<128x32xbf16>
    %cst_81 = arith.constant dense<0.000000e+00> : vector<16x32xf32>
    %184 = tpu.matmul %181, %183, %cst_81 {dimension_numbers = #tpu.dot_dimension_numbers<[1], [0], [0], [1], [0, 0, 1, 1], [], []>} : vector<16x128xbf16>, vector<128x32xbf16>, vector<16x32xf32> -> vector<16x32xf32>
    %c0_82 = arith.constant 0 : index
    %c0_83 = arith.constant 0 : index
    %c0_84 = arith.constant 0 : index
    %185 = vector.load %arg15[%c0_82, %c0_83, %c0_84] : memref<2x1x32xf32, #tpu.memory_space<vmem>>, vector<1x1x32xf32>
    %186 = vector.shape_cast %185 : vector<1x1x32xf32> to vector<1x32xf32>
    %187 = vector.broadcast %186 : vector<1x32xf32> to vector<16x32xf32>
    %188 = arith.addf %184, %187 : vector<16x32xf32>
    %189 = arith.addf %133, %188 : vector<16x32xf32>
    %c1 = arith.constant 1 : index
    %c0_85 = arith.constant 0 : index
    %c0_86 = arith.constant 0 : index
    %190 = vector.load %arg4[%c1, %c0_85, %c0_86] : memref<2x1x32xf32, #tpu.memory_space<vmem>>, vector<1x1x32xf32>
    %191 = vector.shape_cast %190 : vector<1x1x32xf32> to vector<1x32xf32>
    %c1_87 = arith.constant 1 : index
    %c0_88 = arith.constant 0 : index
    %c0_89 = arith.constant 0 : index
    %192 = vector.load %arg5[%c1_87, %c0_88, %c0_89] : memref<2x1x32xf32, #tpu.memory_space<vmem>>, vector<1x1x32xf32>
    %193 = vector.shape_cast %192 : vector<1x1x32xf32> to vector<1x32xf32>
    %cst_90 = arith.constant dense<0.000000e+00> : vector<16xf32>
    %194 = vector.multi_reduction <add>, %189, %cst_90 [1] : vector<16x32xf32> to vector<16xf32>
    %195 = vector.shape_cast %194 : vector<16xf32> to vector<16x1xf32>
    %cst_91 = arith.constant 3.200000e+01 : f32
    %196 = vector.broadcast %cst_91 : f32 to vector<16x1xf32>
    %197 = arith.divf %195, %196 : vector<16x1xf32>
    %198 = vector.broadcast %197 : vector<16x1xf32> to vector<16x32xf32>
    %199 = arith.subf %189, %198 : vector<16x32xf32>
    %200 = arith.mulf %199, %199 : vector<16x32xf32>
    %cst_92 = arith.constant dense<0.000000e+00> : vector<16xf32>
    %201 = vector.multi_reduction <add>, %200, %cst_92 [1] : vector<16x32xf32> to vector<16xf32>
    %202 = vector.shape_cast %201 : vector<16xf32> to vector<16x1xf32>
    %cst_93 = arith.constant 3.200000e+01 : f32
    %203 = vector.broadcast %cst_93 : f32 to vector<16x1xf32>
    %204 = arith.divf %202, %203 : vector<16x1xf32>
    %205 = vector.broadcast %197 : vector<16x1xf32> to vector<16x32xf32>
    %206 = arith.subf %189, %205 : vector<16x32xf32>
    %cst_94 = arith.constant 9.99999974E-6 : f32
    %207 = vector.broadcast %cst_94 : f32 to vector<16x1xf32>
    %208 = arith.addf %204, %207 : vector<16x1xf32>
    %209 = math.rsqrt %208 : vector<16x1xf32>
    %210 = vector.broadcast %209 : vector<16x1xf32> to vector<16x32xf32>
    %211 = arith.mulf %206, %210 : vector<16x32xf32>
    %212 = vector.broadcast %191 : vector<1x32xf32> to vector<16x32xf32>
    %213 = arith.mulf %211, %212 : vector<16x32xf32>
    %214 = vector.broadcast %193 : vector<1x32xf32> to vector<16x32xf32>
    %215 = arith.addf %213, %214 : vector<16x32xf32>
    %216 = arith.truncf %215 : vector<16x32xf32> to vector<16x32xbf16>
    %c1_95 = arith.constant 1 : index
    %c0_96 = arith.constant 0 : index
    %c0_97 = arith.constant 0 : index
    %217 = vector.load %arg6[%c1_95, %c0_96, %c0_97] : memref<2x32x96xbf16, #tpu.memory_space<vmem>>, vector<1x32x96xbf16>
    %218 = vector.shape_cast %217 : vector<1x32x96xbf16> to vector<32x96xbf16>
    %cst_98 = arith.constant dense<0.000000e+00> : vector<16x96xf32>
    %219 = tpu.matmul %216, %218, %cst_98 {dimension_numbers = #tpu.dot_dimension_numbers<[1], [0], [0], [1], [0, 0, 1, 1], [], []>} : vector<16x32xbf16>, vector<32x96xbf16>, vector<16x96xf32> -> vector<16x96xf32>
    %c1_99 = arith.constant 1 : index
    %c0_100 = arith.constant 0 : index
    %c0_101 = arith.constant 0 : index
    %220 = vector.load %arg7[%c1_99, %c0_100, %c0_101] : memref<2x1x96xf32, #tpu.memory_space<vmem>>, vector<1x1x96xf32>
    %221 = vector.shape_cast %220 : vector<1x1x96xf32> to vector<1x96xf32>
    %222 = vector.broadcast %221 : vector<1x96xf32> to vector<16x96xf32>
    %223 = arith.addf %219, %222 : vector<16x96xf32>
    %c1_102 = arith.constant 1 : index
    %c0_103 = arith.constant 0 : index
    %c0_104 = arith.constant 0 : index
    %224 = vector.load %arg8[%c1_102, %c0_103, %c0_104] : memref<2x32x32xbf16, #tpu.memory_space<vmem>>, vector<1x32x32xbf16>
    %225 = vector.shape_cast %224 : vector<1x32x32xbf16> to vector<32x32xbf16>
    %226 = vector.extract_strided_slice %223 {offsets = [0, 0], sizes = [16, 16], strides = [1, 1]} : vector<16x96xf32> to vector<16x16xf32>
    %227 = arith.truncf %226 : vector<16x16xf32> to vector<16x16xbf16>
    %228 = vector.extract_strided_slice %223 {offsets = [0, 32], sizes = [16, 16], strides = [1, 1]} : vector<16x96xf32> to vector<16x16xf32>
    %229 = arith.truncf %228 : vector<16x16xf32> to vector<16x16xbf16>
    %230 = vector.extract_strided_slice %223 {offsets = [0, 64], sizes = [16, 16], strides = [1, 1]} : vector<16x96xf32> to vector<16x16xf32>
    %231 = arith.truncf %230 : vector<16x16xf32> to vector<16x16xbf16>
    %cst_105 = arith.constant dense<0.000000e+00> : vector<16x16xf32>
    %232 = tpu.matmul %227, %229, %cst_105 {dimension_numbers = #tpu.dot_dimension_numbers<[1], [1], [0], [0], [0, 0, 1, 0], [], []>} : vector<16x16xbf16>, vector<16x16xbf16>, vector<16x16xf32> -> vector<16x16xf32>
    %cst_106 = arith.constant 2.500000e-01 : f32
    %233 = vector.broadcast %cst_106 : f32 to vector<16x16xf32>
    %234 = arith.mulf %232, %233 : vector<16x16xf32>
    %235 = arith.addf %234, %43 : vector<16x16xf32>
    %cst_107 = arith.constant dense<0xFF800000> : vector<16xf32>
    %236 = vector.multi_reduction <maximumf>, %235, %cst_107 [1] : vector<16x16xf32> to vector<16xf32>
    %237 = vector.shape_cast %236 : vector<16xf32> to vector<16x1xf32>
    %238 = vector.broadcast %237 : vector<16x1xf32> to vector<16x16xf32>
    %239 = arith.subf %235, %238 : vector<16x16xf32>
    %240 = math.exp %239 : vector<16x16xf32>
    %cst_108 = arith.constant dense<0.000000e+00> : vector<16xf32>
    %241 = vector.multi_reduction <add>, %240, %cst_108 [1] : vector<16x16xf32> to vector<16xf32>
    %242 = vector.shape_cast %241 : vector<16xf32> to vector<16x1xf32>
    %243 = vector.broadcast %242 : vector<16x1xf32> to vector<16x16xf32>
    %244 = arith.divf %240, %243 : vector<16x16xf32>
    %245 = arith.truncf %244 : vector<16x16xf32> to vector<16x16xbf16>
    %cst_109 = arith.constant dense<0.000000e+00> : vector<16x16xf32>
    %246 = tpu.matmul %245, %231, %cst_109 {dimension_numbers = #tpu.dot_dimension_numbers<[1], [0], [0], [1], [0, 0, 1, 1], [], []>} : vector<16x16xbf16>, vector<16x16xbf16>, vector<16x16xf32> -> vector<16x16xf32>
    %247 = arith.truncf %246 : vector<16x16xf32> to vector<16x16xbf16>
    %248 = vector.extract_strided_slice %225 {offsets = [0, 0], sizes = [16, 32], strides = [1, 1]} : vector<32x32xbf16> to vector<16x32xbf16>
    %cst_110 = arith.constant dense<0.000000e+00> : vector<16x32xf32>
    %249 = tpu.matmul %247, %248, %cst_110 {dimension_numbers = #tpu.dot_dimension_numbers<[1], [0], [0], [1], [0, 0, 1, 1], [], []>} : vector<16x16xbf16>, vector<16x32xbf16>, vector<16x32xf32> -> vector<16x32xf32>
    %250 = vector.extract_strided_slice %223 {offsets = [0, 16], sizes = [16, 16], strides = [1, 1]} : vector<16x96xf32> to vector<16x16xf32>
    %251 = arith.truncf %250 : vector<16x16xf32> to vector<16x16xbf16>
    %252 = vector.extract_strided_slice %223 {offsets = [0, 48], sizes = [16, 16], strides = [1, 1]} : vector<16x96xf32> to vector<16x16xf32>
    %253 = arith.truncf %252 : vector<16x16xf32> to vector<16x16xbf16>
    %254 = vector.extract_strided_slice %223 {offsets = [0, 80], sizes = [16, 16], strides = [1, 1]} : vector<16x96xf32> to vector<16x16xf32>
    %255 = arith.truncf %254 : vector<16x16xf32> to vector<16x16xbf16>
    %cst_111 = arith.constant dense<0.000000e+00> : vector<16x16xf32>
    %256 = tpu.matmul %251, %253, %cst_111 {dimension_numbers = #tpu.dot_dimension_numbers<[1], [1], [0], [0], [0, 0, 1, 0], [], []>} : vector<16x16xbf16>, vector<16x16xbf16>, vector<16x16xf32> -> vector<16x16xf32>
    %cst_112 = arith.constant 2.500000e-01 : f32
    %257 = vector.broadcast %cst_112 : f32 to vector<16x16xf32>
    %258 = arith.mulf %256, %257 : vector<16x16xf32>
    %259 = arith.addf %258, %43 : vector<16x16xf32>
    %cst_113 = arith.constant dense<0xFF800000> : vector<16xf32>
    %260 = vector.multi_reduction <maximumf>, %259, %cst_113 [1] : vector<16x16xf32> to vector<16xf32>
    %261 = vector.shape_cast %260 : vector<16xf32> to vector<16x1xf32>
    %262 = vector.broadcast %261 : vector<16x1xf32> to vector<16x16xf32>
    %263 = arith.subf %259, %262 : vector<16x16xf32>
    %264 = math.exp %263 : vector<16x16xf32>
    %cst_114 = arith.constant dense<0.000000e+00> : vector<16xf32>
    %265 = vector.multi_reduction <add>, %264, %cst_114 [1] : vector<16x16xf32> to vector<16xf32>
    %266 = vector.shape_cast %265 : vector<16xf32> to vector<16x1xf32>
    %267 = vector.broadcast %266 : vector<16x1xf32> to vector<16x16xf32>
    %268 = arith.divf %264, %267 : vector<16x16xf32>
    %269 = arith.truncf %268 : vector<16x16xf32> to vector<16x16xbf16>
    %cst_115 = arith.constant dense<0.000000e+00> : vector<16x16xf32>
    %270 = tpu.matmul %269, %255, %cst_115 {dimension_numbers = #tpu.dot_dimension_numbers<[1], [0], [0], [1], [0, 0, 1, 1], [], []>} : vector<16x16xbf16>, vector<16x16xbf16>, vector<16x16xf32> -> vector<16x16xf32>
    %271 = arith.truncf %270 : vector<16x16xf32> to vector<16x16xbf16>
    %272 = vector.extract_strided_slice %225 {offsets = [16, 0], sizes = [16, 32], strides = [1, 1]} : vector<32x32xbf16> to vector<16x32xbf16>
    %cst_116 = arith.constant dense<0.000000e+00> : vector<16x32xf32>
    %273 = tpu.matmul %271, %272, %cst_116 {dimension_numbers = #tpu.dot_dimension_numbers<[1], [0], [0], [1], [0, 0, 1, 1], [], []>} : vector<16x16xbf16>, vector<16x32xbf16>, vector<16x32xf32> -> vector<16x32xf32>
    %274 = arith.addf %249, %273 : vector<16x32xf32>
    %275 = arith.addf %189, %274 : vector<16x32xf32>
    %c1_117 = arith.constant 1 : index
    %c0_118 = arith.constant 0 : index
    %c0_119 = arith.constant 0 : index
    %276 = vector.load %arg9[%c1_117, %c0_118, %c0_119] : memref<2x1x32xf32, #tpu.memory_space<vmem>>, vector<1x1x32xf32>
    %277 = vector.shape_cast %276 : vector<1x1x32xf32> to vector<1x32xf32>
    %278 = vector.broadcast %277 : vector<1x32xf32> to vector<16x32xf32>
    %279 = arith.addf %275, %278 : vector<16x32xf32>
    %c1_120 = arith.constant 1 : index
    %c0_121 = arith.constant 0 : index
    %c0_122 = arith.constant 0 : index
    %280 = vector.load %arg10[%c1_120, %c0_121, %c0_122] : memref<2x1x32xf32, #tpu.memory_space<vmem>>, vector<1x1x32xf32>
    %281 = vector.shape_cast %280 : vector<1x1x32xf32> to vector<1x32xf32>
    %c1_123 = arith.constant 1 : index
    %c0_124 = arith.constant 0 : index
    %c0_125 = arith.constant 0 : index
    %282 = vector.load %arg11[%c1_123, %c0_124, %c0_125] : memref<2x1x32xf32, #tpu.memory_space<vmem>>, vector<1x1x32xf32>
    %283 = vector.shape_cast %282 : vector<1x1x32xf32> to vector<1x32xf32>
    %cst_126 = arith.constant dense<0.000000e+00> : vector<16xf32>
    %284 = vector.multi_reduction <add>, %279, %cst_126 [1] : vector<16x32xf32> to vector<16xf32>
    %285 = vector.shape_cast %284 : vector<16xf32> to vector<16x1xf32>
    %cst_127 = arith.constant 3.200000e+01 : f32
    %286 = vector.broadcast %cst_127 : f32 to vector<16x1xf32>
    %287 = arith.divf %285, %286 : vector<16x1xf32>
    %288 = vector.broadcast %287 : vector<16x1xf32> to vector<16x32xf32>
    %289 = arith.subf %279, %288 : vector<16x32xf32>
    %290 = arith.mulf %289, %289 : vector<16x32xf32>
    %cst_128 = arith.constant dense<0.000000e+00> : vector<16xf32>
    %291 = vector.multi_reduction <add>, %290, %cst_128 [1] : vector<16x32xf32> to vector<16xf32>
    %292 = vector.shape_cast %291 : vector<16xf32> to vector<16x1xf32>
    %cst_129 = arith.constant 3.200000e+01 : f32
    %293 = vector.broadcast %cst_129 : f32 to vector<16x1xf32>
    %294 = arith.divf %292, %293 : vector<16x1xf32>
    %295 = vector.broadcast %287 : vector<16x1xf32> to vector<16x32xf32>
    %296 = arith.subf %279, %295 : vector<16x32xf32>
    %cst_130 = arith.constant 9.99999974E-6 : f32
    %297 = vector.broadcast %cst_130 : f32 to vector<16x1xf32>
    %298 = arith.addf %294, %297 : vector<16x1xf32>
    %299 = math.rsqrt %298 : vector<16x1xf32>
    %300 = vector.broadcast %299 : vector<16x1xf32> to vector<16x32xf32>
    %301 = arith.mulf %296, %300 : vector<16x32xf32>
    %302 = vector.broadcast %281 : vector<1x32xf32> to vector<16x32xf32>
    %303 = arith.mulf %301, %302 : vector<16x32xf32>
    %304 = vector.broadcast %283 : vector<1x32xf32> to vector<16x32xf32>
    %305 = arith.addf %303, %304 : vector<16x32xf32>
    %306 = arith.truncf %305 : vector<16x32xf32> to vector<16x32xbf16>
    %c1_131 = arith.constant 1 : index
    %c0_132 = arith.constant 0 : index
    %c0_133 = arith.constant 0 : index
    %307 = vector.load %arg12[%c1_131, %c0_132, %c0_133] : memref<2x32x128xbf16, #tpu.memory_space<vmem>>, vector<1x32x128xbf16>
    %308 = vector.shape_cast %307 : vector<1x32x128xbf16> to vector<32x128xbf16>
    %cst_134 = arith.constant dense<0.000000e+00> : vector<16x128xf32>
    %309 = tpu.matmul %306, %308, %cst_134 {dimension_numbers = #tpu.dot_dimension_numbers<[1], [0], [0], [1], [0, 0, 1, 1], [], []>} : vector<16x32xbf16>, vector<32x128xbf16>, vector<16x128xf32> -> vector<16x128xf32>
    %c1_135 = arith.constant 1 : index
    %c0_136 = arith.constant 0 : index
    %c0_137 = arith.constant 0 : index
    %310 = vector.load %arg13[%c1_135, %c0_136, %c0_137] : memref<2x1x128xf32, #tpu.memory_space<vmem>>, vector<1x1x128xf32>
    %311 = vector.shape_cast %310 : vector<1x1x128xf32> to vector<1x128xf32>
    %312 = vector.broadcast %311 : vector<1x128xf32> to vector<16x128xf32>
    %313 = arith.addf %309, %312 : vector<16x128xf32>
    %cst_138 = arith.constant 5.000000e-01 : f32
    %314 = vector.broadcast %cst_138 : f32 to vector<16x128xf32>
    %315 = arith.mulf %314, %313 : vector<16x128xf32>
    %cst_139 = arith.constant 4.471500e-02 : f32
    %316 = vector.broadcast %cst_139 : f32 to vector<16x128xf32>
    %317 = arith.mulf %316, %313 : vector<16x128xf32>
    %318 = arith.mulf %317, %313 : vector<16x128xf32>
    %319 = arith.mulf %318, %313 : vector<16x128xf32>
    %320 = arith.addf %313, %319 : vector<16x128xf32>
    %cst_140 = arith.constant 0.797884583 : f32
    %321 = vector.broadcast %cst_140 : f32 to vector<16x128xf32>
    %322 = arith.mulf %321, %320 : vector<16x128xf32>
    %323 = math.tanh %322 : vector<16x128xf32>
    %cst_141 = arith.constant 1.000000e+00 : f32
    %324 = vector.broadcast %cst_141 : f32 to vector<16x128xf32>
    %325 = arith.addf %324, %323 : vector<16x128xf32>
    %326 = arith.mulf %315, %325 : vector<16x128xf32>
    %327 = arith.truncf %326 : vector<16x128xf32> to vector<16x128xbf16>
    %c1_142 = arith.constant 1 : index
    %c0_143 = arith.constant 0 : index
    %c0_144 = arith.constant 0 : index
    %328 = vector.load %arg14[%c1_142, %c0_143, %c0_144] : memref<2x128x32xbf16, #tpu.memory_space<vmem>>, vector<1x128x32xbf16>
    %329 = vector.shape_cast %328 : vector<1x128x32xbf16> to vector<128x32xbf16>
    %cst_145 = arith.constant dense<0.000000e+00> : vector<16x32xf32>
    %330 = tpu.matmul %327, %329, %cst_145 {dimension_numbers = #tpu.dot_dimension_numbers<[1], [0], [0], [1], [0, 0, 1, 1], [], []>} : vector<16x128xbf16>, vector<128x32xbf16>, vector<16x32xf32> -> vector<16x32xf32>
    %c1_146 = arith.constant 1 : index
    %c0_147 = arith.constant 0 : index
    %c0_148 = arith.constant 0 : index
    %331 = vector.load %arg15[%c1_146, %c0_147, %c0_148] : memref<2x1x32xf32, #tpu.memory_space<vmem>>, vector<1x1x32xf32>
    %332 = vector.shape_cast %331 : vector<1x1x32xf32> to vector<1x32xf32>
    %333 = vector.broadcast %332 : vector<1x32xf32> to vector<16x32xf32>
    %334 = arith.addf %330, %333 : vector<16x32xf32>
    %335 = arith.addf %279, %334 : vector<16x32xf32>
    %336 = vector.extract_strided_slice %335 {offsets = [7, 0], sizes = [1, 32], strides = [1, 1]} : vector<16x32xf32> to vector<1x32xf32>
    %cst_149 = arith.constant dense<0.000000e+00> : vector<1xf32>
    %337 = vector.multi_reduction <add>, %336, %cst_149 [1] : vector<1x32xf32> to vector<1xf32>
    %338 = vector.shape_cast %337 : vector<1xf32> to vector<1x1xf32>
    %cst_150 = arith.constant 3.200000e+01 : f32
    %339 = vector.broadcast %cst_150 : f32 to vector<1x1xf32>
    %340 = arith.divf %338, %339 : vector<1x1xf32>
    %341 = vector.broadcast %340 : vector<1x1xf32> to vector<1x32xf32>
    %342 = arith.subf %336, %341 : vector<1x32xf32>
    %343 = arith.mulf %342, %342 : vector<1x32xf32>
    %cst_151 = arith.constant dense<0.000000e+00> : vector<1xf32>
    %344 = vector.multi_reduction <add>, %343, %cst_151 [1] : vector<1x32xf32> to vector<1xf32>
    %345 = vector.shape_cast %344 : vector<1xf32> to vector<1x1xf32>
    %cst_152 = arith.constant 3.200000e+01 : f32
    %346 = vector.broadcast %cst_152 : f32 to vector<1x1xf32>
    %347 = arith.divf %345, %346 : vector<1x1xf32>
    %348 = vector.broadcast %340 : vector<1x1xf32> to vector<1x32xf32>
    %349 = arith.subf %336, %348 : vector<1x32xf32>
    %cst_153 = arith.constant 9.99999974E-6 : f32
    %350 = vector.broadcast %cst_153 : f32 to vector<1x1xf32>
    %351 = arith.addf %347, %350 : vector<1x1xf32>
    %352 = math.rsqrt %351 : vector<1x1xf32>
    %353 = vector.broadcast %352 : vector<1x1xf32> to vector<1x32xf32>
    %354 = arith.mulf %349, %353 : vector<1x32xf32>
    %355 = arith.mulf %354, %12 : vector<1x32xf32>
    %356 = arith.addf %355, %13 : vector<1x32xf32>
    %357 = arith.truncf %356 : vector<1x32xf32> to vector<1x32xbf16>
    %cst_154 = arith.constant dense<0.000000e+00> : vector<1x128xf32>
    %358 = tpu.matmul %357, %10, %cst_154 {dimension_numbers = #tpu.dot_dimension_numbers<[1], [1], [0], [0], [0, 0, 1, 0], [], []>} : vector<1x32xbf16>, vector<128x32xbf16>, vector<1x128xf32> -> vector<1x128xf32>
    %cst_155 = arith.constant dense<0xFF800000> : vector<1xf32>
    %359 = vector.multi_reduction <maximumf>, %358, %cst_155 [1] : vector<1x128xf32> to vector<1xf32>
    %360 = vector.shape_cast %359 : vector<1xf32> to vector<1x1xf32>
    %361 = vector.broadcast %360 : vector<1x1xf32> to vector<1x128xf32>
    %362 = arith.cmpf oge, %358, %361 : vector<1x128xf32>
    %c128_i32 = arith.constant 128 : i32
    %363 = vector.broadcast %c128_i32 : i32 to vector<1x128xi32>
    %364 = arith.select %362, %9, %363 : vector<1x128xi1>, vector<1x128xi32>
    %cst_156 = arith.constant dense<2147483647> : vector<1xi32>
    %365 = vector.multi_reduction <minsi>, %364, %cst_156 [1] : vector<1x128xi32> to vector<1xi32>
    %366 = vector.shape_cast %365 : vector<1xi32> to vector<1x1xi32>
    %c8_i32_157 = arith.constant 8 : i32
    %367 = vector.broadcast %c8_i32_157 : i32 to vector<16x1xi32>
    %368 = arith.cmpi eq, %8, %367 : vector<16x1xi32>
    %369 = vector.shape_cast %366 : vector<1x1xi32> to vector<1x1xi32>
    %370 = vector.broadcast %369 : vector<1x1xi32> to vector<16x1xi32>
    %371 = arith.select %368, %370, %18 : vector<16x1xi1>, vector<16x1xi32>
    %c8_i32_158 = arith.constant 8 : i32
    %372 = vector.broadcast %c8_i32_158 : i32 to vector<1x16xi32>
    %373 = arith.cmpi eq, %7, %372 : vector<1x16xi32>
    %374 = vector.shape_cast %366 : vector<1x1xi32> to vector<1x1xi32>
    %375 = vector.broadcast %374 : vector<1x1xi32> to vector<1x16xi32>
    %376 = arith.select %373, %375, %19 : vector<1x16xi1>, vector<1x16xi32>
    %c8_i32_159 = arith.constant 8 : i32
    %377 = vector.broadcast %c8_i32_159 : i32 to vector<1x16xi32>
    %378 = arith.cmpi sge, %7, %377 : vector<1x16xi32>
    %c9_i32 = arith.constant 9 : i32
    %379 = vector.broadcast %c9_i32 : i32 to vector<1x16xi32>
    %380 = arith.cmpi slt, %7, %379 : vector<1x16xi32>
    %381 = arith.andi %378, %380 : vector<1x16xi1>
    %382 = arith.ori %16, %381 : vector<1x16xi1>
    %383 = vector.broadcast %371 : vector<16x1xi32> to vector<16x128xi32>
    %384 = arith.cmpi eq, %383, %5 : vector<16x128xi32>
    %385 = arith.extui %384 : vector<16x128xi1> to vector<16x128xi32>
    %386 = arith.sitofp %385 : vector<16x128xi32> to vector<16x128xf32>
    %387 = arith.truncf %386 : vector<16x128xf32> to vector<16x128xbf16>
    %388 = vector.broadcast %17 : vector<16x1xi32> to vector<16x64xi32>
    %389 = arith.cmpi eq, %388, %6 : vector<16x64xi32>
    %390 = arith.extui %389 : vector<16x64xi1> to vector<16x64xi32>
    %391 = arith.sitofp %390 : vector<16x64xi32> to vector<16x64xf32>
    %392 = arith.truncf %391 : vector<16x64xf32> to vector<16x64xbf16>
    %cst_160 = arith.constant dense<0.000000e+00> : vector<16x32xf32>
    %393 = tpu.matmul %387, %10, %cst_160 {dimension_numbers = #tpu.dot_dimension_numbers<[1], [0], [0], [1], [0, 0, 1, 1], [], []>} : vector<16x128xbf16>, vector<128x32xbf16>, vector<16x32xf32> -> vector<16x32xf32>
    %cst_161 = arith.constant dense<0.000000e+00> : vector<16x32xf32>
    %394 = tpu.matmul %392, %11, %cst_161 {dimension_numbers = #tpu.dot_dimension_numbers<[1], [0], [0], [1], [0, 0, 1, 1], [], []>} : vector<16x64xbf16>, vector<64x32xbf16>, vector<16x32xf32> -> vector<16x32xf32>
    %395 = arith.addf %393, %394 : vector<16x32xf32>
    %396 = vector.broadcast %382 : vector<1x16xi1> to vector<16x16xi1>
    %397 = arith.andi %2, %396 : vector<16x16xi1>
    %cst_162 = arith.constant 0.000000e+00 : f32
    %cst_163 = arith.constant -1.000000e+09 : f32
    %398 = vector.broadcast %cst_162 : f32 to vector<16x16xf32>
    %399 = vector.broadcast %cst_163 : f32 to vector<16x16xf32>
    %400 = arith.select %397, %398, %399 : vector<16x16xi1>, vector<16x16xf32>
    %c0_164 = arith.constant 0 : index
    %c0_165 = arith.constant 0 : index
    %c0_166 = arith.constant 0 : index
    %401 = vector.load %arg4[%c0_164, %c0_165, %c0_166] : memref<2x1x32xf32, #tpu.memory_space<vmem>>, vector<1x1x32xf32>
    %402 = vector.shape_cast %401 : vector<1x1x32xf32> to vector<1x32xf32>
    %c0_167 = arith.constant 0 : index
    %c0_168 = arith.constant 0 : index
    %c0_169 = arith.constant 0 : index
    %403 = vector.load %arg5[%c0_167, %c0_168, %c0_169] : memref<2x1x32xf32, #tpu.memory_space<vmem>>, vector<1x1x32xf32>
    %404 = vector.shape_cast %403 : vector<1x1x32xf32> to vector<1x32xf32>
    %cst_170 = arith.constant dense<0.000000e+00> : vector<16xf32>
    %405 = vector.multi_reduction <add>, %395, %cst_170 [1] : vector<16x32xf32> to vector<16xf32>
    %406 = vector.shape_cast %405 : vector<16xf32> to vector<16x1xf32>
    %cst_171 = arith.constant 3.200000e+01 : f32
    %407 = vector.broadcast %cst_171 : f32 to vector<16x1xf32>
    %408 = arith.divf %406, %407 : vector<16x1xf32>
    %409 = vector.broadcast %408 : vector<16x1xf32> to vector<16x32xf32>
    %410 = arith.subf %395, %409 : vector<16x32xf32>
    %411 = arith.mulf %410, %410 : vector<16x32xf32>
    %cst_172 = arith.constant dense<0.000000e+00> : vector<16xf32>
    %412 = vector.multi_reduction <add>, %411, %cst_172 [1] : vector<16x32xf32> to vector<16xf32>
    %413 = vector.shape_cast %412 : vector<16xf32> to vector<16x1xf32>
    %cst_173 = arith.constant 3.200000e+01 : f32
    %414 = vector.broadcast %cst_173 : f32 to vector<16x1xf32>
    %415 = arith.divf %413, %414 : vector<16x1xf32>
    %416 = vector.broadcast %408 : vector<16x1xf32> to vector<16x32xf32>
    %417 = arith.subf %395, %416 : vector<16x32xf32>
    %cst_174 = arith.constant 9.99999974E-6 : f32
    %418 = vector.broadcast %cst_174 : f32 to vector<16x1xf32>
    %419 = arith.addf %415, %418 : vector<16x1xf32>
    %420 = math.rsqrt %419 : vector<16x1xf32>
    %421 = vector.broadcast %420 : vector<16x1xf32> to vector<16x32xf32>
    %422 = arith.mulf %417, %421 : vector<16x32xf32>
    %423 = vector.broadcast %402 : vector<1x32xf32> to vector<16x32xf32>
    %424 = arith.mulf %422, %423 : vector<16x32xf32>
    %425 = vector.broadcast %404 : vector<1x32xf32> to vector<16x32xf32>
    %426 = arith.addf %424, %425 : vector<16x32xf32>
    %427 = arith.truncf %426 : vector<16x32xf32> to vector<16x32xbf16>
    %c0_175 = arith.constant 0 : index
    %c0_176 = arith.constant 0 : index
    %c0_177 = arith.constant 0 : index
    %428 = vector.load %arg6[%c0_175, %c0_176, %c0_177] : memref<2x32x96xbf16, #tpu.memory_space<vmem>>, vector<1x32x96xbf16>
    %429 = vector.shape_cast %428 : vector<1x32x96xbf16> to vector<32x96xbf16>
    %cst_178 = arith.constant dense<0.000000e+00> : vector<16x96xf32>
    %430 = tpu.matmul %427, %429, %cst_178 {dimension_numbers = #tpu.dot_dimension_numbers<[1], [0], [0], [1], [0, 0, 1, 1], [], []>} : vector<16x32xbf16>, vector<32x96xbf16>, vector<16x96xf32> -> vector<16x96xf32>
    %c0_179 = arith.constant 0 : index
    %c0_180 = arith.constant 0 : index
    %c0_181 = arith.constant 0 : index
    %431 = vector.load %arg7[%c0_179, %c0_180, %c0_181] : memref<2x1x96xf32, #tpu.memory_space<vmem>>, vector<1x1x96xf32>
    %432 = vector.shape_cast %431 : vector<1x1x96xf32> to vector<1x96xf32>
    %433 = vector.broadcast %432 : vector<1x96xf32> to vector<16x96xf32>
    %434 = arith.addf %430, %433 : vector<16x96xf32>
    %c0_182 = arith.constant 0 : index
    %c0_183 = arith.constant 0 : index
    %c0_184 = arith.constant 0 : index
    %435 = vector.load %arg8[%c0_182, %c0_183, %c0_184] : memref<2x32x32xbf16, #tpu.memory_space<vmem>>, vector<1x32x32xbf16>
    %436 = vector.shape_cast %435 : vector<1x32x32xbf16> to vector<32x32xbf16>
    %437 = vector.extract_strided_slice %434 {offsets = [0, 0], sizes = [16, 16], strides = [1, 1]} : vector<16x96xf32> to vector<16x16xf32>
    %438 = arith.truncf %437 : vector<16x16xf32> to vector<16x16xbf16>
    %439 = vector.extract_strided_slice %434 {offsets = [0, 32], sizes = [16, 16], strides = [1, 1]} : vector<16x96xf32> to vector<16x16xf32>
    %440 = arith.truncf %439 : vector<16x16xf32> to vector<16x16xbf16>
    %441 = vector.extract_strided_slice %434 {offsets = [0, 64], sizes = [16, 16], strides = [1, 1]} : vector<16x96xf32> to vector<16x16xf32>
    %442 = arith.truncf %441 : vector<16x16xf32> to vector<16x16xbf16>
    %cst_185 = arith.constant dense<0.000000e+00> : vector<16x16xf32>
    %443 = tpu.matmul %438, %440, %cst_185 {dimension_numbers = #tpu.dot_dimension_numbers<[1], [1], [0], [0], [0, 0, 1, 0], [], []>} : vector<16x16xbf16>, vector<16x16xbf16>, vector<16x16xf32> -> vector<16x16xf32>
    %cst_186 = arith.constant 2.500000e-01 : f32
    %444 = vector.broadcast %cst_186 : f32 to vector<16x16xf32>
    %445 = arith.mulf %443, %444 : vector<16x16xf32>
    %446 = arith.addf %445, %400 : vector<16x16xf32>
    %cst_187 = arith.constant dense<0xFF800000> : vector<16xf32>
    %447 = vector.multi_reduction <maximumf>, %446, %cst_187 [1] : vector<16x16xf32> to vector<16xf32>
    %448 = vector.shape_cast %447 : vector<16xf32> to vector<16x1xf32>
    %449 = vector.broadcast %448 : vector<16x1xf32> to vector<16x16xf32>
    %450 = arith.subf %446, %449 : vector<16x16xf32>
    %451 = math.exp %450 : vector<16x16xf32>
    %cst_188 = arith.constant dense<0.000000e+00> : vector<16xf32>
    %452 = vector.multi_reduction <add>, %451, %cst_188 [1] : vector<16x16xf32> to vector<16xf32>
    %453 = vector.shape_cast %452 : vector<16xf32> to vector<16x1xf32>
    %454 = vector.broadcast %453 : vector<16x1xf32> to vector<16x16xf32>
    %455 = arith.divf %451, %454 : vector<16x16xf32>
    %456 = arith.truncf %455 : vector<16x16xf32> to vector<16x16xbf16>
    %cst_189 = arith.constant dense<0.000000e+00> : vector<16x16xf32>
    %457 = tpu.matmul %456, %442, %cst_189 {dimension_numbers = #tpu.dot_dimension_numbers<[1], [0], [0], [1], [0, 0, 1, 1], [], []>} : vector<16x16xbf16>, vector<16x16xbf16>, vector<16x16xf32> -> vector<16x16xf32>
    %458 = arith.truncf %457 : vector<16x16xf32> to vector<16x16xbf16>
    %459 = vector.extract_strided_slice %436 {offsets = [0, 0], sizes = [16, 32], strides = [1, 1]} : vector<32x32xbf16> to vector<16x32xbf16>
    %cst_190 = arith.constant dense<0.000000e+00> : vector<16x32xf32>
    %460 = tpu.matmul %458, %459, %cst_190 {dimension_numbers = #tpu.dot_dimension_numbers<[1], [0], [0], [1], [0, 0, 1, 1], [], []>} : vector<16x16xbf16>, vector<16x32xbf16>, vector<16x32xf32> -> vector<16x32xf32>
    %461 = vector.extract_strided_slice %434 {offsets = [0, 16], sizes = [16, 16], strides = [1, 1]} : vector<16x96xf32> to vector<16x16xf32>
    %462 = arith.truncf %461 : vector<16x16xf32> to vector<16x16xbf16>
    %463 = vector.extract_strided_slice %434 {offsets = [0, 48], sizes = [16, 16], strides = [1, 1]} : vector<16x96xf32> to vector<16x16xf32>
    %464 = arith.truncf %463 : vector<16x16xf32> to vector<16x16xbf16>
    %465 = vector.extract_strided_slice %434 {offsets = [0, 80], sizes = [16, 16], strides = [1, 1]} : vector<16x96xf32> to vector<16x16xf32>
    %466 = arith.truncf %465 : vector<16x16xf32> to vector<16x16xbf16>
    %cst_191 = arith.constant dense<0.000000e+00> : vector<16x16xf32>
    %467 = tpu.matmul %462, %464, %cst_191 {dimension_numbers = #tpu.dot_dimension_numbers<[1], [1], [0], [0], [0, 0, 1, 0], [], []>} : vector<16x16xbf16>, vector<16x16xbf16>, vector<16x16xf32> -> vector<16x16xf32>
    %cst_192 = arith.constant 2.500000e-01 : f32
    %468 = vector.broadcast %cst_192 : f32 to vector<16x16xf32>
    %469 = arith.mulf %467, %468 : vector<16x16xf32>
    %470 = arith.addf %469, %400 : vector<16x16xf32>
    %cst_193 = arith.constant dense<0xFF800000> : vector<16xf32>
    %471 = vector.multi_reduction <maximumf>, %470, %cst_193 [1] : vector<16x16xf32> to vector<16xf32>
    %472 = vector.shape_cast %471 : vector<16xf32> to vector<16x1xf32>
    %473 = vector.broadcast %472 : vector<16x1xf32> to vector<16x16xf32>
    %474 = arith.subf %470, %473 : vector<16x16xf32>
    %475 = math.exp %474 : vector<16x16xf32>
    %cst_194 = arith.constant dense<0.000000e+00> : vector<16xf32>
    %476 = vector.multi_reduction <add>, %475, %cst_194 [1] : vector<16x16xf32> to vector<16xf32>
    %477 = vector.shape_cast %476 : vector<16xf32> to vector<16x1xf32>
    %478 = vector.broadcast %477 : vector<16x1xf32> to vector<16x16xf32>
    %479 = arith.divf %475, %478 : vector<16x16xf32>
    %480 = arith.truncf %479 : vector<16x16xf32> to vector<16x16xbf16>
    %cst_195 = arith.constant dense<0.000000e+00> : vector<16x16xf32>
    %481 = tpu.matmul %480, %466, %cst_195 {dimension_numbers = #tpu.dot_dimension_numbers<[1], [0], [0], [1], [0, 0, 1, 1], [], []>} : vector<16x16xbf16>, vector<16x16xbf16>, vector<16x16xf32> -> vector<16x16xf32>
    %482 = arith.truncf %481 : vector<16x16xf32> to vector<16x16xbf16>
    %483 = vector.extract_strided_slice %436 {offsets = [16, 0], sizes = [16, 32], strides = [1, 1]} : vector<32x32xbf16> to vector<16x32xbf16>
    %cst_196 = arith.constant dense<0.000000e+00> : vector<16x32xf32>
    %484 = tpu.matmul %482, %483, %cst_196 {dimension_numbers = #tpu.dot_dimension_numbers<[1], [0], [0], [1], [0, 0, 1, 1], [], []>} : vector<16x16xbf16>, vector<16x32xbf16>, vector<16x32xf32> -> vector<16x32xf32>
    %485 = arith.addf %460, %484 : vector<16x32xf32>
    %486 = arith.addf %395, %485 : vector<16x32xf32>
    %c0_197 = arith.constant 0 : index
    %c0_198 = arith.constant 0 : index
    %c0_199 = arith.constant 0 : index
    %487 = vector.load %arg9[%c0_197, %c0_198, %c0_199] : memref<2x1x32xf32, #tpu.memory_space<vmem>>, vector<1x1x32xf32>
    %488 = vector.shape_cast %487 : vector<1x1x32xf32> to vector<1x32xf32>
    %489 = vector.broadcast %488 : vector<1x32xf32> to vector<16x32xf32>
    %490 = arith.addf %486, %489 : vector<16x32xf32>
    %c0_200 = arith.constant 0 : index
    %c0_201 = arith.constant 0 : index
    %c0_202 = arith.constant 0 : index
    %491 = vector.load %arg10[%c0_200, %c0_201, %c0_202] : memref<2x1x32xf32, #tpu.memory_space<vmem>>, vector<1x1x32xf32>
    %492 = vector.shape_cast %491 : vector<1x1x32xf32> to vector<1x32xf32>
    %c0_203 = arith.constant 0 : index
    %c0_204 = arith.constant 0 : index
    %c0_205 = arith.constant 0 : index
    %493 = vector.load %arg11[%c0_203, %c0_204, %c0_205] : memref<2x1x32xf32, #tpu.memory_space<vmem>>, vector<1x1x32xf32>
    %494 = vector.shape_cast %493 : vector<1x1x32xf32> to vector<1x32xf32>
    %cst_206 = arith.constant dense<0.000000e+00> : vector<16xf32>
    %495 = vector.multi_reduction <add>, %490, %cst_206 [1] : vector<16x32xf32> to vector<16xf32>
    %496 = vector.shape_cast %495 : vector<16xf32> to vector<16x1xf32>
    %cst_207 = arith.constant 3.200000e+01 : f32
    %497 = vector.broadcast %cst_207 : f32 to vector<16x1xf32>
    %498 = arith.divf %496, %497 : vector<16x1xf32>
    %499 = vector.broadcast %498 : vector<16x1xf32> to vector<16x32xf32>
    %500 = arith.subf %490, %499 : vector<16x32xf32>
    %501 = arith.mulf %500, %500 : vector<16x32xf32>
    %cst_208 = arith.constant dense<0.000000e+00> : vector<16xf32>
    %502 = vector.multi_reduction <add>, %501, %cst_208 [1] : vector<16x32xf32> to vector<16xf32>
    %503 = vector.shape_cast %502 : vector<16xf32> to vector<16x1xf32>
    %cst_209 = arith.constant 3.200000e+01 : f32
    %504 = vector.broadcast %cst_209 : f32 to vector<16x1xf32>
    %505 = arith.divf %503, %504 : vector<16x1xf32>
    %506 = vector.broadcast %498 : vector<16x1xf32> to vector<16x32xf32>
    %507 = arith.subf %490, %506 : vector<16x32xf32>
    %cst_210 = arith.constant 9.99999974E-6 : f32
    %508 = vector.broadcast %cst_210 : f32 to vector<16x1xf32>
    %509 = arith.addf %505, %508 : vector<16x1xf32>
    %510 = math.rsqrt %509 : vector<16x1xf32>
    %511 = vector.broadcast %510 : vector<16x1xf32> to vector<16x32xf32>
    %512 = arith.mulf %507, %511 : vector<16x32xf32>
    %513 = vector.broadcast %492 : vector<1x32xf32> to vector<16x32xf32>
    %514 = arith.mulf %512, %513 : vector<16x32xf32>
    %515 = vector.broadcast %494 : vector<1x32xf32> to vector<16x32xf32>
    %516 = arith.addf %514, %515 : vector<16x32xf32>
    %517 = arith.truncf %516 : vector<16x32xf32> to vector<16x32xbf16>
    %c0_211 = arith.constant 0 : index
    %c0_212 = arith.constant 0 : index
    %c0_213 = arith.constant 0 : index
    %518 = vector.load %arg12[%c0_211, %c0_212, %c0_213] : memref<2x32x128xbf16, #tpu.memory_space<vmem>>, vector<1x32x128xbf16>
    %519 = vector.shape_cast %518 : vector<1x32x128xbf16> to vector<32x128xbf16>
    %cst_214 = arith.constant dense<0.000000e+00> : vector<16x128xf32>
    %520 = tpu.matmul %517, %519, %cst_214 {dimension_numbers = #tpu.dot_dimension_numbers<[1], [0], [0], [1], [0, 0, 1, 1], [], []>} : vector<16x32xbf16>, vector<32x128xbf16>, vector<16x128xf32> -> vector<16x128xf32>
    %c0_215 = arith.constant 0 : index
    %c0_216 = arith.constant 0 : index
    %c0_217 = arith.constant 0 : index
    %521 = vector.load %arg13[%c0_215, %c0_216, %c0_217] : memref<2x1x128xf32, #tpu.memory_space<vmem>>, vector<1x1x128xf32>
    %522 = vector.shape_cast %521 : vector<1x1x128xf32> to vector<1x128xf32>
    %523 = vector.broadcast %522 : vector<1x128xf32> to vector<16x128xf32>
    %524 = arith.addf %520, %523 : vector<16x128xf32>
    %cst_218 = arith.constant 5.000000e-01 : f32
    %525 = vector.broadcast %cst_218 : f32 to vector<16x128xf32>
    %526 = arith.mulf %525, %524 : vector<16x128xf32>
    %cst_219 = arith.constant 4.471500e-02 : f32
    %527 = vector.broadcast %cst_219 : f32 to vector<16x128xf32>
    %528 = arith.mulf %527, %524 : vector<16x128xf32>
    %529 = arith.mulf %528, %524 : vector<16x128xf32>
    %530 = arith.mulf %529, %524 : vector<16x128xf32>
    %531 = arith.addf %524, %530 : vector<16x128xf32>
    %cst_220 = arith.constant 0.797884583 : f32
    %532 = vector.broadcast %cst_220 : f32 to vector<16x128xf32>
    %533 = arith.mulf %532, %531 : vector<16x128xf32>
    %534 = math.tanh %533 : vector<16x128xf32>
    %cst_221 = arith.constant 1.000000e+00 : f32
    %535 = vector.broadcast %cst_221 : f32 to vector<16x128xf32>
    %536 = arith.addf %535, %534 : vector<16x128xf32>
    %537 = arith.mulf %526, %536 : vector<16x128xf32>
    %538 = arith.truncf %537 : vector<16x128xf32> to vector<16x128xbf16>
    %c0_222 = arith.constant 0 : index
    %c0_223 = arith.constant 0 : index
    %c0_224 = arith.constant 0 : index
    %539 = vector.load %arg14[%c0_222, %c0_223, %c0_224] : memref<2x128x32xbf16, #tpu.memory_space<vmem>>, vector<1x128x32xbf16>
    %540 = vector.shape_cast %539 : vector<1x128x32xbf16> to vector<128x32xbf16>
    %cst_225 = arith.constant dense<0.000000e+00> : vector<16x32xf32>
    %541 = tpu.matmul %538, %540, %cst_225 {dimension_numbers = #tpu.dot_dimension_numbers<[1], [0], [0], [1], [0, 0, 1, 1], [], []>} : vector<16x128xbf16>, vector<128x32xbf16>, vector<16x32xf32> -> vector<16x32xf32>
    %c0_226 = arith.constant 0 : index
    %c0_227 = arith.constant 0 : index
    %c0_228 = arith.constant 0 : index
    %542 = vector.load %arg15[%c0_226, %c0_227, %c0_228] : memref<2x1x32xf32, #tpu.memory_space<vmem>>, vector<1x1x32xf32>
    %543 = vector.shape_cast %542 : vector<1x1x32xf32> to vector<1x32xf32>
    %544 = vector.broadcast %543 : vector<1x32xf32> to vector<16x32xf32>
    %545 = arith.addf %541, %544 : vector<16x32xf32>
    %546 = arith.addf %490, %545 : vector<16x32xf32>
    %c1_229 = arith.constant 1 : index
    %c0_230 = arith.constant 0 : index
    %c0_231 = arith.constant 0 : index
    %547 = vector.load %arg4[%c1_229, %c0_230, %c0_231] : memref<2x1x32xf32, #tpu.memory_space<vmem>>, vector<1x1x32xf32>
    %548 = vector.shape_cast %547 : vector<1x1x32xf32> to vector<1x32xf32>
    %c1_232 = arith.constant 1 : index
    %c0_233 = arith.constant 0 : index
    %c0_234 = arith.constant 0 : index
    %549 = vector.load %arg5[%c1_232, %c0_233, %c0_234] : memref<2x1x32xf32, #tpu.memory_space<vmem>>, vector<1x1x32xf32>
    %550 = vector.shape_cast %549 : vector<1x1x32xf32> to vector<1x32xf32>
    %cst_235 = arith.constant dense<0.000000e+00> : vector<16xf32>
    %551 = vector.multi_reduction <add>, %546, %cst_235 [1] : vector<16x32xf32> to vector<16xf32>
    %552 = vector.shape_cast %551 : vector<16xf32> to vector<16x1xf32>
    %cst_236 = arith.constant 3.200000e+01 : f32
    %553 = vector.broadcast %cst_236 : f32 to vector<16x1xf32>
    %554 = arith.divf %552, %553 : vector<16x1xf32>
    %555 = vector.broadcast %554 : vector<16x1xf32> to vector<16x32xf32>
    %556 = arith.subf %546, %555 : vector<16x32xf32>
    %557 = arith.mulf %556, %556 : vector<16x32xf32>
    %cst_237 = arith.constant dense<0.000000e+00> : vector<16xf32>
    %558 = vector.multi_reduction <add>, %557, %cst_237 [1] : vector<16x32xf32> to vector<16xf32>
    %559 = vector.shape_cast %558 : vector<16xf32> to vector<16x1xf32>
    %cst_238 = arith.constant 3.200000e+01 : f32
    %560 = vector.broadcast %cst_238 : f32 to vector<16x1xf32>
    %561 = arith.divf %559, %560 : vector<16x1xf32>
    %562 = vector.broadcast %554 : vector<16x1xf32> to vector<16x32xf32>
    %563 = arith.subf %546, %562 : vector<16x32xf32>
    %cst_239 = arith.constant 9.99999974E-6 : f32
    %564 = vector.broadcast %cst_239 : f32 to vector<16x1xf32>
    %565 = arith.addf %561, %564 : vector<16x1xf32>
    %566 = math.rsqrt %565 : vector<16x1xf32>
    %567 = vector.broadcast %566 : vector<16x1xf32> to vector<16x32xf32>
    %568 = arith.mulf %563, %567 : vector<16x32xf32>
    %569 = vector.broadcast %548 : vector<1x32xf32> to vector<16x32xf32>
    %570 = arith.mulf %568, %569 : vector<16x32xf32>
    %571 = vector.broadcast %550 : vector<1x32xf32> to vector<16x32xf32>
    %572 = arith.addf %570, %571 : vector<16x32xf32>
    %573 = arith.truncf %572 : vector<16x32xf32> to vector<16x32xbf16>
    %c1_240 = arith.constant 1 : index
    %c0_241 = arith.constant 0 : index
    %c0_242 = arith.constant 0 : index
    %574 = vector.load %arg6[%c1_240, %c0_241, %c0_242] : memref<2x32x96xbf16, #tpu.memory_space<vmem>>, vector<1x32x96xbf16>
    %575 = vector.shape_cast %574 : vector<1x32x96xbf16> to vector<32x96xbf16>
    %cst_243 = arith.constant dense<0.000000e+00> : vector<16x96xf32>
    %576 = tpu.matmul %573, %575, %cst_243 {dimension_numbers = #tpu.dot_dimension_numbers<[1], [0], [0], [1], [0, 0, 1, 1], [], []>} : vector<16x32xbf16>, vector<32x96xbf16>, vector<16x96xf32> -> vector<16x96xf32>
    %c1_244 = arith.constant 1 : index
    %c0_245 = arith.constant 0 : index
    %c0_246 = arith.constant 0 : index
    %577 = vector.load %arg7[%c1_244, %c0_245, %c0_246] : memref<2x1x96xf32, #tpu.memory_space<vmem>>, vector<1x1x96xf32>
    %578 = vector.shape_cast %577 : vector<1x1x96xf32> to vector<1x96xf32>
    %579 = vector.broadcast %578 : vector<1x96xf32> to vector<16x96xf32>
    %580 = arith.addf %576, %579 : vector<16x96xf32>
    %c1_247 = arith.constant 1 : index
    %c0_248 = arith.constant 0 : index
    %c0_249 = arith.constant 0 : index
    %581 = vector.load %arg8[%c1_247, %c0_248, %c0_249] : memref<2x32x32xbf16, #tpu.memory_space<vmem>>, vector<1x32x32xbf16>
    %582 = vector.shape_cast %581 : vector<1x32x32xbf16> to vector<32x32xbf16>
    %583 = vector.extract_strided_slice %580 {offsets = [0, 0], sizes = [16, 16], strides = [1, 1]} : vector<16x96xf32> to vector<16x16xf32>
    %584 = arith.truncf %583 : vector<16x16xf32> to vector<16x16xbf16>
    %585 = vector.extract_strided_slice %580 {offsets = [0, 32], sizes = [16, 16], strides = [1, 1]} : vector<16x96xf32> to vector<16x16xf32>
    %586 = arith.truncf %585 : vector<16x16xf32> to vector<16x16xbf16>
    %587 = vector.extract_strided_slice %580 {offsets = [0, 64], sizes = [16, 16], strides = [1, 1]} : vector<16x96xf32> to vector<16x16xf32>
    %588 = arith.truncf %587 : vector<16x16xf32> to vector<16x16xbf16>
    %cst_250 = arith.constant dense<0.000000e+00> : vector<16x16xf32>
    %589 = tpu.matmul %584, %586, %cst_250 {dimension_numbers = #tpu.dot_dimension_numbers<[1], [1], [0], [0], [0, 0, 1, 0], [], []>} : vector<16x16xbf16>, vector<16x16xbf16>, vector<16x16xf32> -> vector<16x16xf32>
    %cst_251 = arith.constant 2.500000e-01 : f32
    %590 = vector.broadcast %cst_251 : f32 to vector<16x16xf32>
    %591 = arith.mulf %589, %590 : vector<16x16xf32>
    %592 = arith.addf %591, %400 : vector<16x16xf32>
    %cst_252 = arith.constant dense<0xFF800000> : vector<16xf32>
    %593 = vector.multi_reduction <maximumf>, %592, %cst_252 [1] : vector<16x16xf32> to vector<16xf32>
    %594 = vector.shape_cast %593 : vector<16xf32> to vector<16x1xf32>
    %595 = vector.broadcast %594 : vector<16x1xf32> to vector<16x16xf32>
    %596 = arith.subf %592, %595 : vector<16x16xf32>
    %597 = math.exp %596 : vector<16x16xf32>
    %cst_253 = arith.constant dense<0.000000e+00> : vector<16xf32>
    %598 = vector.multi_reduction <add>, %597, %cst_253 [1] : vector<16x16xf32> to vector<16xf32>
    %599 = vector.shape_cast %598 : vector<16xf32> to vector<16x1xf32>
    %600 = vector.broadcast %599 : vector<16x1xf32> to vector<16x16xf32>
    %601 = arith.divf %597, %600 : vector<16x16xf32>
    %602 = arith.truncf %601 : vector<16x16xf32> to vector<16x16xbf16>
    %cst_254 = arith.constant dense<0.000000e+00> : vector<16x16xf32>
    %603 = tpu.matmul %602, %588, %cst_254 {dimension_numbers = #tpu.dot_dimension_numbers<[1], [0], [0], [1], [0, 0, 1, 1], [], []>} : vector<16x16xbf16>, vector<16x16xbf16>, vector<16x16xf32> -> vector<16x16xf32>
    %604 = arith.truncf %603 : vector<16x16xf32> to vector<16x16xbf16>
    %605 = vector.extract_strided_slice %582 {offsets = [0, 0], sizes = [16, 32], strides = [1, 1]} : vector<32x32xbf16> to vector<16x32xbf16>
    %cst_255 = arith.constant dense<0.000000e+00> : vector<16x32xf32>
    %606 = tpu.matmul %604, %605, %cst_255 {dimension_numbers = #tpu.dot_dimension_numbers<[1], [0], [0], [1], [0, 0, 1, 1], [], []>} : vector<16x16xbf16>, vector<16x32xbf16>, vector<16x32xf32> -> vector<16x32xf32>
    %607 = vector.extract_strided_slice %580 {offsets = [0, 16], sizes = [16, 16], strides = [1, 1]} : vector<16x96xf32> to vector<16x16xf32>
    %608 = arith.truncf %607 : vector<16x16xf32> to vector<16x16xbf16>
    %609 = vector.extract_strided_slice %580 {offsets = [0, 48], sizes = [16, 16], strides = [1, 1]} : vector<16x96xf32> to vector<16x16xf32>
    %610 = arith.truncf %609 : vector<16x16xf32> to vector<16x16xbf16>
    %611 = vector.extract_strided_slice %580 {offsets = [0, 80], sizes = [16, 16], strides = [1, 1]} : vector<16x96xf32> to vector<16x16xf32>
    %612 = arith.truncf %611 : vector<16x16xf32> to vector<16x16xbf16>
    %cst_256 = arith.constant dense<0.000000e+00> : vector<16x16xf32>
    %613 = tpu.matmul %608, %610, %cst_256 {dimension_numbers = #tpu.dot_dimension_numbers<[1], [1], [0], [0], [0, 0, 1, 0], [], []>} : vector<16x16xbf16>, vector<16x16xbf16>, vector<16x16xf32> -> vector<16x16xf32>
    %cst_257 = arith.constant 2.500000e-01 : f32
    %614 = vector.broadcast %cst_257 : f32 to vector<16x16xf32>
    %615 = arith.mulf %613, %614 : vector<16x16xf32>
    %616 = arith.addf %615, %400 : vector<16x16xf32>
    %cst_258 = arith.constant dense<0xFF800000> : vector<16xf32>
    %617 = vector.multi_reduction <maximumf>, %616, %cst_258 [1] : vector<16x16xf32> to vector<16xf32>
    %618 = vector.shape_cast %617 : vector<16xf32> to vector<16x1xf32>
    %619 = vector.broadcast %618 : vector<16x1xf32> to vector<16x16xf32>
    %620 = arith.subf %616, %619 : vector<16x16xf32>
    %621 = math.exp %620 : vector<16x16xf32>
    %cst_259 = arith.constant dense<0.000000e+00> : vector<16xf32>
    %622 = vector.multi_reduction <add>, %621, %cst_259 [1] : vector<16x16xf32> to vector<16xf32>
    %623 = vector.shape_cast %622 : vector<16xf32> to vector<16x1xf32>
    %624 = vector.broadcast %623 : vector<16x1xf32> to vector<16x16xf32>
    %625 = arith.divf %621, %624 : vector<16x16xf32>
    %626 = arith.truncf %625 : vector<16x16xf32> to vector<16x16xbf16>
    %cst_260 = arith.constant dense<0.000000e+00> : vector<16x16xf32>
    %627 = tpu.matmul %626, %612, %cst_260 {dimension_numbers = #tpu.dot_dimension_numbers<[1], [0], [0], [1], [0, 0, 1, 1], [], []>} : vector<16x16xbf16>, vector<16x16xbf16>, vector<16x16xf32> -> vector<16x16xf32>
    %628 = arith.truncf %627 : vector<16x16xf32> to vector<16x16xbf16>
    %629 = vector.extract_strided_slice %582 {offsets = [16, 0], sizes = [16, 32], strides = [1, 1]} : vector<32x32xbf16> to vector<16x32xbf16>
    %cst_261 = arith.constant dense<0.000000e+00> : vector<16x32xf32>
    %630 = tpu.matmul %628, %629, %cst_261 {dimension_numbers = #tpu.dot_dimension_numbers<[1], [0], [0], [1], [0, 0, 1, 1], [], []>} : vector<16x16xbf16>, vector<16x32xbf16>, vector<16x32xf32> -> vector<16x32xf32>
    %631 = arith.addf %606, %630 : vector<16x32xf32>
    %632 = arith.addf %546, %631 : vector<16x32xf32>
    %c1_262 = arith.constant 1 : index
    %c0_263 = arith.constant 0 : index
    %c0_264 = arith.constant 0 : index
    %633 = vector.load %arg9[%c1_262, %c0_263, %c0_264] : memref<2x1x32xf32, #tpu.memory_space<vmem>>, vector<1x1x32xf32>
    %634 = vector.shape_cast %633 : vector<1x1x32xf32> to vector<1x32xf32>
    %635 = vector.broadcast %634 : vector<1x32xf32> to vector<16x32xf32>
    %636 = arith.addf %632, %635 : vector<16x32xf32>
    %c1_265 = arith.constant 1 : index
    %c0_266 = arith.constant 0 : index
    %c0_267 = arith.constant 0 : index
    %637 = vector.load %arg10[%c1_265, %c0_266, %c0_267] : memref<2x1x32xf32, #tpu.memory_space<vmem>>, vector<1x1x32xf32>
    %638 = vector.shape_cast %637 : vector<1x1x32xf32> to vector<1x32xf32>
    %c1_268 = arith.constant 1 : index
    %c0_269 = arith.constant 0 : index
    %c0_270 = arith.constant 0 : index
    %639 = vector.load %arg11[%c1_268, %c0_269, %c0_270] : memref<2x1x32xf32, #tpu.memory_space<vmem>>, vector<1x1x32xf32>
    %640 = vector.shape_cast %639 : vector<1x1x32xf32> to vector<1x32xf32>
    %cst_271 = arith.constant dense<0.000000e+00> : vector<16xf32>
    %641 = vector.multi_reduction <add>, %636, %cst_271 [1] : vector<16x32xf32> to vector<16xf32>
    %642 = vector.shape_cast %641 : vector<16xf32> to vector<16x1xf32>
    %cst_272 = arith.constant 3.200000e+01 : f32
    %643 = vector.broadcast %cst_272 : f32 to vector<16x1xf32>
    %644 = arith.divf %642, %643 : vector<16x1xf32>
    %645 = vector.broadcast %644 : vector<16x1xf32> to vector<16x32xf32>
    %646 = arith.subf %636, %645 : vector<16x32xf32>
    %647 = arith.mulf %646, %646 : vector<16x32xf32>
    %cst_273 = arith.constant dense<0.000000e+00> : vector<16xf32>
    %648 = vector.multi_reduction <add>, %647, %cst_273 [1] : vector<16x32xf32> to vector<16xf32>
    %649 = vector.shape_cast %648 : vector<16xf32> to vector<16x1xf32>
    %cst_274 = arith.constant 3.200000e+01 : f32
    %650 = vector.broadcast %cst_274 : f32 to vector<16x1xf32>
    %651 = arith.divf %649, %650 : vector<16x1xf32>
    %652 = vector.broadcast %644 : vector<16x1xf32> to vector<16x32xf32>
    %653 = arith.subf %636, %652 : vector<16x32xf32>
    %cst_275 = arith.constant 9.99999974E-6 : f32
    %654 = vector.broadcast %cst_275 : f32 to vector<16x1xf32>
    %655 = arith.addf %651, %654 : vector<16x1xf32>
    %656 = math.rsqrt %655 : vector<16x1xf32>
    %657 = vector.broadcast %656 : vector<16x1xf32> to vector<16x32xf32>
    %658 = arith.mulf %653, %657 : vector<16x32xf32>
    %659 = vector.broadcast %638 : vector<1x32xf32> to vector<16x32xf32>
    %660 = arith.mulf %658, %659 : vector<16x32xf32>
    %661 = vector.broadcast %640 : vector<1x32xf32> to vector<16x32xf32>
    %662 = arith.addf %660, %661 : vector<16x32xf32>
    %663 = arith.truncf %662 : vector<16x32xf32> to vector<16x32xbf16>
    %c1_276 = arith.constant 1 : index
    %c0_277 = arith.constant 0 : index
    %c0_278 = arith.constant 0 : index
    %664 = vector.load %arg12[%c1_276, %c0_277, %c0_278] : memref<2x32x128xbf16, #tpu.memory_space<vmem>>, vector<1x32x128xbf16>
    %665 = vector.shape_cast %664 : vector<1x32x128xbf16> to vector<32x128xbf16>
    %cst_279 = arith.constant dense<0.000000e+00> : vector<16x128xf32>
    %666 = tpu.matmul %663, %665, %cst_279 {dimension_numbers = #tpu.dot_dimension_numbers<[1], [0], [0], [1], [0, 0, 1, 1], [], []>} : vector<16x32xbf16>, vector<32x128xbf16>, vector<16x128xf32> -> vector<16x128xf32>
    %c1_280 = arith.constant 1 : index
    %c0_281 = arith.constant 0 : index
    %c0_282 = arith.constant 0 : index
    %667 = vector.load %arg13[%c1_280, %c0_281, %c0_282] : memref<2x1x128xf32, #tpu.memory_space<vmem>>, vector<1x1x128xf32>
    %668 = vector.shape_cast %667 : vector<1x1x128xf32> to vector<1x128xf32>
    %669 = vector.broadcast %668 : vector<1x128xf32> to vector<16x128xf32>
    %670 = arith.addf %666, %669 : vector<16x128xf32>
    %cst_283 = arith.constant 5.000000e-01 : f32
    %671 = vector.broadcast %cst_283 : f32 to vector<16x128xf32>
    %672 = arith.mulf %671, %670 : vector<16x128xf32>
    %cst_284 = arith.constant 4.471500e-02 : f32
    %673 = vector.broadcast %cst_284 : f32 to vector<16x128xf32>
    %674 = arith.mulf %673, %670 : vector<16x128xf32>
    %675 = arith.mulf %674, %670 : vector<16x128xf32>
    %676 = arith.mulf %675, %670 : vector<16x128xf32>
    %677 = arith.addf %670, %676 : vector<16x128xf32>
    %cst_285 = arith.constant 0.797884583 : f32
    %678 = vector.broadcast %cst_285 : f32 to vector<16x128xf32>
    %679 = arith.mulf %678, %677 : vector<16x128xf32>
    %680 = math.tanh %679 : vector<16x128xf32>
    %cst_286 = arith.constant 1.000000e+00 : f32
    %681 = vector.broadcast %cst_286 : f32 to vector<16x128xf32>
    %682 = arith.addf %681, %680 : vector<16x128xf32>
    %683 = arith.mulf %672, %682 : vector<16x128xf32>
    %684 = arith.truncf %683 : vector<16x128xf32> to vector<16x128xbf16>
    %c1_287 = arith.constant 1 : index
    %c0_288 = arith.constant 0 : index
    %c0_289 = arith.constant 0 : index
    %685 = vector.load %arg14[%c1_287, %c0_288, %c0_289] : memref<2x128x32xbf16, #tpu.memory_space<vmem>>, vector<1x128x32xbf16>
    %686 = vector.shape_cast %685 : vector<1x128x32xbf16> to vector<128x32xbf16>
    %cst_290 = arith.constant dense<0.000000e+00> : vector<16x32xf32>
    %687 = tpu.matmul %684, %686, %cst_290 {dimension_numbers = #tpu.dot_dimension_numbers<[1], [0], [0], [1], [0, 0, 1, 1], [], []>} : vector<16x128xbf16>, vector<128x32xbf16>, vector<16x32xf32> -> vector<16x32xf32>
    %c1_291 = arith.constant 1 : index
    %c0_292 = arith.constant 0 : index
    %c0_293 = arith.constant 0 : index
    %688 = vector.load %arg15[%c1_291, %c0_292, %c0_293] : memref<2x1x32xf32, #tpu.memory_space<vmem>>, vector<1x1x32xf32>
    %689 = vector.shape_cast %688 : vector<1x1x32xf32> to vector<1x32xf32>
    %690 = vector.broadcast %689 : vector<1x32xf32> to vector<16x32xf32>
    %691 = arith.addf %687, %690 : vector<16x32xf32>
    %692 = arith.addf %636, %691 : vector<16x32xf32>
    %693 = vector.extract_strided_slice %692 {offsets = [8, 0], sizes = [1, 32], strides = [1, 1]} : vector<16x32xf32> to vector<1x32xf32>
    %cst_294 = arith.constant dense<0.000000e+00> : vector<1xf32>
    %694 = vector.multi_reduction <add>, %693, %cst_294 [1] : vector<1x32xf32> to vector<1xf32>
    %695 = vector.shape_cast %694 : vector<1xf32> to vector<1x1xf32>
    %cst_295 = arith.constant 3.200000e+01 : f32
    %696 = vector.broadcast %cst_295 : f32 to vector<1x1xf32>
    %697 = arith.divf %695, %696 : vector<1x1xf32>
    %698 = vector.broadcast %697 : vector<1x1xf32> to vector<1x32xf32>
    %699 = arith.subf %693, %698 : vector<1x32xf32>
    %700 = arith.mulf %699, %699 : vector<1x32xf32>
    %cst_296 = arith.constant dense<0.000000e+00> : vector<1xf32>
    %701 = vector.multi_reduction <add>, %700, %cst_296 [1] : vector<1x32xf32> to vector<1xf32>
    %702 = vector.shape_cast %701 : vector<1xf32> to vector<1x1xf32>
    %cst_297 = arith.constant 3.200000e+01 : f32
    %703 = vector.broadcast %cst_297 : f32 to vector<1x1xf32>
    %704 = arith.divf %702, %703 : vector<1x1xf32>
    %705 = vector.broadcast %697 : vector<1x1xf32> to vector<1x32xf32>
    %706 = arith.subf %693, %705 : vector<1x32xf32>
    %cst_298 = arith.constant 9.99999974E-6 : f32
    %707 = vector.broadcast %cst_298 : f32 to vector<1x1xf32>
    %708 = arith.addf %704, %707 : vector<1x1xf32>
    %709 = math.rsqrt %708 : vector<1x1xf32>
    %710 = vector.broadcast %709 : vector<1x1xf32> to vector<1x32xf32>
    %711 = arith.mulf %706, %710 : vector<1x32xf32>
    %712 = arith.mulf %711, %12 : vector<1x32xf32>
    %713 = arith.addf %712, %13 : vector<1x32xf32>
    %714 = arith.truncf %713 : vector<1x32xf32> to vector<1x32xbf16>
    %cst_299 = arith.constant dense<0.000000e+00> : vector<1x128xf32>
    %715 = tpu.matmul %714, %10, %cst_299 {dimension_numbers = #tpu.dot_dimension_numbers<[1], [1], [0], [0], [0, 0, 1, 0], [], []>} : vector<1x32xbf16>, vector<128x32xbf16>, vector<1x128xf32> -> vector<1x128xf32>
    %cst_300 = arith.constant dense<0xFF800000> : vector<1xf32>
    %716 = vector.multi_reduction <maximumf>, %715, %cst_300 [1] : vector<1x128xf32> to vector<1xf32>
    %717 = vector.shape_cast %716 : vector<1xf32> to vector<1x1xf32>
    %718 = vector.broadcast %717 : vector<1x1xf32> to vector<1x128xf32>
    %719 = arith.cmpf oge, %715, %718 : vector<1x128xf32>
    %c128_i32_301 = arith.constant 128 : i32
    %720 = vector.broadcast %c128_i32_301 : i32 to vector<1x128xi32>
    %721 = arith.select %719, %9, %720 : vector<1x128xi1>, vector<1x128xi32>
    %cst_302 = arith.constant dense<2147483647> : vector<1xi32>
    %722 = vector.multi_reduction <minsi>, %721, %cst_302 [1] : vector<1x128xi32> to vector<1xi32>
    %723 = vector.shape_cast %722 : vector<1xi32> to vector<1x1xi32>
    %c9_i32_303 = arith.constant 9 : i32
    %724 = vector.broadcast %c9_i32_303 : i32 to vector<16x1xi32>
    %725 = arith.cmpi eq, %8, %724 : vector<16x1xi32>
    %726 = vector.shape_cast %723 : vector<1x1xi32> to vector<1x1xi32>
    %727 = vector.broadcast %726 : vector<1x1xi32> to vector<16x1xi32>
    %728 = arith.select %725, %727, %371 : vector<16x1xi1>, vector<16x1xi32>
    %c9_i32_304 = arith.constant 9 : i32
    %729 = vector.broadcast %c9_i32_304 : i32 to vector<1x16xi32>
    %730 = arith.cmpi eq, %7, %729 : vector<1x16xi32>
    %731 = vector.shape_cast %723 : vector<1x1xi32> to vector<1x1xi32>
    %732 = vector.broadcast %731 : vector<1x1xi32> to vector<1x16xi32>
    %733 = arith.select %730, %732, %376 : vector<1x16xi1>, vector<1x16xi32>
    %c127_i32 = arith.constant 127 : i32
    %734 = vector.broadcast %c127_i32 : i32 to vector<1x16xi32>
    %735 = arith.cmpi ne, %733, %734 : vector<1x16xi32>
    %c10_i32 = arith.constant 10 : i32
    %736 = vector.broadcast %c10_i32 : i32 to vector<1x16xi32>
    %737 = arith.cmpi slt, %7, %736 : vector<1x16xi32>
    %738 = arith.andi %735, %737 : vector<1x16xi1>
    %c127_i32_305 = arith.constant 127 : i32
    %739 = vector.broadcast %c127_i32_305 : i32 to vector<16x1xi32>
    %740 = arith.cmpi ne, %728, %739 : vector<16x1xi32>
    %c10_i32_306 = arith.constant 10 : i32
    %741 = vector.broadcast %c10_i32_306 : i32 to vector<16x1xi32>
    %742 = arith.cmpi slt, %8, %741 : vector<16x1xi32>
    %743 = arith.andi %740, %742 : vector<16x1xi1>
    %744 = arith.extui %743 : vector<16x1xi1> to vector<16x1xi32>
    %745 = arith.sitofp %744 : vector<16x1xi32> to vector<16x1xf32>
    %746 = arith.extui %738 : vector<1x16xi1> to vector<1x16xi32>
    %747 = arith.sitofp %746 : vector<1x16xi32> to vector<1x16xf32>
    %748 = vector.broadcast %747 : vector<1x16xf32> to vector<16x16xf32>
    %749 = arith.mulf %4, %748 : vector<16x16xf32>
    %cst_307 = arith.constant dense<0.000000e+00> : vector<16xf32>
    %750 = vector.multi_reduction <add>, %749, %cst_307 [1] : vector<16x16xf32> to vector<16xf32>
    %751 = vector.shape_cast %750 : vector<16xf32> to vector<16x1xf32>
    %cst_308 = arith.constant 1.000000e+00 : f32
    %752 = vector.broadcast %cst_308 : f32 to vector<16x1xf32>
    %753 = arith.subf %751, %752 : vector<16x1xf32>
    %cst_309 = arith.constant 5.000000e-01 : f32
    %754 = vector.broadcast %cst_309 : f32 to vector<16x1xf32>
    %755 = arith.cmpf ogt, %745, %754 : vector<16x1xf32>
    %cst_310 = arith.constant 1.000000e+00 : f32
    %756 = vector.broadcast %cst_310 : f32 to vector<16x1xf32>
    %757 = arith.select %755, %753, %756 : vector<16x1xi1>, vector<16x1xf32>
    %758 = arith.fptosi %757 : vector<16x1xf32> to vector<16x1xi32>
    %759 = vector.broadcast %728 : vector<16x1xi32> to vector<16x128xi32>
    %760 = arith.cmpi eq, %759, %5 : vector<16x128xi32>
    %761 = arith.extui %760 : vector<16x128xi1> to vector<16x128xi32>
    %762 = arith.sitofp %761 : vector<16x128xi32> to vector<16x128xf32>
    %763 = arith.truncf %762 : vector<16x128xf32> to vector<16x128xbf16>
    %764 = vector.broadcast %758 : vector<16x1xi32> to vector<16x64xi32>
    %765 = arith.cmpi eq, %764, %6 : vector<16x64xi32>
    %766 = arith.extui %765 : vector<16x64xi1> to vector<16x64xi32>
    %767 = arith.sitofp %766 : vector<16x64xi32> to vector<16x64xf32>
    %768 = arith.truncf %767 : vector<16x64xf32> to vector<16x64xbf16>
    %cst_311 = arith.constant dense<0.000000e+00> : vector<16x32xf32>
    %769 = tpu.matmul %763, %10, %cst_311 {dimension_numbers = #tpu.dot_dimension_numbers<[1], [0], [0], [1], [0, 0, 1, 1], [], []>} : vector<16x128xbf16>, vector<128x32xbf16>, vector<16x32xf32> -> vector<16x32xf32>
    %cst_312 = arith.constant dense<0.000000e+00> : vector<16x32xf32>
    %770 = tpu.matmul %768, %11, %cst_312 {dimension_numbers = #tpu.dot_dimension_numbers<[1], [0], [0], [1], [0, 0, 1, 1], [], []>} : vector<16x64xbf16>, vector<64x32xbf16>, vector<16x32xf32> -> vector<16x32xf32>
    %771 = arith.addf %769, %770 : vector<16x32xf32>
    %772 = vector.broadcast %738 : vector<1x16xi1> to vector<16x16xi1>
    %773 = arith.andi %2, %772 : vector<16x16xi1>
    %cst_313 = arith.constant 0.000000e+00 : f32
    %cst_314 = arith.constant -1.000000e+09 : f32
    %774 = vector.broadcast %cst_313 : f32 to vector<16x16xf32>
    %775 = vector.broadcast %cst_314 : f32 to vector<16x16xf32>
    %776 = arith.select %773, %774, %775 : vector<16x16xi1>, vector<16x16xf32>
    %c0_315 = arith.constant 0 : index
    %c0_316 = arith.constant 0 : index
    %c0_317 = arith.constant 0 : index
    %777 = vector.load %arg4[%c0_315, %c0_316, %c0_317] : memref<2x1x32xf32, #tpu.memory_space<vmem>>, vector<1x1x32xf32>
    %778 = vector.shape_cast %777 : vector<1x1x32xf32> to vector<1x32xf32>
    %c0_318 = arith.constant 0 : index
    %c0_319 = arith.constant 0 : index
    %c0_320 = arith.constant 0 : index
    %779 = vector.load %arg5[%c0_318, %c0_319, %c0_320] : memref<2x1x32xf32, #tpu.memory_space<vmem>>, vector<1x1x32xf32>
    %780 = vector.shape_cast %779 : vector<1x1x32xf32> to vector<1x32xf32>
    %cst_321 = arith.constant dense<0.000000e+00> : vector<16xf32>
    %781 = vector.multi_reduction <add>, %771, %cst_321 [1] : vector<16x32xf32> to vector<16xf32>
    %782 = vector.shape_cast %781 : vector<16xf32> to vector<16x1xf32>
    %cst_322 = arith.constant 3.200000e+01 : f32
    %783 = vector.broadcast %cst_322 : f32 to vector<16x1xf32>
    %784 = arith.divf %782, %783 : vector<16x1xf32>
    %785 = vector.broadcast %784 : vector<16x1xf32> to vector<16x32xf32>
    %786 = arith.subf %771, %785 : vector<16x32xf32>
    %787 = arith.mulf %786, %786 : vector<16x32xf32>
    %cst_323 = arith.constant dense<0.000000e+00> : vector<16xf32>
    %788 = vector.multi_reduction <add>, %787, %cst_323 [1] : vector<16x32xf32> to vector<16xf32>
    %789 = vector.shape_cast %788 : vector<16xf32> to vector<16x1xf32>
    %cst_324 = arith.constant 3.200000e+01 : f32
    %790 = vector.broadcast %cst_324 : f32 to vector<16x1xf32>
    %791 = arith.divf %789, %790 : vector<16x1xf32>
    %792 = vector.broadcast %784 : vector<16x1xf32> to vector<16x32xf32>
    %793 = arith.subf %771, %792 : vector<16x32xf32>
    %cst_325 = arith.constant 9.99999974E-6 : f32
    %794 = vector.broadcast %cst_325 : f32 to vector<16x1xf32>
    %795 = arith.addf %791, %794 : vector<16x1xf32>
    %796 = math.rsqrt %795 : vector<16x1xf32>
    %797 = vector.broadcast %796 : vector<16x1xf32> to vector<16x32xf32>
    %798 = arith.mulf %793, %797 : vector<16x32xf32>
    %799 = vector.broadcast %778 : vector<1x32xf32> to vector<16x32xf32>
    %800 = arith.mulf %798, %799 : vector<16x32xf32>
    %801 = vector.broadcast %780 : vector<1x32xf32> to vector<16x32xf32>
    %802 = arith.addf %800, %801 : vector<16x32xf32>
    %803 = arith.truncf %802 : vector<16x32xf32> to vector<16x32xbf16>
    %c0_326 = arith.constant 0 : index
    %c0_327 = arith.constant 0 : index
    %c0_328 = arith.constant 0 : index
    %804 = vector.load %arg6[%c0_326, %c0_327, %c0_328] : memref<2x32x96xbf16, #tpu.memory_space<vmem>>, vector<1x32x96xbf16>
    %805 = vector.shape_cast %804 : vector<1x32x96xbf16> to vector<32x96xbf16>
    %cst_329 = arith.constant dense<0.000000e+00> : vector<16x96xf32>
    %806 = tpu.matmul %803, %805, %cst_329 {dimension_numbers = #tpu.dot_dimension_numbers<[1], [0], [0], [1], [0, 0, 1, 1], [], []>} : vector<16x32xbf16>, vector<32x96xbf16>, vector<16x96xf32> -> vector<16x96xf32>
    %c0_330 = arith.constant 0 : index
    %c0_331 = arith.constant 0 : index
    %c0_332 = arith.constant 0 : index
    %807 = vector.load %arg7[%c0_330, %c0_331, %c0_332] : memref<2x1x96xf32, #tpu.memory_space<vmem>>, vector<1x1x96xf32>
    %808 = vector.shape_cast %807 : vector<1x1x96xf32> to vector<1x96xf32>
    %809 = vector.broadcast %808 : vector<1x96xf32> to vector<16x96xf32>
    %810 = arith.addf %806, %809 : vector<16x96xf32>
    %c0_333 = arith.constant 0 : index
    %c0_334 = arith.constant 0 : index
    %c0_335 = arith.constant 0 : index
    %811 = vector.load %arg8[%c0_333, %c0_334, %c0_335] : memref<2x32x32xbf16, #tpu.memory_space<vmem>>, vector<1x32x32xbf16>
    %812 = vector.shape_cast %811 : vector<1x32x32xbf16> to vector<32x32xbf16>
    %813 = vector.extract_strided_slice %810 {offsets = [0, 0], sizes = [16, 16], strides = [1, 1]} : vector<16x96xf32> to vector<16x16xf32>
    %814 = arith.truncf %813 : vector<16x16xf32> to vector<16x16xbf16>
    %815 = vector.extract_strided_slice %810 {offsets = [0, 32], sizes = [16, 16], strides = [1, 1]} : vector<16x96xf32> to vector<16x16xf32>
    %816 = arith.truncf %815 : vector<16x16xf32> to vector<16x16xbf16>
    %817 = vector.extract_strided_slice %810 {offsets = [0, 64], sizes = [16, 16], strides = [1, 1]} : vector<16x96xf32> to vector<16x16xf32>
    %818 = arith.truncf %817 : vector<16x16xf32> to vector<16x16xbf16>
    %cst_336 = arith.constant dense<0.000000e+00> : vector<16x16xf32>
    %819 = tpu.matmul %814, %816, %cst_336 {dimension_numbers = #tpu.dot_dimension_numbers<[1], [1], [0], [0], [0, 0, 1, 0], [], []>} : vector<16x16xbf16>, vector<16x16xbf16>, vector<16x16xf32> -> vector<16x16xf32>
    %cst_337 = arith.constant 2.500000e-01 : f32
    %820 = vector.broadcast %cst_337 : f32 to vector<16x16xf32>
    %821 = arith.mulf %819, %820 : vector<16x16xf32>
    %822 = arith.addf %821, %776 : vector<16x16xf32>
    %cst_338 = arith.constant dense<0xFF800000> : vector<16xf32>
    %823 = vector.multi_reduction <maximumf>, %822, %cst_338 [1] : vector<16x16xf32> to vector<16xf32>
    %824 = vector.shape_cast %823 : vector<16xf32> to vector<16x1xf32>
    %825 = vector.broadcast %824 : vector<16x1xf32> to vector<16x16xf32>
    %826 = arith.subf %822, %825 : vector<16x16xf32>
    %827 = math.exp %826 : vector<16x16xf32>
    %cst_339 = arith.constant dense<0.000000e+00> : vector<16xf32>
    %828 = vector.multi_reduction <add>, %827, %cst_339 [1] : vector<16x16xf32> to vector<16xf32>
    %829 = vector.shape_cast %828 : vector<16xf32> to vector<16x1xf32>
    %830 = vector.broadcast %829 : vector<16x1xf32> to vector<16x16xf32>
    %831 = arith.divf %827, %830 : vector<16x16xf32>
    %832 = arith.truncf %831 : vector<16x16xf32> to vector<16x16xbf16>
    %cst_340 = arith.constant dense<0.000000e+00> : vector<16x16xf32>
    %833 = tpu.matmul %832, %818, %cst_340 {dimension_numbers = #tpu.dot_dimension_numbers<[1], [0], [0], [1], [0, 0, 1, 1], [], []>} : vector<16x16xbf16>, vector<16x16xbf16>, vector<16x16xf32> -> vector<16x16xf32>
    %834 = arith.truncf %833 : vector<16x16xf32> to vector<16x16xbf16>
    %835 = vector.extract_strided_slice %812 {offsets = [0, 0], sizes = [16, 32], strides = [1, 1]} : vector<32x32xbf16> to vector<16x32xbf16>
    %cst_341 = arith.constant dense<0.000000e+00> : vector<16x32xf32>
    %836 = tpu.matmul %834, %835, %cst_341 {dimension_numbers = #tpu.dot_dimension_numbers<[1], [0], [0], [1], [0, 0, 1, 1], [], []>} : vector<16x16xbf16>, vector<16x32xbf16>, vector<16x32xf32> -> vector<16x32xf32>
    %837 = vector.extract_strided_slice %810 {offsets = [0, 16], sizes = [16, 16], strides = [1, 1]} : vector<16x96xf32> to vector<16x16xf32>
    %838 = arith.truncf %837 : vector<16x16xf32> to vector<16x16xbf16>
    %839 = vector.extract_strided_slice %810 {offsets = [0, 48], sizes = [16, 16], strides = [1, 1]} : vector<16x96xf32> to vector<16x16xf32>
    %840 = arith.truncf %839 : vector<16x16xf32> to vector<16x16xbf16>
    %841 = vector.extract_strided_slice %810 {offsets = [0, 80], sizes = [16, 16], strides = [1, 1]} : vector<16x96xf32> to vector<16x16xf32>
    %842 = arith.truncf %841 : vector<16x16xf32> to vector<16x16xbf16>
    %cst_342 = arith.constant dense<0.000000e+00> : vector<16x16xf32>
    %843 = tpu.matmul %838, %840, %cst_342 {dimension_numbers = #tpu.dot_dimension_numbers<[1], [1], [0], [0], [0, 0, 1, 0], [], []>} : vector<16x16xbf16>, vector<16x16xbf16>, vector<16x16xf32> -> vector<16x16xf32>
    %cst_343 = arith.constant 2.500000e-01 : f32
    %844 = vector.broadcast %cst_343 : f32 to vector<16x16xf32>
    %845 = arith.mulf %843, %844 : vector<16x16xf32>
    %846 = arith.addf %845, %776 : vector<16x16xf32>
    %cst_344 = arith.constant dense<0xFF800000> : vector<16xf32>
    %847 = vector.multi_reduction <maximumf>, %846, %cst_344 [1] : vector<16x16xf32> to vector<16xf32>
    %848 = vector.shape_cast %847 : vector<16xf32> to vector<16x1xf32>
    %849 = vector.broadcast %848 : vector<16x1xf32> to vector<16x16xf32>
    %850 = arith.subf %846, %849 : vector<16x16xf32>
    %851 = math.exp %850 : vector<16x16xf32>
    %cst_345 = arith.constant dense<0.000000e+00> : vector<16xf32>
    %852 = vector.multi_reduction <add>, %851, %cst_345 [1] : vector<16x16xf32> to vector<16xf32>
    %853 = vector.shape_cast %852 : vector<16xf32> to vector<16x1xf32>
    %854 = vector.broadcast %853 : vector<16x1xf32> to vector<16x16xf32>
    %855 = arith.divf %851, %854 : vector<16x16xf32>
    %856 = arith.truncf %855 : vector<16x16xf32> to vector<16x16xbf16>
    %cst_346 = arith.constant dense<0.000000e+00> : vector<16x16xf32>
    %857 = tpu.matmul %856, %842, %cst_346 {dimension_numbers = #tpu.dot_dimension_numbers<[1], [0], [0], [1], [0, 0, 1, 1], [], []>} : vector<16x16xbf16>, vector<16x16xbf16>, vector<16x16xf32> -> vector<16x16xf32>
    %858 = arith.truncf %857 : vector<16x16xf32> to vector<16x16xbf16>
    %859 = vector.extract_strided_slice %812 {offsets = [16, 0], sizes = [16, 32], strides = [1, 1]} : vector<32x32xbf16> to vector<16x32xbf16>
    %cst_347 = arith.constant dense<0.000000e+00> : vector<16x32xf32>
    %860 = tpu.matmul %858, %859, %cst_347 {dimension_numbers = #tpu.dot_dimension_numbers<[1], [0], [0], [1], [0, 0, 1, 1], [], []>} : vector<16x16xbf16>, vector<16x32xbf16>, vector<16x32xf32> -> vector<16x32xf32>
    %861 = arith.addf %836, %860 : vector<16x32xf32>
    %862 = arith.addf %771, %861 : vector<16x32xf32>
    %c0_348 = arith.constant 0 : index
    %c0_349 = arith.constant 0 : index
    %c0_350 = arith.constant 0 : index
    %863 = vector.load %arg9[%c0_348, %c0_349, %c0_350] : memref<2x1x32xf32, #tpu.memory_space<vmem>>, vector<1x1x32xf32>
    %864 = vector.shape_cast %863 : vector<1x1x32xf32> to vector<1x32xf32>
    %865 = vector.broadcast %864 : vector<1x32xf32> to vector<16x32xf32>
    %866 = arith.addf %862, %865 : vector<16x32xf32>
    %c0_351 = arith.constant 0 : index
    %c0_352 = arith.constant 0 : index
    %c0_353 = arith.constant 0 : index
    %867 = vector.load %arg10[%c0_351, %c0_352, %c0_353] : memref<2x1x32xf32, #tpu.memory_space<vmem>>, vector<1x1x32xf32>
    %868 = vector.shape_cast %867 : vector<1x1x32xf32> to vector<1x32xf32>
    %c0_354 = arith.constant 0 : index
    %c0_355 = arith.constant 0 : index
    %c0_356 = arith.constant 0 : index
    %869 = vector.load %arg11[%c0_354, %c0_355, %c0_356] : memref<2x1x32xf32, #tpu.memory_space<vmem>>, vector<1x1x32xf32>
    %870 = vector.shape_cast %869 : vector<1x1x32xf32> to vector<1x32xf32>
    %cst_357 = arith.constant dense<0.000000e+00> : vector<16xf32>
    %871 = vector.multi_reduction <add>, %866, %cst_357 [1] : vector<16x32xf32> to vector<16xf32>
    %872 = vector.shape_cast %871 : vector<16xf32> to vector<16x1xf32>
    %cst_358 = arith.constant 3.200000e+01 : f32
    %873 = vector.broadcast %cst_358 : f32 to vector<16x1xf32>
    %874 = arith.divf %872, %873 : vector<16x1xf32>
    %875 = vector.broadcast %874 : vector<16x1xf32> to vector<16x32xf32>
    %876 = arith.subf %866, %875 : vector<16x32xf32>
    %877 = arith.mulf %876, %876 : vector<16x32xf32>
    %cst_359 = arith.constant dense<0.000000e+00> : vector<16xf32>
    %878 = vector.multi_reduction <add>, %877, %cst_359 [1] : vector<16x32xf32> to vector<16xf32>
    %879 = vector.shape_cast %878 : vector<16xf32> to vector<16x1xf32>
    %cst_360 = arith.constant 3.200000e+01 : f32
    %880 = vector.broadcast %cst_360 : f32 to vector<16x1xf32>
    %881 = arith.divf %879, %880 : vector<16x1xf32>
    %882 = vector.broadcast %874 : vector<16x1xf32> to vector<16x32xf32>
    %883 = arith.subf %866, %882 : vector<16x32xf32>
    %cst_361 = arith.constant 9.99999974E-6 : f32
    %884 = vector.broadcast %cst_361 : f32 to vector<16x1xf32>
    %885 = arith.addf %881, %884 : vector<16x1xf32>
    %886 = math.rsqrt %885 : vector<16x1xf32>
    %887 = vector.broadcast %886 : vector<16x1xf32> to vector<16x32xf32>
    %888 = arith.mulf %883, %887 : vector<16x32xf32>
    %889 = vector.broadcast %868 : vector<1x32xf32> to vector<16x32xf32>
    %890 = arith.mulf %888, %889 : vector<16x32xf32>
    %891 = vector.broadcast %870 : vector<1x32xf32> to vector<16x32xf32>
    %892 = arith.addf %890, %891 : vector<16x32xf32>
    %893 = arith.truncf %892 : vector<16x32xf32> to vector<16x32xbf16>
    %c0_362 = arith.constant 0 : index
    %c0_363 = arith.constant 0 : index
    %c0_364 = arith.constant 0 : index
    %894 = vector.load %arg12[%c0_362, %c0_363, %c0_364] : memref<2x32x128xbf16, #tpu.memory_space<vmem>>, vector<1x32x128xbf16>
    %895 = vector.shape_cast %894 : vector<1x32x128xbf16> to vector<32x128xbf16>
    %cst_365 = arith.constant dense<0.000000e+00> : vector<16x128xf32>
    %896 = tpu.matmul %893, %895, %cst_365 {dimension_numbers = #tpu.dot_dimension_numbers<[1], [0], [0], [1], [0, 0, 1, 1], [], []>} : vector<16x32xbf16>, vector<32x128xbf16>, vector<16x128xf32> -> vector<16x128xf32>
    %c0_366 = arith.constant 0 : index
    %c0_367 = arith.constant 0 : index
    %c0_368 = arith.constant 0 : index
    %897 = vector.load %arg13[%c0_366, %c0_367, %c0_368] : memref<2x1x128xf32, #tpu.memory_space<vmem>>, vector<1x1x128xf32>
    %898 = vector.shape_cast %897 : vector<1x1x128xf32> to vector<1x128xf32>
    %899 = vector.broadcast %898 : vector<1x128xf32> to vector<16x128xf32>
    %900 = arith.addf %896, %899 : vector<16x128xf32>
    %cst_369 = arith.constant 5.000000e-01 : f32
    %901 = vector.broadcast %cst_369 : f32 to vector<16x128xf32>
    %902 = arith.mulf %901, %900 : vector<16x128xf32>
    %cst_370 = arith.constant 4.471500e-02 : f32
    %903 = vector.broadcast %cst_370 : f32 to vector<16x128xf32>
    %904 = arith.mulf %903, %900 : vector<16x128xf32>
    %905 = arith.mulf %904, %900 : vector<16x128xf32>
    %906 = arith.mulf %905, %900 : vector<16x128xf32>
    %907 = arith.addf %900, %906 : vector<16x128xf32>
    %cst_371 = arith.constant 0.797884583 : f32
    %908 = vector.broadcast %cst_371 : f32 to vector<16x128xf32>
    %909 = arith.mulf %908, %907 : vector<16x128xf32>
    %910 = math.tanh %909 : vector<16x128xf32>
    %cst_372 = arith.constant 1.000000e+00 : f32
    %911 = vector.broadcast %cst_372 : f32 to vector<16x128xf32>
    %912 = arith.addf %911, %910 : vector<16x128xf32>
    %913 = arith.mulf %902, %912 : vector<16x128xf32>
    %914 = arith.truncf %913 : vector<16x128xf32> to vector<16x128xbf16>
    %c0_373 = arith.constant 0 : index
    %c0_374 = arith.constant 0 : index
    %c0_375 = arith.constant 0 : index
    %915 = vector.load %arg14[%c0_373, %c0_374, %c0_375] : memref<2x128x32xbf16, #tpu.memory_space<vmem>>, vector<1x128x32xbf16>
    %916 = vector.shape_cast %915 : vector<1x128x32xbf16> to vector<128x32xbf16>
    %cst_376 = arith.constant dense<0.000000e+00> : vector<16x32xf32>
    %917 = tpu.matmul %914, %916, %cst_376 {dimension_numbers = #tpu.dot_dimension_numbers<[1], [0], [0], [1], [0, 0, 1, 1], [], []>} : vector<16x128xbf16>, vector<128x32xbf16>, vector<16x32xf32> -> vector<16x32xf32>
    %c0_377 = arith.constant 0 : index
    %c0_378 = arith.constant 0 : index
    %c0_379 = arith.constant 0 : index
    %918 = vector.load %arg15[%c0_377, %c0_378, %c0_379] : memref<2x1x32xf32, #tpu.memory_space<vmem>>, vector<1x1x32xf32>
    %919 = vector.shape_cast %918 : vector<1x1x32xf32> to vector<1x32xf32>
    %920 = vector.broadcast %919 : vector<1x32xf32> to vector<16x32xf32>
    %921 = arith.addf %917, %920 : vector<16x32xf32>
    %922 = arith.addf %866, %921 : vector<16x32xf32>
    %c1_380 = arith.constant 1 : index
    %c0_381 = arith.constant 0 : index
    %c0_382 = arith.constant 0 : index
    %923 = vector.load %arg4[%c1_380, %c0_381, %c0_382] : memref<2x1x32xf32, #tpu.memory_space<vmem>>, vector<1x1x32xf32>
    %924 = vector.shape_cast %923 : vector<1x1x32xf32> to vector<1x32xf32>
    %c1_383 = arith.constant 1 : index
    %c0_384 = arith.constant 0 : index
    %c0_385 = arith.constant 0 : index
    %925 = vector.load %arg5[%c1_383, %c0_384, %c0_385] : memref<2x1x32xf32, #tpu.memory_space<vmem>>, vector<1x1x32xf32>
    %926 = vector.shape_cast %925 : vector<1x1x32xf32> to vector<1x32xf32>
    %cst_386 = arith.constant dense<0.000000e+00> : vector<16xf32>
    %927 = vector.multi_reduction <add>, %922, %cst_386 [1] : vector<16x32xf32> to vector<16xf32>
    %928 = vector.shape_cast %927 : vector<16xf32> to vector<16x1xf32>
    %cst_387 = arith.constant 3.200000e+01 : f32
    %929 = vector.broadcast %cst_387 : f32 to vector<16x1xf32>
    %930 = arith.divf %928, %929 : vector<16x1xf32>
    %931 = vector.broadcast %930 : vector<16x1xf32> to vector<16x32xf32>
    %932 = arith.subf %922, %931 : vector<16x32xf32>
    %933 = arith.mulf %932, %932 : vector<16x32xf32>
    %cst_388 = arith.constant dense<0.000000e+00> : vector<16xf32>
    %934 = vector.multi_reduction <add>, %933, %cst_388 [1] : vector<16x32xf32> to vector<16xf32>
    %935 = vector.shape_cast %934 : vector<16xf32> to vector<16x1xf32>
    %cst_389 = arith.constant 3.200000e+01 : f32
    %936 = vector.broadcast %cst_389 : f32 to vector<16x1xf32>
    %937 = arith.divf %935, %936 : vector<16x1xf32>
    %938 = vector.broadcast %930 : vector<16x1xf32> to vector<16x32xf32>
    %939 = arith.subf %922, %938 : vector<16x32xf32>
    %cst_390 = arith.constant 9.99999974E-6 : f32
    %940 = vector.broadcast %cst_390 : f32 to vector<16x1xf32>
    %941 = arith.addf %937, %940 : vector<16x1xf32>
    %942 = math.rsqrt %941 : vector<16x1xf32>
    %943 = vector.broadcast %942 : vector<16x1xf32> to vector<16x32xf32>
    %944 = arith.mulf %939, %943 : vector<16x32xf32>
    %945 = vector.broadcast %924 : vector<1x32xf32> to vector<16x32xf32>
    %946 = arith.mulf %944, %945 : vector<16x32xf32>
    %947 = vector.broadcast %926 : vector<1x32xf32> to vector<16x32xf32>
    %948 = arith.addf %946, %947 : vector<16x32xf32>
    %949 = arith.truncf %948 : vector<16x32xf32> to vector<16x32xbf16>
    %c1_391 = arith.constant 1 : index
    %c0_392 = arith.constant 0 : index
    %c0_393 = arith.constant 0 : index
    %950 = vector.load %arg6[%c1_391, %c0_392, %c0_393] : memref<2x32x96xbf16, #tpu.memory_space<vmem>>, vector<1x32x96xbf16>
    %951 = vector.shape_cast %950 : vector<1x32x96xbf16> to vector<32x96xbf16>
    %cst_394 = arith.constant dense<0.000000e+00> : vector<16x96xf32>
    %952 = tpu.matmul %949, %951, %cst_394 {dimension_numbers = #tpu.dot_dimension_numbers<[1], [0], [0], [1], [0, 0, 1, 1], [], []>} : vector<16x32xbf16>, vector<32x96xbf16>, vector<16x96xf32> -> vector<16x96xf32>
    %c1_395 = arith.constant 1 : index
    %c0_396 = arith.constant 0 : index
    %c0_397 = arith.constant 0 : index
    %953 = vector.load %arg7[%c1_395, %c0_396, %c0_397] : memref<2x1x96xf32, #tpu.memory_space<vmem>>, vector<1x1x96xf32>
    %954 = vector.shape_cast %953 : vector<1x1x96xf32> to vector<1x96xf32>
    %955 = vector.broadcast %954 : vector<1x96xf32> to vector<16x96xf32>
    %956 = arith.addf %952, %955 : vector<16x96xf32>
    %c1_398 = arith.constant 1 : index
    %c0_399 = arith.constant 0 : index
    %c0_400 = arith.constant 0 : index
    %957 = vector.load %arg8[%c1_398, %c0_399, %c0_400] : memref<2x32x32xbf16, #tpu.memory_space<vmem>>, vector<1x32x32xbf16>
    %958 = vector.shape_cast %957 : vector<1x32x32xbf16> to vector<32x32xbf16>
    %959 = vector.extract_strided_slice %956 {offsets = [0, 0], sizes = [16, 16], strides = [1, 1]} : vector<16x96xf32> to vector<16x16xf32>
    %960 = arith.truncf %959 : vector<16x16xf32> to vector<16x16xbf16>
    %961 = vector.extract_strided_slice %956 {offsets = [0, 32], sizes = [16, 16], strides = [1, 1]} : vector<16x96xf32> to vector<16x16xf32>
    %962 = arith.truncf %961 : vector<16x16xf32> to vector<16x16xbf16>
    %963 = vector.extract_strided_slice %956 {offsets = [0, 64], sizes = [16, 16], strides = [1, 1]} : vector<16x96xf32> to vector<16x16xf32>
    %964 = arith.truncf %963 : vector<16x16xf32> to vector<16x16xbf16>
    %cst_401 = arith.constant dense<0.000000e+00> : vector<16x16xf32>
    %965 = tpu.matmul %960, %962, %cst_401 {dimension_numbers = #tpu.dot_dimension_numbers<[1], [1], [0], [0], [0, 0, 1, 0], [], []>} : vector<16x16xbf16>, vector<16x16xbf16>, vector<16x16xf32> -> vector<16x16xf32>
    %cst_402 = arith.constant 2.500000e-01 : f32
    %966 = vector.broadcast %cst_402 : f32 to vector<16x16xf32>
    %967 = arith.mulf %965, %966 : vector<16x16xf32>
    %968 = arith.addf %967, %776 : vector<16x16xf32>
    %cst_403 = arith.constant dense<0xFF800000> : vector<16xf32>
    %969 = vector.multi_reduction <maximumf>, %968, %cst_403 [1] : vector<16x16xf32> to vector<16xf32>
    %970 = vector.shape_cast %969 : vector<16xf32> to vector<16x1xf32>
    %971 = vector.broadcast %970 : vector<16x1xf32> to vector<16x16xf32>
    %972 = arith.subf %968, %971 : vector<16x16xf32>
    %973 = math.exp %972 : vector<16x16xf32>
    %cst_404 = arith.constant dense<0.000000e+00> : vector<16xf32>
    %974 = vector.multi_reduction <add>, %973, %cst_404 [1] : vector<16x16xf32> to vector<16xf32>
    %975 = vector.shape_cast %974 : vector<16xf32> to vector<16x1xf32>
    %976 = vector.broadcast %975 : vector<16x1xf32> to vector<16x16xf32>
    %977 = arith.divf %973, %976 : vector<16x16xf32>
    %978 = arith.truncf %977 : vector<16x16xf32> to vector<16x16xbf16>
    %cst_405 = arith.constant dense<0.000000e+00> : vector<16x16xf32>
    %979 = tpu.matmul %978, %964, %cst_405 {dimension_numbers = #tpu.dot_dimension_numbers<[1], [0], [0], [1], [0, 0, 1, 1], [], []>} : vector<16x16xbf16>, vector<16x16xbf16>, vector<16x16xf32> -> vector<16x16xf32>
    %980 = arith.truncf %979 : vector<16x16xf32> to vector<16x16xbf16>
    %981 = vector.extract_strided_slice %958 {offsets = [0, 0], sizes = [16, 32], strides = [1, 1]} : vector<32x32xbf16> to vector<16x32xbf16>
    %cst_406 = arith.constant dense<0.000000e+00> : vector<16x32xf32>
    %982 = tpu.matmul %980, %981, %cst_406 {dimension_numbers = #tpu.dot_dimension_numbers<[1], [0], [0], [1], [0, 0, 1, 1], [], []>} : vector<16x16xbf16>, vector<16x32xbf16>, vector<16x32xf32> -> vector<16x32xf32>
    %983 = vector.extract_strided_slice %956 {offsets = [0, 16], sizes = [16, 16], strides = [1, 1]} : vector<16x96xf32> to vector<16x16xf32>
    %984 = arith.truncf %983 : vector<16x16xf32> to vector<16x16xbf16>
    %985 = vector.extract_strided_slice %956 {offsets = [0, 48], sizes = [16, 16], strides = [1, 1]} : vector<16x96xf32> to vector<16x16xf32>
    %986 = arith.truncf %985 : vector<16x16xf32> to vector<16x16xbf16>
    %987 = vector.extract_strided_slice %956 {offsets = [0, 80], sizes = [16, 16], strides = [1, 1]} : vector<16x96xf32> to vector<16x16xf32>
    %988 = arith.truncf %987 : vector<16x16xf32> to vector<16x16xbf16>
    %cst_407 = arith.constant dense<0.000000e+00> : vector<16x16xf32>
    %989 = tpu.matmul %984, %986, %cst_407 {dimension_numbers = #tpu.dot_dimension_numbers<[1], [1], [0], [0], [0, 0, 1, 0], [], []>} : vector<16x16xbf16>, vector<16x16xbf16>, vector<16x16xf32> -> vector<16x16xf32>
    %cst_408 = arith.constant 2.500000e-01 : f32
    %990 = vector.broadcast %cst_408 : f32 to vector<16x16xf32>
    %991 = arith.mulf %989, %990 : vector<16x16xf32>
    %992 = arith.addf %991, %776 : vector<16x16xf32>
    %cst_409 = arith.constant dense<0xFF800000> : vector<16xf32>
    %993 = vector.multi_reduction <maximumf>, %992, %cst_409 [1] : vector<16x16xf32> to vector<16xf32>
    %994 = vector.shape_cast %993 : vector<16xf32> to vector<16x1xf32>
    %995 = vector.broadcast %994 : vector<16x1xf32> to vector<16x16xf32>
    %996 = arith.subf %992, %995 : vector<16x16xf32>
    %997 = math.exp %996 : vector<16x16xf32>
    %cst_410 = arith.constant dense<0.000000e+00> : vector<16xf32>
    %998 = vector.multi_reduction <add>, %997, %cst_410 [1] : vector<16x16xf32> to vector<16xf32>
    %999 = vector.shape_cast %998 : vector<16xf32> to vector<16x1xf32>
    %1000 = vector.broadcast %999 : vector<16x1xf32> to vector<16x16xf32>
    %1001 = arith.divf %997, %1000 : vector<16x16xf32>
    %1002 = arith.truncf %1001 : vector<16x16xf32> to vector<16x16xbf16>
    %cst_411 = arith.constant dense<0.000000e+00> : vector<16x16xf32>
    %1003 = tpu.matmul %1002, %988, %cst_411 {dimension_numbers = #tpu.dot_dimension_numbers<[1], [0], [0], [1], [0, 0, 1, 1], [], []>} : vector<16x16xbf16>, vector<16x16xbf16>, vector<16x16xf32> -> vector<16x16xf32>
    %1004 = arith.truncf %1003 : vector<16x16xf32> to vector<16x16xbf16>
    %1005 = vector.extract_strided_slice %958 {offsets = [16, 0], sizes = [16, 32], strides = [1, 1]} : vector<32x32xbf16> to vector<16x32xbf16>
    %cst_412 = arith.constant dense<0.000000e+00> : vector<16x32xf32>
    %1006 = tpu.matmul %1004, %1005, %cst_412 {dimension_numbers = #tpu.dot_dimension_numbers<[1], [0], [0], [1], [0, 0, 1, 1], [], []>} : vector<16x16xbf16>, vector<16x32xbf16>, vector<16x32xf32> -> vector<16x32xf32>
    %1007 = arith.addf %982, %1006 : vector<16x32xf32>
    %1008 = arith.addf %922, %1007 : vector<16x32xf32>
    %c1_413 = arith.constant 1 : index
    %c0_414 = arith.constant 0 : index
    %c0_415 = arith.constant 0 : index
    %1009 = vector.load %arg9[%c1_413, %c0_414, %c0_415] : memref<2x1x32xf32, #tpu.memory_space<vmem>>, vector<1x1x32xf32>
    %1010 = vector.shape_cast %1009 : vector<1x1x32xf32> to vector<1x32xf32>
    %1011 = vector.broadcast %1010 : vector<1x32xf32> to vector<16x32xf32>
    %1012 = arith.addf %1008, %1011 : vector<16x32xf32>
    %c1_416 = arith.constant 1 : index
    %c0_417 = arith.constant 0 : index
    %c0_418 = arith.constant 0 : index
    %1013 = vector.load %arg10[%c1_416, %c0_417, %c0_418] : memref<2x1x32xf32, #tpu.memory_space<vmem>>, vector<1x1x32xf32>
    %1014 = vector.shape_cast %1013 : vector<1x1x32xf32> to vector<1x32xf32>
    %c1_419 = arith.constant 1 : index
    %c0_420 = arith.constant 0 : index
    %c0_421 = arith.constant 0 : index
    %1015 = vector.load %arg11[%c1_419, %c0_420, %c0_421] : memref<2x1x32xf32, #tpu.memory_space<vmem>>, vector<1x1x32xf32>
    %1016 = vector.shape_cast %1015 : vector<1x1x32xf32> to vector<1x32xf32>
    %cst_422 = arith.constant dense<0.000000e+00> : vector<16xf32>
    %1017 = vector.multi_reduction <add>, %1012, %cst_422 [1] : vector<16x32xf32> to vector<16xf32>
    %1018 = vector.shape_cast %1017 : vector<16xf32> to vector<16x1xf32>
    %cst_423 = arith.constant 3.200000e+01 : f32
    %1019 = vector.broadcast %cst_423 : f32 to vector<16x1xf32>
    %1020 = arith.divf %1018, %1019 : vector<16x1xf32>
    %1021 = vector.broadcast %1020 : vector<16x1xf32> to vector<16x32xf32>
    %1022 = arith.subf %1012, %1021 : vector<16x32xf32>
    %1023 = arith.mulf %1022, %1022 : vector<16x32xf32>
    %cst_424 = arith.constant dense<0.000000e+00> : vector<16xf32>
    %1024 = vector.multi_reduction <add>, %1023, %cst_424 [1] : vector<16x32xf32> to vector<16xf32>
    %1025 = vector.shape_cast %1024 : vector<16xf32> to vector<16x1xf32>
    %cst_425 = arith.constant 3.200000e+01 : f32
    %1026 = vector.broadcast %cst_425 : f32 to vector<16x1xf32>
    %1027 = arith.divf %1025, %1026 : vector<16x1xf32>
    %1028 = vector.broadcast %1020 : vector<16x1xf32> to vector<16x32xf32>
    %1029 = arith.subf %1012, %1028 : vector<16x32xf32>
    %cst_426 = arith.constant 9.99999974E-6 : f32
    %1030 = vector.broadcast %cst_426 : f32 to vector<16x1xf32>
    %1031 = arith.addf %1027, %1030 : vector<16x1xf32>
    %1032 = math.rsqrt %1031 : vector<16x1xf32>
    %1033 = vector.broadcast %1032 : vector<16x1xf32> to vector<16x32xf32>
    %1034 = arith.mulf %1029, %1033 : vector<16x32xf32>
    %1035 = vector.broadcast %1014 : vector<1x32xf32> to vector<16x32xf32>
    %1036 = arith.mulf %1034, %1035 : vector<16x32xf32>
    %1037 = vector.broadcast %1016 : vector<1x32xf32> to vector<16x32xf32>
    %1038 = arith.addf %1036, %1037 : vector<16x32xf32>
    %1039 = arith.truncf %1038 : vector<16x32xf32> to vector<16x32xbf16>
    %c1_427 = arith.constant 1 : index
    %c0_428 = arith.constant 0 : index
    %c0_429 = arith.constant 0 : index
    %1040 = vector.load %arg12[%c1_427, %c0_428, %c0_429] : memref<2x32x128xbf16, #tpu.memory_space<vmem>>, vector<1x32x128xbf16>
    %1041 = vector.shape_cast %1040 : vector<1x32x128xbf16> to vector<32x128xbf16>
    %cst_430 = arith.constant dense<0.000000e+00> : vector<16x128xf32>
    %1042 = tpu.matmul %1039, %1041, %cst_430 {dimension_numbers = #tpu.dot_dimension_numbers<[1], [0], [0], [1], [0, 0, 1, 1], [], []>} : vector<16x32xbf16>, vector<32x128xbf16>, vector<16x128xf32> -> vector<16x128xf32>
    %c1_431 = arith.constant 1 : index
    %c0_432 = arith.constant 0 : index
    %c0_433 = arith.constant 0 : index
    %1043 = vector.load %arg13[%c1_431, %c0_432, %c0_433] : memref<2x1x128xf32, #tpu.memory_space<vmem>>, vector<1x1x128xf32>
    %1044 = vector.shape_cast %1043 : vector<1x1x128xf32> to vector<1x128xf32>
    %1045 = vector.broadcast %1044 : vector<1x128xf32> to vector<16x128xf32>
    %1046 = arith.addf %1042, %1045 : vector<16x128xf32>
    %cst_434 = arith.constant 5.000000e-01 : f32
    %1047 = vector.broadcast %cst_434 : f32 to vector<16x128xf32>
    %1048 = arith.mulf %1047, %1046 : vector<16x128xf32>
    %cst_435 = arith.constant 4.471500e-02 : f32
    %1049 = vector.broadcast %cst_435 : f32 to vector<16x128xf32>
    %1050 = arith.mulf %1049, %1046 : vector<16x128xf32>
    %1051 = arith.mulf %1050, %1046 : vector<16x128xf32>
    %1052 = arith.mulf %1051, %1046 : vector<16x128xf32>
    %1053 = arith.addf %1046, %1052 : vector<16x128xf32>
    %cst_436 = arith.constant 0.797884583 : f32
    %1054 = vector.broadcast %cst_436 : f32 to vector<16x128xf32>
    %1055 = arith.mulf %1054, %1053 : vector<16x128xf32>
    %1056 = math.tanh %1055 : vector<16x128xf32>
    %cst_437 = arith.constant 1.000000e+00 : f32
    %1057 = vector.broadcast %cst_437 : f32 to vector<16x128xf32>
    %1058 = arith.addf %1057, %1056 : vector<16x128xf32>
    %1059 = arith.mulf %1048, %1058 : vector<16x128xf32>
    %1060 = arith.truncf %1059 : vector<16x128xf32> to vector<16x128xbf16>
    %c1_438 = arith.constant 1 : index
    %c0_439 = arith.constant 0 : index
    %c0_440 = arith.constant 0 : index
    %1061 = vector.load %arg14[%c1_438, %c0_439, %c0_440] : memref<2x128x32xbf16, #tpu.memory_space<vmem>>, vector<1x128x32xbf16>
    %1062 = vector.shape_cast %1061 : vector<1x128x32xbf16> to vector<128x32xbf16>
    %cst_441 = arith.constant dense<0.000000e+00> : vector<16x32xf32>
    %1063 = tpu.matmul %1060, %1062, %cst_441 {dimension_numbers = #tpu.dot_dimension_numbers<[1], [0], [0], [1], [0, 0, 1, 1], [], []>} : vector<16x128xbf16>, vector<128x32xbf16>, vector<16x32xf32> -> vector<16x32xf32>
    %c1_442 = arith.constant 1 : index
    %c0_443 = arith.constant 0 : index
    %c0_444 = arith.constant 0 : index
    %1064 = vector.load %arg15[%c1_442, %c0_443, %c0_444] : memref<2x1x32xf32, #tpu.memory_space<vmem>>, vector<1x1x32xf32>
    %1065 = vector.shape_cast %1064 : vector<1x1x32xf32> to vector<1x32xf32>
    %1066 = vector.broadcast %1065 : vector<1x32xf32> to vector<16x32xf32>
    %1067 = arith.addf %1063, %1066 : vector<16x32xf32>
    %1068 = arith.addf %1012, %1067 : vector<16x32xf32>
    %cst_445 = arith.constant dense<0.000000e+00> : vector<16xf32>
    %1069 = vector.multi_reduction <add>, %1068, %cst_445 [1] : vector<16x32xf32> to vector<16xf32>
    %1070 = vector.shape_cast %1069 : vector<16xf32> to vector<16x1xf32>
    %cst_446 = arith.constant 3.200000e+01 : f32
    %1071 = vector.broadcast %cst_446 : f32 to vector<16x1xf32>
    %1072 = arith.divf %1070, %1071 : vector<16x1xf32>
    %1073 = vector.broadcast %1072 : vector<16x1xf32> to vector<16x32xf32>
    %1074 = arith.subf %1068, %1073 : vector<16x32xf32>
    %1075 = arith.mulf %1074, %1074 : vector<16x32xf32>
    %cst_447 = arith.constant dense<0.000000e+00> : vector<16xf32>
    %1076 = vector.multi_reduction <add>, %1075, %cst_447 [1] : vector<16x32xf32> to vector<16xf32>
    %1077 = vector.shape_cast %1076 : vector<16xf32> to vector<16x1xf32>
    %cst_448 = arith.constant 3.200000e+01 : f32
    %1078 = vector.broadcast %cst_448 : f32 to vector<16x1xf32>
    %1079 = arith.divf %1077, %1078 : vector<16x1xf32>
    %1080 = vector.broadcast %1072 : vector<16x1xf32> to vector<16x32xf32>
    %1081 = arith.subf %1068, %1080 : vector<16x32xf32>
    %cst_449 = arith.constant 9.99999974E-6 : f32
    %1082 = vector.broadcast %cst_449 : f32 to vector<16x1xf32>
    %1083 = arith.addf %1079, %1082 : vector<16x1xf32>
    %1084 = math.rsqrt %1083 : vector<16x1xf32>
    %1085 = vector.broadcast %1084 : vector<16x1xf32> to vector<16x32xf32>
    %1086 = arith.mulf %1081, %1085 : vector<16x32xf32>
    %1087 = vector.broadcast %12 : vector<1x32xf32> to vector<16x32xf32>
    %1088 = arith.mulf %1086, %1087 : vector<16x32xf32>
    %1089 = vector.broadcast %13 : vector<1x32xf32> to vector<16x32xf32>
    %1090 = arith.addf %1088, %1089 : vector<16x32xf32>
    %1091 = arith.truncf %1090 : vector<16x32xf32> to vector<16x32xbf16>
    %cst_450 = arith.constant dense<0.000000e+00> : vector<16x128xf32>
    %1092 = tpu.matmul %1091, %10, %cst_450 {dimension_numbers = #tpu.dot_dimension_numbers<[1], [1], [0], [0], [0, 0, 1, 0], [], []>} : vector<16x32xbf16>, vector<128x32xbf16>, vector<16x128xf32> -> vector<16x128xf32>
    %c0_451 = arith.constant 0 : index
    %c0_452 = arith.constant 0 : index
    %1093 = vector.load %arg20[%c0_451, %c0_452] : memref<16x128xf32, #tpu.memory_space<vmem>>, vector<16x128xf32>
    tpu.vector_store %arg20[%c0_451, %c0_452], %1092 {strides = array<i32>} : memref<16x128xf32, #tpu.memory_space<vmem>>, vector<16x128xf32>,
    %c0_453 = arith.constant 0 : index
    %c0_454 = arith.constant 0 : index
    %1094 = vector.load %arg21[%c0_453, %c0_454] : memref<16x1xi32, #tpu.memory_space<vmem>>, vector<16x1xi32>
    tpu.vector_store %arg21[%c0_453, %c0_454], %728 {strides = array<i32>} : memref<16x1xi32, #tpu.memory_space<vmem>>, vector<16x1xi32>,
    return
  }
}

</mosaic_0001>

<llo_original>
// kernel: prompt_gpt2_forward.1
$region0: #{prompt_gpt2_forward.1}
  #allocation0 [shape = 'u32[]', space=smem, size = 0x4, offset = 0x4, fixed_abs, tag = 'smem constant byte address 0x4 - core index']
  #allocation1 [shape = 'u32[144,128]{1,0:T(1,128)}', space=vmem, size = 0x12000, scoped, tag = 'internal scratch']
  %s0 = inlined_call_operand.vmem [shape: s32[16,1], index: 0, kind: input, shape index: {}]
  %s1 = inlined_call_operand.vmem [shape: s32[1,16], index: 1, kind: input, shape index: {}]
  %s2 = inlined_call_operand.vmem [shape: f32[1,16], index: 2, kind: input, shape index: {}]
  %s3 = inlined_call_operand.vmem [shape: s32[16,1], index: 3, kind: input, shape index: {}]
  %s4 = inlined_call_operand.vmem [shape: f32[2,1,32], index: 4, kind: input, shape index: {}]
  %s5 = inlined_call_operand.vmem [shape: f32[2,1,32], index: 5, kind: input, shape index: {}]
  %s6 = inlined_call_operand.vmem [shape: bf16[2,32,96], index: 6, kind: input, shape index: {}]
  %s7 = inlined_call_operand.vmem [shape: f32[2,1,96], index: 7, kind: input, shape index: {}]
  %s8 = inlined_call_operand.vmem [shape: bf16[2,32,32], index: 8, kind: input, shape index: {}]
  %s9 = inlined_call_operand.vmem [shape: f32[2,1,32], index: 9, kind: input, shape index: {}]
  %s10 = inlined_call_operand.vmem [shape: f32[2,1,32], index: 10, kind: input, shape index: {}]
  %s11 = inlined_call_operand.vmem [shape: f32[2,1,32], index: 11, kind: input, shape index: {}]
  %s12 = inlined_call_operand.vmem [shape: bf16[2,32,128], index: 12, kind: input, shape index: {}]
  %s13 = inlined_call_operand.vmem [shape: f32[2,1,128], index: 13, kind: input, shape index: {}]
  %s14 = inlined_call_operand.vmem [shape: bf16[2,128,32], index: 14, kind: input, shape index: {}]
  %s15 = inlined_call_operand.vmem [shape: f32[2,1,32], index: 15, kind: input, shape index: {}]
  %s16 = inlined_call_operand.vmem [shape: f32[1,32], index: 16, kind: input, shape index: {}]
  %s17 = inlined_call_operand.vmem [shape: f32[1,32], index: 17, kind: input, shape index: {}]
  %s18 = inlined_call_operand.vmem [shape: bf16[128,32], index: 18, kind: input, shape index: {}]
  %s19 = inlined_call_operand.vmem [shape: bf16[64,32], index: 19, kind: input, shape index: {}]
  %s20 = inlined_call_operand.vmem [shape: f32[16,128], index: 20, kind: output, shape index: {0}]
  %s21 = inlined_call_operand.vmem [shape: s32[16,1], index: 21, kind: output, shape index: {1}]
  %22 = xla_tuple %s20, %s21
  %s23 = sld [smem:[#allocation0]]
  $region98: #{prompt_gpt2_forward.1} parent=0
    _
  %s25 = ssub.s32 1, %s23
  %s26 = scalar_select 0, %s25, %s23
  // Predicated region
  $region2: #{prompt_gpt2_forward.1} parent=0 // pred_check
    _
  $region3: #{prompt_gpt2_forward.1} parent=0 // pred_check_branch
    %28 = sbr.rel (0) target = $region5
  $region4: #{prompt_gpt2_forward.1} parent=0 // pred_region
    _
  $region5: #{prompt_gpt2_forward.1} parent=0 // pred_fallthru
    _
  // Predicated region
  $region6: #{prompt_gpt2_forward.1} parent=0 // pred_check
    _
  $region7: #{prompt_gpt2_forward.1} parent=0 // pred_check_branch
    %30 = sbr.rel (0) target = $region9
  $region8: #{prompt_gpt2_forward.1} parent=0 // pred_region
    _
  $region9: #{prompt_gpt2_forward.1} parent=0 // pred_fallthru
    _
  // Predicated region
  $region10: #{prompt_gpt2_forward.1} parent=0 // pred_check
    _
  $region11: #{prompt_gpt2_forward.1} parent=0 // pred_check_branch
    %32 = sbr.rel (0) target = $region13
  $region12: #{prompt_gpt2_forward.1} parent=0 // pred_region
    _
  $region13: #{prompt_gpt2_forward.1} parent=0 // pred_fallthru
    _
  // Predicated region
  $region14: #{prompt_gpt2_forward.1} parent=0 // pred_check
    _
  $region15: #{prompt_gpt2_forward.1} parent=0 // pred_check_branch
    %34 = sbr.rel (0) target = $region17
  $region16: #{prompt_gpt2_forward.1} parent=0 // pred_region
    _
  $region17: #{prompt_gpt2_forward.1} parent=0 // pred_fallthru
    _
  // Predicated region
  $region18: #{prompt_gpt2_forward.1} parent=0 // pred_check
    _
  $region19: #{prompt_gpt2_forward.1} parent=0 // pred_check_branch
    %36 = sbr.rel (0) target = $region21
  $region20: #{prompt_gpt2_forward.1} parent=0 // pred_region
    _
  $region21: #{prompt_gpt2_forward.1} parent=0 // pred_fallthru
    _
  // Predicated region
  $region22: #{prompt_gpt2_forward.1} parent=0 // pred_check
    _
  $region23: #{prompt_gpt2_forward.1} parent=0 // pred_check_branch
    %38 = sbr.rel (0) target = $region25
  $region24: #{prompt_gpt2_forward.1} parent=0 // pred_region
    _
  $region25: #{prompt_gpt2_forward.1} parent=0 // pred_fallthru
    _
  // Predicated region
  $region26: #{prompt_gpt2_forward.1} parent=0 // pred_check
    _
  $region27: #{prompt_gpt2_forward.1} parent=0 // pred_check_branch
    %40 = sbr.rel (0) target = $region29
  $region28: #{prompt_gpt2_forward.1} parent=0 // pred_region
    _
  $region29: #{prompt_gpt2_forward.1} parent=0 // pred_fallthru
    _
  // Predicated region
  $region30: #{prompt_gpt2_forward.1} parent=0 // pred_check
    _
  $region31: #{prompt_gpt2_forward.1} parent=0 // pred_check_branch
    %42 = sbr.rel (0) target = $region33
  $region32: #{prompt_gpt2_forward.1} parent=0 // pred_region
    _
  $region33: #{prompt_gpt2_forward.1} parent=0 // pred_fallthru
    _
  // Predicated region
  $region34: #{prompt_gpt2_forward.1} parent=0 // pred_check
    _
  $region35: #{prompt_gpt2_forward.1} parent=0 // pred_check_branch
    %44 = sbr.rel (0) target = $region37
  $region36: #{prompt_gpt2_forward.1} parent=0 // pred_region
    _
  $region37: #{prompt_gpt2_forward.1} parent=0 // pred_fallthru
    _
  // Predicated region
  $region38: #{prompt_gpt2_forward.1} parent=0 // pred_check
    _
  $region39: #{prompt_gpt2_forward.1} parent=0 // pred_check_branch
    %46 = sbr.rel (0) target = $region41
  $region40: #{prompt_gpt2_forward.1} parent=0 // pred_region
    _
  $region41: #{prompt_gpt2_forward.1} parent=0 // pred_fallthru
    _
  // Predicated region
  $region42: #{prompt_gpt2_forward.1} parent=0 // pred_check
    _
  $region43: #{prompt_gpt2_forward.1} parent=0 // pred_check_branch
    %48 = sbr.rel (0) target = $region45
  $region44: #{prompt_gpt2_forward.1} parent=0 // pred_region
    _
  $region45: #{prompt_gpt2_forward.1} parent=0 // pred_fallthru
    _
  // Predicated region
  $region46: #{prompt_gpt2_forward.1} parent=0 // pred_check
    _
  $region47: #{prompt_gpt2_forward.1} parent=0 // pred_check_branch
    %50 = sbr.rel (0) target = $region49
  $region48: #{prompt_gpt2_forward.1} parent=0 // pred_region
    _
  $region49: #{prompt_gpt2_forward.1} parent=0 // pred_fallthru
    _
  // Predicated region
  $region50: #{prompt_gpt2_forward.1} parent=0 // pred_check
    _
  $region51: #{prompt_gpt2_forward.1} parent=0 // pred_check_branch
    %52 = sbr.rel (0) target = $region53
  $region52: #{prompt_gpt2_forward.1} parent=0 // pred_region
    _
  $region53: #{prompt_gpt2_forward.1} parent=0 // pred_fallthru
    _
  // Predicated region
  $region54: #{prompt_gpt2_forward.1} parent=0 // pred_check
    _
  $region55: #{prompt_gpt2_forward.1} parent=0 // pred_check_branch
    %54 = sbr.rel (0) target = $region57
  $region56: #{prompt_gpt2_forward.1} parent=0 // pred_region
    _
  $region57: #{prompt_gpt2_forward.1} parent=0 // pred_fallthru
    _
  // Predicated region
  $region58: #{prompt_gpt2_forward.1} parent=0 // pred_check
    _
  $region59: #{prompt_gpt2_forward.1} parent=0 // pred_check_branch
    %56 = sbr.rel (0) target = $region61
  $region60: #{prompt_gpt2_forward.1} parent=0 // pred_region
    _
  $region61: #{prompt_gpt2_forward.1} parent=0 // pred_fallthru
    _
  // Predicated region
  $region62: #{prompt_gpt2_forward.1} parent=0 // pred_check
    _
  $region63: #{prompt_gpt2_forward.1} parent=0 // pred_check_branch
    %58 = sbr.rel (0) target = $region65
  $region64: #{prompt_gpt2_forward.1} parent=0 // pred_region
    _
  $region65: #{prompt_gpt2_forward.1} parent=0 // pred_fallthru
    _
  // Predicated region
  $region66: #{prompt_gpt2_forward.1} parent=0 // pred_check
    _
  $region67: #{prompt_gpt2_forward.1} parent=0 // pred_check_branch
    %60 = sbr.rel (0) target = $region69
  $region68: #{prompt_gpt2_forward.1} parent=0 // pred_region
    _
  $region69: #{prompt_gpt2_forward.1} parent=0 // pred_fallthru
    _
  // Predicated region
  $region70: #{prompt_gpt2_forward.1} parent=0 // pred_check
    _
  $region71: #{prompt_gpt2_forward.1} parent=0 // pred_check_branch
    %62 = sbr.rel (0) target = $region73
  $region72: #{prompt_gpt2_forward.1} parent=0 // pred_region
    _
  $region73: #{prompt_gpt2_forward.1} parent=0 // pred_fallthru
    _
  // Predicated region
  $region74: #{prompt_gpt2_forward.1} parent=0 // pred_check
    _
  $region75: #{prompt_gpt2_forward.1} parent=0 // pred_check_branch
    %64 = sbr.rel (0) target = $region77
  $region76: #{prompt_gpt2_forward.1} parent=0 // pred_region
    _
  $region77: #{prompt_gpt2_forward.1} parent=0 // pred_fallthru
    _
  // Predicated region
  $region78: #{prompt_gpt2_forward.1} parent=0 // pred_check
    _
  $region79: #{prompt_gpt2_forward.1} parent=0 // pred_check_branch
    %66 = sbr.rel (0) target = $region81
  $region80: #{prompt_gpt2_forward.1} parent=0 // pred_region
    _
  $region81: #{prompt_gpt2_forward.1} parent=0 // pred_fallthru
    _
  %v68 = vlaneseq
  %v69 = vshrl.u32 %v68, 7
  %v70 = vadd.s32 %v69, 8
  %v71 = vlaneseq
  %v72 = vand.u32 %v71, 127
  %vm73 = vcmp.le.s32.totalorder %v72, %v69
  %vm74 = vcmp.le.s32.totalorder %v72, %v70
  %v75 = vsel %vm73, 1, 0
  %v76 = vsel %vm74, 1, 0
  %v77 = vcvt.s32.f32 %v75
  %v78 = vcvt.s32.f32 %v76
  %v79 = vld [vmem:[%s18] sm:$0xf]
  %v80 = vld [vmem:[%s18 + $0x4] sm:$0xf]
  %v81 = vld [vmem:[%s18 + $0x8] sm:$0xf]
  %v82 = vld [vmem:[%s18 + $0xc] sm:$0xf]
  %v83 = vld [vmem:[%s18 + $0x10] sm:$0xf]
  %v84 = vld [vmem:[%s18 + $0x14] sm:$0xf]
  %v85 = vld [vmem:[%s18 + $0x18] sm:$0xf]
  %v86 = vld [vmem:[%s18 + $0x1c] sm:$0xf]
  %v87 = vld [vmem:[%s18 + $0x20] sm:$0xf]
  %v88 = vld [vmem:[%s18 + $0x24] sm:$0xf]
  %v89 = vld [vmem:[%s18 + $0x28] sm:$0xf]
  %v90 = vld [vmem:[%s18 + $0x2c] sm:$0xf]
  %v91 = vld [vmem:[%s18 + $0x30] sm:$0xf]
  %v92 = vld [vmem:[%s18 + $0x34] sm:$0xf]
  %v93 = vld [vmem:[%s18 + $0x38] sm:$0xf]
  %v94 = vld [vmem:[%s18 + $0x3c] sm:$0xf]
  %v95 = vld [vmem:[%s19] sm:$0xf]
  %v96 = vld [vmem:[%s19 + $0x4] sm:$0xf]
  %v97 = vld [vmem:[%s19 + $0x8] sm:$0xf]
  %v98 = vld [vmem:[%s19 + $0xc] sm:$0xf]
  %v99 = vld [vmem:[%s19 + $0x10] sm:$0xf]
  %v100 = vld [vmem:[%s19 + $0x14] sm:$0xf]
  %v101 = vld [vmem:[%s19 + $0x18] sm:$0xf]
  %v102 = vld [vmem:[%s19 + $0x1c] sm:$0xf]
  %v103 = vld [vmem:[%s16] sm:$0x1]
  %v104 = vld [vmem:[%s17] sm:$0x1]
  %v105 = vld [vmem:[%s2] sm:$0x1]
  %vm106 = vcmp.gt.f32.partialorder %v105, 0.5
  %v107 = vld [vmem:[%s3] sm:$0xff]
  %v108 = vld [vmem:[%s3 + $0x8] sm:$0xff]
  %v109 = vld [vmem:[%s0] sm:$0xff]
  %v110 = vld [vmem:[%s0 + $0x8] sm:$0xff]
  %v111 = vld [vmem:[%s1] sm:$0x1]
  %vm112 = vcmp.ge.s32.totalorder %v72, 8
  %vm113 = vcmp.lt.s32.totalorder %v72, 8
  %vm114 = vmand %vm112, %vm113
  %vm115 = vmor %vm106, %vm114
  %116 = vset.pattern.permute.xlu0 0
  %117 = vperm.xlu0 %116, %v109
  %v118 = vpop.permute.xlu0 %117
  %119 = vset.pattern.permute.xlu0 0
  %120 = vperm.xlu0 %119, %v110
  %v121 = vpop.permute.xlu0 %120
  %vm122 = vcmp.eq.s32.totalorder %v118, %v72
  %vm123 = vcmp.eq.s32.totalorder %v121, %v72
  %v124 = vsel %vm122, 1, 0
  %v125 = vsel %vm123, 1, 0
  %v126 = vcvt.s32.f32 %v124
  %v127 = vcvt.s32.f32 %v125
  %v128 = vpack.c.bf16 %v127, %v126
  %129 = vset.pattern.permute.xlu0 0
  %130 = vperm.xlu0 %129, %v107
  %v131 = vpop.permute.xlu0 %130
  %132 = vset.pattern.permute.xlu0 0
  %133 = vperm.xlu0 %132, %v108
  %v134 = vpop.permute.xlu0 %133
  %vm135 = vcmp.eq.s32.totalorder %v131, %v72
  %vm136 = vcmp.eq.s32.totalorder %v134, %v72
  %v137 = vsel %vm135, 1, 0
  %v138 = vsel %vm136, 1, 0
  %v139 = vcvt.s32.f32 %v137
  %v140 = vcvt.s32.f32 %v138
  %v141 = vpack.c.bf16 %v140, %v139
  %v150 = vunpack.c.l.b16 %v95
  %v151 = vunpack.c.l.b16 %v96
  %v152 = vunpack.c.l.b16 %v97
  %v153 = vunpack.c.l.b16 %v98
  %v154 = vunpack.c.l.b16 %v99
  %v155 = vunpack.c.l.b16 %v100
  %v156 = vunpack.c.l.b16 %v101
  %v157 = vunpack.c.l.b16 %v102
  %v158 = vpack.c.b16 %v151, %v150
  %v159 = vpack.c.b16 %v153, %v152
  %v160 = vpack.c.b16 %v155, %v154
  %v161 = vpack.c.b16 %v157, %v156
  %vm166 = vcmask 523264
  %v168 = vsel %vm166, %v141, 0
  %170 = vmatprep.subr.bf16.mxu0 0
  %171 = vmatpush1.bf16.msra.mxu0 %v158
  %172 = vmatprep.subr.bf16.mxu0 0
  %173 = vmatpush1.bf16.msra.mxu0 %v159
  %174 = vmatprep.subr.bf16.mxu0 0
  %175 = vmatpush1.bf16.msra.mxu0 %v160
  %176 = vmatprep.subr.bf16.mxu0 0
  %177 = vmatpush1.bf16.msra.mxu0 %v161
  %178 = vmatprep.subr.bf16.mxu0 0
  %179 = vmatpush1.bf16.msra.mxu0 0
  %180 = vmatprep.subr.bf16.mxu0 0
  %181 = vmatpush1.bf16.msra.mxu0 0
  %182 = vmatprep.subr.bf16.mxu0 0
  %183 = vmatpush1.bf16.msra.mxu0 0
  %184 = vmatprep.subr.bf16.mxu0 0
  %185 = vmatpush1.bf16.msra.mxu0 0
  %186 = vmatprep.subr.bf16.mxu0 0
  %187 = vmatpush1.bf16.msra.mxu0 0
  %188 = vmatprep.subr.bf16.mxu0 0
  %189 = vmatpush1.bf16.msra.mxu0 0
  %190 = vmatprep.subr.bf16.mxu0 0
  %191 = vmatpush1.bf16.msra.mxu0 0
  %192 = vmatprep.subr.bf16.mxu0 0
  %193 = vmatpush1.bf16.msra.mxu0 0
  %194 = vmatprep.subr.bf16.mxu0 0
  %195 = vmatpush1.bf16.msra.mxu0 0
  %196 = vmatprep.subr.bf16.mxu0 0
  %197 = vmatpush1.bf16.msra.mxu0 0
  %198 = vmatprep.subr.bf16.mxu0 0
  %199 = vmatpush1.bf16.msra.mxu0 0
  %200 = vmatprep.subr.bf16.mxu0 0
  %201 = vmatpush1.bf16.msra.mxu0 0
  %202 = vmatprep.mubr.bf16.mxu0 0
  %203 = vmatmul.mubr.bf16.gmra.mrb[0].mxu0 %v168
  %v204 = vpop.f32.mrb[0].mxu0
  %v205 = vadd.f32 0.0, %v204
  %v206 = vpop.f32.mrb[0].mxu0
  %v207 = vpop.f32.mrb[0].mxu0
  %v208 = vadd.f32 0.0, %v207
  %v209 = vpop.f32.mrb[0].mxu0
  %210 = vdwg.mxu0
  %v227 = vunpack.c.l.b16 %v79
  %v228 = vunpack.c.l.b16 %v80
  %v229 = vunpack.c.l.b16 %v81
  %v230 = vunpack.c.l.b16 %v82
  %v231 = vunpack.c.l.b16 %v83
  %v232 = vunpack.c.l.b16 %v84
  %v233 = vunpack.c.l.b16 %v85
  %v234 = vunpack.c.l.b16 %v86
  %v235 = vunpack.c.l.b16 %v87
  %v236 = vunpack.c.l.b16 %v88
  %v237 = vunpack.c.l.b16 %v89
  %v238 = vunpack.c.l.b16 %v90
  %v239 = vunpack.c.l.b16 %v91
  %v240 = vunpack.c.l.b16 %v92
  %v241 = vunpack.c.l.b16 %v93
  %v242 = vunpack.c.l.b16 %v94
  %v243 = vpack.c.b16 %v228, %v227
  %v244 = vpack.c.b16 %v230, %v229
  %v245 = vpack.c.b16 %v232, %v231
  %v246 = vpack.c.b16 %v234, %v233
  %v247 = vpack.c.b16 %v236, %v235
  %v248 = vpack.c.b16 %v238, %v237
  %v249 = vpack.c.b16 %v240, %v239
  %v250 = vpack.c.b16 %v242, %v241
  %259 = vmatprep.subr.bf16.mxu0 0
  %260 = vmatpush1.bf16.msra.mxu0 %v243
  %261 = vmatprep.subr.bf16.mxu0 0
  %262 = vmatpush1.bf16.msra.mxu0 %v244
  %263 = vmatprep.subr.bf16.mxu0 0
  %264 = vmatpush1.bf16.msra.mxu0 %v245
  %265 = vmatprep.subr.bf16.mxu0 0
  %266 = vmatpush1.bf16.msra.mxu0 %v246
  %267 = vmatprep.subr.bf16.mxu0 0
  %268 = vmatpush1.bf16.msra.mxu0 %v247
  %269 = vmatprep.subr.bf16.mxu0 0
  %270 = vmatpush1.bf16.msra.mxu0 %v248
  %271 = vmatprep.subr.bf16.mxu0 0
  %272 = vmatpush1.bf16.msra.mxu0 %v249
  %273 = vmatprep.subr.bf16.mxu0 0
  %274 = vmatpush1.bf16.msra.mxu0 %v250
  %275 = vmatprep.subr.bf16.mxu0 0
  %276 = vmatpush1.bf16.msra.mxu0 0
  %277 = vmatprep.subr.bf16.mxu0 0
  %278 = vmatpush1.bf16.msra.mxu0 0
  %279 = vmatprep.subr.bf16.mxu0 0
  %280 = vmatpush1.bf16.msra.mxu0 0
  %281 = vmatprep.subr.bf16.mxu0 0
  %282 = vmatpush1.bf16.msra.mxu0 0
  %283 = vmatprep.subr.bf16.mxu0 0
  %284 = vmatpush1.bf16.msra.mxu0 0
  %285 = vmatprep.subr.bf16.mxu0 0
  %286 = vmatpush1.bf16.msra.mxu0 0
  %287 = vmatprep.subr.bf16.mxu0 0
  %288 = vmatpush1.bf16.msra.mxu0 0
  %289 = vmatprep.subr.bf16.mxu0 0
  %290 = vmatpush1.bf16.msra.mxu0 0
  %291 = vmatprep.mubr.bf16.mxu0 0
  %292 = vmatmul.mubr.bf16.gmra.mrb[0].mxu0 %v128
  %v293 = vpop.f32.mrb[0].mxu0
  %v294 = vadd.f32 %v205, %v293
  %v295 = vpop.f32.mrb[0].mxu0
  %v296 = vpop.f32.mrb[0].mxu0
  %v297 = vadd.f32 %v208, %v296
  %v298 = vpop.f32.mrb[0].mxu0
  %299 = vdwg.mxu0
  %v300 = vsel %vm115, 1, 0
  %v301 = vlaneseq
  %v302 = vshrl.u32 %v301, 7
  %v303 = vsub.s32 0, %v302
  %v304 = vrot.slane %v300, %v303
  %vm305 = vcmp.eq.s32.totalorder %v304, 1
  %vm306 = vmand %vm73, %vm305
  %vm307 = vmand %vm74, %vm305
  %v308 = vsel %vm306, 0.0, -1e+09
  %v309 = vsel %vm307, 0.0, -1e+09
  %v310 = vld [vmem:[%s4] sm:$0x1]
  %v311 = vld [vmem:[%s5] sm:$0x1]
  %vm312 = vcmask 261120
  %v313 = vsel %vm312, %v294, 0.0
  %314 = vadd.xlane.f32.xlu0 %v313
  %v315 = vpop.xlane.xlu0 %314
  %v316 = vsel %vm312, %v297, 0.0
  %317 = vadd.xlane.f32.xlu0 %v316
  %v318 = vpop.xlane.xlu0 %317
  %v319 = vrcp.pop 32.0
  %v320 = vmul.f32 %v315, %v319
  %v321 = vmul.f32 %v318, %v319
  %v322 = vsub.f32 %v294, %v320
  %v323 = vsub.f32 %v297, %v321
  %v324 = vmul.f32 %v322, %v322
  %v325 = vmul.f32 %v323, %v323
  %v326 = vsel %vm312, %v324, 0.0
  %327 = vadd.xlane.f32.xlu0 %v326
  %v328 = vpop.xlane.xlu0 %327
  %v329 = vsel %vm312, %v325, 0.0
  %330 = vadd.xlane.f32.xlu0 %v329
  %v331 = vpop.xlane.xlu0 %330
  %v332 = vmul.f32 %v328, %v319
  %v333 = vmul.f32 %v331, %v319
  %v334 = vadd.f32 %v332, 1e-05
  %v335 = vadd.f32 %v333, 1e-05
  %v336 = vrsqrt.pop %v334
  %v337 = vrsqrt.pop %v335
  %v338 = vmul.f32 %v322, %v336
  %v339 = vmul.f32 %v323, %v337
  %v341 = vlaneseq
  %v342 = vshrl.u32 %v341, 7
  %v343 = vsub.s32 0, %v342
  %v344 = vrot.slane %v310, %v343
  %v346 = vmul.f32 %v338, %v344
  %v347 = vmul.f32 %v339, %v344
  %v349 = vlaneseq
  %v350 = vshrl.u32 %v349, 7
  %v351 = vsub.s32 0, %v350
  %v352 = vrot.slane %v311, %v351
  %v354 = vadd.f32 %v346, %v352
  %v355 = vadd.f32 %v347, %v352
  %v356 = vpack.c.bf16 %v355, %v354
  %v357 = vld [vmem:[%s6] sm:$0xf]
  %v358 = vld [vmem:[%s6 + $0x4] sm:$0xf]
  %v359 = vld [vmem:[%s6 + $0x8] sm:$0xf]
  %v360 = vld [vmem:[%s6 + $0xc] sm:$0xf]
  %v361 = vld [vmem:[%s7] sm:$0x1]
  %v363 = vlaneseq
  %v364 = vshrl.u32 %v363, 7
  %v365 = vsub.s32 0, %v364
  %v366 = vrot.slane %v361, %v365
  %v372 = vunpack.c.l.b16 %v357
  %v373 = vunpack.c.l.b16 %v358
  %v374 = vunpack.c.l.b16 %v359
  %v375 = vunpack.c.l.b16 %v360
  %v376 = vpack.c.b16 %v373, %v372
  %v377 = vpack.c.b16 %v375, %v374
  %v381 = vsel %vm312, %v356, 0
  %383 = vmatprep.subr.bf16.mxu0 0
  %384 = vmatpush1.bf16.msra.mxu0 %v376
  %385 = vmatprep.subr.bf16.mxu0 0
  %386 = vmatpush1.bf16.msra.mxu0 %v377
  %387 = vmatprep.subr.bf16.mxu0 0
  %388 = vmatpush1.bf16.msra.mxu0 0
  %389 = vmatprep.subr.bf16.mxu0 0
  %390 = vmatpush1.bf16.msra.mxu0 0
  %391 = vmatprep.subr.bf16.mxu0 0
  %392 = vmatpush1.bf16.msra.mxu0 0
  %393 = vmatprep.subr.bf16.mxu0 0
  %394 = vmatpush1.bf16.msra.mxu0 0
  %395 = vmatprep.subr.bf16.mxu0 0
  %396 = vmatpush1.bf16.msra.mxu0 0
  %397 = vmatprep.subr.bf16.mxu0 0
  %398 = vmatpush1.bf16.msra.mxu0 0
  %399 = vmatprep.subr.bf16.mxu0 0
  %400 = vmatpush1.bf16.msra.mxu0 0
  %401 = vmatprep.subr.bf16.mxu0 0
  %402 = vmatpush1.bf16.msra.mxu0 0
  %403 = vmatprep.subr.bf16.mxu0 0
  %404 = vmatpush1.bf16.msra.mxu0 0
  %405 = vmatprep.subr.bf16.mxu0 0
  %406 = vmatpush1.bf16.msra.mxu0 0
  %407 = vmatprep.subr.bf16.mxu0 0
  %408 = vmatpush1.bf16.msra.mxu0 0
  %409 = vmatprep.subr.bf16.mxu0 0
  %410 = vmatpush1.bf16.msra.mxu0 0
  %411 = vmatprep.subr.bf16.mxu0 0
  %412 = vmatpush1.bf16.msra.mxu0 0
  %413 = vmatprep.subr.bf16.mxu0 0
  %414 = vmatpush1.bf16.msra.mxu0 0
  %415 = vmatprep.mubr.bf16.mxu0 0
  %416 = vmatmul.mubr.bf16.gmra.mrb[0].mxu0 %v381
  %v417 = vpop.f32.mrb[0].mxu0
  %v418 = vadd.f32 %v366, %v417
  %v419 = vpop.f32.mrb[0].mxu0
  %v420 = vpop.f32.mrb[0].mxu0
  %v421 = vadd.f32 %v366, %v420
  %v422 = vpop.f32.mrb[0].mxu0
  %423 = vdwg.mxu0
  %v424 = vld [vmem:[%s8] sm:$0xf]
  %v425 = vld [vmem:[%s8 + $0x4] sm:$0xf]
  %v426 = vld [vmem:[%s8 + $0x8] sm:$0xf]
  %v427 = vld [vmem:[%s8 + $0xc] sm:$0xf]
  %v428 = vpack.c.bf16 %v421, %v418
  %430 = vrot.lane.b32.xlu0 %v428, 96
  %v431 = vpop.permute.xlu0 %430
  %vm432 = vcmask 130048
  %v434 = vsel %vm432, %v428, 0
  %v437 = vsel %vm432, %v431, 0
  %439 = vmatprep.subr.bf16.mxu0 0
  %440 = vmatpush1.bf16.xpose.msra.mxu0 %v437
  %441 = vmatprep.subr.bf16.mxu0 0
  %442 = vmatpush1.bf16.xpose.msra.mxu0 0
  %443 = vmatprep.subr.bf16.mxu0 0
  %444 = vmatpush1.bf16.xpose.msra.mxu0 0
  %445 = vmatprep.subr.bf16.mxu0 0
  %446 = vmatpush1.bf16.xpose.msra.mxu0 0
  %447 = vmatprep.subr.bf16.mxu0 0
  %448 = vmatpush1.bf16.xpose.msra.mxu0 0
  %449 = vmatprep.subr.bf16.mxu0 0
  %450 = vmatpush1.bf16.xpose.msra.mxu0 0
  %451 = vmatprep.subr.bf16.mxu0 0
  %452 = vmatpush1.bf16.xpose.msra.mxu0 0
  %453 = vmatprep.subr.bf16.mxu0 0
  %454 = vmatpush1.bf16.xpose.msra.mxu0 0
  %455 = vmatprep.subr.bf16.mxu0 0
  %456 = vmatpush1.bf16.xpose.msra.mxu0 0
  %457 = vmatprep.subr.bf16.mxu0 0
  %458 = vmatpush1.bf16.xpose.msra.mxu0 0
  %459 = vmatprep.subr.bf16.mxu0 0
  %460 = vmatpush1.bf16.xpose.msra.mxu0 0
  %461 = vmatprep.subr.bf16.mxu0 0
  %462 = vmatpush1.bf16.xpose.msra.mxu0 0
  %463 = vmatprep.subr.bf16.mxu0 0
  %464 = vmatpush1.bf16.xpose.msra.mxu0 0
  %465 = vmatprep.subr.bf16.mxu0 0
  %466 = vmatpush1.bf16.xpose.msra.mxu0 0
  %467 = vmatprep.subr.bf16.mxu0 0
  %468 = vmatpush1.bf16.xpose.msra.mxu0 0
  %469 = vmatprep.subr.bf16.mxu0 0
  %470 = vmatpush1.bf16.xpose.msra.mxu0 0
  %471 = vmatprep.mubr.bf16.mxu0 0
  %472 = vmatmul.mubr.bf16.gmra.mrb[0].mxu0 %v434
  %v473 = vpop.f32.mrb[0].mxu0
  %v474 = vadd.f32 0.0, %v473
  %v475 = vpop.f32.mrb[0].mxu0
  %v476 = vpop.f32.mrb[0].mxu0
  %v477 = vadd.f32 0.0, %v476
  %v478 = vpop.f32.mrb[0].mxu0
  %479 = vdwg.mxu0
  %v480 = vmul.f32 %v474, 0.25
  %v481 = vmul.f32 %v477, 0.25
  %v482 = vadd.f32 %v480, %v308
  %v483 = vadd.f32 %v481, %v309
  %v484 = vsel %vm432, %v482, -inf
  %485 = vmax.xlane.f32.xlu0 %v484
  %v486 = vpop.xlane.xlu0 %485
  %v487 = vsel %vm432, %v483, -inf
  %488 = vmax.xlane.f32.xlu0 %v487
  %v489 = vpop.xlane.xlu0 %488
  %v490 = vsub.f32 %v482, %v486
  %v491 = vsub.f32 %v483, %v489
  %v492 = vmul.f32 %v490, 1.442695
  %v493 = vpow.pop %v492
  %v494 = vmul.f32 %v491, 1.442695
  %v495 = vpow.pop %v494
  %v496 = vsel %vm432, %v493, 0.0
  %497 = vadd.xlane.f32.xlu0 %v496
  %v498 = vpop.xlane.xlu0 %497
  %v499 = vsel %vm432, %v495, 0.0
  %500 = vadd.xlane.f32.xlu0 %v499
  %v501 = vpop.xlane.xlu0 %500
  %v502 = vrcp.pop %v498
  %v503 = vmul.f32 %v493, %v502
  %v504 = vrcp.pop %v501
  %v505 = vmul.f32 %v495, %v504
  %v506 = vpack.c.bf16 %v505, %v503
  %507 = vrot.lane.b32.xlu0 %v428, 64
  %v508 = vpop.permute.xlu0 %507
  %v511 = vsel %vm432, %v506, 0
  %513 = vmatprep.subr.bf16.mxu0 0
  %514 = vmatpush1.bf16.msra.mxu0 %v508
  %515 = vmatprep.subr.bf16.mxu0 0
  %516 = vmatpush1.bf16.msra.mxu0 0
  %517 = vmatprep.subr.bf16.mxu0 0
  %518 = vmatpush1.bf16.msra.mxu0 0
  %519 = vmatprep.subr.bf16.mxu0 0
  %520 = vmatpush1.bf16.msra.mxu0 0
  %521 = vmatprep.subr.bf16.mxu0 0
  %522 = vmatpush1.bf16.msra.mxu0 0
  %523 = vmatprep.subr.bf16.mxu0 0
  %524 = vmatpush1.bf16.msra.mxu0 0
  %525 = vmatprep.subr.bf16.mxu0 0
  %526 = vmatpush1.bf16.msra.mxu0 0
  %527 = vmatprep.subr.bf16.mxu0 0
  %528 = vmatpush1.bf16.msra.mxu0 0
  %529 = vmatprep.subr.bf16.mxu0 0
  %530 = vmatpush1.bf16.msra.mxu0 0
  %531 = vmatprep.subr.bf16.mxu0 0
  %532 = vmatpush1.bf16.msra.mxu0 0
  %533 = vmatprep.subr.bf16.mxu0 0
  %534 = vmatpush1.bf16.msra.mxu0 0
  %535 = vmatprep.subr.bf16.mxu0 0
  %536 = vmatpush1.bf16.msra.mxu0 0
  %537 = vmatprep.subr.bf16.mxu0 0
  %538 = vmatpush1.bf16.msra.mxu0 0
  %539 = vmatprep.subr.bf16.mxu0 0
  %540 = vmatpush1.bf16.msra.mxu0 0
  %541 = vmatprep.subr.bf16.mxu0 0
  %542 = vmatpush1.bf16.msra.mxu0 0
  %543 = vmatprep.subr.bf16.mxu0 0
  %544 = vmatpush1.bf16.msra.mxu0 0
  %545 = vmatprep.mubr.bf16.mxu0 0
  %546 = vmatmul.mubr.bf16.gmra.mrb[0].mxu0 %v511
  %v547 = vpop.f32.mrb[0].mxu0
  %v548 = vadd.f32 0.0, %v547
  %v549 = vpop.f32.mrb[0].mxu0
  %v550 = vpop.f32.mrb[0].mxu0
  %v551 = vadd.f32 0.0, %v550
  %v552 = vpop.f32.mrb[0].mxu0
  %553 = vdwg.mxu0
  %v554 = vpack.c.bf16 %v551, %v548
  %555 = vrot.lane.b32.xlu0 %v428, 112
  %v556 = vpop.permute.xlu0 %555
  %557 = vrot.lane.b32.xlu0 %v428, 80
  %v558 = vpop.permute.xlu0 %557
  %v560 = vsel %vm432, %v556, 0
  %v563 = vsel %vm432, %v558, 0
  %565 = vmatprep.subr.bf16.mxu0 0
  %566 = vmatpush1.bf16.xpose.msra.mxu0 %v563
  %567 = vmatprep.subr.bf16.mxu0 0
  %568 = vmatpush1.bf16.xpose.msra.mxu0 0
  %569 = vmatprep.subr.bf16.mxu0 0
  %570 = vmatpush1.bf16.xpose.msra.mxu0 0
  %571 = vmatprep.subr.bf16.mxu0 0
  %572 = vmatpush1.bf16.xpose.msra.mxu0 0
  %573 = vmatprep.subr.bf16.mxu0 0
  %574 = vmatpush1.bf16.xpose.msra.mxu0 0
  %575 = vmatprep.subr.bf16.mxu0 0
  %576 = vmatpush1.bf16.xpose.msra.mxu0 0
  %577 = vmatprep.subr.bf16.mxu0 0
  %578 = vmatpush1.bf16.xpose.msra.mxu0 0
  %579 = vmatprep.subr.bf16.mxu0 0
  %580 = vmatpush1.bf16.xpose.msra.mxu0 0
  %581 = vmatprep.subr.bf16.mxu0 0
  %582 = vmatpush1.bf16.xpose.msra.mxu0 0
  %583 = vmatprep.subr.bf16.mxu0 0
  %584 = vmatpush1.bf16.xpose.msra.mxu0 0
  %585 = vmatprep.subr.bf16.mxu0 0
  %586 = vmatpush1.bf16.xpose.msra.mxu0 0
  %587 = vmatprep.subr.bf16.mxu0 0
  %588 = vmatpush1.bf16.xpose.msra.mxu0 0
  %589 = vmatprep.subr.bf16.mxu0 0
  %590 = vmatpush1.bf16.xpose.msra.mxu0 0
  %591 = vmatprep.subr.bf16.mxu0 0
  %592 = vmatpush1.bf16.xpose.msra.mxu0 0
  %593 = vmatprep.subr.bf16.mxu0 0
  %594 = vmatpush1.bf16.xpose.msra.mxu0 0
  %595 = vmatprep.subr.bf16.mxu0 0
  %596 = vmatpush1.bf16.xpose.msra.mxu0 0
  %597 = vmatprep.mubr.bf16.mxu0 0
  %598 = vmatmul.mubr.bf16.gmra.mrb[0].mxu0 %v560
  %v599 = vpop.f32.mrb[0].mxu0
  %v600 = vadd.f32 0.0, %v599
  %v601 = vpop.f32.mrb[0].mxu0
  %v602 = vpop.f32.mrb[0].mxu0
  %v603 = vadd.f32 0.0, %v602
  %v604 = vpop.f32.mrb[0].mxu0
  %605 = vdwg.mxu0
  %v606 = vmul.f32 %v600, 0.25
  %v607 = vmul.f32 %v603, 0.25
  %v608 = vadd.f32 %v606, %v308
  %v609 = vadd.f32 %v607, %v309
  %v610 = vsel %vm432, %v608, -inf
  %611 = vmax.xlane.f32.xlu0 %v610
  %v612 = vpop.xlane.xlu0 %611
  %v613 = vsel %vm432, %v609, -inf
  %614 = vmax.xlane.f32.xlu0 %v613
  %v615 = vpop.xlane.xlu0 %614
  %v616 = vsub.f32 %v608, %v612
  %v617 = vsub.f32 %v609, %v615
  %v618 = vmul.f32 %v616, 1.442695
  %v619 = vpow.pop %v618
  %v620 = vmul.f32 %v617, 1.442695
  %v621 = vpow.pop %v620
  %v622 = vsel %vm432, %v619, 0.0
  %623 = vadd.xlane.f32.xlu0 %v622
  %v624 = vpop.xlane.xlu0 %623
  %v625 = vsel %vm432, %v621, 0.0
  %626 = vadd.xlane.f32.xlu0 %v625
  %v627 = vpop.xlane.xlu0 %626
  %v628 = vrcp.pop %v624
  %v629 = vmul.f32 %v619, %v628
  %v630 = vrcp.pop %v627
  %v631 = vmul.f32 %v621, %v630
  %v632 = vpack.c.bf16 %v631, %v629
  %633 = vrot.lane.b32.xlu0 %v428, 48
  %v634 = vpop.permute.xlu0 %633
  %v637 = vsel %vm432, %v632, 0
  %639 = vmatprep.subr.bf16.mxu0 0
  %640 = vmatpush1.bf16.msra.mxu0 %v634
  %641 = vmatprep.subr.bf16.mxu0 0
  %642 = vmatpush1.bf16.msra.mxu0 0
  %643 = vmatprep.subr.bf16.mxu0 0
  %644 = vmatpush1.bf16.msra.mxu0 0
  %645 = vmatprep.subr.bf16.mxu0 0
  %646 = vmatpush1.bf16.msra.mxu0 0
  %647 = vmatprep.subr.bf16.mxu0 0
  %648 = vmatpush1.bf16.msra.mxu0 0
  %649 = vmatprep.subr.bf16.mxu0 0
  %650 = vmatpush1.bf16.msra.mxu0 0
  %651 = vmatprep.subr.bf16.mxu0 0
  %652 = vmatpush1.bf16.msra.mxu0 0
  %653 = vmatprep.subr.bf16.mxu0 0
  %654 = vmatpush1.bf16.msra.mxu0 0
  %655 = vmatprep.subr.bf16.mxu0 0
  %656 = vmatpush1.bf16.msra.mxu0 0
  %657 = vmatprep.subr.bf16.mxu0 0
  %658 = vmatpush1.bf16.msra.mxu0 0
  %659 = vmatprep.subr.bf16.mxu0 0
  %660 = vmatpush1.bf16.msra.mxu0 0
  %661 = vmatprep.subr.bf16.mxu0 0
  %662 = vmatpush1.bf16.msra.mxu0 0
  %663 = vmatprep.subr.bf16.mxu0 0
  %664 = vmatpush1.bf16.msra.mxu0 0
  %665 = vmatprep.subr.bf16.mxu0 0
  %666 = vmatpush1.bf16.msra.mxu0 0
  %667 = vmatprep.subr.bf16.mxu0 0
  %668 = vmatpush1.bf16.msra.mxu0 0
  %669 = vmatprep.subr.bf16.mxu0 0
  %670 = vmatpush1.bf16.msra.mxu0 0
  %671 = vmatprep.mubr.bf16.mxu0 0
  %672 = vmatmul.mubr.bf16.gmra.mrb[0].mxu0 %v637
  %v673 = vpop.f32.mrb[0].mxu0
  %v674 = vadd.f32 0.0, %v673
  %v675 = vpop.f32.mrb[0].mxu0
  %v676 = vpop.f32.mrb[0].mxu0
  %v677 = vadd.f32 0.0, %v676
  %v678 = vpop.f32.mrb[0].mxu0
  %679 = vdwg.mxu0
  %v680 = vpack.c.bf16 %v677, %v674
  %v683 = vunpack.c.l.b16 %v426
  %v684 = vunpack.c.l.b16 %v427
  %v685 = vpack.c.b16 %v684, %v683
  %v688 = vsel %vm432, %v680, 0
  %690 = vmatprep.subr.bf16.mxu0 0
  %691 = vmatpush1.bf16.msra.mxu0 %v685
  %692 = vmatprep.subr.bf16.mxu0 0
  %693 = vmatpush1.bf16.msra.mxu0 0
  %694 = vmatprep.subr.bf16.mxu0 0
  %695 = vmatpush1.bf16.msra.mxu0 0
  %696 = vmatprep.subr.bf16.mxu0 0
  %697 = vmatpush1.bf16.msra.mxu0 0
  %698 = vmatprep.subr.bf16.mxu0 0
  %699 = vmatpush1.bf16.msra.mxu0 0
  %700 = vmatprep.subr.bf16.mxu0 0
  %701 = vmatpush1.bf16.msra.mxu0 0
  %702 = vmatprep.subr.bf16.mxu0 0
  %703 = vmatpush1.bf16.msra.mxu0 0
  %704 = vmatprep.subr.bf16.mxu0 0
  %705 = vmatpush1.bf16.msra.mxu0 0
  %706 = vmatprep.subr.bf16.mxu0 0
  %707 = vmatpush1.bf16.msra.mxu0 0
  %708 = vmatprep.subr.bf16.mxu0 0
  %709 = vmatpush1.bf16.msra.mxu0 0
  %710 = vmatprep.subr.bf16.mxu0 0
  %711 = vmatpush1.bf16.msra.mxu0 0
  %712 = vmatprep.subr.bf16.mxu0 0
  %713 = vmatpush1.bf16.msra.mxu0 0
  %714 = vmatprep.subr.bf16.mxu0 0
  %715 = vmatpush1.bf16.msra.mxu0 0
  %716 = vmatprep.subr.bf16.mxu0 0
  %717 = vmatpush1.bf16.msra.mxu0 0
  %718 = vmatprep.subr.bf16.mxu0 0
  %719 = vmatpush1.bf16.msra.mxu0 0
  %720 = vmatprep.subr.bf16.mxu0 0
  %721 = vmatpush1.bf16.msra.mxu0 0
  %722 = vmatprep.mubr.bf16.mxu0 0
  %723 = vmatmul.mubr.bf16.gmra.mrb[0].mxu0 %v688
  %v724 = vpop.f32.mrb[0].mxu0
  %v725 = vadd.f32 0.0, %v724
  %v726 = vpop.f32.mrb[0].mxu0
  %v727 = vpop.f32.mrb[0].mxu0
  %v728 = vadd.f32 0.0, %v727
  %v729 = vpop.f32.mrb[0].mxu0
  %730 = vdwg.mxu0
  %v733 = vunpack.c.l.b16 %v424
  %v734 = vunpack.c.l.b16 %v425
  %v735 = vpack.c.b16 %v734, %v733
  %v738 = vsel %vm432, %v554, 0
  %740 = vmatprep.subr.bf16.mxu0 0
  %741 = vmatpush1.bf16.msra.mxu0 %v735
  %742 = vmatprep.subr.bf16.mxu0 0
  %743 = vmatpush1.bf16.msra.mxu0 0
  %744 = vmatprep.subr.bf16.mxu0 0
  %745 = vmatpush1.bf16.msra.mxu0 0
  %746 = vmatprep.subr.bf16.mxu0 0
  %747 = vmatpush1.bf16.msra.mxu0 0
  %748 = vmatprep.subr.bf16.mxu0 0
  %749 = vmatpush1.bf16.msra.mxu0 0
  %750 = vmatprep.subr.bf16.mxu0 0
  %751 = vmatpush1.bf16.msra.mxu0 0
  %752 = vmatprep.subr.bf16.mxu0 0
  %753 = vmatpush1.bf16.msra.mxu0 0
  %754 = vmatprep.subr.bf16.mxu0 0
  %755 = vmatpush1.bf16.msra.mxu0 0
  %756 = vmatprep.subr.bf16.mxu0 0
  %757 = vmatpush1.bf16.msra.mxu0 0
  %758 = vmatprep.subr.bf16.mxu0 0
  %759 = vmatpush1.bf16.msra.mxu0 0
  %760 = vmatprep.subr.bf16.mxu0 0
  %761 = vmatpush1.bf16.msra.mxu0 0
  %762 = vmatprep.subr.bf16.mxu0 0
  %763 = vmatpush1.bf16.msra.mxu0 0
  %764 = vmatprep.subr.bf16.mxu0 0
  %765 = vmatpush1.bf16.msra.mxu0 0
  %766 = vmatprep.subr.bf16.mxu0 0
  %767 = vmatpush1.bf16.msra.mxu0 0
  %768 = vmatprep.subr.bf16.mxu0 0
  %769 = vmatpush1.bf16.msra.mxu0 0
  %770 = vmatprep.subr.bf16.mxu0 0
  %771 = vmatpush1.bf16.msra.mxu0 0
  %772 = vmatprep.mubr.bf16.mxu0 0
  %773 = vmatmul.mubr.bf16.gmra.mrb[0].mxu0 %v738
  %v774 = vpop.f32.mrb[0].mxu0
  %v775 = vadd.f32 %v725, %v774
  %v776 = vpop.f32.mrb[0].mxu0
  %v777 = vpop.f32.mrb[0].mxu0
  %v778 = vadd.f32 %v728, %v777
  %v779 = vpop.f32.mrb[0].mxu0
  %780 = vdwg.mxu0
  %v781 = vadd.f32 %v294, %v775
  %v782 = vadd.f32 %v297, %v778
  %v783 = vld [vmem:[%s9] sm:$0x1]
  %v785 = vlaneseq
  %v786 = vshrl.u32 %v785, 7
  %v787 = vsub.s32 0, %v786
  %v788 = vrot.slane %v783, %v787
  %v790 = vadd.f32 %v781, %v788
  %v791 = vadd.f32 %v782, %v788
  %v792 = vld [vmem:[%s10] sm:$0x1]
  %v793 = vld [vmem:[%s11] sm:$0x1]
  %v794 = vsel %vm312, %v790, 0.0
  %795 = vadd.xlane.f32.xlu0 %v794
  %v796 = vpop.xlane.xlu0 %795
  %v797 = vsel %vm312, %v791, 0.0
  %798 = vadd.xlane.f32.xlu0 %v797
  %v799 = vpop.xlane.xlu0 %798
  %v800 = vmul.f32 %v796, %v319
  %v801 = vmul.f32 %v799, %v319
  %v802 = vsub.f32 %v790, %v800
  %v803 = vsub.f32 %v791, %v801
  %v804 = vmul.f32 %v802, %v802
  %v805 = vmul.f32 %v803, %v803
  %v806 = vsel %vm312, %v804, 0.0
  %807 = vadd.xlane.f32.xlu0 %v806
  %v808 = vpop.xlane.xlu0 %807
  %v809 = vsel %vm312, %v805, 0.0
  %810 = vadd.xlane.f32.xlu0 %v809
  %v811 = vpop.xlane.xlu0 %810
  %v812 = vmul.f32 %v808, %v319
  %v813 = vmul.f32 %v811, %v319
  %v814 = vadd.f32 %v812, 1e-05
  %v815 = vadd.f32 %v813, 1e-05
  %v816 = vrsqrt.pop %v814
  %v817 = vrsqrt.pop %v815
  %v818 = vmul.f32 %v802, %v816
  %v819 = vmul.f32 %v803, %v817
  %v821 = vlaneseq
  %v822 = vshrl.u32 %v821, 7
  %v823 = vsub.s32 0, %v822
  %v824 = vrot.slane %v792, %v823
  %v826 = vmul.f32 %v818, %v824
  %v827 = vmul.f32 %v819, %v824
  %v829 = vlaneseq
  %v830 = vshrl.u32 %v829, 7
  %v831 = vsub.s32 0, %v830
  %v832 = vrot.slane %v793, %v831
  %v834 = vadd.f32 %v826, %v832
  %v835 = vadd.f32 %v827, %v832
  %v836 = vpack.c.bf16 %v835, %v834
  %v837 = vld [vmem:[%s12] sm:$0xf]
  %v838 = vld [vmem:[%s12 + $0x4] sm:$0xf]
  %v839 = vld [vmem:[%s12 + $0x8] sm:$0xf]
  %v840 = vld [vmem:[%s12 + $0xc] sm:$0xf]
  %v841 = vld [vmem:[%s13] sm:$0x1]
  %v843 = vlaneseq
  %v844 = vshrl.u32 %v843, 7
  %v845 = vsub.s32 0, %v844
  %v846 = vrot.slane %v841, %v845
  %v852 = vunpack.c.l.b16 %v837
  %v853 = vunpack.c.l.b16 %v838
  %v854 = vunpack.c.l.b16 %v839
  %v855 = vunpack.c.l.b16 %v840
  %v856 = vpack.c.b16 %v853, %v852
  %v857 = vpack.c.b16 %v855, %v854
  %v861 = vsel %vm312, %v836, 0
  %863 = vmatprep.subr.bf16.mxu0 0
  %864 = vmatpush1.bf16.msra.mxu0 %v856
  %865 = vmatprep.subr.bf16.mxu0 0
  %866 = vmatpush1.bf16.msra.mxu0 %v857
  %867 = vmatprep.subr.bf16.mxu0 0
  %868 = vmatpush1.bf16.msra.mxu0 0
  %869 = vmatprep.subr.bf16.mxu0 0
  %870 = vmatpush1.bf16.msra.mxu0 0
  %871 = vmatprep.subr.bf16.mxu0 0
  %872 = vmatpush1.bf16.msra.mxu0 0
  %873 = vmatprep.subr.bf16.mxu0 0
  %874 = vmatpush1.bf16.msra.mxu0 0
  %875 = vmatprep.subr.bf16.mxu0 0
  %876 = vmatpush1.bf16.msra.mxu0 0
  %877 = vmatprep.subr.bf16.mxu0 0
  %878 = vmatpush1.bf16.msra.mxu0 0
  %879 = vmatprep.subr.bf16.mxu0 0
  %880 = vmatpush1.bf16.msra.mxu0 0
  %881 = vmatprep.subr.bf16.mxu0 0
  %882 = vmatpush1.bf16.msra.mxu0 0
  %883 = vmatprep.subr.bf16.mxu0 0
  %884 = vmatpush1.bf16.msra.mxu0 0
  %885 = vmatprep.subr.bf16.mxu0 0
  %886 = vmatpush1.bf16.msra.mxu0 0
  %887 = vmatprep.subr.bf16.mxu0 0
  %888 = vmatpush1.bf16.msra.mxu0 0
  %889 = vmatprep.subr.bf16.mxu0 0
  %890 = vmatpush1.bf16.msra.mxu0 0
  %891 = vmatprep.subr.bf16.mxu0 0
  %892 = vmatpush1.bf16.msra.mxu0 0
  %893 = vmatprep.subr.bf16.mxu0 0
  %894 = vmatpush1.bf16.msra.mxu0 0
  %895 = vmatprep.mubr.bf16.mxu0 0
  %896 = vmatmul.mubr.bf16.gmra.mrb[0].mxu0 %v861
  %v897 = vpop.f32.mrb[0].mxu0
  %v898 = vadd.f32 %v846, %v897
  %v899 = vpop.f32.mrb[0].mxu0
  %v900 = vpop.f32.mrb[0].mxu0
  %v901 = vadd.f32 %v846, %v900
  %v902 = vpop.f32.mrb[0].mxu0
  %903 = vdwg.mxu0
  %v904 = vmul.f32 %v898, 0.5
  %v905 = vmul.f32 %v901, 0.5
  %v906 = vmul.f32 %v898, 0.044715
  %v907 = vmul.f32 %v901, 0.044715
  %v908 = vmul.f32 %v906, %v898
  %v909 = vmul.f32 %v907, %v901
  %v910 = vmul.f32 %v908, %v898
  %v911 = vmul.f32 %v909, %v901
  %v912 = vadd.f32 %v898, %v910
  %v913 = vadd.f32 %v901, %v911
  %v914 = vmul.f32 %v912, 0.7978846
  %v915 = vmul.f32 %v913, 0.7978846
  %v916 = vtanh.pop %v914
  %v917 = vtanh.pop %v915
  %v918 = vadd.f32 %v916, 1.0
  %v919 = vadd.f32 %v917, 1.0
  %v920 = vmul.f32 %v904, %v918
  %v921 = vmul.f32 %v905, %v919
  %v922 = vpack.c.bf16 %v921, %v920
  %v923 = vld [vmem:[%s14] sm:$0xf]
  %v924 = vld [vmem:[%s14 + $0x4] sm:$0xf]
  %v925 = vld [vmem:[%s14 + $0x8] sm:$0xf]
  %v926 = vld [vmem:[%s14 + $0xc] sm:$0xf]
  %v927 = vld [vmem:[%s14 + $0x10] sm:$0xf]
  %v928 = vld [vmem:[%s14 + $0x14] sm:$0xf]
  %v929 = vld [vmem:[%s14 + $0x18] sm:$0xf]
  %v930 = vld [vmem:[%s14 + $0x1c] sm:$0xf]
  %v931 = vld [vmem:[%s14 + $0x20] sm:$0xf]
  %v932 = vld [vmem:[%s14 + $0x24] sm:$0xf]
  %v933 = vld [vmem:[%s14 + $0x28] sm:$0xf]
  %v934 = vld [vmem:[%s14 + $0x2c] sm:$0xf]
  %v935 = vld [vmem:[%s14 + $0x30] sm:$0xf]
  %v936 = vld [vmem:[%s14 + $0x34] sm:$0xf]
  %v937 = vld [vmem:[%s14 + $0x38] sm:$0xf]
  %v938 = vld [vmem:[%s14 + $0x3c] sm:$0xf]
  %v939 = vld [vmem:[%s15] sm:$0x1]
  %v941 = vlaneseq
  %v942 = vshrl.u32 %v941, 7
  %v943 = vsub.s32 0, %v942
  %v944 = vrot.slane %v939, %v943
  %v962 = vunpack.c.l.b16 %v923
  %v963 = vunpack.c.l.b16 %v924
  %v964 = vunpack.c.l.b16 %v925
  %v965 = vunpack.c.l.b16 %v926
  %v966 = vunpack.c.l.b16 %v927
  %v967 = vunpack.c.l.b16 %v928
  %v968 = vunpack.c.l.b16 %v929
  %v969 = vunpack.c.l.b16 %v930
  %v970 = vunpack.c.l.b16 %v931
  %v971 = vunpack.c.l.b16 %v932
  %v972 = vunpack.c.l.b16 %v933
  %v973 = vunpack.c.l.b16 %v934
  %v974 = vunpack.c.l.b16 %v935
  %v975 = vunpack.c.l.b16 %v936
  %v976 = vunpack.c.l.b16 %v937
  %v977 = vunpack.c.l.b16 %v938
  %v978 = vpack.c.b16 %v963, %v962
  %v979 = vpack.c.b16 %v965, %v964
  %v980 = vpack.c.b16 %v967, %v966
  %v981 = vpack.c.b16 %v969, %v968
  %v982 = vpack.c.b16 %v971, %v970
  %v983 = vpack.c.b16 %v973, %v972
  %v984 = vpack.c.b16 %v975, %v974
  %v985 = vpack.c.b16 %v977, %v976
  %994 = vmatprep.subr.bf16.mxu0 0
  %995 = vmatpush1.bf16.msra.mxu0 %v978
  %996 = vmatprep.subr.bf16.mxu0 0
  %997 = vmatpush1.bf16.msra.mxu0 %v979
  %998 = vmatprep.subr.bf16.mxu0 0
  %999 = vmatpush1.bf16.msra.mxu0 %v980
  %1000 = vmatprep.subr.bf16.mxu0 0
  %1001 = vmatpush1.bf16.msra.mxu0 %v981
  %1002 = vmatprep.subr.bf16.mxu0 0
  %1003 = vmatpush1.bf16.msra.mxu0 %v982
  %1004 = vmatprep.subr.bf16.mxu0 0
  %1005 = vmatpush1.bf16.msra.mxu0 %v983
  %1006 = vmatprep.subr.bf16.mxu0 0
  %1007 = vmatpush1.bf16.msra.mxu0 %v984
  %1008 = vmatprep.subr.bf16.mxu0 0
  %1009 = vmatpush1.bf16.msra.mxu0 %v985
  %1010 = vmatprep.subr.bf16.mxu0 0
  %1011 = vmatpush1.bf16.msra.mxu0 0
  %1012 = vmatprep.subr.bf16.mxu0 0
  %1013 = vmatpush1.bf16.msra.mxu0 0
  %1014 = vmatprep.subr.bf16.mxu0 0
  %1015 = vmatpush1.bf16.msra.mxu0 0
  %1016 = vmatprep.subr.bf16.mxu0 0
  %1017 = vmatpush1.bf16.msra.mxu0 0
  %1018 = vmatprep.subr.bf16.mxu0 0
  %1019 = vmatpush1.bf16.msra.mxu0 0
  %1020 = vmatprep.subr.bf16.mxu0 0
  %1021 = vmatpush1.bf16.msra.mxu0 0
  %1022 = vmatprep.subr.bf16.mxu0 0
  %1023 = vmatpush1.bf16.msra.mxu0 0
  %1024 = vmatprep.subr.bf16.mxu0 0
  %1025 = vmatpush1.bf16.msra.mxu0 0
  %1026 = vmatprep.mubr.bf16.mxu0 0
  %1027 = vmatmul.mubr.bf16.gmra.mrb[0].mxu0 %v922
  %v1028 = vpop.f32.mrb[0].mxu0
  %v1029 = vadd.f32 %v944, %v1028
  %v1030 = vpop.f32.mrb[0].mxu0
  %v1031 = vpop.f32.mrb[0].mxu0
  %v1032 = vadd.f32 %v944, %v1031
  %v1033 = vpop.f32.mrb[0].mxu0
  %1034 = vdwg.mxu0
  %v1035 = vadd.f32 %v790, %v1029
  %v1036 = vadd.f32 %v791, %v1032
  %s1037 = scalar_lea.vmem %s4, 1
  %v1038 = vld [vmem:[%s1037] sm:$0x1]
  %s1039 = scalar_lea.vmem %s5, 1
  %v1040 = vld [vmem:[%s1039] sm:$0x1]
  %v1041 = vsel %vm312, %v1035, 0.0
  %1042 = vadd.xlane.f32.xlu0 %v1041
  %v1043 = vpop.xlane.xlu0 %1042
  %v1044 = vsel %vm312, %v1036, 0.0
  %1045 = vadd.xlane.f32.xlu0 %v1044
  %v1046 = vpop.xlane.xlu0 %1045
  %v1047 = vmul.f32 %v1043, %v319
  %v1048 = vmul.f32 %v1046, %v319
  %v1049 = vsub.f32 %v1035, %v1047
  %v1050 = vsub.f32 %v1036, %v1048
  %v1051 = vmul.f32 %v1049, %v1049
  %v1052 = vmul.f32 %v1050, %v1050
  %v1053 = vsel %vm312, %v1051, 0.0
  %1054 = vadd.xlane.f32.xlu0 %v1053
  %v1055 = vpop.xlane.xlu0 %1054
  %v1056 = vsel %vm312, %v1052, 0.0
  %1057 = vadd.xlane.f32.xlu0 %v1056
  %v1058 = vpop.xlane.xlu0 %1057
  %v1059 = vmul.f32 %v1055, %v319
  %v1060 = vmul.f32 %v1058, %v319
  %v1061 = vadd.f32 %v1059, 1e-05
  %v1062 = vadd.f32 %v1060, 1e-05
  %v1063 = vrsqrt.pop %v1061
  %v1064 = vrsqrt.pop %v1062
  %v1065 = vmul.f32 %v1049, %v1063
  %v1066 = vmul.f32 %v1050, %v1064
  %v1068 = vlaneseq
  %v1069 = vshrl.u32 %v1068, 7
  %v1070 = vsub.s32 0, %v1069
  %v1071 = vrot.slane %v1038, %v1070
  %v1073 = vmul.f32 %v1065, %v1071
  %v1074 = vmul.f32 %v1066, %v1071
  %v1076 = vlaneseq
  %v1077 = vshrl.u32 %v1076, 7
  %v1078 = vsub.s32 0, %v1077
  %v1079 = vrot.slane %v1040, %v1078
  %v1081 = vadd.f32 %v1073, %v1079
  %v1082 = vadd.f32 %v1074, %v1079
  %v1083 = vpack.c.bf16 %v1082, %v1081
  %s1084 = scalar_lea.vmem %s6, 16
  %v1085 = vld [vmem:[%s1084] sm:$0xf]
  %v1086 = vld [vmem:[%s1084 + $0x4] sm:$0xf]
  %v1087 = vld [vmem:[%s1084 + $0x8] sm:$0xf]
  %v1088 = vld [vmem:[%s1084 + $0xc] sm:$0xf]
  %s1089 = scalar_lea.vmem %s7, 1
  %v1090 = vld [vmem:[%s1089] sm:$0x1]
  %v1092 = vlaneseq
  %v1093 = vshrl.u32 %v1092, 7
  %v1094 = vsub.s32 0, %v1093
  %v1095 = vrot.slane %v1090, %v1094
  %v1101 = vunpack.c.l.b16 %v1085
  %v1102 = vunpack.c.l.b16 %v1086
  %v1103 = vunpack.c.l.b16 %v1087
  %v1104 = vunpack.c.l.b16 %v1088
  %v1105 = vpack.c.b16 %v1102, %v1101
  %v1106 = vpack.c.b16 %v1104, %v1103
  %v1110 = vsel %vm312, %v1083, 0
  %1112 = vmatprep.subr.bf16.mxu0 0
  %1113 = vmatpush1.bf16.msra.mxu0 %v1105
  %1114 = vmatprep.subr.bf16.mxu0 0
  %1115 = vmatpush1.bf16.msra.mxu0 %v1106
  %1116 = vmatprep.subr.bf16.mxu0 0
  %1117 = vmatpush1.bf16.msra.mxu0 0
  %1118 = vmatprep.subr.bf16.mxu0 0
  %1119 = vmatpush1.bf16.msra.mxu0 0
  %1120 = vmatprep.subr.bf16.mxu0 0
  %1121 = vmatpush1.bf16.msra.mxu0 0
  %1122 = vmatprep.subr.bf16.mxu0 0
  %1123 = vmatpush1.bf16.msra.mxu0 0
  %1124 = vmatprep.subr.bf16.mxu0 0
  %1125 = vmatpush1.bf16.msra.mxu0 0
  %1126 = vmatprep.subr.bf16.mxu0 0
  %1127 = vmatpush1.bf16.msra.mxu0 0
  %1128 = vmatprep.subr.bf16.mxu0 0
  %1129 = vmatpush1.bf16.msra.mxu0 0
  %1130 = vmatprep.subr.bf16.mxu0 0
  %1131 = vmatpush1.bf16.msra.mxu0 0
  %1132 = vmatprep.subr.bf16.mxu0 0
  %1133 = vmatpush1.bf16.msra.mxu0 0
  %1134 = vmatprep.subr.bf16.mxu0 0
  %1135 = vmatpush1.bf16.msra.mxu0 0
  %1136 = vmatprep.subr.bf16.mxu0 0
  %1137 = vmatpush1.bf16.msra.mxu0 0
  %1138 = vmatprep.subr.bf16.mxu0 0
  %1139 = vmatpush1.bf16.msra.mxu0 0
  %1140 = vmatprep.subr.bf16.mxu0 0
  %1141 = vmatpush1.bf16.msra.mxu0 0
  %1142 = vmatprep.subr.bf16.mxu0 0
  %1143 = vmatpush1.bf16.msra.mxu0 0
  %1144 = vmatprep.mubr.bf16.mxu0 0
  %1145 = vmatmul.mubr.bf16.gmra.mrb[0].mxu0 %v1110
  %v1146 = vpop.f32.mrb[0].mxu0
  %v1147 = vadd.f32 %v1095, %v1146
  %v1148 = vpop.f32.mrb[0].mxu0
  %v1149 = vpop.f32.mrb[0].mxu0
  %v1150 = vadd.f32 %v1095, %v1149
  %v1151 = vpop.f32.mrb[0].mxu0
  %1152 = vdwg.mxu0
  %s1153 = scalar_lea.vmem %s8, 16
  %v1154 = vld [vmem:[%s1153] sm:$0xf]
  %v1155 = vld [vmem:[%s1153 + $0x4] sm:$0xf]
  %v1156 = vld [vmem:[%s1153 + $0x8] sm:$0xf]
  %v1157 = vld [vmem:[%s1153 + $0xc] sm:$0xf]
  %v1158 = vpack.c.bf16 %v1150, %v1147
  %1160 = vrot.lane.b32.xlu0 %v1158, 96
  %v1161 = vpop.permute.xlu0 %1160
  %v1163 = vsel %vm432, %v1158, 0
  %v1166 = vsel %vm432, %v1161, 0
  %1168 = vmatprep.subr.bf16.mxu0 0
  %1169 = vmatpush1.bf16.xpose.msra.mxu0 %v1166
  %1170 = vmatprep.subr.bf16.mxu0 0
  %1171 = vmatpush1.bf16.xpose.msra.mxu0 0
  %1172 = vmatprep.subr.bf16.mxu0 0
  %1173 = vmatpush1.bf16.xpose.msra.mxu0 0
  %1174 = vmatprep.subr.bf16.mxu0 0
  %1175 = vmatpush1.bf16.xpose.msra.mxu0 0
  %1176 = vmatprep.subr.bf16.mxu0 0
  %1177 = vmatpush1.bf16.xpose.msra.mxu0 0
  %1178 = vmatprep.subr.bf16.mxu0 0
  %1179 = vmatpush1.bf16.xpose.msra.mxu0 0
  %1180 = vmatprep.subr.bf16.mxu0 0
  %1181 = vmatpush1.bf16.xpose.msra.mxu0 0
  %1182 = vmatprep.subr.bf16.mxu0 0
  %1183 = vmatpush1.bf16.xpose.msra.mxu0 0
  %1184 = vmatprep.subr.bf16.mxu0 0
  %1185 = vmatpush1.bf16.xpose.msra.mxu0 0
  %1186 = vmatprep.subr.bf16.mxu0 0
  %1187 = vmatpush1.bf16.xpose.msra.mxu0 0
  %1188 = vmatprep.subr.bf16.mxu0 0
  %1189 = vmatpush1.bf16.xpose.msra.mxu0 0
  %1190 = vmatprep.subr.bf16.mxu0 0
  %1191 = vmatpush1.bf16.xpose.msra.mxu0 0
  %1192 = vmatprep.subr.bf16.mxu0 0
  %1193 = vmatpush1.bf16.xpose.msra.mxu0 0
  %1194 = vmatprep.subr.bf16.mxu0 0
  %1195 = vmatpush1.bf16.xpose.msra.mxu0 0
  %1196 = vmatprep.subr.bf16.mxu0 0
  %1197 = vmatpush1.bf16.xpose.msra.mxu0 0
  %1198 = vmatprep.subr.bf16.mxu0 0
  %1199 = vmatpush1.bf16.xpose.msra.mxu0 0
  %1200 = vmatprep.mubr.bf16.mxu0 0
  %1201 = vmatmul.mubr.bf16.gmra.mrb[0].mxu0 %v1163
  %v1202 = vpop.f32.mrb[0].mxu0
  %v1203 = vadd.f32 0.0, %v1202
  %v1204 = vpop.f32.mrb[0].mxu0
  %v1205 = vpop.f32.mrb[0].mxu0
  %v1206 = vadd.f32 0.0, %v1205
  %v1207 = vpop.f32.mrb[0].mxu0
  %1208 = vdwg.mxu0
  %v1209 = vmul.f32 %v1203, 0.25
  %v1210 = vmul.f32 %v1206, 0.25
  %v1211 = vadd.f32 %v1209, %v308
  %v1212 = vadd.f32 %v1210, %v309
  %v1213 = vsel %vm432, %v1211, -inf
  %1214 = vmax.xlane.f32.xlu0 %v1213
  %v1215 = vpop.xlane.xlu0 %1214
  %v1216 = vsel %vm432, %v1212, -inf
  %1217 = vmax.xlane.f32.xlu0 %v1216
  %v1218 = vpop.xlane.xlu0 %1217
  %v1219 = vsub.f32 %v1211, %v1215
  %v1220 = vsub.f32 %v1212, %v1218
  %v1221 = vmul.f32 %v1219, 1.442695
  %v1222 = vpow.pop %v1221
  %v1223 = vmul.f32 %v1220, 1.442695
  %v1224 = vpow.pop %v1223
  %v1225 = vsel %vm432, %v1222, 0.0
  %1226 = vadd.xlane.f32.xlu0 %v1225
  %v1227 = vpop.xlane.xlu0 %1226
  %v1228 = vsel %vm432, %v1224, 0.0
  %1229 = vadd.xlane.f32.xlu0 %v1228
  %v1230 = vpop.xlane.xlu0 %1229
  %v1231 = vrcp.pop %v1227
  %v1232 = vmul.f32 %v1222, %v1231
  %v1233 = vrcp.pop %v1230
  %v1234 = vmul.f32 %v1224, %v1233
  %v1235 = vpack.c.bf16 %v1234, %v1232
  %1236 = vrot.lane.b32.xlu0 %v1158, 64
  %v1237 = vpop.permute.xlu0 %1236
  %v1240 = vsel %vm432, %v1235, 0
  %1242 = vmatprep.subr.bf16.mxu0 0
  %1243 = vmatpush1.bf16.msra.mxu0 %v1237
  %1244 = vmatprep.subr.bf16.mxu0 0
  %1245 = vmatpush1.bf16.msra.mxu0 0
  %1246 = vmatprep.subr.bf16.mxu0 0
  %1247 = vmatpush1.bf16.msra.mxu0 0
  %1248 = vmatprep.subr.bf16.mxu0 0
  %1249 = vmatpush1.bf16.msra.mxu0 0
  %1250 = vmatprep.subr.bf16.mxu0 0
  %1251 = vmatpush1.bf16.msra.mxu0 0
  %1252 = vmatprep.subr.bf16.mxu0 0
  %1253 = vmatpush1.bf16.msra.mxu0 0
  %1254 = vmatprep.subr.bf16.mxu0 0
  %1255 = vmatpush1.bf16.msra.mxu0 0
  %1256 = vmatprep.subr.bf16.mxu0 0
  %1257 = vmatpush1.bf16.msra.mxu0 0
  %1258 = vmatprep.subr.bf16.mxu0 0
  %1259 = vmatpush1.bf16.msra.mxu0 0
  %1260 = vmatprep.subr.bf16.mxu0 0
  %1261 = vmatpush1.bf16.msra.mxu0 0
  %1262 = vmatprep.subr.bf16.mxu0 0
  %1263 = vmatpush1.bf16.msra.mxu0 0
  %1264 = vmatprep.subr.bf16.mxu0 0
  %1265 = vmatpush1.bf16.msra.mxu0 0
  %1266 = vmatprep.subr.bf16.mxu0 0
  %1267 = vmatpush1.bf16.msra.mxu0 0
  %1268 = vmatprep.subr.bf16.mxu0 0
  %1269 = vmatpush1.bf16.msra.mxu0 0
  %1270 = vmatprep.subr.bf16.mxu0 0
  %1271 = vmatpush1.bf16.msra.mxu0 0
  %1272 = vmatprep.subr.bf16.mxu0 0
  %1273 = vmatpush1.bf16.msra.mxu0 0
  %1274 = vmatprep.mubr.bf16.mxu0 0
  %1275 = vmatmul.mubr.bf16.gmra.mrb[0].mxu0 %v1240
  %v1276 = vpop.f32.mrb[0].mxu0
  %v1277 = vadd.f32 0.0, %v1276
  %v1278 = vpop.f32.mrb[0].mxu0
  %v1279 = vpop.f32.mrb[0].mxu0
  %v1280 = vadd.f32 0.0, %v1279
  %v1281 = vpop.f32.mrb[0].mxu0
  %1282 = vdwg.mxu0
  %v1283 = vpack.c.bf16 %v1280, %v1277
  %1284 = vrot.lane.b32.xlu0 %v1158, 112
  %v1285 = vpop.permute.xlu0 %1284
  %1286 = vrot.lane.b32.xlu0 %v1158, 80
  %v1287 = vpop.permute.xlu0 %1286
  %v1289 = vsel %vm432, %v1285, 0
  %v1292 = vsel %vm432, %v1287, 0
  %1294 = vmatprep.subr.bf16.mxu0 0
  %1295 = vmatpush1.bf16.xpose.msra.mxu0 %v1292
  %1296 = vmatprep.subr.bf16.mxu0 0
  %1297 = vmatpush1.bf16.xpose.msra.mxu0 0
  %1298 = vmatprep.subr.bf16.mxu0 0
  %1299 = vmatpush1.bf16.xpose.msra.mxu0 0
  %1300 = vmatprep.subr.bf16.mxu0 0
  %1301 = vmatpush1.bf16.xpose.msra.mxu0 0
  %1302 = vmatprep.subr.bf16.mxu0 0
  %1303 = vmatpush1.bf16.xpose.msra.mxu0 0
  %1304 = vmatprep.subr.bf16.mxu0 0
  %1305 = vmatpush1.bf16.xpose.msra.mxu0 0
  %1306 = vmatprep.subr.bf16.mxu0 0
  %1307 = vmatpush1.bf16.xpose.msra.mxu0 0
  %1308 = vmatprep.subr.bf16.mxu0 0
  %1309 = vmatpush1.bf16.xpose.msra.mxu0 0
  %1310 = vmatprep.subr.bf16.mxu0 0
  %1311 = vmatpush1.bf16.xpose.msra.mxu0 0
  %1312 = vmatprep.subr.bf16.mxu0 0
  %1313 = vmatpush1.bf16.xpose.msra.mxu0 0
  %1314 = vmatprep.subr.bf16.mxu0 0
  %1315 = vmatpush1.bf16.xpose.msra.mxu0 0
  %1316 = vmatprep.subr.bf16.mxu0 0
  %1317 = vmatpush1.bf16.xpose.msra.mxu0 0
  %1318 = vmatprep.subr.bf16.mxu0 0
  %1319 = vmatpush1.bf16.xpose.msra.mxu0 0
  %1320 = vmatprep.subr.bf16.mxu0 0
  %1321 = vmatpush1.bf16.xpose.msra.mxu0 0
  %1322 = vmatprep.subr.bf16.mxu0 0
  %1323 = vmatpush1.bf16.xpose.msra.mxu0 0
  %1324 = vmatprep.subr.bf16.mxu0 0
  %1325 = vmatpush1.bf16.xpose.msra.mxu0 0
  %1326 = vmatprep.mubr.bf16.mxu0 0
  %1327 = vmatmul.mubr.bf16.gmra.mrb[0].mxu0 %v1289
  %v1328 = vpop.f32.mrb[0].mxu0
  %v1329 = vadd.f32 0.0, %v1328
  %v1330 = vpop.f32.mrb[0].mxu0
  %v1331 = vpop.f32.mrb[0].mxu0
  %v1332 = vadd.f32 0.0, %v1331
  %v1333 = vpop.f32.mrb[0].mxu0
  %1334 = vdwg.mxu0
  %v1335 = vmul.f32 %v1329, 0.25
  %v1336 = vmul.f32 %v1332, 0.25
  %v1337 = vadd.f32 %v1335, %v308
  %v1338 = vadd.f32 %v1336, %v309
  %v1339 = vsel %vm432, %v1337, -inf
  %1340 = vmax.xlane.f32.xlu0 %v1339
  %v1341 = vpop.xlane.xlu0 %1340
  %v1342 = vsel %vm432, %v1338, -inf
  %1343 = vmax.xlane.f32.xlu0 %v1342
  %v1344 = vpop.xlane.xlu0 %1343
  %v1345 = vsub.f32 %v1337, %v1341
  %v1346 = vsub.f32 %v1338, %v1344
  %v1347 = vmul.f32 %v1345, 1.442695
  %v1348 = vpow.pop %v1347
  %v1349 = vmul.f32 %v1346, 1.442695
  %v1350 = vpow.pop %v1349
  %v1351 = vsel %vm432, %v1348, 0.0
  %1352 = vadd.xlane.f32.xlu0 %v1351
  %v1353 = vpop.xlane.xlu0 %1352
  %v1354 = vsel %vm432, %v1350, 0.0
  %1355 = vadd.xlane.f32.xlu0 %v1354
  %v1356 = vpop.xlane.xlu0 %1355
  %v1357 = vrcp.pop %v1353
  %v1358 = vmul.f32 %v1348, %v1357
  %v1359 = vrcp.pop %v1356
  %v1360 = vmul.f32 %v1350, %v1359
  %v1361 = vpack.c.bf16 %v1360, %v1358
  %1362 = vrot.lane.b32.xlu0 %v1158, 48
  %v1363 = vpop.permute.xlu0 %1362
  %v1366 = vsel %vm432, %v1361, 0
  %1368 = vmatprep.subr.bf16.mxu0 0
  %1369 = vmatpush1.bf16.msra.mxu0 %v1363
  %1370 = vmatprep.subr.bf16.mxu0 0
  %1371 = vmatpush1.bf16.msra.mxu0 0
  %1372 = vmatprep.subr.bf16.mxu0 0
  %1373 = vmatpush1.bf16.msra.mxu0 0
  %1374 = vmatprep.subr.bf16.mxu0 0
  %1375 = vmatpush1.bf16.msra.mxu0 0
  %1376 = vmatprep.subr.bf16.mxu0 0
  %1377 = vmatpush1.bf16.msra.mxu0 0
  %1378 = vmatprep.subr.bf16.mxu0 0
  %1379 = vmatpush1.bf16.msra.mxu0 0
  %1380 = vmatprep.subr.bf16.mxu0 0
  %1381 = vmatpush1.bf16.msra.mxu0 0
  %1382 = vmatprep.subr.bf16.mxu0 0
  %1383 = vmatpush1.bf16.msra.mxu0 0
  %1384 = vmatprep.subr.bf16.mxu0 0
  %1385 = vmatpush1.bf16.msra.mxu0 0
  %1386 = vmatprep.subr.bf16.mxu0 0
  %1387 = vmatpush1.bf16.msra.mxu0 0
  %1388 = vmatprep.subr.bf16.mxu0 0
  %1389 = vmatpush1.bf16.msra.mxu0 0
  %1390 = vmatprep.subr.bf16.mxu0 0
  %1391 = vmatpush1.bf16.msra.mxu0 0
  %1392 = vmatprep.subr.bf16.mxu0 0
  %1393 = vmatpush1.bf16.msra.mxu0 0
  %1394 = vmatprep.subr.bf16.mxu0 0
  %1395 = vmatpush1.bf16.msra.mxu0 0
  %1396 = vmatprep.subr.bf16.mxu0 0
  %1397 = vmatpush1.bf16.msra.mxu0 0
  %1398 = vmatprep.subr.bf16.mxu0 0
  %1399 = vmatpush1.bf16.msra.mxu0 0
  %1400 = vmatprep.mubr.bf16.mxu0 0
  %1401 = vmatmul.mubr.bf16.gmra.mrb[0].mxu0 %v1366
  %v1402 = vpop.f32.mrb[0].mxu0
  %v1403 = vadd.f32 0.0, %v1402
  %v1404 = vpop.f32.mrb[0].mxu0
  %v1405 = vpop.f32.mrb[0].mxu0
  %v1406 = vadd.f32 0.0, %v1405
  %v1407 = vpop.f32.mrb[0].mxu0
  %1408 = vdwg.mxu0
  %v1409 = vpack.c.bf16 %v1406, %v1403
  %v1412 = vunpack.c.l.b16 %v1156
  %v1413 = vunpack.c.l.b16 %v1157
  %v1414 = vpack.c.b16 %v1413, %v1412
  %v1417 = vsel %vm432, %v1409, 0
  %1419 = vmatprep.subr.bf16.mxu0 0
  %1420 = vmatpush1.bf16.msra.mxu0 %v1414
  %1421 = vmatprep.subr.bf16.mxu0 0
  %1422 = vmatpush1.bf16.msra.mxu0 0
  %1423 = vmatprep.subr.bf16.mxu0 0
  %1424 = vmatpush1.bf16.msra.mxu0 0
  %1425 = vmatprep.subr.bf16.mxu0 0
  %1426 = vmatpush1.bf16.msra.mxu0 0
  %1427 = vmatprep.subr.bf16.mxu0 0
  %1428 = vmatpush1.bf16.msra.mxu0 0
  %1429 = vmatprep.subr.bf16.mxu0 0
  %1430 = vmatpush1.bf16.msra.mxu0 0
  %1431 = vmatprep.subr.bf16.mxu0 0
  %1432 = vmatpush1.bf16.msra.mxu0 0
  %1433 = vmatprep.subr.bf16.mxu0 0
  %1434 = vmatpush1.bf16.msra.mxu0 0
  %1435 = vmatprep.subr.bf16.mxu0 0
  %1436 = vmatpush1.bf16.msra.mxu0 0
  %1437 = vmatprep.subr.bf16.mxu0 0
  %1438 = vmatpush1.bf16.msra.mxu0 0
  %1439 = vmatprep.subr.bf16.mxu0 0
  %1440 = vmatpush1.bf16.msra.mxu0 0
  %1441 = vmatprep.subr.bf16.mxu0 0
  %1442 = vmatpush1.bf16.msra.mxu0 0
  %1443 = vmatprep.subr.bf16.mxu0 0
  %1444 = vmatpush1.bf16.msra.mxu0 0
  %1445 = vmatprep.subr.bf16.mxu0 0
  %1446 = vmatpush1.bf16.msra.mxu0 0
  %1447 = vmatprep.subr.bf16.mxu0 0
  %1448 = vmatpush1.bf16.msra.mxu0 0
  %1449 = vmatprep.subr.bf16.mxu0 0
  %1450 = vmatpush1.bf16.msra.mxu0 0
  %1451 = vmatprep.mubr.bf16.mxu0 0
  %1452 = vmatmul.mubr.bf16.gmra.mrb[0].mxu0 %v1417
  %v1453 = vpop.f32.mrb[0].mxu0
  %v1454 = vadd.f32 0.0, %v1453
  %v1455 = vpop.f32.mrb[0].mxu0
  %v1456 = vpop.f32.mrb[0].mxu0
  %v1457 = vadd.f32 0.0, %v1456
  %v1458 = vpop.f32.mrb[0].mxu0
  %1459 = vdwg.mxu0
  %v1462 = vunpack.c.l.b16 %v1154
  %v1463 = vunpack.c.l.b16 %v1155
  %v1464 = vpack.c.b16 %v1463, %v1462
  %v1467 = vsel %vm432, %v1283, 0
  %1469 = vmatprep.subr.bf16.mxu0 0
  %1470 = vmatpush1.bf16.msra.mxu0 %v1464
  %1471 = vmatprep.subr.bf16.mxu0 0
  %1472 = vmatpush1.bf16.msra.mxu0 0
  %1473 = vmatprep.subr.bf16.mxu0 0
  %1474 = vmatpush1.bf16.msra.mxu0 0
  %1475 = vmatprep.subr.bf16.mxu0 0
  %1476 = vmatpush1.bf16.msra.mxu0 0
  %1477 = vmatprep.subr.bf16.mxu0 0
  %1478 = vmatpush1.bf16.msra.mxu0 0
  %1479 = vmatprep.subr.bf16.mxu0 0
  %1480 = vmatpush1.bf16.msra.mxu0 0
  %1481 = vmatprep.subr.bf16.mxu0 0
  %1482 = vmatpush1.bf16.msra.mxu0 0
  %1483 = vmatprep.subr.bf16.mxu0 0
  %1484 = vmatpush1.bf16.msra.mxu0 0
  %1485 = vmatprep.subr.bf16.mxu0 0
  %1486 = vmatpush1.bf16.msra.mxu0 0
  %1487 = vmatprep.subr.bf16.mxu0 0
  %1488 = vmatpush1.bf16.msra.mxu0 0
  %1489 = vmatprep.subr.bf16.mxu0 0
  %1490 = vmatpush1.bf16.msra.mxu0 0
  %1491 = vmatprep.subr.bf16.mxu0 0
  %1492 = vmatpush1.bf16.msra.mxu0 0
  %1493 = vmatprep.subr.bf16.mxu0 0
  %1494 = vmatpush1.bf16.msra.mxu0 0
  %1495 = vmatprep.subr.bf16.mxu0 0
  %1496 = vmatpush1.bf16.msra.mxu0 0
  %1497 = vmatprep.subr.bf16.mxu0 0
  %1498 = vmatpush1.bf16.msra.mxu0 0
  %1499 = vmatprep.subr.bf16.mxu0 0
  %1500 = vmatpush1.bf16.msra.mxu0 0
  %1501 = vmatprep.mubr.bf16.mxu0 0
  %1502 = vmatmul.mubr.bf16.gmra.mrb[0].mxu0 %v1467
  %v1503 = vpop.f32.mrb[0].mxu0
  %v1504 = vadd.f32 %v1454, %v1503
  %v1505 = vpop.f32.mrb[0].mxu0
  %v1506 = vpop.f32.mrb[0].mxu0
  %v1507 = vadd.f32 %v1457, %v1506
  %v1508 = vpop.f32.mrb[0].mxu0
  %1509 = vdwg.mxu0
  %v1510 = vadd.f32 %v1035, %v1504
  %v1511 = vadd.f32 %v1036, %v1507
  %s1512 = scalar_lea.vmem %s9, 1
  %v1513 = vld [vmem:[%s1512] sm:$0x1]
  %v1515 = vlaneseq
  %v1516 = vshrl.u32 %v1515, 7
  %v1517 = vsub.s32 0, %v1516
  %v1518 = vrot.slane %v1513, %v1517
  %v1520 = vadd.f32 %v1510, %v1518
  %v1521 = vadd.f32 %v1511, %v1518
  %s1522 = scalar_lea.vmem %s10, 1
  %v1523 = vld [vmem:[%s1522] sm:$0x1]
  %s1524 = scalar_lea.vmem %s11, 1
  %v1525 = vld [vmem:[%s1524] sm:$0x1]
  %v1526 = vsel %vm312, %v1520, 0.0
  %1527 = vadd.xlane.f32.xlu0 %v1526
  %v1528 = vpop.xlane.xlu0 %1527
  %v1529 = vsel %vm312, %v1521, 0.0
  %1530 = vadd.xlane.f32.xlu0 %v1529
  %v1531 = vpop.xlane.xlu0 %1530
  %v1532 = vmul.f32 %v1528, %v319
  %v1533 = vmul.f32 %v1531, %v319
  %v1534 = vsub.f32 %v1520, %v1532
  %v1535 = vsub.f32 %v1521, %v1533
  %v1536 = vmul.f32 %v1534, %v1534
  %v1537 = vmul.f32 %v1535, %v1535
  %v1538 = vsel %vm312, %v1536, 0.0
  %1539 = vadd.xlane.f32.xlu0 %v1538
  %v1540 = vpop.xlane.xlu0 %1539
  %v1541 = vsel %vm312, %v1537, 0.0
  %1542 = vadd.xlane.f32.xlu0 %v1541
  %v1543 = vpop.xlane.xlu0 %1542
  %v1544 = vmul.f32 %v1540, %v319
  %v1545 = vmul.f32 %v1543, %v319
  %v1546 = vadd.f32 %v1544, 1e-05
  %v1547 = vadd.f32 %v1545, 1e-05
  %v1548 = vrsqrt.pop %v1546
  %v1549 = vrsqrt.pop %v1547
  %v1550 = vmul.f32 %v1534, %v1548
  %v1551 = vmul.f32 %v1535, %v1549
  %v1553 = vlaneseq
  %v1554 = vshrl.u32 %v1553, 7
  %v1555 = vsub.s32 0, %v1554
  %v1556 = vrot.slane %v1523, %v1555
  %v1558 = vmul.f32 %v1550, %v1556
  %v1559 = vmul.f32 %v1551, %v1556
  %v1561 = vlaneseq
  %v1562 = vshrl.u32 %v1561, 7
  %v1563 = vsub.s32 0, %v1562
  %v1564 = vrot.slane %v1525, %v1563
  %v1566 = vadd.f32 %v1558, %v1564
  %v1567 = vadd.f32 %v1559, %v1564
  %v1568 = vpack.c.bf16 %v1567, %v1566
  %s1569 = scalar_lea.vmem %s12, 16
  %v1570 = vld [vmem:[%s1569] sm:$0xf]
  %v1571 = vld [vmem:[%s1569 + $0x4] sm:$0xf]
  %v1572 = vld [vmem:[%s1569 + $0x8] sm:$0xf]
  %v1573 = vld [vmem:[%s1569 + $0xc] sm:$0xf]
  %s1574 = scalar_lea.vmem %s13, 1
  %v1575 = vld [vmem:[%s1574] sm:$0x1]
  %v1577 = vlaneseq
  %v1578 = vshrl.u32 %v1577, 7
  %v1579 = vsub.s32 0, %v1578
  %v1580 = vrot.slane %v1575, %v1579
  %v1586 = vunpack.c.l.b16 %v1570
  %v1587 = vunpack.c.l.b16 %v1571
  %v1588 = vunpack.c.l.b16 %v1572
  %v1589 = vunpack.c.l.b16 %v1573
  %v1590 = vpack.c.b16 %v1587, %v1586
  %v1591 = vpack.c.b16 %v1589, %v1588
  %v1595 = vsel %vm312, %v1568, 0
  %1597 = vmatprep.subr.bf16.mxu0 0
  %1598 = vmatpush1.bf16.msra.mxu0 %v1590
  %1599 = vmatprep.subr.bf16.mxu0 0
  %1600 = vmatpush1.bf16.msra.mxu0 %v1591
  %1601 = vmatprep.subr.bf16.mxu0 0
  %1602 = vmatpush1.bf16.msra.mxu0 0
  %1603 = vmatprep.subr.bf16.mxu0 0
  %1604 = vmatpush1.bf16.msra.mxu0 0
  %1605 = vmatprep.subr.bf16.mxu0 0
  %1606 = vmatpush1.bf16.msra.mxu0 0
  %1607 = vmatprep.subr.bf16.mxu0 0
  %1608 = vmatpush1.bf16.msra.mxu0 0
  %1609 = vmatprep.subr.bf16.mxu0 0
  %1610 = vmatpush1.bf16.msra.mxu0 0
  %1611 = vmatprep.subr.bf16.mxu0 0
  %1612 = vmatpush1.bf16.msra.mxu0 0
  %1613 = vmatprep.subr.bf16.mxu0 0
  %1614 = vmatpush1.bf16.msra.mxu0 0
  %1615 = vmatprep.subr.bf16.mxu0 0
  %1616 = vmatpush1.bf16.msra.mxu0 0
  %1617 = vmatprep.subr.bf16.mxu0 0
  %1618 = vmatpush1.bf16.msra.mxu0 0
  %1619 = vmatprep.subr.bf16.mxu0 0
  %1620 = vmatpush1.bf16.msra.mxu0 0
  %1621 = vmatprep.subr.bf16.mxu0 0
  %1622 = vmatpush1.bf16.msra.mxu0 0
  %1623 = vmatprep.subr.bf16.mxu0 0
  %1624 = vmatpush1.bf16.msra.mxu0 0
  %1625 = vmatprep.subr.bf16.mxu0 0
  %1626 = vmatpush1.bf16.msra.mxu0 0
  %1627 = vmatprep.subr.bf16.mxu0 0
  %1628 = vmatpush1.bf16.msra.mxu0 0
  %1629 = vmatprep.mubr.bf16.mxu0 0
  %1630 = vmatmul.mubr.bf16.gmra.mrb[0].mxu0 %v1595
  %v1631 = vpop.f32.mrb[0].mxu0
  %v1632 = vadd.f32 %v1580, %v1631
  %v1633 = vpop.f32.mrb[0].mxu0
  %v1634 = vpop.f32.mrb[0].mxu0
  %v1635 = vadd.f32 %v1580, %v1634
  %v1636 = vpop.f32.mrb[0].mxu0
  %1637 = vdwg.mxu0
  %v1638 = vmul.f32 %v1632, 0.5
  %v1639 = vmul.f32 %v1635, 0.5
  %v1640 = vmul.f32 %v1632, 0.044715
  %v1641 = vmul.f32 %v1635, 0.044715
  %v1642 = vmul.f32 %v1640, %v1632
  %v1643 = vmul.f32 %v1641, %v1635
  %v1644 = vmul.f32 %v1642, %v1632
  %v1645 = vmul.f32 %v1643, %v1635
  %v1646 = vadd.f32 %v1632, %v1644
  %v1647 = vadd.f32 %v1635, %v1645
  %v1648 = vmul.f32 %v1646, 0.7978846
  %v1649 = vmul.f32 %v1647, 0.7978846
  %v1650 = vtanh.pop %v1648
  %v1651 = vtanh.pop %v1649
  %v1652 = vadd.f32 %v1650, 1.0
  %v1653 = vadd.f32 %v1651, 1.0
  %v1654 = vmul.f32 %v1638, %v1652
  %v1655 = vmul.f32 %v1639, %v1653
  %v1656 = vpack.c.bf16 %v1655, %v1654
  %s1657 = scalar_lea.vmem %s14, 64
  %v1658 = vld [vmem:[%s1657] sm:$0xf]
  %v1659 = vld [vmem:[%s1657 + $0x4] sm:$0xf]
  %v1660 = vld [vmem:[%s1657 + $0x8] sm:$0xf]
  %v1661 = vld [vmem:[%s1657 + $0xc] sm:$0xf]
  %v1662 = vld [vmem:[%s1657 + $0x10] sm:$0xf]
  %v1663 = vld [vmem:[%s1657 + $0x14] sm:$0xf]
  %v1664 = vld [vmem:[%s1657 + $0x18] sm:$0xf]
  %v1665 = vld [vmem:[%s1657 + $0x1c] sm:$0xf]
  %v1666 = vld [vmem:[%s1657 + $0x20] sm:$0xf]
  %v1667 = vld [vmem:[%s1657 + $0x24] sm:$0xf]
  %v1668 = vld [vmem:[%s1657 + $0x28] sm:$0xf]
  %v1669 = vld [vmem:[%s1657 + $0x2c] sm:$0xf]
  %v1670 = vld [vmem:[%s1657 + $0x30] sm:$0xf]
  %v1671 = vld [vmem:[%s1657 + $0x34] sm:$0xf]
  %v1672 = vld [vmem:[%s1657 + $0x38] sm:$0xf]
  %v1673 = vld [vmem:[%s1657 + $0x3c] sm:$0xf]
  %s1674 = scalar_lea.vmem %s15, 1
  %v1675 = vld [vmem:[%s1674] sm:$0x1]
  %v1677 = vlaneseq
  %v1678 = vshrl.u32 %v1677, 7
  %v1679 = vsub.s32 0, %v1678
  %v1680 = vrot.slane %v1675, %v1679
  %v1698 = vunpack.c.l.b16 %v1658
  %v1699 = vunpack.c.l.b16 %v1659
  %v1700 = vunpack.c.l.b16 %v1660
  %v1701 = vunpack.c.l.b16 %v1661
  %v1702 = vunpack.c.l.b16 %v1662
  %v1703 = vunpack.c.l.b16 %v1663
  %v1704 = vunpack.c.l.b16 %v1664
  %v1705 = vunpack.c.l.b16 %v1665
  %v1706 = vunpack.c.l.b16 %v1666
  %v1707 = vunpack.c.l.b16 %v1667
  %v1708 = vunpack.c.l.b16 %v1668
  %v1709 = vunpack.c.l.b16 %v1669
  %v1710 = vunpack.c.l.b16 %v1670
  %v1711 = vunpack.c.l.b16 %v1671
  %v1712 = vunpack.c.l.b16 %v1672
  %v1713 = vunpack.c.l.b16 %v1673
  %v1714 = vpack.c.b16 %v1699, %v1698
  %v1715 = vpack.c.b16 %v1701, %v1700
  %v1716 = vpack.c.b16 %v1703, %v1702
  %v1717 = vpack.c.b16 %v1705, %v1704
  %v1718 = vpack.c.b16 %v1707, %v1706
  %v1719 = vpack.c.b16 %v1709, %v1708
  %v1720 = vpack.c.b16 %v1711, %v1710
  %v1721 = vpack.c.b16 %v1713, %v1712
  %1730 = vmatprep.subr.bf16.mxu0 0
  %1731 = vmatpush1.bf16.msra.mxu0 %v1714
  %1732 = vmatprep.subr.bf16.mxu0 0
  %1733 = vmatpush1.bf16.msra.mxu0 %v1715
  %1734 = vmatprep.subr.bf16.mxu0 0
  %1735 = vmatpush1.bf16.msra.mxu0 %v1716
  %1736 = vmatprep.subr.bf16.mxu0 0
  %1737 = vmatpush1.bf16.msra.mxu0 %v1717
  %1738 = vmatprep.subr.bf16.mxu0 0
  %1739 = vmatpush1.bf16.msra.mxu0 %v1718
  %1740 = vmatprep.subr.bf16.mxu0 0
  %1741 = vmatpush1.bf16.msra.mxu0 %v1719
  %1742 = vmatprep.subr.bf16.mxu0 0
  %1743 = vmatpush1.bf16.msra.mxu0 %v1720
  %1744 = vmatprep.subr.bf16.mxu0 0
  %1745 = vmatpush1.bf16.msra.mxu0 %v1721
  %1746 = vmatprep.subr.bf16.mxu0 0
  %1747 = vmatpush1.bf16.msra.mxu0 0
  %1748 = vmatprep.subr.bf16.mxu0 0
  %1749 = vmatpush1.bf16.msra.mxu0 0
  %1750 = vmatprep.subr.bf16.mxu0 0
  %1751 = vmatpush1.bf16.msra.mxu0 0
  %1752 = vmatprep.subr.bf16.mxu0 0
  %1753 = vmatpush1.bf16.msra.mxu0 0
  %1754 = vmatprep.subr.bf16.mxu0 0
  %1755 = vmatpush1.bf16.msra.mxu0 0
  %1756 = vmatprep.subr.bf16.mxu0 0
  %1757 = vmatpush1.bf16.msra.mxu0 0
  %1758 = vmatprep.subr.bf16.mxu0 0
  %1759 = vmatpush1.bf16.msra.mxu0 0
  %1760 = vmatprep.subr.bf16.mxu0 0
  %1761 = vmatpush1.bf16.msra.mxu0 0
  %1762 = vmatprep.mubr.bf16.mxu0 0
  %1763 = vmatmul.mubr.bf16.gmra.mrb[0].mxu0 %v1656
  %v1764 = vpop.f32.mrb[0].mxu0
  %v1765 = vadd.f32 %v1680, %v1764
  %v1766 = vpop.f32.mrb[0].mxu0
  %v1767 = vpop.f32.mrb[0].mxu0
  %v1768 = vpop.f32.mrb[0].mxu0
  %1769 = vdwg.mxu0
  %v1770 = vadd.f32 %v1520, %v1765
  %vm1771 = vcmask 261127
  %v1772 = vsel %vm1771, %v1770, 0.0
  %1773 = vadd.xlane.f32.xlu0 %v1772
  %v1774 = vpop.xlane.xlu0 %1773
  %v1775 = vmul.f32 %v1774, %v319
  %v1776 = vsub.f32 %v1770, %v1775
  %v1777 = vmul.f32 %v1776, %v1776
  %v1778 = vsel %vm1771, %v1777, 0.0
  %1779 = vadd.xlane.f32.xlu0 %v1778
  %v1780 = vpop.xlane.xlu0 %1779
  %v1781 = vmul.f32 %v1780, %v319
  %v1782 = vadd.f32 %v1781, 1e-05
  %v1783 = vrsqrt.pop %v1782
  %v1784 = vmul.f32 %v1776, %v1783
  %v1786 = vlaneseq
  %v1787 = vshrl.u32 %v1786, 7
  %v1788 = vsub.s32 0, %v1787
  %v1789 = vrot.slane %v103, %v1788
  %v1791 = vmul.f32 %v1784, %v1789
  %v1793 = vlaneseq
  %v1794 = vshrl.u32 %v1793, 7
  %v1795 = vsub.s32 0, %v1794
  %v1796 = vrot.slane %v104, %v1795
  %v1798 = vadd.f32 %v1791, %v1796
  %v1799 = vpack.c.bf16 %v1798, %v1798
  %v1801 = vshrl.u32 %v1799, 16
  %v1803 = vrot.slane %v1801, 3
  %v1805 = vsel %vm312, %v1803, 0
  %v1808 = vsel %vm312, %v243, 0
  %v1811 = vsel %vm312, %v244, 0
  %v1814 = vsel %vm312, %v245, 0
  %v1817 = vsel %vm312, %v246, 0
  %v1820 = vsel %vm312, %v247, 0
  %v1823 = vsel %vm312, %v248, 0
  %v1826 = vsel %vm312, %v249, 0
  %v1829 = vsel %vm312, %v250, 0
  %1831 = vmatprep.subr.bf16.mxu0 0
  %1832 = vmatpush1.bf16.xpose.msra.mxu0 %v1808
  %1833 = vmatprep.subr.bf16.mxu0 0
  %1834 = vmatpush1.bf16.xpose.msra.mxu0 %v1811
  %1835 = vmatprep.subr.bf16.mxu0 0
  %1836 = vmatpush1.bf16.xpose.msra.mxu0 %v1814
  %1837 = vmatprep.subr.bf16.mxu0 0
  %1838 = vmatpush1.bf16.xpose.msra.mxu0 %v1817
  %1839 = vmatprep.subr.bf16.mxu0 0
  %1840 = vmatpush1.bf16.xpose.msra.mxu0 %v1820
  %1841 = vmatprep.subr.bf16.mxu0 0
  %1842 = vmatpush1.bf16.xpose.msra.mxu0 %v1823
  %1843 = vmatprep.subr.bf16.mxu0 0
  %1844 = vmatpush1.bf16.xpose.msra.mxu0 %v1826
  %1845 = vmatprep.subr.bf16.mxu0 0
  %1846 = vmatpush1.bf16.xpose.msra.mxu0 %v1829
  %1847 = vmatprep.subr.bf16.mxu0 0
  %1848 = vmatpush1.bf16.xpose.msra.mxu0 0
  %1849 = vmatprep.subr.bf16.mxu0 0
  %1850 = vmatpush1.bf16.xpose.msra.mxu0 0
  %1851 = vmatprep.subr.bf16.mxu0 0
  %1852 = vmatpush1.bf16.xpose.msra.mxu0 0
  %1853 = vmatprep.subr.bf16.mxu0 0
  %1854 = vmatpush1.bf16.xpose.msra.mxu0 0
  %1855 = vmatprep.subr.bf16.mxu0 0
  %1856 = vmatpush1.bf16.xpose.msra.mxu0 0
  %1857 = vmatprep.subr.bf16.mxu0 0
  %1858 = vmatpush1.bf16.xpose.msra.mxu0 0
  %1859 = vmatprep.subr.bf16.mxu0 0
  %1860 = vmatpush1.bf16.xpose.msra.mxu0 0
  %1861 = vmatprep.subr.bf16.mxu0 0
  %1862 = vmatpush1.bf16.xpose.msra.mxu0 0
  %1863 = vmatprep.mubr.bf16.mxu0 0
  %1864 = vmatmul.mubr.bf16.gmra.mrb[0].mxu0 %v1805
  %v1865 = vpop.f32.mrb[0].mxu0
  %v1866 = vadd.f32 0.0, %v1865
  %v1867 = vpop.f32.mrb[0].mxu0
  %v1868 = vpop.f32.mrb[0].mxu0
  %v1869 = vpop.f32.mrb[0].mxu0
  %1870 = vdwg.mxu0
  %vm1871 = vcmask 1040384
  %v1872 = vsel %vm1871, %v1866, -inf
  %1873 = vmax.xlane.f32.xlu0 %v1872
  %v1874 = vpop.xlane.xlu0 %1873
  %vm1875 = vcmp.ge.f32.partialorder %v1866, %v1874
  %v1876 = vsel %vm1875, %v72, 128
  %v1877 = vsel %vm1871, %v1876, 2147483647
  %v1878 = vand.u32 %v1877, 65535
  %v1879 = vshra.s32 %v1877, 16
  %v1880 = vcvt.s32.f32 %v1878
  %v1881 = vcvt.s32.f32 %v1879
  %1882 = vmin.xlane.f32.xlu0 %v1881
  %v1883 = vpop.xlane.xlu0 %1882
  %vm1884 = vcmp.eq.f32.partialorder %v1881, %v1883
  %v1885 = vsel %vm1884, %v1880, inf
  %1886 = vmin.xlane.f32.xlu0 %v1885
  %v1887 = vpop.xlane.xlu0 %1886
  %v1888 = vcvt.f32.s32 %v1887
  %v1889 = vcvt.f32.s32 %v1883
  %v1890 = vshll.u32 %v1889, 16
  %v1891 = vadd.s32 %v1890, %v1888
  %vm1892 = vcmp.eq.s32.totalorder %v69, 8
  %vm1893 = vcmp.eq.s32.totalorder %v70, 8
  %v1894 = vlaneseq
  %v1895 = vshrl.u32 %v1894, 7
  %v1896 = vsub.s32 0, %v1895
  %v1897 = vrot.slane %v1891, %v1896
  %v1898 = vsel %vm1892, %v1897, %v109
  %v1899 = vsel %vm1893, %v1897, %v110
  %vm1900 = vcmp.eq.s32.totalorder %v72, 8
  %v1901 = vsel %vm1900, %v1891, %v111
  %vm1902 = vcmp.lt.s32.totalorder %v72, 9
  %vm1903 = vmand %vm112, %vm1902
  %vm1904 = vmor %vm106, %vm1903
  %1905 = vset.pattern.permute.xlu0 0
  %1906 = vperm.xlu0 %1905, %v1898
  %v1907 = vpop.permute.xlu0 %1906
  %1908 = vset.pattern.permute.xlu0 0
  %1909 = vperm.xlu0 %1908, %v1899
  %v1910 = vpop.permute.xlu0 %1909
  %vm1911 = vcmp.eq.s32.totalorder %v1907, %v72
  %vm1912 = vcmp.eq.s32.totalorder %v1910, %v72
  %v1913 = vsel %vm1911, 1, 0
  %v1914 = vsel %vm1912, 1, 0
  %v1915 = vcvt.s32.f32 %v1913
  %v1916 = vcvt.s32.f32 %v1914
  %v1917 = vpack.c.bf16 %v1916, %v1915
  %1918 = vmatprep.subr.bf16.mxu0 0
  %1919 = vmatpush1.bf16.msra.mxu0 %v243
  %1920 = vmatprep.subr.bf16.mxu0 0
  %1921 = vmatpush1.bf16.msra.mxu0 %v244
  %1922 = vmatprep.subr.bf16.mxu0 0
  %1923 = vmatpush1.bf16.msra.mxu0 %v245
  %1924 = vmatprep.subr.bf16.mxu0 0
  %1925 = vmatpush1.bf16.msra.mxu0 %v246
  %1926 = vmatprep.subr.bf16.mxu0 0
  %1927 = vmatpush1.bf16.msra.mxu0 %v247
  %1928 = vmatprep.subr.bf16.mxu0 0
  %1929 = vmatpush1.bf16.msra.mxu0 %v248
  %1930 = vmatprep.subr.bf16.mxu0 0
  %1931 = vmatpush1.bf16.msra.mxu0 %v249
  %1932 = vmatprep.subr.bf16.mxu0 0
  %1933 = vmatpush1.bf16.msra.mxu0 %v250
  %1934 = vmatprep.subr.bf16.mxu0 0
  %1935 = vmatpush1.bf16.msra.mxu0 0
  %1936 = vmatprep.subr.bf16.mxu0 0
  %1937 = vmatpush1.bf16.msra.mxu0 0
  %1938 = vmatprep.subr.bf16.mxu0 0
  %1939 = vmatpush1.bf16.msra.mxu0 0
  %1940 = vmatprep.subr.bf16.mxu0 0
  %1941 = vmatpush1.bf16.msra.mxu0 0
  %1942 = vmatprep.subr.bf16.mxu0 0
  %1943 = vmatpush1.bf16.msra.mxu0 0
  %1944 = vmatprep.subr.bf16.mxu0 0
  %1945 = vmatpush1.bf16.msra.mxu0 0
  %1946 = vmatprep.subr.bf16.mxu0 0
  %1947 = vmatpush1.bf16.msra.mxu0 0
  %1948 = vmatprep.subr.bf16.mxu0 0
  %1949 = vmatpush1.bf16.msra.mxu0 0
  %1950 = vmatprep.mubr.bf16.mxu0 0
  %1951 = vmatmul.mubr.bf16.gmra.mrb[0].mxu0 %v1917
  %v1952 = vpop.f32.mrb[0].mxu0
  %v1953 = vadd.f32 %v205, %v1952
  %v1954 = vpop.f32.mrb[0].mxu0
  %v1955 = vpop.f32.mrb[0].mxu0
  %v1956 = vadd.f32 %v208, %v1955
  %v1957 = vpop.f32.mrb[0].mxu0
  %1958 = vdwg.mxu0
  %v1959 = vsel %vm1904, 1, 0
  %v1960 = vlaneseq
  %v1961 = vshrl.u32 %v1960, 7
  %v1962 = vsub.s32 0, %v1961
  %v1963 = vrot.slane %v1959, %v1962
  %vm1964 = vcmp.eq.s32.totalorder %v1963, 1
  %vm1965 = vmand %vm73, %vm1964
  %vm1966 = vmand %vm74, %vm1964
  %v1967 = vsel %vm1965, 0.0, -1e+09
  %v1968 = vsel %vm1966, 0.0, -1e+09
  %v1969 = vsel %vm312, %v1953, 0.0
  %1970 = vadd.xlane.f32.xlu0 %v1969
  %v1971 = vpop.xlane.xlu0 %1970
  %v1972 = vsel %vm312, %v1956, 0.0
  %1973 = vadd.xlane.f32.xlu0 %v1972
  %v1974 = vpop.xlane.xlu0 %1973
  %v1975 = vmul.f32 %v1971, %v319
  %v1976 = vmul.f32 %v1974, %v319
  %v1977 = vsub.f32 %v1953, %v1975
  %v1978 = vsub.f32 %v1956, %v1976
  %v1979 = vmul.f32 %v1977, %v1977
  %v1980 = vmul.f32 %v1978, %v1978
  %v1981 = vsel %vm312, %v1979, 0.0
  %1982 = vadd.xlane.f32.xlu0 %v1981
  %v1983 = vpop.xlane.xlu0 %1982
  %v1984 = vsel %vm312, %v1980, 0.0
  %1985 = vadd.xlane.f32.xlu0 %v1984
  %v1986 = vpop.xlane.xlu0 %1985
  %v1987 = vmul.f32 %v1983, %v319
  %v1988 = vmul.f32 %v1986, %v319
  %v1989 = vadd.f32 %v1987, 1e-05
  %v1990 = vadd.f32 %v1988, 1e-05
  %v1991 = vrsqrt.pop %v1989
  %v1992 = vrsqrt.pop %v1990
  %v1993 = vmul.f32 %v1977, %v1991
  %v1994 = vmul.f32 %v1978, %v1992
  %v1995 = vmul.f32 %v1993, %v344
  %v1996 = vmul.f32 %v1994, %v344
  %v1997 = vadd.f32 %v1995, %v352
  %v1998 = vadd.f32 %v1996, %v352
  %v1999 = vpack.c.bf16 %v1998, %v1997
  %v2001 = vsel %vm312, %v1999, 0
  %2003 = vmatprep.subr.bf16.mxu0 0
  %2004 = vmatpush1.bf16.msra.mxu0 %v376
  %2005 = vmatprep.subr.bf16.mxu0 0
  %2006 = vmatpush1.bf16.msra.mxu0 %v377
  %2007 = vmatprep.subr.bf16.mxu0 0
  %2008 = vmatpush1.bf16.msra.mxu0 0
  %2009 = vmatprep.subr.bf16.mxu0 0
  %2010 = vmatpush1.bf16.msra.mxu0 0
  %2011 = vmatprep.subr.bf16.mxu0 0
  %2012 = vmatpush1.bf16.msra.mxu0 0
  %2013 = vmatprep.subr.bf16.mxu0 0
  %2014 = vmatpush1.bf16.msra.mxu0 0
  %2015 = vmatprep.subr.bf16.mxu0 0
  %2016 = vmatpush1.bf16.msra.mxu0 0
  %2017 = vmatprep.subr.bf16.mxu0 0
  %2018 = vmatpush1.bf16.msra.mxu0 0
  %2019 = vmatprep.subr.bf16.mxu0 0
  %2020 = vmatpush1.bf16.msra.mxu0 0
  %2021 = vmatprep.subr.bf16.mxu0 0
  %2022 = vmatpush1.bf16.msra.mxu0 0
  %2023 = vmatprep.subr.bf16.mxu0 0
  %2024 = vmatpush1.bf16.msra.mxu0 0
  %2025 = vmatprep.subr.bf16.mxu0 0
  %2026 = vmatpush1.bf16.msra.mxu0 0
  %2027 = vmatprep.subr.bf16.mxu0 0
  %2028 = vmatpush1.bf16.msra.mxu0 0
  %2029 = vmatprep.subr.bf16.mxu0 0
  %2030 = vmatpush1.bf16.msra.mxu0 0
  %2031 = vmatprep.subr.bf16.mxu0 0
  %2032 = vmatpush1.bf16.msra.mxu0 0
  %2033 = vmatprep.subr.bf16.mxu0 0
  %2034 = vmatpush1.bf16.msra.mxu0 0
  %2035 = vmatprep.mubr.bf16.mxu0 0
  %2036 = vmatmul.mubr.bf16.gmra.mrb[0].mxu0 %v2001
  %v2037 = vpop.f32.mrb[0].mxu0
  %v2038 = vadd.f32 %v366, %v2037
  %v2039 = vpop.f32.mrb[0].mxu0
  %v2040 = vpop.f32.mrb[0].mxu0
  %v2041 = vadd.f32 %v366, %v2040
  %v2042 = vpop.f32.mrb[0].mxu0
  %2043 = vdwg.mxu0
  %v2044 = vpack.c.bf16 %v2041, %v2038
  %2046 = vrot.lane.b32.xlu0 %v2044, 96
  %v2047 = vpop.permute.xlu0 %2046
  %v2049 = vsel %vm432, %v2044, 0
  %v2052 = vsel %vm432, %v2047, 0
  %2054 = vmatprep.subr.bf16.mxu0 0
  %2055 = vmatpush1.bf16.xpose.msra.mxu0 %v2052
  %2056 = vmatprep.subr.bf16.mxu0 0
  %2057 = vmatpush1.bf16.xpose.msra.mxu0 0
  %2058 = vmatprep.subr.bf16.mxu0 0
  %2059 = vmatpush1.bf16.xpose.msra.mxu0 0
  %2060 = vmatprep.subr.bf16.mxu0 0
  %2061 = vmatpush1.bf16.xpose.msra.mxu0 0
  %2062 = vmatprep.subr.bf16.mxu0 0
  %2063 = vmatpush1.bf16.xpose.msra.mxu0 0
  %2064 = vmatprep.subr.bf16.mxu0 0
  %2065 = vmatpush1.bf16.xpose.msra.mxu0 0
  %2066 = vmatprep.subr.bf16.mxu0 0
  %2067 = vmatpush1.bf16.xpose.msra.mxu0 0
  %2068 = vmatprep.subr.bf16.mxu0 0
  %2069 = vmatpush1.bf16.xpose.msra.mxu0 0
  %2070 = vmatprep.subr.bf16.mxu0 0
  %2071 = vmatpush1.bf16.xpose.msra.mxu0 0
  %2072 = vmatprep.subr.bf16.mxu0 0
  %2073 = vmatpush1.bf16.xpose.msra.mxu0 0
  %2074 = vmatprep.subr.bf16.mxu0 0
  %2075 = vmatpush1.bf16.xpose.msra.mxu0 0
  %2076 = vmatprep.subr.bf16.mxu0 0
  %2077 = vmatpush1.bf16.xpose.msra.mxu0 0
  %2078 = vmatprep.subr.bf16.mxu0 0
  %2079 = vmatpush1.bf16.xpose.msra.mxu0 0
  %2080 = vmatprep.subr.bf16.mxu0 0
  %2081 = vmatpush1.bf16.xpose.msra.mxu0 0
  %2082 = vmatprep.subr.bf16.mxu0 0
  %2083 = vmatpush1.bf16.xpose.msra.mxu0 0
  %2084 = vmatprep.subr.bf16.mxu0 0
  %2085 = vmatpush1.bf16.xpose.msra.mxu0 0
  %2086 = vmatprep.mubr.bf16.mxu0 0
  %2087 = vmatmul.mubr.bf16.gmra.mrb[0].mxu0 %v2049
  %v2088 = vpop.f32.mrb[0].mxu0
  %v2089 = vadd.f32 0.0, %v2088
  %v2090 = vpop.f32.mrb[0].mxu0
  %v2091 = vpop.f32.mrb[0].mxu0
  %v2092 = vadd.f32 0.0, %v2091
  %v2093 = vpop.f32.mrb[0].mxu0
  %2094 = vdwg.mxu0
  %v2095 = vmul.f32 %v2089, 0.25
  %v2096 = vmul.f32 %v2092, 0.25
  %v2097 = vadd.f32 %v2095, %v1967
  %v2098 = vadd.f32 %v2096, %v1968
  %v2099 = vsel %vm432, %v2097, -inf
  %2100 = vmax.xlane.f32.xlu0 %v2099
  %v2101 = vpop.xlane.xlu0 %2100
  %v2102 = vsel %vm432, %v2098, -inf
  %2103 = vmax.xlane.f32.xlu0 %v2102
  %v2104 = vpop.xlane.xlu0 %2103
  %v2105 = vsub.f32 %v2097, %v2101
  %v2106 = vsub.f32 %v2098, %v2104
  %v2107 = vmul.f32 %v2105, 1.442695
  %v2108 = vpow.pop %v2107
  %v2109 = vmul.f32 %v2106, 1.442695
  %v2110 = vpow.pop %v2109
  %v2111 = vsel %vm432, %v2108, 0.0
  %2112 = vadd.xlane.f32.xlu0 %v2111
  %v2113 = vpop.xlane.xlu0 %2112
  %v2114 = vsel %vm432, %v2110, 0.0
  %2115 = vadd.xlane.f32.xlu0 %v2114
  %v2116 = vpop.xlane.xlu0 %2115
  %v2117 = vrcp.pop %v2113
  %v2118 = vmul.f32 %v2108, %v2117
  %v2119 = vrcp.pop %v2116
  %v2120 = vmul.f32 %v2110, %v2119
  %v2121 = vpack.c.bf16 %v2120, %v2118
  %2122 = vrot.lane.b32.xlu0 %v2044, 64
  %v2123 = vpop.permute.xlu0 %2122
  %v2126 = vsel %vm432, %v2121, 0
  %2128 = vmatprep.subr.bf16.mxu0 0
  %2129 = vmatpush1.bf16.msra.mxu0 %v2123
  %2130 = vmatprep.subr.bf16.mxu0 0
  %2131 = vmatpush1.bf16.msra.mxu0 0
  %2132 = vmatprep.subr.bf16.mxu0 0
  %2133 = vmatpush1.bf16.msra.mxu0 0
  %2134 = vmatprep.subr.bf16.mxu0 0
  %2135 = vmatpush1.bf16.msra.mxu0 0
  %2136 = vmatprep.subr.bf16.mxu0 0
  %2137 = vmatpush1.bf16.msra.mxu0 0
  %2138 = vmatprep.subr.bf16.mxu0 0
  %2139 = vmatpush1.bf16.msra.mxu0 0
  %2140 = vmatprep.subr.bf16.mxu0 0
  %2141 = vmatpush1.bf16.msra.mxu0 0
  %2142 = vmatprep.subr.bf16.mxu0 0
  %2143 = vmatpush1.bf16.msra.mxu0 0
  %2144 = vmatprep.subr.bf16.mxu0 0
  %2145 = vmatpush1.bf16.msra.mxu0 0
  %2146 = vmatprep.subr.bf16.mxu0 0
  %2147 = vmatpush1.bf16.msra.mxu0 0
  %2148 = vmatprep.subr.bf16.mxu0 0
  %2149 = vmatpush1.bf16.msra.mxu0 0
  %2150 = vmatprep.subr.bf16.mxu0 0
  %2151 = vmatpush1.bf16.msra.mxu0 0
  %2152 = vmatprep.subr.bf16.mxu0 0
  %2153 = vmatpush1.bf16.msra.mxu0 0
  %2154 = vmatprep.subr.bf16.mxu0 0
  %2155 = vmatpush1.bf16.msra.mxu0 0
  %2156 = vmatprep.subr.bf16.mxu0 0
  %2157 = vmatpush1.bf16.msra.mxu0 0
  %2158 = vmatprep.subr.bf16.mxu0 0
  %2159 = vmatpush1.bf16.msra.mxu0 0
  %2160 = vmatprep.mubr.bf16.mxu0 0
  %2161 = vmatmul.mubr.bf16.gmra.mrb[0].mxu0 %v2126
  %v2162 = vpop.f32.mrb[0].mxu0
  %v2163 = vadd.f32 0.0, %v2162
  %v2164 = vpop.f32.mrb[0].mxu0
  %v2165 = vpop.f32.mrb[0].mxu0
  %v2166 = vadd.f32 0.0, %v2165
  %v2167 = vpop.f32.mrb[0].mxu0
  %2168 = vdwg.mxu0
  %v2169 = vpack.c.bf16 %v2166, %v2163
  %2170 = vrot.lane.b32.xlu0 %v2044, 112
  %v2171 = vpop.permute.xlu0 %2170
  %2172 = vrot.lane.b32.xlu0 %v2044, 80
  %v2173 = vpop.permute.xlu0 %2172
  %v2175 = vsel %vm432, %v2171, 0
  %v2178 = vsel %vm432, %v2173, 0
  %2180 = vmatprep.subr.bf16.mxu0 0
  %2181 = vmatpush1.bf16.xpose.msra.mxu0 %v2178
  %2182 = vmatprep.subr.bf16.mxu0 0
  %2183 = vmatpush1.bf16.xpose.msra.mxu0 0
  %2184 = vmatprep.subr.bf16.mxu0 0
  %2185 = vmatpush1.bf16.xpose.msra.mxu0 0
  %2186 = vmatprep.subr.bf16.mxu0 0
  %2187 = vmatpush1.bf16.xpose.msra.mxu0 0
  %2188 = vmatprep.subr.bf16.mxu0 0
  %2189 = vmatpush1.bf16.xpose.msra.mxu0 0
  %2190 = vmatprep.subr.bf16.mxu0 0
  %2191 = vmatpush1.bf16.xpose.msra.mxu0 0
  %2192 = vmatprep.subr.bf16.mxu0 0
  %2193 = vmatpush1.bf16.xpose.msra.mxu0 0
  %2194 = vmatprep.subr.bf16.mxu0 0
  %2195 = vmatpush1.bf16.xpose.msra.mxu0 0
  %2196 = vmatprep.subr.bf16.mxu0 0
  %2197 = vmatpush1.bf16.xpose.msra.mxu0 0
  %2198 = vmatprep.subr.bf16.mxu0 0
  %2199 = vmatpush1.bf16.xpose.msra.mxu0 0
  %2200 = vmatprep.subr.bf16.mxu0 0
  %2201 = vmatpush1.bf16.xpose.msra.mxu0 0
  %2202 = vmatprep.subr.bf16.mxu0 0
  %2203 = vmatpush1.bf16.xpose.msra.mxu0 0
  %2204 = vmatprep.subr.bf16.mxu0 0
  %2205 = vmatpush1.bf16.xpose.msra.mxu0 0
  %2206 = vmatprep.subr.bf16.mxu0 0
  %2207 = vmatpush1.bf16.xpose.msra.mxu0 0
  %2208 = vmatprep.subr.bf16.mxu0 0
  %2209 = vmatpush1.bf16.xpose.msra.mxu0 0
  %2210 = vmatprep.subr.bf16.mxu0 0
  %2211 = vmatpush1.bf16.xpose.msra.mxu0 0
  %2212 = vmatprep.mubr.bf16.mxu0 0
  %2213 = vmatmul.mubr.bf16.gmra.mrb[0].mxu0 %v2175
  %v2214 = vpop.f32.mrb[0].mxu0
  %v2215 = vadd.f32 0.0, %v2214
  %v2216 = vpop.f32.mrb[0].mxu0
  %v2217 = vpop.f32.mrb[0].mxu0
  %v2218 = vadd.f32 0.0, %v2217
  %v2219 = vpop.f32.mrb[0].mxu0
  %2220 = vdwg.mxu0
  %v2221 = vmul.f32 %v2215, 0.25
  %v2222 = vmul.f32 %v2218, 0.25
  %v2223 = vadd.f32 %v2221, %v1967
  %v2224 = vadd.f32 %v2222, %v1968
  %v2225 = vsel %vm432, %v2223, -inf
  %2226 = vmax.xlane.f32.xlu0 %v2225
  %v2227 = vpop.xlane.xlu0 %2226
  %v2228 = vsel %vm432, %v2224, -inf
  %2229 = vmax.xlane.f32.xlu0 %v2228
  %v2230 = vpop.xlane.xlu0 %2229
  %v2231 = vsub.f32 %v2223, %v2227
  %v2232 = vsub.f32 %v2224, %v2230
  %v2233 = vmul.f32 %v2231, 1.442695
  %v2234 = vpow.pop %v2233
  %v2235 = vmul.f32 %v2232, 1.442695
  %v2236 = vpow.pop %v2235
  %v2237 = vsel %vm432, %v2234, 0.0
  %2238 = vadd.xlane.f32.xlu0 %v2237
  %v2239 = vpop.xlane.xlu0 %2238
  %v2240 = vsel %vm432, %v2236, 0.0
  %2241 = vadd.xlane.f32.xlu0 %v2240
  %v2242 = vpop.xlane.xlu0 %2241
  %v2243 = vrcp.pop %v2239
  %v2244 = vmul.f32 %v2234, %v2243
  %v2245 = vrcp.pop %v2242
  %v2246 = vmul.f32 %v2236, %v2245
  %v2247 = vpack.c.bf16 %v2246, %v2244
  %2248 = vrot.lane.b32.xlu0 %v2044, 48
  %v2249 = vpop.permute.xlu0 %2248
  %v2252 = vsel %vm432, %v2247, 0
  %2254 = vmatprep.subr.bf16.mxu0 0
  %2255 = vmatpush1.bf16.msra.mxu0 %v2249
  %2256 = vmatprep.subr.bf16.mxu0 0
  %2257 = vmatpush1.bf16.msra.mxu0 0
  %2258 = vmatprep.subr.bf16.mxu0 0
  %2259 = vmatpush1.bf16.msra.mxu0 0
  %2260 = vmatprep.subr.bf16.mxu0 0
  %2261 = vmatpush1.bf16.msra.mxu0 0
  %2262 = vmatprep.subr.bf16.mxu0 0
  %2263 = vmatpush1.bf16.msra.mxu0 0
  %2264 = vmatprep.subr.bf16.mxu0 0
  %2265 = vmatpush1.bf16.msra.mxu0 0
  %2266 = vmatprep.subr.bf16.mxu0 0
  %2267 = vmatpush1.bf16.msra.mxu0 0
  %2268 = vmatprep.subr.bf16.mxu0 0
  %2269 = vmatpush1.bf16.msra.mxu0 0
  %2270 = vmatprep.subr.bf16.mxu0 0
  %2271 = vmatpush1.bf16.msra.mxu0 0
  %2272 = vmatprep.subr.bf16.mxu0 0
  %2273 = vmatpush1.bf16.msra.mxu0 0
  %2274 = vmatprep.subr.bf16.mxu0 0
  %2275 = vmatpush1.bf16.msra.mxu0 0
  %2276 = vmatprep.subr.bf16.mxu0 0
  %2277 = vmatpush1.bf16.msra.mxu0 0
  %2278 = vmatprep.subr.bf16.mxu0 0
  %2279 = vmatpush1.bf16.msra.mxu0 0
  %2280 = vmatprep.subr.bf16.mxu0 0
  %2281 = vmatpush1.bf16.msra.mxu0 0
  %2282 = vmatprep.subr.bf16.mxu0 0
  %2283 = vmatpush1.bf16.msra.mxu0 0
  %2284 = vmatprep.subr.bf16.mxu0 0
  %2285 = vmatpush1.bf16.msra.mxu0 0
  %2286 = vmatprep.mubr.bf16.mxu0 0
  %2287 = vmatmul.mubr.bf16.gmra.mrb[0].mxu0 %v2252
  %v2288 = vpop.f32.mrb[0].mxu0
  %v2289 = vadd.f32 0.0, %v2288
  %v2290 = vpop.f32.mrb[0].mxu0
  %v2291 = vpop.f32.mrb[0].mxu0
  %v2292 = vadd.f32 0.0, %v2291
  %v2293 = vpop.f32.mrb[0].mxu0
  %2294 = vdwg.mxu0
  %v2295 = vpack.c.bf16 %v2292, %v2289
  %v2297 = vsel %vm432, %v2295, 0
  %2299 = vmatprep.subr.bf16.mxu0 0
  %2300 = vmatpush1.bf16.msra.mxu0 %v685
  %2301 = vmatprep.subr.bf16.mxu0 0
  %2302 = vmatpush1.bf16.msra.mxu0 0
  %2303 = vmatprep.subr.bf16.mxu0 0
  %2304 = vmatpush1.bf16.msra.mxu0 0
  %2305 = vmatprep.subr.bf16.mxu0 0
  %2306 = vmatpush1.bf16.msra.mxu0 0
  %2307 = vmatprep.subr.bf16.mxu0 0
  %2308 = vmatpush1.bf16.msra.mxu0 0
  %2309 = vmatprep.subr.bf16.mxu0 0
  %2310 = vmatpush1.bf16.msra.mxu0 0
  %2311 = vmatprep.subr.bf16.mxu0 0
  %2312 = vmatpush1.bf16.msra.mxu0 0
  %2313 = vmatprep.subr.bf16.mxu0 0
  %2314 = vmatpush1.bf16.msra.mxu0 0
  %2315 = vmatprep.subr.bf16.mxu0 0
  %2316 = vmatpush1.bf16.msra.mxu0 0
  %2317 = vmatprep.subr.bf16.mxu0 0
  %2318 = vmatpush1.bf16.msra.mxu0 0
  %2319 = vmatprep.subr.bf16.mxu0 0
  %2320 = vmatpush1.bf16.msra.mxu0 0
  %2321 = vmatprep.subr.bf16.mxu0 0
  %2322 = vmatpush1.bf16.msra.mxu0 0
  %2323 = vmatprep.subr.bf16.mxu0 0
  %2324 = vmatpush1.bf16.msra.mxu0 0
  %2325 = vmatprep.subr.bf16.mxu0 0
  %2326 = vmatpush1.bf16.msra.mxu0 0
  %2327 = vmatprep.subr.bf16.mxu0 0
  %2328 = vmatpush1.bf16.msra.mxu0 0
  %2329 = vmatprep.subr.bf16.mxu0 0
  %2330 = vmatpush1.bf16.msra.mxu0 0
  %2331 = vmatprep.mubr.bf16.mxu0 0
  %2332 = vmatmul.mubr.bf16.gmra.mrb[0].mxu0 %v2297
  %v2333 = vpop.f32.mrb[0].mxu0
  %v2334 = vadd.f32 0.0, %v2333
  %v2335 = vpop.f32.mrb[0].mxu0
  %v2336 = vpop.f32.mrb[0].mxu0
  %v2337 = vadd.f32 0.0, %v2336
  %v2338 = vpop.f32.mrb[0].mxu0
  %2339 = vdwg.mxu0
  %v2341 = vsel %vm432, %v2169, 0
  %2343 = vmatprep.subr.bf16.mxu0 0
  %2344 = vmatpush1.bf16.msra.mxu0 %v735
  %2345 = vmatprep.subr.bf16.mxu0 0
  %2346 = vmatpush1.bf16.msra.mxu0 0
  %2347 = vmatprep.subr.bf16.mxu0 0
  %2348 = vmatpush1.bf16.msra.mxu0 0
  %2349 = vmatprep.subr.bf16.mxu0 0
  %2350 = vmatpush1.bf16.msra.mxu0 0
  %2351 = vmatprep.subr.bf16.mxu0 0
  %2352 = vmatpush1.bf16.msra.mxu0 0
  %2353 = vmatprep.subr.bf16.mxu0 0
  %2354 = vmatpush1.bf16.msra.mxu0 0
  %2355 = vmatprep.subr.bf16.mxu0 0
  %2356 = vmatpush1.bf16.msra.mxu0 0
  %2357 = vmatprep.subr.bf16.mxu0 0
  %2358 = vmatpush1.bf16.msra.mxu0 0
  %2359 = vmatprep.subr.bf16.mxu0 0
  %2360 = vmatpush1.bf16.msra.mxu0 0
  %2361 = vmatprep.subr.bf16.mxu0 0
  %2362 = vmatpush1.bf16.msra.mxu0 0
  %2363 = vmatprep.subr.bf16.mxu0 0
  %2364 = vmatpush1.bf16.msra.mxu0 0
  %2365 = vmatprep.subr.bf16.mxu0 0
  %2366 = vmatpush1.bf16.msra.mxu0 0
  %2367 = vmatprep.subr.bf16.mxu0 0
  %2368 = vmatpush1.bf16.msra.mxu0 0
  %2369 = vmatprep.subr.bf16.mxu0 0
  %2370 = vmatpush1.bf16.msra.mxu0 0
  %2371 = vmatprep.subr.bf16.mxu0 0
  %2372 = vmatpush1.bf16.msra.mxu0 0
  %2373 = vmatprep.subr.bf16.mxu0 0
  %2374 = vmatpush1.bf16.msra.mxu0 0
  %2375 = vmatprep.mubr.bf16.mxu0 0
  %2376 = vmatmul.mubr.bf16.gmra.mrb[0].mxu0 %v2341
  %v2377 = vpop.f32.mrb[0].mxu0
  %v2378 = vadd.f32 %v2334, %v2377
  %v2379 = vpop.f32.mrb[0].mxu0
  %v2380 = vpop.f32.mrb[0].mxu0
  %v2381 = vadd.f32 %v2337, %v2380
  %v2382 = vpop.f32.mrb[0].mxu0
  %2383 = vdwg.mxu0
  %v2384 = vadd.f32 %v1953, %v2378
  %v2385 = vadd.f32 %v1956, %v2381
  %v2386 = vadd.f32 %v2384, %v788
  %v2387 = vadd.f32 %v2385, %v788
  %v2388 = vsel %vm312, %v2386, 0.0
  %2389 = vadd.xlane.f32.xlu0 %v2388
  %v2390 = vpop.xlane.xlu0 %2389
  %v2391 = vsel %vm312, %v2387, 0.0
  %2392 = vadd.xlane.f32.xlu0 %v2391
  %v2393 = vpop.xlane.xlu0 %2392
  %v2394 = vmul.f32 %v2390, %v319
  %v2395 = vmul.f32 %v2393, %v319
  %v2396 = vsub.f32 %v2386, %v2394
  %v2397 = vsub.f32 %v2387, %v2395
  %v2398 = vmul.f32 %v2396, %v2396
  %v2399 = vmul.f32 %v2397, %v2397
  %v2400 = vsel %vm312, %v2398, 0.0
  %2401 = vadd.xlane.f32.xlu0 %v2400
  %v2402 = vpop.xlane.xlu0 %2401
  %v2403 = vsel %vm312, %v2399, 0.0
  %2404 = vadd.xlane.f32.xlu0 %v2403
  %v2405 = vpop.xlane.xlu0 %2404
  %v2406 = vmul.f32 %v2402, %v319
  %v2407 = vmul.f32 %v2405, %v319
  %v2408 = vadd.f32 %v2406, 1e-05
  %v2409 = vadd.f32 %v2407, 1e-05
  %v2410 = vrsqrt.pop %v2408
  %v2411 = vrsqrt.pop %v2409
  %v2412 = vmul.f32 %v2396, %v2410
  %v2413 = vmul.f32 %v2397, %v2411
  %v2414 = vmul.f32 %v2412, %v824
  %v2415 = vmul.f32 %v2413, %v824
  %v2416 = vadd.f32 %v2414, %v832
  %v2417 = vadd.f32 %v2415, %v832
  %v2418 = vpack.c.bf16 %v2417, %v2416
  %v2420 = vsel %vm312, %v2418, 0
  %2422 = vmatprep.subr.bf16.mxu0 0
  %2423 = vmatpush1.bf16.msra.mxu0 %v856
  %2424 = vmatprep.subr.bf16.mxu0 0
  %2425 = vmatpush1.bf16.msra.mxu0 %v857
  %2426 = vmatprep.subr.bf16.mxu0 0
  %2427 = vmatpush1.bf16.msra.mxu0 0
  %2428 = vmatprep.subr.bf16.mxu0 0
  %2429 = vmatpush1.bf16.msra.mxu0 0
  %2430 = vmatprep.subr.bf16.mxu0 0
  %2431 = vmatpush1.bf16.msra.mxu0 0
  %2432 = vmatprep.subr.bf16.mxu0 0
  %2433 = vmatpush1.bf16.msra.mxu0 0
  %2434 = vmatprep.subr.bf16.mxu0 0
  %2435 = vmatpush1.bf16.msra.mxu0 0
  %2436 = vmatprep.subr.bf16.mxu0 0
  %2437 = vmatpush1.bf16.msra.mxu0 0
  %2438 = vmatprep.subr.bf16.mxu0 0
  %2439 = vmatpush1.bf16.msra.mxu0 0
  %2440 = vmatprep.subr.bf16.mxu0 0
  %2441 = vmatpush1.bf16.msra.mxu0 0
  %2442 = vmatprep.subr.bf16.mxu0 0
  %2443 = vmatpush1.bf16.msra.mxu0 0
  %2444 = vmatprep.subr.bf16.mxu0 0
  %2445 = vmatpush1.bf16.msra.mxu0 0
  %2446 = vmatprep.subr.bf16.mxu0 0
  %2447 = vmatpush1.bf16.msra.mxu0 0
  %2448 = vmatprep.subr.bf16.mxu0 0
  %2449 = vmatpush1.bf16.msra.mxu0 0
  %2450 = vmatprep.subr.bf16.mxu0 0
  %2451 = vmatpush1.bf16.msra.mxu0 0
  %2452 = vmatprep.subr.bf16.mxu0 0
  %2453 = vmatpush1.bf16.msra.mxu0 0
  %2454 = vmatprep.mubr.bf16.mxu0 0
  %2455 = vmatmul.mubr.bf16.gmra.mrb[0].mxu0 %v2420
  %v2456 = vpop.f32.mrb[0].mxu0
  %v2457 = vadd.f32 %v846, %v2456
  %v2458 = vpop.f32.mrb[0].mxu0
  %v2459 = vpop.f32.mrb[0].mxu0
  %v2460 = vadd.f32 %v846, %v2459
  %v2461 = vpop.f32.mrb[0].mxu0
  %2462 = vdwg.mxu0
  %v2463 = vmul.f32 %v2457, 0.5
  %v2464 = vmul.f32 %v2460, 0.5
  %v2465 = vmul.f32 %v2457, 0.044715
  %v2466 = vmul.f32 %v2460, 0.044715
  %v2467 = vmul.f32 %v2465, %v2457
  %v2468 = vmul.f32 %v2466, %v2460
  %v2469 = vmul.f32 %v2467, %v2457
  %v2470 = vmul.f32 %v2468, %v2460
  %v2471 = vadd.f32 %v2457, %v2469
  %v2472 = vadd.f32 %v2460, %v2470
  %v2473 = vmul.f32 %v2471, 0.7978846
  %v2474 = vmul.f32 %v2472, 0.7978846
  %v2475 = vtanh.pop %v2473
  %v2476 = vtanh.pop %v2474
  %v2477 = vadd.f32 %v2475, 1.0
  %v2478 = vadd.f32 %v2476, 1.0
  %v2479 = vmul.f32 %v2463, %v2477
  %v2480 = vmul.f32 %v2464, %v2478
  %v2481 = vpack.c.bf16 %v2480, %v2479
  %2482 = vmatprep.subr.bf16.mxu0 0
  %2483 = vmatpush1.bf16.msra.mxu0 %v978
  %2484 = vmatprep.subr.bf16.mxu0 0
  %2485 = vmatpush1.bf16.msra.mxu0 %v979
  %2486 = vmatprep.subr.bf16.mxu0 0
  %2487 = vmatpush1.bf16.msra.mxu0 %v980
  %2488 = vmatprep.subr.bf16.mxu0 0
  %2489 = vmatpush1.bf16.msra.mxu0 %v981
  %2490 = vmatprep.subr.bf16.mxu0 0
  %2491 = vmatpush1.bf16.msra.mxu0 %v982
  %2492 = vmatprep.subr.bf16.mxu0 0
  %2493 = vmatpush1.bf16.msra.mxu0 %v983
  %2494 = vmatprep.subr.bf16.mxu0 0
  %2495 = vmatpush1.bf16.msra.mxu0 %v984
  %2496 = vmatprep.subr.bf16.mxu0 0
  %2497 = vmatpush1.bf16.msra.mxu0 %v985
  %2498 = vmatprep.subr.bf16.mxu0 0
  %2499 = vmatpush1.bf16.msra.mxu0 0
  %2500 = vmatprep.subr.bf16.mxu0 0
  %2501 = vmatpush1.bf16.msra.mxu0 0
  %2502 = vmatprep.subr.bf16.mxu0 0
  %2503 = vmatpush1.bf16.msra.mxu0 0
  %2504 = vmatprep.subr.bf16.mxu0 0
  %2505 = vmatpush1.bf16.msra.mxu0 0
  %2506 = vmatprep.subr.bf16.mxu0 0
  %2507 = vmatpush1.bf16.msra.mxu0 0
  %2508 = vmatprep.subr.bf16.mxu0 0
  %2509 = vmatpush1.bf16.msra.mxu0 0
  %2510 = vmatprep.subr.bf16.mxu0 0
  %2511 = vmatpush1.bf16.msra.mxu0 0
  %2512 = vmatprep.subr.bf16.mxu0 0
  %2513 = vmatpush1.bf16.msra.mxu0 0
  %2514 = vmatprep.mubr.bf16.mxu0 0
  %2515 = vmatmul.mubr.bf16.gmra.mrb[0].mxu0 %v2481
  %v2516 = vpop.f32.mrb[0].mxu0
  %v2517 = vadd.f32 %v944, %v2516
  %v2518 = vpop.f32.mrb[0].mxu0
  %v2519 = vpop.f32.mrb[0].mxu0
  %v2520 = vadd.f32 %v944, %v2519
  %v2521 = vpop.f32.mrb[0].mxu0
  %2522 = vdwg.mxu0
  %v2523 = vadd.f32 %v2386, %v2517
  %v2524 = vadd.f32 %v2387, %v2520
  %v2525 = vsel %vm312, %v2523, 0.0
  %2526 = vadd.xlane.f32.xlu0 %v2525
  %v2527 = vpop.xlane.xlu0 %2526
  %v2528 = vsel %vm312, %v2524, 0.0
  %2529 = vadd.xlane.f32.xlu0 %v2528
  %v2530 = vpop.xlane.xlu0 %2529
  %v2531 = vmul.f32 %v2527, %v319
  %v2532 = vmul.f32 %v2530, %v319
  %v2533 = vsub.f32 %v2523, %v2531
  %v2534 = vsub.f32 %v2524, %v2532
  %v2535 = vmul.f32 %v2533, %v2533
  %v2536 = vmul.f32 %v2534, %v2534
  %v2537 = vsel %vm312, %v2535, 0.0
  %2538 = vadd.xlane.f32.xlu0 %v2537
  %v2539 = vpop.xlane.xlu0 %2538
  %v2540 = vsel %vm312, %v2536, 0.0
  %2541 = vadd.xlane.f32.xlu0 %v2540
  %v2542 = vpop.xlane.xlu0 %2541
  %v2543 = vmul.f32 %v2539, %v319
  %v2544 = vmul.f32 %v2542, %v319
  %v2545 = vadd.f32 %v2543, 1e-05
  %v2546 = vadd.f32 %v2544, 1e-05
  %v2547 = vrsqrt.pop %v2545
  %v2548 = vrsqrt.pop %v2546
  %v2549 = vmul.f32 %v2533, %v2547
  %v2550 = vmul.f32 %v2534, %v2548
  %v2551 = vmul.f32 %v2549, %v1071
  %v2552 = vmul.f32 %v2550, %v1071
  %v2553 = vadd.f32 %v2551, %v1079
  %v2554 = vadd.f32 %v2552, %v1079
  %v2555 = vpack.c.bf16 %v2554, %v2553
  %v2557 = vsel %vm312, %v2555, 0
  %2559 = vmatprep.subr.bf16.mxu0 0
  %2560 = vmatpush1.bf16.msra.mxu0 %v1105
  %2561 = vmatprep.subr.bf16.mxu0 0
  %2562 = vmatpush1.bf16.msra.mxu0 %v1106
  %2563 = vmatprep.subr.bf16.mxu0 0
  %2564 = vmatpush1.bf16.msra.mxu0 0
  %2565 = vmatprep.subr.bf16.mxu0 0
  %2566 = vmatpush1.bf16.msra.mxu0 0
  %2567 = vmatprep.subr.bf16.mxu0 0
  %2568 = vmatpush1.bf16.msra.mxu0 0
  %2569 = vmatprep.subr.bf16.mxu0 0
  %2570 = vmatpush1.bf16.msra.mxu0 0
  %2571 = vmatprep.subr.bf16.mxu0 0
  %2572 = vmatpush1.bf16.msra.mxu0 0
  %2573 = vmatprep.subr.bf16.mxu0 0
  %2574 = vmatpush1.bf16.msra.mxu0 0
  %2575 = vmatprep.subr.bf16.mxu0 0
  %2576 = vmatpush1.bf16.msra.mxu0 0
  %2577 = vmatprep.subr.bf16.mxu0 0
  %2578 = vmatpush1.bf16.msra.mxu0 0
  %2579 = vmatprep.subr.bf16.mxu0 0
  %2580 = vmatpush1.bf16.msra.mxu0 0
  %2581 = vmatprep.subr.bf16.mxu0 0
  %2582 = vmatpush1.bf16.msra.mxu0 0
  %2583 = vmatprep.subr.bf16.mxu0 0
  %2584 = vmatpush1.bf16.msra.mxu0 0
  %2585 = vmatprep.subr.bf16.mxu0 0
  %2586 = vmatpush1.bf16.msra.mxu0 0
  %2587 = vmatprep.subr.bf16.mxu0 0
  %2588 = vmatpush1.bf16.msra.mxu0 0
  %2589 = vmatprep.subr.bf16.mxu0 0
  %2590 = vmatpush1.bf16.msra.mxu0 0
  %2591 = vmatprep.mubr.bf16.mxu0 0
  %2592 = vmatmul.mubr.bf16.gmra.mrb[0].mxu0 %v2557
  %v2593 = vpop.f32.mrb[0].mxu0
  %v2594 = vadd.f32 %v1095, %v2593
  %v2595 = vpop.f32.mrb[0].mxu0
  %v2596 = vpop.f32.mrb[0].mxu0
  %v2597 = vadd.f32 %v1095, %v2596
  %v2598 = vpop.f32.mrb[0].mxu0
  %2599 = vdwg.mxu0
  %v2600 = vpack.c.bf16 %v2597, %v2594
  %2602 = vrot.lane.b32.xlu0 %v2600, 96
  %v2603 = vpop.permute.xlu0 %2602
  %v2605 = vsel %vm432, %v2600, 0
  %v2608 = vsel %vm432, %v2603, 0
  %2610 = vmatprep.subr.bf16.mxu0 0
  %2611 = vmatpush1.bf16.xpose.msra.mxu0 %v2608
  %2612 = vmatprep.subr.bf16.mxu0 0
  %2613 = vmatpush1.bf16.xpose.msra.mxu0 0
  %2614 = vmatprep.subr.bf16.mxu0 0
  %2615 = vmatpush1.bf16.xpose.msra.mxu0 0
  %2616 = vmatprep.subr.bf16.mxu0 0
  %2617 = vmatpush1.bf16.xpose.msra.mxu0 0
  %2618 = vmatprep.subr.bf16.mxu0 0
  %2619 = vmatpush1.bf16.xpose.msra.mxu0 0
  %2620 = vmatprep.subr.bf16.mxu0 0
  %2621 = vmatpush1.bf16.xpose.msra.mxu0 0
  %2622 = vmatprep.subr.bf16.mxu0 0
  %2623 = vmatpush1.bf16.xpose.msra.mxu0 0
  %2624 = vmatprep.subr.bf16.mxu0 0
  %2625 = vmatpush1.bf16.xpose.msra.mxu0 0
  %2626 = vmatprep.subr.bf16.mxu0 0
  %2627 = vmatpush1.bf16.xpose.msra.mxu0 0
  %2628 = vmatprep.subr.bf16.mxu0 0
  %2629 = vmatpush1.bf16.xpose.msra.mxu0 0
  %2630 = vmatprep.subr.bf16.mxu0 0
  %2631 = vmatpush1.bf16.xpose.msra.mxu0 0
  %2632 = vmatprep.subr.bf16.mxu0 0
  %2633 = vmatpush1.bf16.xpose.msra.mxu0 0
  %2634 = vmatprep.subr.bf16.mxu0 0
  %2635 = vmatpush1.bf16.xpose.msra.mxu0 0
  %2636 = vmatprep.subr.bf16.mxu0 0
  %2637 = vmatpush1.bf16.xpose.msra.mxu0 0
  %2638 = vmatprep.subr.bf16.mxu0 0
  %2639 = vmatpush1.bf16.xpose.msra.mxu0 0
  %2640 = vmatprep.subr.bf16.mxu0 0
  %2641 = vmatpush1.bf16.xpose.msra.mxu0 0
  %2642 = vmatprep.mubr.bf16.mxu0 0
  %2643 = vmatmul.mubr.bf16.gmra.mrb[0].mxu0 %v2605
  %v2644 = vpop.f32.mrb[0].mxu0
  %v2645 = vadd.f32 0.0, %v2644
  %v2646 = vpop.f32.mrb[0].mxu0
  %v2647 = vpop.f32.mrb[0].mxu0
  %v2648 = vadd.f32 0.0, %v2647
  %v2649 = vpop.f32.mrb[0].mxu0
  %2650 = vdwg.mxu0
  %v2651 = vmul.f32 %v2645, 0.25
  %v2652 = vmul.f32 %v2648, 0.25
  %v2653 = vadd.f32 %v2651, %v1967
  %v2654 = vadd.f32 %v2652, %v1968
  %v2655 = vsel %vm432, %v2653, -inf
  %2656 = vmax.xlane.f32.xlu0 %v2655
  %v2657 = vpop.xlane.xlu0 %2656
  %v2658 = vsel %vm432, %v2654, -inf
  %2659 = vmax.xlane.f32.xlu0 %v2658
  %v2660 = vpop.xlane.xlu0 %2659
  %v2661 = vsub.f32 %v2653, %v2657
  %v2662 = vsub.f32 %v2654, %v2660
  %v2663 = vmul.f32 %v2661, 1.442695
  %v2664 = vpow.pop %v2663
  %v2665 = vmul.f32 %v2662, 1.442695
  %v2666 = vpow.pop %v2665
  %v2667 = vsel %vm432, %v2664, 0.0
  %2668 = vadd.xlane.f32.xlu0 %v2667
  %v2669 = vpop.xlane.xlu0 %2668
  %v2670 = vsel %vm432, %v2666, 0.0
  %2671 = vadd.xlane.f32.xlu0 %v2670
  %v2672 = vpop.xlane.xlu0 %2671
  %v2673 = vrcp.pop %v2669
  %v2674 = vmul.f32 %v2664, %v2673
  %v2675 = vrcp.pop %v2672
  %v2676 = vmul.f32 %v2666, %v2675
  %v2677 = vpack.c.bf16 %v2676, %v2674
  %2678 = vrot.lane.b32.xlu0 %v2600, 64
  %v2679 = vpop.permute.xlu0 %2678
  %v2682 = vsel %vm432, %v2677, 0
  %2684 = vmatprep.subr.bf16.mxu0 0
  %2685 = vmatpush1.bf16.msra.mxu0 %v2679
  %2686 = vmatprep.subr.bf16.mxu0 0
  %2687 = vmatpush1.bf16.msra.mxu0 0
  %2688 = vmatprep.subr.bf16.mxu0 0
  %2689 = vmatpush1.bf16.msra.mxu0 0
  %2690 = vmatprep.subr.bf16.mxu0 0
  %2691 = vmatpush1.bf16.msra.mxu0 0
  %2692 = vmatprep.subr.bf16.mxu0 0
  %2693 = vmatpush1.bf16.msra.mxu0 0
  %2694 = vmatprep.subr.bf16.mxu0 0
  %2695 = vmatpush1.bf16.msra.mxu0 0
  %2696 = vmatprep.subr.bf16.mxu0 0
  %2697 = vmatpush1.bf16.msra.mxu0 0
  %2698 = vmatprep.subr.bf16.mxu0 0
  %2699 = vmatpush1.bf16.msra.mxu0 0
  %2700 = vmatprep.subr.bf16.mxu0 0
  %2701 = vmatpush1.bf16.msra.mxu0 0
  %2702 = vmatprep.subr.bf16.mxu0 0
  %2703 = vmatpush1.bf16.msra.mxu0 0
  %2704 = vmatprep.subr.bf16.mxu0 0
  %2705 = vmatpush1.bf16.msra.mxu0 0
  %2706 = vmatprep.subr.bf16.mxu0 0
  %2707 = vmatpush1.bf16.msra.mxu0 0
  %2708 = vmatprep.subr.bf16.mxu0 0
  %2709 = vmatpush1.bf16.msra.mxu0 0
  %2710 = vmatprep.subr.bf16.mxu0 0
  %2711 = vmatpush1.bf16.msra.mxu0 0
  %2712 = vmatprep.subr.bf16.mxu0 0
  %2713 = vmatpush1.bf16.msra.mxu0 0
  %2714 = vmatprep.subr.bf16.mxu0 0
  %2715 = vmatpush1.bf16.msra.mxu0 0
  %2716 = vmatprep.mubr.bf16.mxu0 0
  %2717 = vmatmul.mubr.bf16.gmra.mrb[0].mxu0 %v2682
  %v2718 = vpop.f32.mrb[0].mxu0
  %v2719 = vadd.f32 0.0, %v2718
  %v2720 = vpop.f32.mrb[0].mxu0
  %v2721 = vpop.f32.mrb[0].mxu0
  %v2722 = vadd.f32 0.0, %v2721
  %v2723 = vpop.f32.mrb[0].mxu0
  %2724 = vdwg.mxu0
  %v2725 = vpack.c.bf16 %v2722, %v2719
  %2726 = vrot.lane.b32.xlu0 %v2600, 112
  %v2727 = vpop.permute.xlu0 %2726
  %2728 = vrot.lane.b32.xlu0 %v2600, 80
  %v2729 = vpop.permute.xlu0 %2728
  %v2731 = vsel %vm432, %v2727, 0
  %v2734 = vsel %vm432, %v2729, 0
  %2736 = vmatprep.subr.bf16.mxu0 0
  %2737 = vmatpush1.bf16.xpose.msra.mxu0 %v2734
  %2738 = vmatprep.subr.bf16.mxu0 0
  %2739 = vmatpush1.bf16.xpose.msra.mxu0 0
  %2740 = vmatprep.subr.bf16.mxu0 0
  %2741 = vmatpush1.bf16.xpose.msra.mxu0 0
  %2742 = vmatprep.subr.bf16.mxu0 0
  %2743 = vmatpush1.bf16.xpose.msra.mxu0 0
  %2744 = vmatprep.subr.bf16.mxu0 0
  %2745 = vmatpush1.bf16.xpose.msra.mxu0 0
  %2746 = vmatprep.subr.bf16.mxu0 0
  %2747 = vmatpush1.bf16.xpose.msra.mxu0 0
  %2748 = vmatprep.subr.bf16.mxu0 0
  %2749 = vmatpush1.bf16.xpose.msra.mxu0 0
  %2750 = vmatprep.subr.bf16.mxu0 0
  %2751 = vmatpush1.bf16.xpose.msra.mxu0 0
  %2752 = vmatprep.subr.bf16.mxu0 0
  %2753 = vmatpush1.bf16.xpose.msra.mxu0 0
  %2754 = vmatprep.subr.bf16.mxu0 0
  %2755 = vmatpush1.bf16.xpose.msra.mxu0 0
  %2756 = vmatprep.subr.bf16.mxu0 0
  %2757 = vmatpush1.bf16.xpose.msra.mxu0 0
  %2758 = vmatprep.subr.bf16.mxu0 0
  %2759 = vmatpush1.bf16.xpose.msra.mxu0 0
  %2760 = vmatprep.subr.bf16.mxu0 0
  %2761 = vmatpush1.bf16.xpose.msra.mxu0 0
  %2762 = vmatprep.subr.bf16.mxu0 0
  %2763 = vmatpush1.bf16.xpose.msra.mxu0 0
  %2764 = vmatprep.subr.bf16.mxu0 0
  %2765 = vmatpush1.bf16.xpose.msra.mxu0 0
  %2766 = vmatprep.subr.bf16.mxu0 0
  %2767 = vmatpush1.bf16.xpose.msra.mxu0 0
  %2768 = vmatprep.mubr.bf16.mxu0 0
  %2769 = vmatmul.mubr.bf16.gmra.mrb[0].mxu0 %v2731
  %v2770 = vpop.f32.mrb[0].mxu0
  %v2771 = vadd.f32 0.0, %v2770
  %v2772 = vpop.f32.mrb[0].mxu0
  %v2773 = vpop.f32.mrb[0].mxu0
  %v2774 = vadd.f32 0.0, %v2773
  %v2775 = vpop.f32.mrb[0].mxu0
  %2776 = vdwg.mxu0
  %v2777 = vmul.f32 %v2771, 0.25
  %v2778 = vmul.f32 %v2774, 0.25
  %v2779 = vadd.f32 %v2777, %v1967
  %v2780 = vadd.f32 %v2778, %v1968
  %v2781 = vsel %vm432, %v2779, -inf
  %2782 = vmax.xlane.f32.xlu0 %v2781
  %v2783 = vpop.xlane.xlu0 %2782
  %v2784 = vsel %vm432, %v2780, -inf
  %2785 = vmax.xlane.f32.xlu0 %v2784
  %v2786 = vpop.xlane.xlu0 %2785
  %v2787 = vsub.f32 %v2779, %v2783
  %v2788 = vsub.f32 %v2780, %v2786
  %v2789 = vmul.f32 %v2787, 1.442695
  %v2790 = vpow.pop %v2789
  %v2791 = vmul.f32 %v2788, 1.442695
  %v2792 = vpow.pop %v2791
  %v2793 = vsel %vm432, %v2790, 0.0
  %2794 = vadd.xlane.f32.xlu0 %v2793
  %v2795 = vpop.xlane.xlu0 %2794
  %v2796 = vsel %vm432, %v2792, 0.0
  %2797 = vadd.xlane.f32.xlu0 %v2796
  %v2798 = vpop.xlane.xlu0 %2797
  %v2799 = vrcp.pop %v2795
  %v2800 = vmul.f32 %v2790, %v2799
  %v2801 = vrcp.pop %v2798
  %v2802 = vmul.f32 %v2792, %v2801
  %v2803 = vpack.c.bf16 %v2802, %v2800
  %2804 = vrot.lane.b32.xlu0 %v2600, 48
  %v2805 = vpop.permute.xlu0 %2804
  %v2808 = vsel %vm432, %v2803, 0
  %2810 = vmatprep.subr.bf16.mxu0 0
  %2811 = vmatpush1.bf16.msra.mxu0 %v2805
  %2812 = vmatprep.subr.bf16.mxu0 0
  %2813 = vmatpush1.bf16.msra.mxu0 0
  %2814 = vmatprep.subr.bf16.mxu0 0
  %2815 = vmatpush1.bf16.msra.mxu0 0
  %2816 = vmatprep.subr.bf16.mxu0 0
  %2817 = vmatpush1.bf16.msra.mxu0 0
  %2818 = vmatprep.subr.bf16.mxu0 0
  %2819 = vmatpush1.bf16.msra.mxu0 0
  %2820 = vmatprep.subr.bf16.mxu0 0
  %2821 = vmatpush1.bf16.msra.mxu0 0
  %2822 = vmatprep.subr.bf16.mxu0 0
  %2823 = vmatpush1.bf16.msra.mxu0 0
  %2824 = vmatprep.subr.bf16.mxu0 0
  %2825 = vmatpush1.bf16.msra.mxu0 0
  %2826 = vmatprep.subr.bf16.mxu0 0
  %2827 = vmatpush1.bf16.msra.mxu0 0
  %2828 = vmatprep.subr.bf16.mxu0 0
  %2829 = vmatpush1.bf16.msra.mxu0 0
  %2830 = vmatprep.subr.bf16.mxu0 0
  %2831 = vmatpush1.bf16.msra.mxu0 0
  %2832 = vmatprep.subr.bf16.mxu0 0
  %2833 = vmatpush1.bf16.msra.mxu0 0
  %2834 = vmatprep.subr.bf16.mxu0 0
  %2835 = vmatpush1.bf16.msra.mxu0 0
  %2836 = vmatprep.subr.bf16.mxu0 0
  %2837 = vmatpush1.bf16.msra.mxu0 0
  %2838 = vmatprep.subr.bf16.mxu0 0
  %2839 = vmatpush1.bf16.msra.mxu0 0
  %2840 = vmatprep.subr.bf16.mxu0 0
  %2841 = vmatpush1.bf16.msra.mxu0 0
  %2842 = vmatprep.mubr.bf16.mxu0 0
  %2843 = vmatmul.mubr.bf16.gmra.mrb[0].mxu0 %v2808
  %v2844 = vpop.f32.mrb[0].mxu0
  %v2845 = vadd.f32 0.0, %v2844
  %v2846 = vpop.f32.mrb[0].mxu0
  %v2847 = vpop.f32.mrb[0].mxu0
  %v2848 = vadd.f32 0.0, %v2847
  %v2849 = vpop.f32.mrb[0].mxu0
  %2850 = vdwg.mxu0
  %v2851 = vpack.c.bf16 %v2848, %v2845
  %v2853 = vsel %vm432, %v2851, 0
  %2855 = vmatprep.subr.bf16.mxu0 0
  %2856 = vmatpush1.bf16.msra.mxu0 %v1414
  %2857 = vmatprep.subr.bf16.mxu0 0
  %2858 = vmatpush1.bf16.msra.mxu0 0
  %2859 = vmatprep.subr.bf16.mxu0 0
  %2860 = vmatpush1.bf16.msra.mxu0 0
  %2861 = vmatprep.subr.bf16.mxu0 0
  %2862 = vmatpush1.bf16.msra.mxu0 0
  %2863 = vmatprep.subr.bf16.mxu0 0
  %2864 = vmatpush1.bf16.msra.mxu0 0
  %2865 = vmatprep.subr.bf16.mxu0 0
  %2866 = vmatpush1.bf16.msra.mxu0 0
  %2867 = vmatprep.subr.bf16.mxu0 0
  %2868 = vmatpush1.bf16.msra.mxu0 0
  %2869 = vmatprep.subr.bf16.mxu0 0
  %2870 = vmatpush1.bf16.msra.mxu0 0
  %2871 = vmatprep.subr.bf16.mxu0 0
  %2872 = vmatpush1.bf16.msra.mxu0 0
  %2873 = vmatprep.subr.bf16.mxu0 0
  %2874 = vmatpush1.bf16.msra.mxu0 0
  %2875 = vmatprep.subr.bf16.mxu0 0
  %2876 = vmatpush1.bf16.msra.mxu0 0
  %2877 = vmatprep.subr.bf16.mxu0 0
  %2878 = vmatpush1.bf16.msra.mxu0 0
  %2879 = vmatprep.subr.bf16.mxu0 0
  %2880 = vmatpush1.bf16.msra.mxu0 0
  %2881 = vmatprep.subr.bf16.mxu0 0
  %2882 = vmatpush1.bf16.msra.mxu0 0
  %2883 = vmatprep.subr.bf16.mxu0 0
  %2884 = vmatpush1.bf16.msra.mxu0 0
  %2885 = vmatprep.subr.bf16.mxu0 0
  %2886 = vmatpush1.bf16.msra.mxu0 0
  %2887 = vmatprep.mubr.bf16.mxu0 0
  %2888 = vmatmul.mubr.bf16.gmra.mrb[0].mxu0 %v2853
  %v2889 = vpop.f32.mrb[0].mxu0
  %v2890 = vadd.f32 0.0, %v2889
  %v2891 = vpop.f32.mrb[0].mxu0
  %v2892 = vpop.f32.mrb[0].mxu0
  %v2893 = vadd.f32 0.0, %v2892
  %v2894 = vpop.f32.mrb[0].mxu0
  %2895 = vdwg.mxu0
  %v2897 = vsel %vm432, %v2725, 0
  %2899 = vmatprep.subr.bf16.mxu0 0
  %2900 = vmatpush1.bf16.msra.mxu0 %v1464
  %2901 = vmatprep.subr.bf16.mxu0 0
  %2902 = vmatpush1.bf16.msra.mxu0 0
  %2903 = vmatprep.subr.bf16.mxu0 0
  %2904 = vmatpush1.bf16.msra.mxu0 0
  %2905 = vmatprep.subr.bf16.mxu0 0
  %2906 = vmatpush1.bf16.msra.mxu0 0
  %2907 = vmatprep.subr.bf16.mxu0 0
  %2908 = vmatpush1.bf16.msra.mxu0 0
  %2909 = vmatprep.subr.bf16.mxu0 0
  %2910 = vmatpush1.bf16.msra.mxu0 0
  %2911 = vmatprep.subr.bf16.mxu0 0
  %2912 = vmatpush1.bf16.msra.mxu0 0
  %2913 = vmatprep.subr.bf16.mxu0 0
  %2914 = vmatpush1.bf16.msra.mxu0 0
  %2915 = vmatprep.subr.bf16.mxu0 0
  %2916 = vmatpush1.bf16.msra.mxu0 0
  %2917 = vmatprep.subr.bf16.mxu0 0
  %2918 = vmatpush1.bf16.msra.mxu0 0
  %2919 = vmatprep.subr.bf16.mxu0 0
  %2920 = vmatpush1.bf16.msra.mxu0 0
  %2921 = vmatprep.subr.bf16.mxu0 0
  %2922 = vmatpush1.bf16.msra.mxu0 0
  %2923 = vmatprep.subr.bf16.mxu0 0
  %2924 = vmatpush1.bf16.msra.mxu0 0
  %2925 = vmatprep.subr.bf16.mxu0 0
  %2926 = vmatpush1.bf16.msra.mxu0 0
  %2927 = vmatprep.subr.bf16.mxu0 0
  %2928 = vmatpush1.bf16.msra.mxu0 0
  %2929 = vmatprep.subr.bf16.mxu0 0
  %2930 = vmatpush1.bf16.msra.mxu0 0
  %2931 = vmatprep.mubr.bf16.mxu0 0
  %2932 = vmatmul.mubr.bf16.gmra.mrb[0].mxu0 %v2897
  %v2933 = vpop.f32.mrb[0].mxu0
  %v2934 = vadd.f32 %v2890, %v2933
  %v2935 = vpop.f32.mrb[0].mxu0
  %v2936 = vpop.f32.mrb[0].mxu0
  %v2937 = vadd.f32 %v2893, %v2936
  %v2938 = vpop.f32.mrb[0].mxu0
  %2939 = vdwg.mxu0
  %v2940 = vadd.f32 %v2523, %v2934
  %v2941 = vadd.f32 %v2524, %v2937
  %v2942 = vadd.f32 %v2940, %v1518
  %v2943 = vadd.f32 %v2941, %v1518
  %v2944 = vsel %vm312, %v2942, 0.0
  %2945 = vadd.xlane.f32.xlu0 %v2944
  %v2946 = vpop.xlane.xlu0 %2945
  %v2947 = vsel %vm312, %v2943, 0.0
  %2948 = vadd.xlane.f32.xlu0 %v2947
  %v2949 = vpop.xlane.xlu0 %2948
  %v2950 = vmul.f32 %v2946, %v319
  %v2951 = vmul.f32 %v2949, %v319
  %v2952 = vsub.f32 %v2942, %v2950
  %v2953 = vsub.f32 %v2943, %v2951
  %v2954 = vmul.f32 %v2952, %v2952
  %v2955 = vmul.f32 %v2953, %v2953
  %v2956 = vsel %vm312, %v2954, 0.0
  %2957 = vadd.xlane.f32.xlu0 %v2956
  %v2958 = vpop.xlane.xlu0 %2957
  %v2959 = vsel %vm312, %v2955, 0.0
  %2960 = vadd.xlane.f32.xlu0 %v2959
  %v2961 = vpop.xlane.xlu0 %2960
  %v2962 = vmul.f32 %v2958, %v319
  %v2963 = vmul.f32 %v2961, %v319
  %v2964 = vadd.f32 %v2962, 1e-05
  %v2965 = vadd.f32 %v2963, 1e-05
  %v2966 = vrsqrt.pop %v2964
  %v2967 = vrsqrt.pop %v2965
  %v2968 = vmul.f32 %v2952, %v2966
  %v2969 = vmul.f32 %v2953, %v2967
  %v2970 = vmul.f32 %v2968, %v1556
  %v2971 = vmul.f32 %v2969, %v1556
  %v2972 = vadd.f32 %v2970, %v1564
  %v2973 = vadd.f32 %v2971, %v1564
  %v2974 = vpack.c.bf16 %v2973, %v2972
  %v2976 = vsel %vm312, %v2974, 0
  %2978 = vmatprep.subr.bf16.mxu0 0
  %2979 = vmatpush1.bf16.msra.mxu0 %v1590
  %2980 = vmatprep.subr.bf16.mxu0 0
  %2981 = vmatpush1.bf16.msra.mxu0 %v1591
  %2982 = vmatprep.subr.bf16.mxu0 0
  %2983 = vmatpush1.bf16.msra.mxu0 0
  %2984 = vmatprep.subr.bf16.mxu0 0
  %2985 = vmatpush1.bf16.msra.mxu0 0
  %2986 = vmatprep.subr.bf16.mxu0 0
  %2987 = vmatpush1.bf16.msra.mxu0 0
  %2988 = vmatprep.subr.bf16.mxu0 0
  %2989 = vmatpush1.bf16.msra.mxu0 0
  %2990 = vmatprep.subr.bf16.mxu0 0
  %2991 = vmatpush1.bf16.msra.mxu0 0
  %2992 = vmatprep.subr.bf16.mxu0 0
  %2993 = vmatpush1.bf16.msra.mxu0 0
  %2994 = vmatprep.subr.bf16.mxu0 0
  %2995 = vmatpush1.bf16.msra.mxu0 0
  %2996 = vmatprep.subr.bf16.mxu0 0
  %2997 = vmatpush1.bf16.msra.mxu0 0
  %2998 = vmatprep.subr.bf16.mxu0 0
  %2999 = vmatpush1.bf16.msra.mxu0 0
  %3000 = vmatprep.subr.bf16.mxu0 0
  %3001 = vmatpush1.bf16.msra.mxu0 0
  %3002 = vmatprep.subr.bf16.mxu0 0
  %3003 = vmatpush1.bf16.msra.mxu0 0
  %3004 = vmatprep.subr.bf16.mxu0 0
  %3005 = vmatpush1.bf16.msra.mxu0 0
  %3006 = vmatprep.subr.bf16.mxu0 0
  %3007 = vmatpush1.bf16.msra.mxu0 0
  %3008 = vmatprep.subr.bf16.mxu0 0
  %3009 = vmatpush1.bf16.msra.mxu0 0
  %3010 = vmatprep.mubr.bf16.mxu0 0
  %3011 = vmatmul.mubr.bf16.gmra.mrb[0].mxu0 %v2976
  %v3012 = vpop.f32.mrb[0].mxu0
  %v3013 = vadd.f32 %v1580, %v3012
  %v3014 = vpop.f32.mrb[0].mxu0
  %v3015 = vpop.f32.mrb[0].mxu0
  %v3016 = vadd.f32 %v1580, %v3015
  %v3017 = vpop.f32.mrb[0].mxu0
  %3018 = vdwg.mxu0
  %v3019 = vmul.f32 %v3013, 0.5
  %v3020 = vmul.f32 %v3016, 0.5
  %v3021 = vmul.f32 %v3013, 0.044715
  %v3022 = vmul.f32 %v3016, 0.044715
  %v3023 = vmul.f32 %v3021, %v3013
  %v3024 = vmul.f32 %v3022, %v3016
  %v3025 = vmul.f32 %v3023, %v3013
  %v3026 = vmul.f32 %v3024, %v3016
  %v3027 = vadd.f32 %v3013, %v3025
  %v3028 = vadd.f32 %v3016, %v3026
  %v3029 = vmul.f32 %v3027, 0.7978846
  %v3030 = vmul.f32 %v3028, 0.7978846
  %v3031 = vtanh.pop %v3029
  %v3032 = vtanh.pop %v3030
  %v3033 = vadd.f32 %v3031, 1.0
  %v3034 = vadd.f32 %v3032, 1.0
  %v3035 = vmul.f32 %v3019, %v3033
  %v3036 = vmul.f32 %v3020, %v3034
  %v3037 = vpack.c.bf16 %v3036, %v3035
  %3038 = vmatprep.subr.bf16.mxu0 0
  %3039 = vmatpush1.bf16.msra.mxu0 %v1714
  %3040 = vmatprep.subr.bf16.mxu0 0
  %3041 = vmatpush1.bf16.msra.mxu0 %v1715
  %3042 = vmatprep.subr.bf16.mxu0 0
  %3043 = vmatpush1.bf16.msra.mxu0 %v1716
  %3044 = vmatprep.subr.bf16.mxu0 0
  %3045 = vmatpush1.bf16.msra.mxu0 %v1717
  %3046 = vmatprep.subr.bf16.mxu0 0
  %3047 = vmatpush1.bf16.msra.mxu0 %v1718
  %3048 = vmatprep.subr.bf16.mxu0 0
  %3049 = vmatpush1.bf16.msra.mxu0 %v1719
  %3050 = vmatprep.subr.bf16.mxu0 0
  %3051 = vmatpush1.bf16.msra.mxu0 %v1720
  %3052 = vmatprep.subr.bf16.mxu0 0
  %3053 = vmatpush1.bf16.msra.mxu0 %v1721
  %3054 = vmatprep.subr.bf16.mxu0 0
  %3055 = vmatpush1.bf16.msra.mxu0 0
  %3056 = vmatprep.subr.bf16.mxu0 0
  %3057 = vmatpush1.bf16.msra.mxu0 0
  %3058 = vmatprep.subr.bf16.mxu0 0
  %3059 = vmatpush1.bf16.msra.mxu0 0
  %3060 = vmatprep.subr.bf16.mxu0 0
  %3061 = vmatpush1.bf16.msra.mxu0 0
  %3062 = vmatprep.subr.bf16.mxu0 0
  %3063 = vmatpush1.bf16.msra.mxu0 0
  %3064 = vmatprep.subr.bf16.mxu0 0
  %3065 = vmatpush1.bf16.msra.mxu0 0
  %3066 = vmatprep.subr.bf16.mxu0 0
  %3067 = vmatpush1.bf16.msra.mxu0 0
  %3068 = vmatprep.subr.bf16.mxu0 0
  %3069 = vmatpush1.bf16.msra.mxu0 0
  %3070 = vmatprep.mubr.bf16.mxu0 0
  %3071 = vmatmul.mubr.bf16.gmra.mrb[0].mxu0 %v3037
  %v3072 = vpop.f32.mrb[0].mxu0
  %v3073 = vpop.f32.mrb[0].mxu0
  %v3074 = vpop.f32.mrb[0].mxu0
  %v3075 = vadd.f32 %v1680, %v3074
  %v3076 = vpop.f32.mrb[0].mxu0
  %3077 = vdwg.mxu0
  %v3078 = vadd.f32 %v2943, %v3075
  %vm3079 = vcmask 253952
  %v3080 = vsel %vm3079, %v3078, 0.0
  %3081 = vadd.xlane.f32.xlu0 %v3080
  %v3082 = vpop.xlane.xlu0 %3081
  %v3083 = vmul.f32 %v3082, %v319
  %v3084 = vsub.f32 %v3078, %v3083
  %v3085 = vmul.f32 %v3084, %v3084
  %v3086 = vsel %vm3079, %v3085, 0.0
  %3087 = vadd.xlane.f32.xlu0 %v3086
  %v3088 = vpop.xlane.xlu0 %3087
  %v3089 = vmul.f32 %v3088, %v319
  %v3090 = vadd.f32 %v3089, 1e-05
  %v3091 = vrsqrt.pop %v3090
  %v3092 = vmul.f32 %v3084, %v3091
  %v3093 = vmul.f32 %v3092, %v103
  %v3094 = vadd.f32 %v3093, %v104
  %v3095 = vpack.c.bf16 %v3094, %v3094
  %v3097 = vsel %vm312, %v3095, 0
  %3099 = vmatprep.subr.bf16.mxu0 0
  %3100 = vmatpush1.bf16.xpose.msra.mxu0 %v1808
  %3101 = vmatprep.subr.bf16.mxu0 0
  %3102 = vmatpush1.bf16.xpose.msra.mxu0 %v1811
  %3103 = vmatprep.subr.bf16.mxu0 0
  %3104 = vmatpush1.bf16.xpose.msra.mxu0 %v1814
  %3105 = vmatprep.subr.bf16.mxu0 0
  %3106 = vmatpush1.bf16.xpose.msra.mxu0 %v1817
  %3107 = vmatprep.subr.bf16.mxu0 0
  %3108 = vmatpush1.bf16.xpose.msra.mxu0 %v1820
  %3109 = vmatprep.subr.bf16.mxu0 0
  %3110 = vmatpush1.bf16.xpose.msra.mxu0 %v1823
  %3111 = vmatprep.subr.bf16.mxu0 0
  %3112 = vmatpush1.bf16.xpose.msra.mxu0 %v1826
  %3113 = vmatprep.subr.bf16.mxu0 0
  %3114 = vmatpush1.bf16.xpose.msra.mxu0 %v1829
  %3115 = vmatprep.subr.bf16.mxu0 0
  %3116 = vmatpush1.bf16.xpose.msra.mxu0 0
  %3117 = vmatprep.subr.bf16.mxu0 0
  %3118 = vmatpush1.bf16.xpose.msra.mxu0 0
  %3119 = vmatprep.subr.bf16.mxu0 0
  %3120 = vmatpush1.bf16.xpose.msra.mxu0 0
  %3121 = vmatprep.subr.bf16.mxu0 0
  %3122 = vmatpush1.bf16.xpose.msra.mxu0 0
  %3123 = vmatprep.subr.bf16.mxu0 0
  %3124 = vmatpush1.bf16.xpose.msra.mxu0 0
  %3125 = vmatprep.subr.bf16.mxu0 0
  %3126 = vmatpush1.bf16.xpose.msra.mxu0 0
  %3127 = vmatprep.subr.bf16.mxu0 0
  %3128 = vmatpush1.bf16.xpose.msra.mxu0 0
  %3129 = vmatprep.subr.bf16.mxu0 0
  %3130 = vmatpush1.bf16.xpose.msra.mxu0 0
  %3131 = vmatprep.mubr.bf16.mxu0 0
  %3132 = vmatmul.mubr.bf16.gmra.mrb[0].mxu0 %v3097
  %v3133 = vpop.f32.mrb[0].mxu0
  %v3134 = vadd.f32 0.0, %v3133
  %v3135 = vpop.f32.mrb[0].mxu0
  %v3136 = vpop.f32.mrb[0].mxu0
  %v3137 = vpop.f32.mrb[0].mxu0
  %3138 = vdwg.mxu0
  %v3139 = vsel %vm1871, %v3134, -inf
  %3140 = vmax.xlane.f32.xlu0 %v3139
  %v3141 = vpop.xlane.xlu0 %3140
  %vm3142 = vcmp.ge.f32.partialorder %v3134, %v3141
  %v3143 = vsel %vm3142, %v72, 128
  %v3144 = vsel %vm1871, %v3143, 2147483647
  %v3145 = vand.u32 %v3144, 65535
  %v3146 = vshra.s32 %v3144, 16
  %v3147 = vcvt.s32.f32 %v3145
  %v3148 = vcvt.s32.f32 %v3146
  %3149 = vmin.xlane.f32.xlu0 %v3148
  %v3150 = vpop.xlane.xlu0 %3149
  %vm3151 = vcmp.eq.f32.partialorder %v3148, %v3150
  %v3152 = vsel %vm3151, %v3147, inf
  %3153 = vmin.xlane.f32.xlu0 %v3152
  %v3154 = vpop.xlane.xlu0 %3153
  %v3155 = vcvt.f32.s32 %v3154
  %v3156 = vcvt.f32.s32 %v3150
  %v3157 = vshll.u32 %v3156, 16
  %v3158 = vadd.s32 %v3157, %v3155
  %vm3159 = vcmp.eq.s32.totalorder %v69, 9
  %vm3160 = vcmp.eq.s32.totalorder %v70, 9
  %v3161 = vlaneseq
  %v3162 = vshrl.u32 %v3161, 7
  %v3163 = vsub.s32 0, %v3162
  %v3164 = vrot.slane %v3158, %v3163
  %v3165 = vsel %vm3159, %v3164, %v1898
  %v3166 = vsel %vm3160, %v3164, %v1899
  %vm3167 = vcmp.eq.s32.totalorder %v72, 9
  %v3168 = vsel %vm3167, %v3158, %v1901
  %vm3169 = vcmp.ne.s32.totalorder %v3168, 127
  %vm3170 = vcmp.lt.s32.totalorder %v72, 10
  %vm3171 = vmand %vm3169, %vm3170
  %vm3172 = vcmp.ne.s32.totalorder %v3165, 127
  %vm3173 = vcmp.ne.s32.totalorder %v3166, 127
  %vm3174 = vcmp.lt.s32.totalorder %v69, 10
  %vm3175 = vcmp.lt.s32.totalorder %v70, 10
  %vm3176 = vmand %vm3172, %vm3174
  %vm3177 = vmand %vm3173, %vm3175
  %v3178 = vsel %vm3176, 1, 0
  %v3179 = vsel %vm3177, 1, 0
  %v3180 = vcvt.s32.f32 %v3178
  %v3181 = vcvt.s32.f32 %v3179
  %v3182 = vsel %vm3171, 1, 0
  %v3183 = vcvt.s32.f32 %v3182
  %v3184 = vlaneseq
  %v3185 = vshrl.u32 %v3184, 7
  %v3186 = vsub.s32 0, %v3185
  %v3187 = vrot.slane %v3183, %v3186
  %v3188 = vmul.f32 %v77, %v3187
  %v3189 = vmul.f32 %v78, %v3187
  %v3190 = vsel %vm432, %v3188, 0.0
  %3191 = vadd.xlane.f32.xlu0 %v3190
  %v3192 = vpop.xlane.xlu0 %3191
  %v3193 = vsel %vm432, %v3189, 0.0
  %3194 = vadd.xlane.f32.xlu0 %v3193
  %v3195 = vpop.xlane.xlu0 %3194
  %v3196 = vsub.f32 %v3192, 1.0
  %v3197 = vsub.f32 %v3195, 1.0
  %vm3198 = vcmp.gt.f32.partialorder %v3180, 0.5
  %vm3199 = vcmp.gt.f32.partialorder %v3181, 0.5
  %v3200 = vsel %vm3198, %v3196, 1.0
  %v3201 = vsel %vm3199, %v3197, 1.0
  %v3202 = vcvt.f32.s32.to.zero.pseudo %v3200
  %v3203 = vcvt.f32.s32.to.zero.pseudo %v3201
  %3204 = vset.pattern.permute.xlu0 0
  %3205 = vperm.xlu0 %3204, %v3165
  %v3206 = vpop.permute.xlu0 %3205
  %3207 = vset.pattern.permute.xlu0 0
  %3208 = vperm.xlu0 %3207, %v3166
  %v3209 = vpop.permute.xlu0 %3208
  %vm3210 = vcmp.eq.s32.totalorder %v3206, %v72
  %vm3211 = vcmp.eq.s32.totalorder %v3209, %v72
  %v3212 = vsel %vm3210, 1, 0
  %v3213 = vsel %vm3211, 1, 0
  %v3214 = vcvt.s32.f32 %v3212
  %v3215 = vcvt.s32.f32 %v3213
  %v3216 = vpack.c.bf16 %v3215, %v3214
  %3217 = vset.pattern.permute.xlu0 0
  %3218 = vperm.xlu0 %3217, %v3202
  %v3219 = vpop.permute.xlu0 %3218
  %3220 = vset.pattern.permute.xlu0 0
  %3221 = vperm.xlu0 %3220, %v3203
  %v3222 = vpop.permute.xlu0 %3221
  %vm3223 = vcmp.eq.s32.totalorder %v3219, %v72
  %vm3224 = vcmp.eq.s32.totalorder %v3222, %v72
  %v3225 = vsel %vm3223, 1, 0
  %v3226 = vsel %vm3224, 1, 0
  %v3227 = vcvt.s32.f32 %v3225
  %v3228 = vcvt.s32.f32 %v3226
  %v3229 = vpack.c.bf16 %v3228, %v3227
  %v3231 = vsel %vm166, %v3229, 0
  %3233 = vmatprep.subr.bf16.mxu0 0
  %3234 = vmatpush1.bf16.msra.mxu0 %v158
  %3235 = vmatprep.subr.bf16.mxu0 0
  %3236 = vmatpush1.bf16.msra.mxu0 %v159
  %3237 = vmatprep.subr.bf16.mxu0 0
  %3238 = vmatpush1.bf16.msra.mxu0 %v160
  %3239 = vmatprep.subr.bf16.mxu0 0
  %3240 = vmatpush1.bf16.msra.mxu0 %v161
  %3241 = vmatprep.subr.bf16.mxu0 0
  %3242 = vmatpush1.bf16.msra.mxu0 0
  %3243 = vmatprep.subr.bf16.mxu0 0
  %3244 = vmatpush1.bf16.msra.mxu0 0
  %3245 = vmatprep.subr.bf16.mxu0 0
  %3246 = vmatpush1.bf16.msra.mxu0 0
  %3247 = vmatprep.subr.bf16.mxu0 0
  %3248 = vmatpush1.bf16.msra.mxu0 0
  %3249 = vmatprep.subr.bf16.mxu0 0
  %3250 = vmatpush1.bf16.msra.mxu0 0
  %3251 = vmatprep.subr.bf16.mxu0 0
  %3252 = vmatpush1.bf16.msra.mxu0 0
  %3253 = vmatprep.subr.bf16.mxu0 0
  %3254 = vmatpush1.bf16.msra.mxu0 0
  %3255 = vmatprep.subr.bf16.mxu0 0
  %3256 = vmatpush1.bf16.msra.mxu0 0
  %3257 = vmatprep.subr.bf16.mxu0 0
  %3258 = vmatpush1.bf16.msra.mxu0 0
  %3259 = vmatprep.subr.bf16.mxu0 0
  %3260 = vmatpush1.bf16.msra.mxu0 0
  %3261 = vmatprep.subr.bf16.mxu0 0
  %3262 = vmatpush1.bf16.msra.mxu0 0
  %3263 = vmatprep.subr.bf16.mxu0 0
  %3264 = vmatpush1.bf16.msra.mxu0 0
  %3265 = vmatprep.mubr.bf16.mxu0 0
  %3266 = vmatmul.mubr.bf16.gmra.mrb[0].mxu0 %v3231
  %v3267 = vpop.f32.mrb[0].mxu0
  %v3268 = vadd.f32 0.0, %v3267
  %v3269 = vpop.f32.mrb[0].mxu0
  %v3270 = vpop.f32.mrb[0].mxu0
  %v3271 = vadd.f32 0.0, %v3270
  %v3272 = vpop.f32.mrb[0].mxu0
  %3273 = vdwg.mxu0
  %3274 = vmatprep.subr.bf16.mxu0 0
  %3275 = vmatpush1.bf16.msra.mxu0 %v243
  %3276 = vmatprep.subr.bf16.mxu0 0
  %3277 = vmatpush1.bf16.msra.mxu0 %v244
  %3278 = vmatprep.subr.bf16.mxu0 0
  %3279 = vmatpush1.bf16.msra.mxu0 %v245
  %3280 = vmatprep.subr.bf16.mxu0 0
  %3281 = vmatpush1.bf16.msra.mxu0 %v246
  %3282 = vmatprep.subr.bf16.mxu0 0
  %3283 = vmatpush1.bf16.msra.mxu0 %v247
  %3284 = vmatprep.subr.bf16.mxu0 0
  %3285 = vmatpush1.bf16.msra.mxu0 %v248
  %3286 = vmatprep.subr.bf16.mxu0 0
  %3287 = vmatpush1.bf16.msra.mxu0 %v249
  %3288 = vmatprep.subr.bf16.mxu0 0
  %3289 = vmatpush1.bf16.msra.mxu0 %v250
  %3290 = vmatprep.subr.bf16.mxu0 0
  %3291 = vmatpush1.bf16.msra.mxu0 0
  %3292 = vmatprep.subr.bf16.mxu0 0
  %3293 = vmatpush1.bf16.msra.mxu0 0
  %3294 = vmatprep.subr.bf16.mxu0 0
  %3295 = vmatpush1.bf16.msra.mxu0 0
  %3296 = vmatprep.subr.bf16.mxu0 0
  %3297 = vmatpush1.bf16.msra.mxu0 0
  %3298 = vmatprep.subr.bf16.mxu0 0
  %3299 = vmatpush1.bf16.msra.mxu0 0
  %3300 = vmatprep.subr.bf16.mxu0 0
  %3301 = vmatpush1.bf16.msra.mxu0 0
  %3302 = vmatprep.subr.bf16.mxu0 0
  %3303 = vmatpush1.bf16.msra.mxu0 0
  %3304 = vmatprep.subr.bf16.mxu0 0
  %3305 = vmatpush1.bf16.msra.mxu0 0
  %3306 = vmatprep.mubr.bf16.mxu0 0
  %3307 = vmatmul.mubr.bf16.gmra.mrb[0].mxu0 %v3216
  %v3308 = vpop.f32.mrb[0].mxu0
  %v3309 = vadd.f32 %v3268, %v3308
  %v3310 = vpop.f32.mrb[0].mxu0
  %v3311 = vpop.f32.mrb[0].mxu0
  %v3312 = vadd.f32 %v3271, %v3311
  %v3313 = vpop.f32.mrb[0].mxu0
  %3314 = vdwg.mxu0
  %v3315 = vlaneseq
  %v3316 = vshrl.u32 %v3315, 7
  %v3317 = vsub.s32 0, %v3316
  %v3318 = vrot.slane %v3182, %v3317
  %vm3319 = vcmp.eq.s32.totalorder %v3318, 1
  %vm3320 = vmand %vm73, %vm3319
  %vm3321 = vmand %vm74, %vm3319
  %v3322 = vsel %vm3320, 0.0, -1e+09
  %v3323 = vsel %vm3321, 0.0, -1e+09
  %v3324 = vsel %vm312, %v3309, 0.0
  %3325 = vadd.xlane.f32.xlu0 %v3324
  %v3326 = vpop.xlane.xlu0 %3325
  %v3327 = vsel %vm312, %v3312, 0.0
  %3328 = vadd.xlane.f32.xlu0 %v3327
  %v3329 = vpop.xlane.xlu0 %3328
  %v3330 = vmul.f32 %v3326, %v319
  %v3331 = vmul.f32 %v3329, %v319
  %v3332 = vsub.f32 %v3309, %v3330
  %v3333 = vsub.f32 %v3312, %v3331
  %v3334 = vmul.f32 %v3332, %v3332
  %v3335 = vmul.f32 %v3333, %v3333
  %v3336 = vsel %vm312, %v3334, 0.0
  %3337 = vadd.xlane.f32.xlu0 %v3336
  %v3338 = vpop.xlane.xlu0 %3337
  %v3339 = vsel %vm312, %v3335, 0.0
  %3340 = vadd.xlane.f32.xlu0 %v3339
  %v3341 = vpop.xlane.xlu0 %3340
  %v3342 = vmul.f32 %v3338, %v319
  %v3343 = vmul.f32 %v3341, %v319
  %v3344 = vadd.f32 %v3342, 1e-05
  %v3345 = vadd.f32 %v3343, 1e-05
  %v3346 = vrsqrt.pop %v3344
  %v3347 = vrsqrt.pop %v3345
  %v3348 = vmul.f32 %v3332, %v3346
  %v3349 = vmul.f32 %v3333, %v3347
  %v3350 = vmul.f32 %v3348, %v344
  %v3351 = vmul.f32 %v3349, %v344
  %v3352 = vadd.f32 %v3350, %v352
  %v3353 = vadd.f32 %v3351, %v352
  %v3354 = vpack.c.bf16 %v3353, %v3352
  %v3356 = vsel %vm312, %v3354, 0
  %3358 = vmatprep.subr.bf16.mxu0 0
  %3359 = vmatpush1.bf16.msra.mxu0 %v376
  %3360 = vmatprep.subr.bf16.mxu0 0
  %3361 = vmatpush1.bf16.msra.mxu0 %v377
  %3362 = vmatprep.subr.bf16.mxu0 0
  %3363 = vmatpush1.bf16.msra.mxu0 0
  %3364 = vmatprep.subr.bf16.mxu0 0
  %3365 = vmatpush1.bf16.msra.mxu0 0
  %3366 = vmatprep.subr.bf16.mxu0 0
  %3367 = vmatpush1.bf16.msra.mxu0 0
  %3368 = vmatprep.subr.bf16.mxu0 0
  %3369 = vmatpush1.bf16.msra.mxu0 0
  %3370 = vmatprep.subr.bf16.mxu0 0
  %3371 = vmatpush1.bf16.msra.mxu0 0
  %3372 = vmatprep.subr.bf16.mxu0 0
  %3373 = vmatpush1.bf16.msra.mxu0 0
  %3374 = vmatprep.subr.bf16.mxu0 0
  %3375 = vmatpush1.bf16.msra.mxu0 0
  %3376 = vmatprep.subr.bf16.mxu0 0
  %3377 = vmatpush1.bf16.msra.mxu0 0
  %3378 = vmatprep.subr.bf16.mxu0 0
  %3379 = vmatpush1.bf16.msra.mxu0 0
  %3380 = vmatprep.subr.bf16.mxu0 0
  %3381 = vmatpush1.bf16.msra.mxu0 0
  %3382 = vmatprep.subr.bf16.mxu0 0
  %3383 = vmatpush1.bf16.msra.mxu0 0
  %3384 = vmatprep.subr.bf16.mxu0 0
  %3385 = vmatpush1.bf16.msra.mxu0 0
  %3386 = vmatprep.subr.bf16.mxu0 0
  %3387 = vmatpush1.bf16.msra.mxu0 0
  %3388 = vmatprep.subr.bf16.mxu0 0
  %3389 = vmatpush1.bf16.msra.mxu0 0
  %3390 = vmatprep.mubr.bf16.mxu0 0
  %3391 = vmatmul.mubr.bf16.gmra.mrb[0].mxu0 %v3356
  %v3392 = vpop.f32.mrb[0].mxu0
  %v3393 = vadd.f32 %v366, %v3392
  %v3394 = vpop.f32.mrb[0].mxu0
  %v3395 = vpop.f32.mrb[0].mxu0
  %v3396 = vadd.f32 %v366, %v3395
  %v3397 = vpop.f32.mrb[0].mxu0
  %3398 = vdwg.mxu0
  %v3399 = vpack.c.bf16 %v3396, %v3393
  %3401 = vrot.lane.b32.xlu0 %v3399, 96
  %v3402 = vpop.permute.xlu0 %3401
  %v3404 = vsel %vm432, %v3399, 0
  %v3407 = vsel %vm432, %v3402, 0
  %3409 = vmatprep.subr.bf16.mxu0 0
  %3410 = vmatpush1.bf16.xpose.msra.mxu0 %v3407
  %3411 = vmatprep.subr.bf16.mxu0 0
  %3412 = vmatpush1.bf16.xpose.msra.mxu0 0
  %3413 = vmatprep.subr.bf16.mxu0 0
  %3414 = vmatpush1.bf16.xpose.msra.mxu0 0
  %3415 = vmatprep.subr.bf16.mxu0 0
  %3416 = vmatpush1.bf16.xpose.msra.mxu0 0
  %3417 = vmatprep.subr.bf16.mxu0 0
  %3418 = vmatpush1.bf16.xpose.msra.mxu0 0
  %3419 = vmatprep.subr.bf16.mxu0 0
  %3420 = vmatpush1.bf16.xpose.msra.mxu0 0
  %3421 = vmatprep.subr.bf16.mxu0 0
  %3422 = vmatpush1.bf16.xpose.msra.mxu0 0
  %3423 = vmatprep.subr.bf16.mxu0 0
  %3424 = vmatpush1.bf16.xpose.msra.mxu0 0
  %3425 = vmatprep.subr.bf16.mxu0 0
  %3426 = vmatpush1.bf16.xpose.msra.mxu0 0
  %3427 = vmatprep.subr.bf16.mxu0 0
  %3428 = vmatpush1.bf16.xpose.msra.mxu0 0
  %3429 = vmatprep.subr.bf16.mxu0 0
  %3430 = vmatpush1.bf16.xpose.msra.mxu0 0
  %3431 = vmatprep.subr.bf16.mxu0 0
  %3432 = vmatpush1.bf16.xpose.msra.mxu0 0
  %3433 = vmatprep.subr.bf16.mxu0 0
  %3434 = vmatpush1.bf16.xpose.msra.mxu0 0
  %3435 = vmatprep.subr.bf16.mxu0 0
  %3436 = vmatpush1.bf16.xpose.msra.mxu0 0
  %3437 = vmatprep.subr.bf16.mxu0 0
  %3438 = vmatpush1.bf16.xpose.msra.mxu0 0
  %3439 = vmatprep.subr.bf16.mxu0 0
  %3440 = vmatpush1.bf16.xpose.msra.mxu0 0
  %3441 = vmatprep.mubr.bf16.mxu0 0
  %3442 = vmatmul.mubr.bf16.gmra.mrb[0].mxu0 %v3404
  %v3443 = vpop.f32.mrb[0].mxu0
  %v3444 = vadd.f32 0.0, %v3443
  %v3445 = vpop.f32.mrb[0].mxu0
  %v3446 = vpop.f32.mrb[0].mxu0
  %v3447 = vadd.f32 0.0, %v3446
  %v3448 = vpop.f32.mrb[0].mxu0
  %3449 = vdwg.mxu0
  %v3450 = vmul.f32 %v3444, 0.25
  %v3451 = vmul.f32 %v3447, 0.25
  %v3452 = vadd.f32 %v3450, %v3322
  %v3453 = vadd.f32 %v3451, %v3323
  %v3454 = vsel %vm432, %v3452, -inf
  %3455 = vmax.xlane.f32.xlu0 %v3454
  %v3456 = vpop.xlane.xlu0 %3455
  %v3457 = vsel %vm432, %v3453, -inf
  %3458 = vmax.xlane.f32.xlu0 %v3457
  %v3459 = vpop.xlane.xlu0 %3458
  %v3460 = vsub.f32 %v3452, %v3456
  %v3461 = vsub.f32 %v3453, %v3459
  %v3462 = vmul.f32 %v3460, 1.442695
  %v3463 = vpow.pop %v3462
  %v3464 = vmul.f32 %v3461, 1.442695
  %v3465 = vpow.pop %v3464
  %v3466 = vsel %vm432, %v3463, 0.0
  %3467 = vadd.xlane.f32.xlu0 %v3466
  %v3468 = vpop.xlane.xlu0 %3467
  %v3469 = vsel %vm432, %v3465, 0.0
  %3470 = vadd.xlane.f32.xlu0 %v3469
  %v3471 = vpop.xlane.xlu0 %3470
  %v3472 = vrcp.pop %v3468
  %v3473 = vmul.f32 %v3463, %v3472
  %v3474 = vrcp.pop %v3471
  %v3475 = vmul.f32 %v3465, %v3474
  %v3476 = vpack.c.bf16 %v3475, %v3473
  %3477 = vrot.lane.b32.xlu0 %v3399, 64
  %v3478 = vpop.permute.xlu0 %3477
  %v3481 = vsel %vm432, %v3476, 0
  %3483 = vmatprep.subr.bf16.mxu0 0
  %3484 = vmatpush1.bf16.msra.mxu0 %v3478
  %3485 = vmatprep.subr.bf16.mxu0 0
  %3486 = vmatpush1.bf16.msra.mxu0 0
  %3487 = vmatprep.subr.bf16.mxu0 0
  %3488 = vmatpush1.bf16.msra.mxu0 0
  %3489 = vmatprep.subr.bf16.mxu0 0
  %3490 = vmatpush1.bf16.msra.mxu0 0
  %3491 = vmatprep.subr.bf16.mxu0 0
  %3492 = vmatpush1.bf16.msra.mxu0 0
  %3493 = vmatprep.subr.bf16.mxu0 0
  %3494 = vmatpush1.bf16.msra.mxu0 0
  %3495 = vmatprep.subr.bf16.mxu0 0
  %3496 = vmatpush1.bf16.msra.mxu0 0
  %3497 = vmatprep.subr.bf16.mxu0 0
  %3498 = vmatpush1.bf16.msra.mxu0 0
  %3499 = vmatprep.subr.bf16.mxu0 0
  %3500 = vmatpush1.bf16.msra.mxu0 0
  %3501 = vmatprep.subr.bf16.mxu0 0
  %3502 = vmatpush1.bf16.msra.mxu0 0
  %3503 = vmatprep.subr.bf16.mxu0 0
  %3504 = vmatpush1.bf16.msra.mxu0 0
  %3505 = vmatprep.subr.bf16.mxu0 0
  %3506 = vmatpush1.bf16.msra.mxu0 0
  %3507 = vmatprep.subr.bf16.mxu0 0
  %3508 = vmatpush1.bf16.msra.mxu0 0
  %3509 = vmatprep.subr.bf16.mxu0 0
  %3510 = vmatpush1.bf16.msra.mxu0 0
  %3511 = vmatprep.subr.bf16.mxu0 0
  %3512 = vmatpush1.bf16.msra.mxu0 0
  %3513 = vmatprep.subr.bf16.mxu0 0
  %3514 = vmatpush1.bf16.msra.mxu0 0
  %3515 = vmatprep.mubr.bf16.mxu0 0
  %3516 = vmatmul.mubr.bf16.gmra.mrb[0].mxu0 %v3481
  %v3517 = vpop.f32.mrb[0].mxu0
  %v3518 = vadd.f32 0.0, %v3517
  %v3519 = vpop.f32.mrb[0].mxu0
  %v3520 = vpop.f32.mrb[0].mxu0
  %v3521 = vadd.f32 0.0, %v3520
  %v3522 = vpop.f32.mrb[0].mxu0
  %3523 = vdwg.mxu0
  %v3524 = vpack.c.bf16 %v3521, %v3518
  %3525 = vrot.lane.b32.xlu0 %v3399, 112
  %v3526 = vpop.permute.xlu0 %3525
  %3527 = vrot.lane.b32.xlu0 %v3399, 80
  %v3528 = vpop.permute.xlu0 %3527
  %v3530 = vsel %vm432, %v3526, 0
  %v3533 = vsel %vm432, %v3528, 0
  %3535 = vmatprep.subr.bf16.mxu0 0
  %3536 = vmatpush1.bf16.xpose.msra.mxu0 %v3533
  %3537 = vmatprep.subr.bf16.mxu0 0
  %3538 = vmatpush1.bf16.xpose.msra.mxu0 0
  %3539 = vmatprep.subr.bf16.mxu0 0
  %3540 = vmatpush1.bf16.xpose.msra.mxu0 0
  %3541 = vmatprep.subr.bf16.mxu0 0
  %3542 = vmatpush1.bf16.xpose.msra.mxu0 0
  %3543 = vmatprep.subr.bf16.mxu0 0
  %3544 = vmatpush1.bf16.xpose.msra.mxu0 0
  %3545 = vmatprep.subr.bf16.mxu0 0
  %3546 = vmatpush1.bf16.xpose.msra.mxu0 0
  %3547 = vmatprep.subr.bf16.mxu0 0
  %3548 = vmatpush1.bf16.xpose.msra.mxu0 0
  %3549 = vmatprep.subr.bf16.mxu0 0
  %3550 = vmatpush1.bf16.xpose.msra.mxu0 0
  %3551 = vmatprep.subr.bf16.mxu0 0
  %3552 = vmatpush1.bf16.xpose.msra.mxu0 0
  %3553 = vmatprep.subr.bf16.mxu0 0
  %3554 = vmatpush1.bf16.xpose.msra.mxu0 0
  %3555 = vmatprep.subr.bf16.mxu0 0
  %3556 = vmatpush1.bf16.xpose.msra.mxu0 0
  %3557 = vmatprep.subr.bf16.mxu0 0
  %3558 = vmatpush1.bf16.xpose.msra.mxu0 0
  %3559 = vmatprep.subr.bf16.mxu0 0
  %3560 = vmatpush1.bf16.xpose.msra.mxu0 0
  %3561 = vmatprep.subr.bf16.mxu0 0
  %3562 = vmatpush1.bf16.xpose.msra.mxu0 0
  %3563 = vmatprep.subr.bf16.mxu0 0
  %3564 = vmatpush1.bf16.xpose.msra.mxu0 0
  %3565 = vmatprep.subr.bf16.mxu0 0
  %3566 = vmatpush1.bf16.xpose.msra.mxu0 0
  %3567 = vmatprep.mubr.bf16.mxu0 0
  %3568 = vmatmul.mubr.bf16.gmra.mrb[0].mxu0 %v3530
  %v3569 = vpop.f32.mrb[0].mxu0
  %v3570 = vadd.f32 0.0, %v3569
  %v3571 = vpop.f32.mrb[0].mxu0
  %v3572 = vpop.f32.mrb[0].mxu0
  %v3573 = vadd.f32 0.0, %v3572
  %v3574 = vpop.f32.mrb[0].mxu0
  %3575 = vdwg.mxu0
  %v3576 = vmul.f32 %v3570, 0.25
  %v3577 = vmul.f32 %v3573, 0.25
  %v3578 = vadd.f32 %v3576, %v3322
  %v3579 = vadd.f32 %v3577, %v3323
  %v3580 = vsel %vm432, %v3578, -inf
  %3581 = vmax.xlane.f32.xlu0 %v3580
  %v3582 = vpop.xlane.xlu0 %3581
  %v3583 = vsel %vm432, %v3579, -inf
  %3584 = vmax.xlane.f32.xlu0 %v3583
  %v3585 = vpop.xlane.xlu0 %3584
  %v3586 = vsub.f32 %v3578, %v3582
  %v3587 = vsub.f32 %v3579, %v3585
  %v3588 = vmul.f32 %v3586, 1.442695
  %v3589 = vpow.pop %v3588
  %v3590 = vmul.f32 %v3587, 1.442695
  %v3591 = vpow.pop %v3590
  %v3592 = vsel %vm432, %v3589, 0.0
  %3593 = vadd.xlane.f32.xlu0 %v3592
  %v3594 = vpop.xlane.xlu0 %3593
  %v3595 = vsel %vm432, %v3591, 0.0
  %3596 = vadd.xlane.f32.xlu0 %v3595
  %v3597 = vpop.xlane.xlu0 %3596
  %v3598 = vrcp.pop %v3594
  %v3599 = vmul.f32 %v3589, %v3598
  %v3600 = vrcp.pop %v3597
  %v3601 = vmul.f32 %v3591, %v3600
  %v3602 = vpack.c.bf16 %v3601, %v3599
  %3603 = vrot.lane.b32.xlu0 %v3399, 48
  %v3604 = vpop.permute.xlu0 %3603
  %v3607 = vsel %vm432, %v3602, 0
  %3609 = vmatprep.subr.bf16.mxu0 0
  %3610 = vmatpush1.bf16.msra.mxu0 %v3604
  %3611 = vmatprep.subr.bf16.mxu0 0
  %3612 = vmatpush1.bf16.msra.mxu0 0
  %3613 = vmatprep.subr.bf16.mxu0 0
  %3614 = vmatpush1.bf16.msra.mxu0 0
  %3615 = vmatprep.subr.bf16.mxu0 0
  %3616 = vmatpush1.bf16.msra.mxu0 0
  %3617 = vmatprep.subr.bf16.mxu0 0
  %3618 = vmatpush1.bf16.msra.mxu0 0
  %3619 = vmatprep.subr.bf16.mxu0 0
  %3620 = vmatpush1.bf16.msra.mxu0 0
  %3621 = vmatprep.subr.bf16.mxu0 0
  %3622 = vmatpush1.bf16.msra.mxu0 0
  %3623 = vmatprep.subr.bf16.mxu0 0
  %3624 = vmatpush1.bf16.msra.mxu0 0
  %3625 = vmatprep.subr.bf16.mxu0 0
  %3626 = vmatpush1.bf16.msra.mxu0 0
  %3627 = vmatprep.subr.bf16.mxu0 0
  %3628 = vmatpush1.bf16.msra.mxu0 0
  %3629 = vmatprep.subr.bf16.mxu0 0
  %3630 = vmatpush1.bf16.msra.mxu0 0
  %3631 = vmatprep.subr.bf16.mxu0 0
  %3632 = vmatpush1.bf16.msra.mxu0 0
  %3633 = vmatprep.subr.bf16.mxu0 0
  %3634 = vmatpush1.bf16.msra.mxu0 0
  %3635 = vmatprep.subr.bf16.mxu0 0
  %3636 = vmatpush1.bf16.msra.mxu0 0
  %3637 = vmatprep.subr.bf16.mxu0 0
  %3638 = vmatpush1.bf16.msra.mxu0 0
  %3639 = vmatprep.subr.bf16.mxu0 0
  %3640 = vmatpush1.bf16.msra.mxu0 0
  %3641 = vmatprep.mubr.bf16.mxu0 0
  %3642 = vmatmul.mubr.bf16.gmra.mrb[0].mxu0 %v3607
  %v3643 = vpop.f32.mrb[0].mxu0
  %v3644 = vadd.f32 0.0, %v3643
  %v3645 = vpop.f32.mrb[0].mxu0
  %v3646 = vpop.f32.mrb[0].mxu0
  %v3647 = vadd.f32 0.0, %v3646
  %v3648 = vpop.f32.mrb[0].mxu0
  %3649 = vdwg.mxu0
  %v3650 = vpack.c.bf16 %v3647, %v3644
  %v3652 = vsel %vm432, %v3650, 0
  %3654 = vmatprep.subr.bf16.mxu0 0
  %3655 = vmatpush1.bf16.msra.mxu0 %v685
  %3656 = vmatprep.subr.bf16.mxu0 0
  %3657 = vmatpush1.bf16.msra.mxu0 0
  %3658 = vmatprep.subr.bf16.mxu0 0
  %3659 = vmatpush1.bf16.msra.mxu0 0
  %3660 = vmatprep.subr.bf16.mxu0 0
  %3661 = vmatpush1.bf16.msra.mxu0 0
  %3662 = vmatprep.subr.bf16.mxu0 0
  %3663 = vmatpush1.bf16.msra.mxu0 0
  %3664 = vmatprep.subr.bf16.mxu0 0
  %3665 = vmatpush1.bf16.msra.mxu0 0
  %3666 = vmatprep.subr.bf16.mxu0 0
  %3667 = vmatpush1.bf16.msra.mxu0 0
  %3668 = vmatprep.subr.bf16.mxu0 0
  %3669 = vmatpush1.bf16.msra.mxu0 0
  %3670 = vmatprep.subr.bf16.mxu0 0
  %3671 = vmatpush1.bf16.msra.mxu0 0
  %3672 = vmatprep.subr.bf16.mxu0 0
  %3673 = vmatpush1.bf16.msra.mxu0 0
  %3674 = vmatprep.subr.bf16.mxu0 0
  %3675 = vmatpush1.bf16.msra.mxu0 0
  %3676 = vmatprep.subr.bf16.mxu0 0
  %3677 = vmatpush1.bf16.msra.mxu0 0
  %3678 = vmatprep.subr.bf16.mxu0 0
  %3679 = vmatpush1.bf16.msra.mxu0 0
  %3680 = vmatprep.subr.bf16.mxu0 0
  %3681 = vmatpush1.bf16.msra.mxu0 0
  %3682 = vmatprep.subr.bf16.mxu0 0
  %3683 = vmatpush1.bf16.msra.mxu0 0
  %3684 = vmatprep.subr.bf16.mxu0 0
  %3685 = vmatpush1.bf16.msra.mxu0 0
  %3686 = vmatprep.mubr.bf16.mxu0 0
  %3687 = vmatmul.mubr.bf16.gmra.mrb[0].mxu0 %v3652
  %v3688 = vpop.f32.mrb[0].mxu0
  %v3689 = vadd.f32 0.0, %v3688
  %v3690 = vpop.f32.mrb[0].mxu0
  %v3691 = vpop.f32.mrb[0].mxu0
  %v3692 = vadd.f32 0.0, %v3691
  %v3693 = vpop.f32.mrb[0].mxu0
  %3694 = vdwg.mxu0
  %v3696 = vsel %vm432, %v3524, 0
  %3698 = vmatprep.subr.bf16.mxu0 0
  %3699 = vmatpush1.bf16.msra.mxu0 %v735
  %3700 = vmatprep.subr.bf16.mxu0 0
  %3701 = vmatpush1.bf16.msra.mxu0 0
  %3702 = vmatprep.subr.bf16.mxu0 0
  %3703 = vmatpush1.bf16.msra.mxu0 0
  %3704 = vmatprep.subr.bf16.mxu0 0
  %3705 = vmatpush1.bf16.msra.mxu0 0
  %3706 = vmatprep.subr.bf16.mxu0 0
  %3707 = vmatpush1.bf16.msra.mxu0 0
  %3708 = vmatprep.subr.bf16.mxu0 0
  %3709 = vmatpush1.bf16.msra.mxu0 0
  %3710 = vmatprep.subr.bf16.mxu0 0
  %3711 = vmatpush1.bf16.msra.mxu0 0
  %3712 = vmatprep.subr.bf16.mxu0 0
  %3713 = vmatpush1.bf16.msra.mxu0 0
  %3714 = vmatprep.subr.bf16.mxu0 0
  %3715 = vmatpush1.bf16.msra.mxu0 0
  %3716 = vmatprep.subr.bf16.mxu0 0
  %3717 = vmatpush1.bf16.msra.mxu0 0
  %3718 = vmatprep.subr.bf16.mxu0 0
  %3719 = vmatpush1.bf16.msra.mxu0 0
  %3720 = vmatprep.subr.bf16.mxu0 0
  %3721 = vmatpush1.bf16.msra.mxu0 0
  %3722 = vmatprep.subr.bf16.mxu0 0
  %3723 = vmatpush1.bf16.msra.mxu0 0
  %3724 = vmatprep.subr.bf16.mxu0 0
  %3725 = vmatpush1.bf16.msra.mxu0 0
  %3726 = vmatprep.subr.bf16.mxu0 0
  %3727 = vmatpush1.bf16.msra.mxu0 0
  %3728 = vmatprep.subr.bf16.mxu0 0
  %3729 = vmatpush1.bf16.msra.mxu0 0
  %3730 = vmatprep.mubr.bf16.mxu0 0
  %3731 = vmatmul.mubr.bf16.gmra.mrb[0].mxu0 %v3696
  %v3732 = vpop.f32.mrb[0].mxu0
  %v3733 = vadd.f32 %v3689, %v3732
  %v3734 = vpop.f32.mrb[0].mxu0
  %v3735 = vpop.f32.mrb[0].mxu0
  %v3736 = vadd.f32 %v3692, %v3735
  %v3737 = vpop.f32.mrb[0].mxu0
  %3738 = vdwg.mxu0
  %v3739 = vadd.f32 %v3309, %v3733
  %v3740 = vadd.f32 %v3312, %v3736
  %v3741 = vadd.f32 %v3739, %v788
  %v3742 = vadd.f32 %v3740, %v788
  %v3743 = vsel %vm312, %v3741, 0.0
  %3744 = vadd.xlane.f32.xlu0 %v3743
  %v3745 = vpop.xlane.xlu0 %3744
  %v3746 = vsel %vm312, %v3742, 0.0
  %3747 = vadd.xlane.f32.xlu0 %v3746
  %v3748 = vpop.xlane.xlu0 %3747
  %v3749 = vmul.f32 %v3745, %v319
  %v3750 = vmul.f32 %v3748, %v319
  %v3751 = vsub.f32 %v3741, %v3749
  %v3752 = vsub.f32 %v3742, %v3750
  %v3753 = vmul.f32 %v3751, %v3751
  %v3754 = vmul.f32 %v3752, %v3752
  %v3755 = vsel %vm312, %v3753, 0.0
  %3756 = vadd.xlane.f32.xlu0 %v3755
  %v3757 = vpop.xlane.xlu0 %3756
  %v3758 = vsel %vm312, %v3754, 0.0
  %3759 = vadd.xlane.f32.xlu0 %v3758
  %v3760 = vpop.xlane.xlu0 %3759
  %v3761 = vmul.f32 %v3757, %v319
  %v3762 = vmul.f32 %v3760, %v319
  %v3763 = vadd.f32 %v3761, 1e-05
  %v3764 = vadd.f32 %v3762, 1e-05
  %v3765 = vrsqrt.pop %v3763
  %v3766 = vrsqrt.pop %v3764
  %v3767 = vmul.f32 %v3751, %v3765
  %v3768 = vmul.f32 %v3752, %v3766
  %v3769 = vmul.f32 %v3767, %v824
  %v3770 = vmul.f32 %v3768, %v824
  %v3771 = vadd.f32 %v3769, %v832
  %v3772 = vadd.f32 %v3770, %v832
  %v3773 = vpack.c.bf16 %v3772, %v3771
  %v3775 = vsel %vm312, %v3773, 0
  %3777 = vmatprep.subr.bf16.mxu0 0
  %3778 = vmatpush1.bf16.msra.mxu0 %v856
  %3779 = vmatprep.subr.bf16.mxu0 0
  %3780 = vmatpush1.bf16.msra.mxu0 %v857
  %3781 = vmatprep.subr.bf16.mxu0 0
  %3782 = vmatpush1.bf16.msra.mxu0 0
  %3783 = vmatprep.subr.bf16.mxu0 0
  %3784 = vmatpush1.bf16.msra.mxu0 0
  %3785 = vmatprep.subr.bf16.mxu0 0
  %3786 = vmatpush1.bf16.msra.mxu0 0
  %3787 = vmatprep.subr.bf16.mxu0 0
  %3788 = vmatpush1.bf16.msra.mxu0 0
  %3789 = vmatprep.subr.bf16.mxu0 0
  %3790 = vmatpush1.bf16.msra.mxu0 0
  %3791 = vmatprep.subr.bf16.mxu0 0
  %3792 = vmatpush1.bf16.msra.mxu0 0
  %3793 = vmatprep.subr.bf16.mxu0 0
  %3794 = vmatpush1.bf16.msra.mxu0 0
  %3795 = vmatprep.subr.bf16.mxu0 0
  %3796 = vmatpush1.bf16.msra.mxu0 0
  %3797 = vmatprep.subr.bf16.mxu0 0
  %3798 = vmatpush1.bf16.msra.mxu0 0
  %3799 = vmatprep.subr.bf16.mxu0 0
  %3800 = vmatpush1.bf16.msra.mxu0 0
  %3801 = vmatprep.subr.bf16.mxu0 0
  %3802 = vmatpush1.bf16.msra.mxu0 0
  %3803 = vmatprep.subr.bf16.mxu0 0
  %3804 = vmatpush1.bf16.msra.mxu0 0
  %3805 = vmatprep.subr.bf16.mxu0 0
  %3806 = vmatpush1.bf16.msra.mxu0 0
  %3807 = vmatprep.subr.bf16.mxu0 0
  %3808 = vmatpush1.bf16.msra.mxu0 0
  %3809 = vmatprep.mubr.bf16.mxu0 0
  %3810 = vmatmul.mubr.bf16.gmra.mrb[0].mxu0 %v3775
  %v3811 = vpop.f32.mrb[0].mxu0
  %v3812 = vadd.f32 %v846, %v3811
  %v3813 = vpop.f32.mrb[0].mxu0
  %v3814 = vpop.f32.mrb[0].mxu0
  %v3815 = vadd.f32 %v846, %v3814
  %v3816 = vpop.f32.mrb[0].mxu0
  %3817 = vdwg.mxu0
  %v3818 = vmul.f32 %v3812, 0.5
  %v3819 = vmul.f32 %v3815, 0.5
  %v3820 = vmul.f32 %v3812, 0.044715
  %v3821 = vmul.f32 %v3815, 0.044715
  %v3822 = vmul.f32 %v3820, %v3812
  %v3823 = vmul.f32 %v3821, %v3815
  %v3824 = vmul.f32 %v3822, %v3812
  %v3825 = vmul.f32 %v3823, %v3815
  %v3826 = vadd.f32 %v3812, %v3824
  %v3827 = vadd.f32 %v3815, %v3825
  %v3828 = vmul.f32 %v3826, 0.7978846
  %v3829 = vmul.f32 %v3827, 0.7978846
  %v3830 = vtanh.pop %v3828
  %v3831 = vtanh.pop %v3829
  %v3832 = vadd.f32 %v3830, 1.0
  %v3833 = vadd.f32 %v3831, 1.0
  %v3834 = vmul.f32 %v3818, %v3832
  %v3835 = vmul.f32 %v3819, %v3833
  %v3836 = vpack.c.bf16 %v3835, %v3834
  %3837 = vmatprep.subr.bf16.mxu0 0
  %3838 = vmatpush1.bf16.msra.mxu0 %v978
  %3839 = vmatprep.subr.bf16.mxu0 0
  %3840 = vmatpush1.bf16.msra.mxu0 %v979
  %3841 = vmatprep.subr.bf16.mxu0 0
  %3842 = vmatpush1.bf16.msra.mxu0 %v980
  %3843 = vmatprep.subr.bf16.mxu0 0
  %3844 = vmatpush1.bf16.msra.mxu0 %v981
  %3845 = vmatprep.subr.bf16.mxu0 0
  %3846 = vmatpush1.bf16.msra.mxu0 %v982
  %3847 = vmatprep.subr.bf16.mxu0 0
  %3848 = vmatpush1.bf16.msra.mxu0 %v983
  %3849 = vmatprep.subr.bf16.mxu0 0
  %3850 = vmatpush1.bf16.msra.mxu0 %v984
  %3851 = vmatprep.subr.bf16.mxu0 0
  %3852 = vmatpush1.bf16.msra.mxu0 %v985
  %3853 = vmatprep.subr.bf16.mxu0 0
  %3854 = vmatpush1.bf16.msra.mxu0 0
  %3855 = vmatprep.subr.bf16.mxu0 0
  %3856 = vmatpush1.bf16.msra.mxu0 0
  %3857 = vmatprep.subr.bf16.mxu0 0
  %3858 = vmatpush1.bf16.msra.mxu0 0
  %3859 = vmatprep.subr.bf16.mxu0 0
  %3860 = vmatpush1.bf16.msra.mxu0 0
  %3861 = vmatprep.subr.bf16.mxu0 0
  %3862 = vmatpush1.bf16.msra.mxu0 0
  %3863 = vmatprep.subr.bf16.mxu0 0
  %3864 = vmatpush1.bf16.msra.mxu0 0
  %3865 = vmatprep.subr.bf16.mxu0 0
  %3866 = vmatpush1.bf16.msra.mxu0 0
  %3867 = vmatprep.subr.bf16.mxu0 0
  %3868 = vmatpush1.bf16.msra.mxu0 0
  %3869 = vmatprep.mubr.bf16.mxu0 0
  %3870 = vmatmul.mubr.bf16.gmra.mrb[0].mxu0 %v3836
  %v3871 = vpop.f32.mrb[0].mxu0
  %v3872 = vadd.f32 %v944, %v3871
  %v3873 = vpop.f32.mrb[0].mxu0
  %v3874 = vpop.f32.mrb[0].mxu0
  %v3875 = vadd.f32 %v944, %v3874
  %v3876 = vpop.f32.mrb[0].mxu0
  %3877 = vdwg.mxu0
  %v3878 = vadd.f32 %v3741, %v3872
  %v3879 = vadd.f32 %v3742, %v3875
  %v3880 = vsel %vm312, %v3878, 0.0
  %3881 = vadd.xlane.f32.xlu0 %v3880
  %v3882 = vpop.xlane.xlu0 %3881
  %v3883 = vsel %vm312, %v3879, 0.0
  %3884 = vadd.xlane.f32.xlu0 %v3883
  %v3885 = vpop.xlane.xlu0 %3884
  %v3886 = vmul.f32 %v3882, %v319
  %v3887 = vmul.f32 %v3885, %v319
  %v3888 = vsub.f32 %v3878, %v3886
  %v3889 = vsub.f32 %v3879, %v3887
  %v3890 = vmul.f32 %v3888, %v3888
  %v3891 = vmul.f32 %v3889, %v3889
  %v3892 = vsel %vm312, %v3890, 0.0
  %3893 = vadd.xlane.f32.xlu0 %v3892
  %v3894 = vpop.xlane.xlu0 %3893
  %v3895 = vsel %vm312, %v3891, 0.0
  %3896 = vadd.xlane.f32.xlu0 %v3895
  %v3897 = vpop.xlane.xlu0 %3896
  %v3898 = vmul.f32 %v3894, %v319
  %v3899 = vmul.f32 %v3897, %v319
  %v3900 = vadd.f32 %v3898, 1e-05
  %v3901 = vadd.f32 %v3899, 1e-05
  %v3902 = vrsqrt.pop %v3900
  %v3903 = vrsqrt.pop %v3901
  %v3904 = vmul.f32 %v3888, %v3902
  %v3905 = vmul.f32 %v3889, %v3903
  %v3906 = vmul.f32 %v3904, %v1071
  %v3907 = vmul.f32 %v3905, %v1071
  %v3908 = vadd.f32 %v3906, %v1079
  %v3909 = vadd.f32 %v3907, %v1079
  %v3910 = vpack.c.bf16 %v3909, %v3908
  %v3912 = vsel %vm312, %v3910, 0
  %3914 = vmatprep.subr.bf16.mxu0 0
  %3915 = vmatpush1.bf16.msra.mxu0 %v1105
  %3916 = vmatprep.subr.bf16.mxu0 0
  %3917 = vmatpush1.bf16.msra.mxu0 %v1106
  %3918 = vmatprep.subr.bf16.mxu0 0
  %3919 = vmatpush1.bf16.msra.mxu0 0
  %3920 = vmatprep.subr.bf16.mxu0 0
  %3921 = vmatpush1.bf16.msra.mxu0 0
  %3922 = vmatprep.subr.bf16.mxu0 0
  %3923 = vmatpush1.bf16.msra.mxu0 0
  %3924 = vmatprep.subr.bf16.mxu0 0
  %3925 = vmatpush1.bf16.msra.mxu0 0
  %3926 = vmatprep.subr.bf16.mxu0 0
  %3927 = vmatpush1.bf16.msra.mxu0 0
  %3928 = vmatprep.subr.bf16.mxu0 0
  %3929 = vmatpush1.bf16.msra.mxu0 0
  %3930 = vmatprep.subr.bf16.mxu0 0
  %3931 = vmatpush1.bf16.msra.mxu0 0
  %3932 = vmatprep.subr.bf16.mxu0 0
  %3933 = vmatpush1.bf16.msra.mxu0 0
  %3934 = vmatprep.subr.bf16.mxu0 0
  %3935 = vmatpush1.bf16.msra.mxu0 0
  %3936 = vmatprep.subr.bf16.mxu0 0
  %3937 = vmatpush1.bf16.msra.mxu0 0
  %3938 = vmatprep.subr.bf16.mxu0 0
  %3939 = vmatpush1.bf16.msra.mxu0 0
  %3940 = vmatprep.subr.bf16.mxu0 0
  %3941 = vmatpush1.bf16.msra.mxu0 0
  %3942 = vmatprep.subr.bf16.mxu0 0
  %3943 = vmatpush1.bf16.msra.mxu0 0
  %3944 = vmatprep.subr.bf16.mxu0 0
  %3945 = vmatpush1.bf16.msra.mxu0 0
  %3946 = vmatprep.mubr.bf16.mxu0 0
  %3947 = vmatmul.mubr.bf16.gmra.mrb[0].mxu0 %v3912
  %v3948 = vpop.f32.mrb[0].mxu0
  %v3949 = vadd.f32 %v1095, %v3948
  %v3950 = vpop.f32.mrb[0].mxu0
  %v3951 = vpop.f32.mrb[0].mxu0
  %v3952 = vadd.f32 %v1095, %v3951
  %v3953 = vpop.f32.mrb[0].mxu0
  %3954 = vdwg.mxu0
  %v3955 = vpack.c.bf16 %v3952, %v3949
  %3957 = vrot.lane.b32.xlu0 %v3955, 96
  %v3958 = vpop.permute.xlu0 %3957
  %v3960 = vsel %vm432, %v3955, 0
  %v3963 = vsel %vm432, %v3958, 0
  %3965 = vmatprep.subr.bf16.mxu0 0
  %3966 = vmatpush1.bf16.xpose.msra.mxu0 %v3963
  %3967 = vmatprep.subr.bf16.mxu0 0
  %3968 = vmatpush1.bf16.xpose.msra.mxu0 0
  %3969 = vmatprep.subr.bf16.mxu0 0
  %3970 = vmatpush1.bf16.xpose.msra.mxu0 0
  %3971 = vmatprep.subr.bf16.mxu0 0
  %3972 = vmatpush1.bf16.xpose.msra.mxu0 0
  %3973 = vmatprep.subr.bf16.mxu0 0
  %3974 = vmatpush1.bf16.xpose.msra.mxu0 0
  %3975 = vmatprep.subr.bf16.mxu0 0
  %3976 = vmatpush1.bf16.xpose.msra.mxu0 0
  %3977 = vmatprep.subr.bf16.mxu0 0
  %3978 = vmatpush1.bf16.xpose.msra.mxu0 0
  %3979 = vmatprep.subr.bf16.mxu0 0
  %3980 = vmatpush1.bf16.xpose.msra.mxu0 0
  %3981 = vmatprep.subr.bf16.mxu0 0
  %3982 = vmatpush1.bf16.xpose.msra.mxu0 0
  %3983 = vmatprep.subr.bf16.mxu0 0
  %3984 = vmatpush1.bf16.xpose.msra.mxu0 0
  %3985 = vmatprep.subr.bf16.mxu0 0
  %3986 = vmatpush1.bf16.xpose.msra.mxu0 0
  %3987 = vmatprep.subr.bf16.mxu0 0
  %3988 = vmatpush1.bf16.xpose.msra.mxu0 0
  %3989 = vmatprep.subr.bf16.mxu0 0
  %3990 = vmatpush1.bf16.xpose.msra.mxu0 0
  %3991 = vmatprep.subr.bf16.mxu0 0
  %3992 = vmatpush1.bf16.xpose.msra.mxu0 0
  %3993 = vmatprep.subr.bf16.mxu0 0
  %3994 = vmatpush1.bf16.xpose.msra.mxu0 0
  %3995 = vmatprep.subr.bf16.mxu0 0
  %3996 = vmatpush1.bf16.xpose.msra.mxu0 0
  %3997 = vmatprep.mubr.bf16.mxu0 0
  %3998 = vmatmul.mubr.bf16.gmra.mrb[0].mxu0 %v3960
  %v3999 = vpop.f32.mrb[0].mxu0
  %v4000 = vadd.f32 0.0, %v3999
  %v4001 = vpop.f32.mrb[0].mxu0
  %v4002 = vpop.f32.mrb[0].mxu0
  %v4003 = vadd.f32 0.0, %v4002
  %v4004 = vpop.f32.mrb[0].mxu0
  %4005 = vdwg.mxu0
  %v4006 = vmul.f32 %v4000, 0.25
  %v4007 = vmul.f32 %v4003, 0.25
  %v4008 = vadd.f32 %v4006, %v3322
  %v4009 = vadd.f32 %v4007, %v3323
  %v4010 = vsel %vm432, %v4008, -inf
  %4011 = vmax.xlane.f32.xlu0 %v4010
  %v4012 = vpop.xlane.xlu0 %4011
  %v4013 = vsel %vm432, %v4009, -inf
  %4014 = vmax.xlane.f32.xlu0 %v4013
  %v4015 = vpop.xlane.xlu0 %4014
  %v4016 = vsub.f32 %v4008, %v4012
  %v4017 = vsub.f32 %v4009, %v4015
  %v4018 = vmul.f32 %v4016, 1.442695
  %v4019 = vpow.pop %v4018
  %v4020 = vmul.f32 %v4017, 1.442695
  %v4021 = vpow.pop %v4020
  %v4022 = vsel %vm432, %v4019, 0.0
  %4023 = vadd.xlane.f32.xlu0 %v4022
  %v4024 = vpop.xlane.xlu0 %4023
  %v4025 = vsel %vm432, %v4021, 0.0
  %4026 = vadd.xlane.f32.xlu0 %v4025
  %v4027 = vpop.xlane.xlu0 %4026
  %v4028 = vrcp.pop %v4024
  %v4029 = vmul.f32 %v4019, %v4028
  %v4030 = vrcp.pop %v4027
  %v4031 = vmul.f32 %v4021, %v4030
  %v4032 = vpack.c.bf16 %v4031, %v4029
  %4033 = vrot.lane.b32.xlu0 %v3955, 64
  %v4034 = vpop.permute.xlu0 %4033
  %v4037 = vsel %vm432, %v4032, 0
  %4039 = vmatprep.subr.bf16.mxu0 0
  %4040 = vmatpush1.bf16.msra.mxu0 %v4034
  %4041 = vmatprep.subr.bf16.mxu0 0
  %4042 = vmatpush1.bf16.msra.mxu0 0
  %4043 = vmatprep.subr.bf16.mxu0 0
  %4044 = vmatpush1.bf16.msra.mxu0 0
  %4045 = vmatprep.subr.bf16.mxu0 0
  %4046 = vmatpush1.bf16.msra.mxu0 0
  %4047 = vmatprep.subr.bf16.mxu0 0
  %4048 = vmatpush1.bf16.msra.mxu0 0
  %4049 = vmatprep.subr.bf16.mxu0 0
  %4050 = vmatpush1.bf16.msra.mxu0 0
  %4051 = vmatprep.subr.bf16.mxu0 0
  %4052 = vmatpush1.bf16.msra.mxu0 0
  %4053 = vmatprep.subr.bf16.mxu0 0
  %4054 = vmatpush1.bf16.msra.mxu0 0
  %4055 = vmatprep.subr.bf16.mxu0 0
  %4056 = vmatpush1.bf16.msra.mxu0 0
  %4057 = vmatprep.subr.bf16.mxu0 0
  %4058 = vmatpush1.bf16.msra.mxu0 0
  %4059 = vmatprep.subr.bf16.mxu0 0
  %4060 = vmatpush1.bf16.msra.mxu0 0
  %4061 = vmatprep.subr.bf16.mxu0 0
  %4062 = vmatpush1.bf16.msra.mxu0 0
  %4063 = vmatprep.subr.bf16.mxu0 0
  %4064 = vmatpush1.bf16.msra.mxu0 0
  %4065 = vmatprep.subr.bf16.mxu0 0
  %4066 = vmatpush1.bf16.msra.mxu0 0
  %4067 = vmatprep.subr.bf16.mxu0 0
  %4068 = vmatpush1.bf16.msra.mxu0 0
  %4069 = vmatprep.subr.bf16.mxu0 0
  %4070 = vmatpush1.bf16.msra.mxu0 0
  %4071 = vmatprep.mubr.bf16.mxu0 0
  %4072 = vmatmul.mubr.bf16.gmra.mrb[0].mxu0 %v4037
  %v4073 = vpop.f32.mrb[0].mxu0
  %v4074 = vadd.f32 0.0, %v4073
  %v4075 = vpop.f32.mrb[0].mxu0
  %v4076 = vpop.f32.mrb[0].mxu0
  %v4077 = vadd.f32 0.0, %v4076
  %v4078 = vpop.f32.mrb[0].mxu0
  %4079 = vdwg.mxu0
  %v4080 = vpack.c.bf16 %v4077, %v4074
  %4081 = vrot.lane.b32.xlu0 %v3955, 112
  %v4082 = vpop.permute.xlu0 %4081
  %4083 = vrot.lane.b32.xlu0 %v3955, 80
  %v4084 = vpop.permute.xlu0 %4083
  %v4086 = vsel %vm432, %v4082, 0
  %v4089 = vsel %vm432, %v4084, 0
  %4091 = vmatprep.subr.bf16.mxu0 0
  %4092 = vmatpush1.bf16.xpose.msra.mxu0 %v4089
  %4093 = vmatprep.subr.bf16.mxu0 0
  %4094 = vmatpush1.bf16.xpose.msra.mxu0 0
  %4095 = vmatprep.subr.bf16.mxu0 0
  %4096 = vmatpush1.bf16.xpose.msra.mxu0 0
  %4097 = vmatprep.subr.bf16.mxu0 0
  %4098 = vmatpush1.bf16.xpose.msra.mxu0 0
  %4099 = vmatprep.subr.bf16.mxu0 0
  %4100 = vmatpush1.bf16.xpose.msra.mxu0 0
  %4101 = vmatprep.subr.bf16.mxu0 0
  %4102 = vmatpush1.bf16.xpose.msra.mxu0 0
  %4103 = vmatprep.subr.bf16.mxu0 0
  %4104 = vmatpush1.bf16.xpose.msra.mxu0 0
  %4105 = vmatprep.subr.bf16.mxu0 0
  %4106 = vmatpush1.bf16.xpose.msra.mxu0 0
  %4107 = vmatprep.subr.bf16.mxu0 0
  %4108 = vmatpush1.bf16.xpose.msra.mxu0 0
  %4109 = vmatprep.subr.bf16.mxu0 0
  %4110 = vmatpush1.bf16.xpose.msra.mxu0 0
  %4111 = vmatprep.subr.bf16.mxu0 0
  %4112 = vmatpush1.bf16.xpose.msra.mxu0 0
  %4113 = vmatprep.subr.bf16.mxu0 0
  %4114 = vmatpush1.bf16.xpose.msra.mxu0 0
  %4115 = vmatprep.subr.bf16.mxu0 0
  %4116 = vmatpush1.bf16.xpose.msra.mxu0 0
  %4117 = vmatprep.subr.bf16.mxu0 0
  %4118 = vmatpush1.bf16.xpose.msra.mxu0 0
  %4119 = vmatprep.subr.bf16.mxu0 0
  %4120 = vmatpush1.bf16.xpose.msra.mxu0 0
  %4121 = vmatprep.subr.bf16.mxu0 0
  %4122 = vmatpush1.bf16.xpose.msra.mxu0 0
  %4123 = vmatprep.mubr.bf16.mxu0 0
  %4124 = vmatmul.mubr.bf16.gmra.mrb[0].mxu0 %v4086
  %v4125 = vpop.f32.mrb[0].mxu0
  %v4126 = vadd.f32 0.0, %v4125
  %v4127 = vpop.f32.mrb[0].mxu0
  %v4128 = vpop.f32.mrb[0].mxu0
  %v4129 = vadd.f32 0.0, %v4128
  %v4130 = vpop.f32.mrb[0].mxu0
  %4131 = vdwg.mxu0
  %v4132 = vmul.f32 %v4126, 0.25
  %v4133 = vmul.f32 %v4129, 0.25
  %v4134 = vadd.f32 %v4132, %v3322
  %v4135 = vadd.f32 %v4133, %v3323
  %v4136 = vsel %vm432, %v4134, -inf
  %4137 = vmax.xlane.f32.xlu0 %v4136
  %v4138 = vpop.xlane.xlu0 %4137
  %v4139 = vsel %vm432, %v4135, -inf
  %4140 = vmax.xlane.f32.xlu0 %v4139
  %v4141 = vpop.xlane.xlu0 %4140
  %v4142 = vsub.f32 %v4134, %v4138
  %v4143 = vsub.f32 %v4135, %v4141
  %v4144 = vmul.f32 %v4142, 1.442695
  %v4145 = vpow.pop %v4144
  %v4146 = vmul.f32 %v4143, 1.442695
  %v4147 = vpow.pop %v4146
  %v4148 = vsel %vm432, %v4145, 0.0
  %4149 = vadd.xlane.f32.xlu0 %v4148
  %v4150 = vpop.xlane.xlu0 %4149
  %v4151 = vsel %vm432, %v4147, 0.0
  %4152 = vadd.xlane.f32.xlu0 %v4151
  %v4153 = vpop.xlane.xlu0 %4152
  %v4154 = vrcp.pop %v4150
  %v4155 = vmul.f32 %v4145, %v4154
  %v4156 = vrcp.pop %v4153
  %v4157 = vmul.f32 %v4147, %v4156
  %v4158 = vpack.c.bf16 %v4157, %v4155
  %4159 = vrot.lane.b32.xlu0 %v3955, 48
  %v4160 = vpop.permute.xlu0 %4159
  %v4163 = vsel %vm432, %v4158, 0
  %4165 = vmatprep.subr.bf16.mxu0 0
  %4166 = vmatpush1.bf16.msra.mxu0 %v4160
  %4167 = vmatprep.subr.bf16.mxu0 0
  %4168 = vmatpush1.bf16.msra.mxu0 0
  %4169 = vmatprep.subr.bf16.mxu0 0
  %4170 = vmatpush1.bf16.msra.mxu0 0
  %4171 = vmatprep.subr.bf16.mxu0 0
  %4172 = vmatpush1.bf16.msra.mxu0 0
  %4173 = vmatprep.subr.bf16.mxu0 0
  %4174 = vmatpush1.bf16.msra.mxu0 0
  %4175 = vmatprep.subr.bf16.mxu0 0
  %4176 = vmatpush1.bf16.msra.mxu0 0
  %4177 = vmatprep.subr.bf16.mxu0 0
  %4178 = vmatpush1.bf16.msra.mxu0 0
  %4179 = vmatprep.subr.bf16.mxu0 0
  %4180 = vmatpush1.bf16.msra.mxu0 0
  %4181 = vmatprep.subr.bf16.mxu0 0
  %4182 = vmatpush1.bf16.msra.mxu0 0
  %4183 = vmatprep.subr.bf16.mxu0 0
  %4184 = vmatpush1.bf16.msra.mxu0 0
  %4185 = vmatprep.subr.bf16.mxu0 0
  %4186 = vmatpush1.bf16.msra.mxu0 0
  %4187 = vmatprep.subr.bf16.mxu0 0
  %4188 = vmatpush1.bf16.msra.mxu0 0
  %4189 = vmatprep.subr.bf16.mxu0 0
  %4190 = vmatpush1.bf16.msra.mxu0 0
  %4191 = vmatprep.subr.bf16.mxu0 0
  %4192 = vmatpush1.bf16.msra.mxu0 0
  %4193 = vmatprep.subr.bf16.mxu0 0
  %4194 = vmatpush1.bf16.msra.mxu0 0
  %4195 = vmatprep.subr.bf16.mxu0 0
  %4196 = vmatpush1.bf16.msra.mxu0 0
  %4197 = vmatprep.mubr.bf16.mxu0 0
  %4198 = vmatmul.mubr.bf16.gmra.mrb[0].mxu0 %v4163
  %v4199 = vpop.f32.mrb[0].mxu0
  %v4200 = vadd.f32 0.0, %v4199
  %v4201 = vpop.f32.mrb[0].mxu0
  %v4202 = vpop.f32.mrb[0].mxu0
  %v4203 = vadd.f32 0.0, %v4202
  %v4204 = vpop.f32.mrb[0].mxu0
  %4205 = vdwg.mxu0
  %v4206 = vpack.c.bf16 %v4203, %v4200
  %v4208 = vsel %vm432, %v4206, 0
  %4210 = vmatprep.subr.bf16.mxu0 0
  %4211 = vmatpush1.bf16.msra.mxu0 %v1414
  %4212 = vmatprep.subr.bf16.mxu0 0
  %4213 = vmatpush1.bf16.msra.mxu0 0
  %4214 = vmatprep.subr.bf16.mxu0 0
  %4215 = vmatpush1.bf16.msra.mxu0 0
  %4216 = vmatprep.subr.bf16.mxu0 0
  %4217 = vmatpush1.bf16.msra.mxu0 0
  %4218 = vmatprep.subr.bf16.mxu0 0
  %4219 = vmatpush1.bf16.msra.mxu0 0
  %4220 = vmatprep.subr.bf16.mxu0 0
  %4221 = vmatpush1.bf16.msra.mxu0 0
  %4222 = vmatprep.subr.bf16.mxu0 0
  %4223 = vmatpush1.bf16.msra.mxu0 0
  %4224 = vmatprep.subr.bf16.mxu0 0
  %4225 = vmatpush1.bf16.msra.mxu0 0
  %4226 = vmatprep.subr.bf16.mxu0 0
  %4227 = vmatpush1.bf16.msra.mxu0 0
  %4228 = vmatprep.subr.bf16.mxu0 0
  %4229 = vmatpush1.bf16.msra.mxu0 0
  %4230 = vmatprep.subr.bf16.mxu0 0
  %4231 = vmatpush1.bf16.msra.mxu0 0
  %4232 = vmatprep.subr.bf16.mxu0 0
  %4233 = vmatpush1.bf16.msra.mxu0 0
  %4234 = vmatprep.subr.bf16.mxu0 0
  %4235 = vmatpush1.bf16.msra.mxu0 0
  %4236 = vmatprep.subr.bf16.mxu0 0
  %4237 = vmatpush1.bf16.msra.mxu0 0
  %4238 = vmatprep.subr.bf16.mxu0 0
  %4239 = vmatpush1.bf16.msra.mxu0 0
  %4240 = vmatprep.subr.bf16.mxu0 0
  %4241 = vmatpush1.bf16.msra.mxu0 0
  %4242 = vmatprep.mubr.bf16.mxu0 0
  %4243 = vmatmul.mubr.bf16.gmra.mrb[0].mxu0 %v4208
  %v4244 = vpop.f32.mrb[0].mxu0
  %v4245 = vadd.f32 0.0, %v4244
  %v4246 = vpop.f32.mrb[0].mxu0
  %v4247 = vpop.f32.mrb[0].mxu0
  %v4248 = vadd.f32 0.0, %v4247
  %v4249 = vpop.f32.mrb[0].mxu0
  %4250 = vdwg.mxu0
  %v4252 = vsel %vm432, %v4080, 0
  %4254 = vmatprep.subr.bf16.mxu0 0
  %4255 = vmatpush1.bf16.msra.mxu0 %v1464
  %4256 = vmatprep.subr.bf16.mxu0 0
  %4257 = vmatpush1.bf16.msra.mxu0 0
  %4258 = vmatprep.subr.bf16.mxu0 0
  %4259 = vmatpush1.bf16.msra.mxu0 0
  %4260 = vmatprep.subr.bf16.mxu0 0
  %4261 = vmatpush1.bf16.msra.mxu0 0
  %4262 = vmatprep.subr.bf16.mxu0 0
  %4263 = vmatpush1.bf16.msra.mxu0 0
  %4264 = vmatprep.subr.bf16.mxu0 0
  %4265 = vmatpush1.bf16.msra.mxu0 0
  %4266 = vmatprep.subr.bf16.mxu0 0
  %4267 = vmatpush1.bf16.msra.mxu0 0
  %4268 = vmatprep.subr.bf16.mxu0 0
  %4269 = vmatpush1.bf16.msra.mxu0 0
  %4270 = vmatprep.subr.bf16.mxu0 0
  %4271 = vmatpush1.bf16.msra.mxu0 0
  %4272 = vmatprep.subr.bf16.mxu0 0
  %4273 = vmatpush1.bf16.msra.mxu0 0
  %4274 = vmatprep.subr.bf16.mxu0 0
  %4275 = vmatpush1.bf16.msra.mxu0 0
  %4276 = vmatprep.subr.bf16.mxu0 0
  %4277 = vmatpush1.bf16.msra.mxu0 0
  %4278 = vmatprep.subr.bf16.mxu0 0
  %4279 = vmatpush1.bf16.msra.mxu0 0
  %4280 = vmatprep.subr.bf16.mxu0 0
  %4281 = vmatpush1.bf16.msra.mxu0 0
  %4282 = vmatprep.subr.bf16.mxu0 0
  %4283 = vmatpush1.bf16.msra.mxu0 0
  %4284 = vmatprep.subr.bf16.mxu0 0
  %4285 = vmatpush1.bf16.msra.mxu0 0
  %4286 = vmatprep.mubr.bf16.mxu0 0
  %4287 = vmatmul.mubr.bf16.gmra.mrb[0].mxu0 %v4252
  %v4288 = vpop.f32.mrb[0].mxu0
  %v4289 = vadd.f32 %v4245, %v4288
  %v4290 = vpop.f32.mrb[0].mxu0
  %v4291 = vpop.f32.mrb[0].mxu0
  %v4292 = vadd.f32 %v4248, %v4291
  %v4293 = vpop.f32.mrb[0].mxu0
  %4294 = vdwg.mxu0
  %v4295 = vadd.f32 %v3878, %v4289
  %v4296 = vadd.f32 %v3879, %v4292
  %v4297 = vadd.f32 %v4295, %v1518
  %v4298 = vadd.f32 %v4296, %v1518
  %v4299 = vsel %vm312, %v4297, 0.0
  %4300 = vadd.xlane.f32.xlu0 %v4299
  %v4301 = vpop.xlane.xlu0 %4300
  %v4302 = vsel %vm312, %v4298, 0.0
  %4303 = vadd.xlane.f32.xlu0 %v4302
  %v4304 = vpop.xlane.xlu0 %4303
  %v4305 = vmul.f32 %v4301, %v319
  %v4306 = vmul.f32 %v4304, %v319
  %v4307 = vsub.f32 %v4297, %v4305
  %v4308 = vsub.f32 %v4298, %v4306
  %v4309 = vmul.f32 %v4307, %v4307
  %v4310 = vmul.f32 %v4308, %v4308
  %v4311 = vsel %vm312, %v4309, 0.0
  %4312 = vadd.xlane.f32.xlu0 %v4311
  %v4313 = vpop.xlane.xlu0 %4312
  %v4314 = vsel %vm312, %v4310, 0.0
  %4315 = vadd.xlane.f32.xlu0 %v4314
  %v4316 = vpop.xlane.xlu0 %4315
  %v4317 = vmul.f32 %v4313, %v319
  %v4318 = vmul.f32 %v4316, %v319
  %v4319 = vadd.f32 %v4317, 1e-05
  %v4320 = vadd.f32 %v4318, 1e-05
  %v4321 = vrsqrt.pop %v4319
  %v4322 = vrsqrt.pop %v4320
  %v4323 = vmul.f32 %v4307, %v4321
  %v4324 = vmul.f32 %v4308, %v4322
  %v4325 = vmul.f32 %v4323, %v1556
  %v4326 = vmul.f32 %v4324, %v1556
  %v4327 = vadd.f32 %v4325, %v1564
  %v4328 = vadd.f32 %v4326, %v1564
  %v4329 = vpack.c.bf16 %v4328, %v4327
  %v4331 = vsel %vm312, %v4329, 0
  %4333 = vmatprep.subr.bf16.mxu0 0
  %4334 = vmatpush1.bf16.msra.mxu0 %v1590
  %4335 = vmatprep.subr.bf16.mxu0 0
  %4336 = vmatpush1.bf16.msra.mxu0 %v1591
  %4337 = vmatprep.subr.bf16.mxu0 0
  %4338 = vmatpush1.bf16.msra.mxu0 0
  %4339 = vmatprep.subr.bf16.mxu0 0
  %4340 = vmatpush1.bf16.msra.mxu0 0
  %4341 = vmatprep.subr.bf16.mxu0 0
  %4342 = vmatpush1.bf16.msra.mxu0 0
  %4343 = vmatprep.subr.bf16.mxu0 0
  %4344 = vmatpush1.bf16.msra.mxu0 0
  %4345 = vmatprep.subr.bf16.mxu0 0
  %4346 = vmatpush1.bf16.msra.mxu0 0
  %4347 = vmatprep.subr.bf16.mxu0 0
  %4348 = vmatpush1.bf16.msra.mxu0 0
  %4349 = vmatprep.subr.bf16.mxu0 0
  %4350 = vmatpush1.bf16.msra.mxu0 0
  %4351 = vmatprep.subr.bf16.mxu0 0
  %4352 = vmatpush1.bf16.msra.mxu0 0
  %4353 = vmatprep.subr.bf16.mxu0 0
  %4354 = vmatpush1.bf16.msra.mxu0 0
  %4355 = vmatprep.subr.bf16.mxu0 0
  %4356 = vmatpush1.bf16.msra.mxu0 0
  %4357 = vmatprep.subr.bf16.mxu0 0
  %4358 = vmatpush1.bf16.msra.mxu0 0
  %4359 = vmatprep.subr.bf16.mxu0 0
  %4360 = vmatpush1.bf16.msra.mxu0 0
  %4361 = vmatprep.subr.bf16.mxu0 0
  %4362 = vmatpush1.bf16.msra.mxu0 0
  %4363 = vmatprep.subr.bf16.mxu0 0
  %4364 = vmatpush1.bf16.msra.mxu0 0
  %4365 = vmatprep.mubr.bf16.mxu0 0
  %4366 = vmatmul.mubr.bf16.gmra.mrb[0].mxu0 %v4331
  %v4367 = vpop.f32.mrb[0].mxu0
  %v4368 = vadd.f32 %v1580, %v4367
  %v4369 = vpop.f32.mrb[0].mxu0
  %v4370 = vpop.f32.mrb[0].mxu0
  %v4371 = vadd.f32 %v1580, %v4370
  %v4372 = vpop.f32.mrb[0].mxu0
  %4373 = vdwg.mxu0
  %v4374 = vmul.f32 %v4368, 0.5
  %v4375 = vmul.f32 %v4371, 0.5
  %v4376 = vmul.f32 %v4368, 0.044715
  %v4377 = vmul.f32 %v4371, 0.044715
  %v4378 = vmul.f32 %v4376, %v4368
  %v4379 = vmul.f32 %v4377, %v4371
  %v4380 = vmul.f32 %v4378, %v4368
  %v4381 = vmul.f32 %v4379, %v4371
  %v4382 = vadd.f32 %v4368, %v4380
  %v4383 = vadd.f32 %v4371, %v4381
  %v4384 = vmul.f32 %v4382, 0.7978846
  %v4385 = vmul.f32 %v4383, 0.7978846
  %v4386 = vtanh.pop %v4384
  %v4387 = vtanh.pop %v4385
  %v4388 = vadd.f32 %v4386, 1.0
  %v4389 = vadd.f32 %v4387, 1.0
  %v4390 = vmul.f32 %v4374, %v4388
  %v4391 = vmul.f32 %v4375, %v4389
  %v4392 = vpack.c.bf16 %v4391, %v4390
  %4393 = vmatprep.subr.bf16.mxu0 0
  %4394 = vmatpush1.bf16.msra.mxu0 %v1714
  %4395 = vmatprep.subr.bf16.mxu0 0
  %4396 = vmatpush1.bf16.msra.mxu0 %v1715
  %4397 = vmatprep.subr.bf16.mxu0 0
  %4398 = vmatpush1.bf16.msra.mxu0 %v1716
  %4399 = vmatprep.subr.bf16.mxu0 0
  %4400 = vmatpush1.bf16.msra.mxu0 %v1717
  %4401 = vmatprep.subr.bf16.mxu0 0
  %4402 = vmatpush1.bf16.msra.mxu0 %v1718
  %4403 = vmatprep.subr.bf16.mxu0 0
  %4404 = vmatpush1.bf16.msra.mxu0 %v1719
  %4405 = vmatprep.subr.bf16.mxu0 0
  %4406 = vmatpush1.bf16.msra.mxu0 %v1720
  %4407 = vmatprep.subr.bf16.mxu0 0
  %4408 = vmatpush1.bf16.msra.mxu0 %v1721
  %4409 = vmatprep.subr.bf16.mxu0 0
  %4410 = vmatpush1.bf16.msra.mxu0 0
  %4411 = vmatprep.subr.bf16.mxu0 0
  %4412 = vmatpush1.bf16.msra.mxu0 0
  %4413 = vmatprep.subr.bf16.mxu0 0
  %4414 = vmatpush1.bf16.msra.mxu0 0
  %4415 = vmatprep.subr.bf16.mxu0 0
  %4416 = vmatpush1.bf16.msra.mxu0 0
  %4417 = vmatprep.subr.bf16.mxu0 0
  %4418 = vmatpush1.bf16.msra.mxu0 0
  %4419 = vmatprep.subr.bf16.mxu0 0
  %4420 = vmatpush1.bf16.msra.mxu0 0
  %4421 = vmatprep.subr.bf16.mxu0 0
  %4422 = vmatpush1.bf16.msra.mxu0 0
  %4423 = vmatprep.subr.bf16.mxu0 0
  %4424 = vmatpush1.bf16.msra.mxu0 0
  %4425 = vmatprep.mubr.bf16.mxu0 0
  %4426 = vmatmul.mubr.bf16.gmra.mrb[0].mxu0 %v4392
  %v4427 = vpop.f32.mrb[0].mxu0
  %v4428 = vadd.f32 %v1680, %v4427
  %v4429 = vpop.f32.mrb[0].mxu0
  %v4430 = vpop.f32.mrb[0].mxu0
  %v4431 = vadd.f32 %v1680, %v4430
  %v4432 = vpop.f32.mrb[0].mxu0
  %4433 = vdwg.mxu0
  %v4434 = vadd.f32 %v4297, %v4428
  %v4435 = vadd.f32 %v4298, %v4431
  %v4436 = vsel %vm312, %v4434, 0.0
  %4437 = vadd.xlane.f32.xlu0 %v4436
  %v4438 = vpop.xlane.xlu0 %4437
  %v4439 = vsel %vm312, %v4435, 0.0
  %4440 = vadd.xlane.f32.xlu0 %v4439
  %v4441 = vpop.xlane.xlu0 %4440
  %v4442 = vmul.f32 %v4438, %v319
  %v4443 = vmul.f32 %v4441, %v319
  %v4444 = vsub.f32 %v4434, %v4442
  %v4445 = vsub.f32 %v4435, %v4443
  %v4446 = vmul.f32 %v4444, %v4444
  %v4447 = vmul.f32 %v4445, %v4445
  %v4448 = vsel %vm312, %v4446, 0.0
  %4449 = vadd.xlane.f32.xlu0 %v4448
  %v4450 = vpop.xlane.xlu0 %4449
  %v4451 = vsel %vm312, %v4447, 0.0
  %4452 = vadd.xlane.f32.xlu0 %v4451
  %v4453 = vpop.xlane.xlu0 %4452
  %v4454 = vmul.f32 %v4450, %v319
  %v4455 = vmul.f32 %v4453, %v319
  %v4456 = vadd.f32 %v4454, 1e-05
  %v4457 = vadd.f32 %v4455, 1e-05
  %v4458 = vrsqrt.pop %v4456
  %v4459 = vrsqrt.pop %v4457
  %v4460 = vmul.f32 %v4444, %v4458
  %v4461 = vmul.f32 %v4445, %v4459
  %v4462 = vmul.f32 %v4460, %v1789
  %v4463 = vmul.f32 %v4461, %v1789
  %v4464 = vadd.f32 %v4462, %v1796
  %v4465 = vadd.f32 %v4463, %v1796
  %v4466 = vpack.c.bf16 %v4465, %v4464
  %v4468 = vsel %vm312, %v4466, 0
  %4470 = vmatprep.subr.bf16.mxu0 0
  %4471 = vmatpush1.bf16.xpose.msra.mxu0 %v1808
  %4472 = vmatprep.subr.bf16.mxu0 0
  %4473 = vmatpush1.bf16.xpose.msra.mxu0 %v1811
  %4474 = vmatprep.subr.bf16.mxu0 0
  %4475 = vmatpush1.bf16.xpose.msra.mxu0 %v1814
  %4476 = vmatprep.subr.bf16.mxu0 0
  %4477 = vmatpush1.bf16.xpose.msra.mxu0 %v1817
  %4478 = vmatprep.subr.bf16.mxu0 0
  %4479 = vmatpush1.bf16.xpose.msra.mxu0 %v1820
  %4480 = vmatprep.subr.bf16.mxu0 0
  %4481 = vmatpush1.bf16.xpose.msra.mxu0 %v1823
  %4482 = vmatprep.subr.bf16.mxu0 0
  %4483 = vmatpush1.bf16.xpose.msra.mxu0 %v1826
  %4484 = vmatprep.subr.bf16.mxu0 0
  %4485 = vmatpush1.bf16.xpose.msra.mxu0 %v1829
  %4486 = vmatprep.subr.bf16.mxu0 0
  %4487 = vmatpush1.bf16.xpose.msra.mxu0 0
  %4488 = vmatprep.subr.bf16.mxu0 0
  %4489 = vmatpush1.bf16.xpose.msra.mxu0 0
  %4490 = vmatprep.subr.bf16.mxu0 0
  %4491 = vmatpush1.bf16.xpose.msra.mxu0 0
  %4492 = vmatprep.subr.bf16.mxu0 0
  %4493 = vmatpush1.bf16.xpose.msra.mxu0 0
  %4494 = vmatprep.subr.bf16.mxu0 0
  %4495 = vmatpush1.bf16.xpose.msra.mxu0 0
  %4496 = vmatprep.subr.bf16.mxu0 0
  %4497 = vmatpush1.bf16.xpose.msra.mxu0 0
  %4498 = vmatprep.subr.bf16.mxu0 0
  %4499 = vmatpush1.bf16.xpose.msra.mxu0 0
  %4500 = vmatprep.subr.bf16.mxu0 0
  %4501 = vmatpush1.bf16.xpose.msra.mxu0 0
  %4502 = vmatprep.mubr.bf16.mxu0 0
  %4503 = vmatmul.mubr.bf16.gmra.mrb[0].mxu0 %v4468
  %v4504 = vpop.f32.mrb[0].mxu0
  %v4505 = vadd.f32 0.0, %v4504
  %v4506 = vpop.f32.mrb[0].mxu0
  %v4507 = vpop.f32.mrb[0].mxu0
  %v4508 = vadd.f32 0.0, %v4507
  %v4509 = vpop.f32.mrb[0].mxu0
  %4510 = vdwg.mxu0
  %4511 = vst [vmem:[%s20] sm:$0xff] %v4505
  %4512 = vst [vmem:[%s20 + $0x8] sm:$0xff] %v4508
  %vm4513 = vcmask 7168
  %4514 = vst.msk [vmem:[%s21] sm:$0xff] %vm4513, %v3165
  %4515 = vst.msk [vmem:[%s21 + $0x8] sm:$0xff] %vm4513, %v3166
  // Predicated region
  $region82: #{prompt_gpt2_forward.1} parent=0 // pred_check
    _
  $region83: #{prompt_gpt2_forward.1} parent=0 // pred_check_branch
    %4517 = sbr.rel (0) target = $region85
  $region84: #{prompt_gpt2_forward.1} parent=0 // pred_region
    _
  $region85: #{prompt_gpt2_forward.1} parent=0 // pred_fallthru
    _
  // Predicated region
  $region86: #{prompt_gpt2_forward.1} parent=0 // pred_check
    _
  $region87: #{prompt_gpt2_forward.1} parent=0 // pred_check_branch
    %4519 = sbr.rel (0) target = $region89
  $region88: #{prompt_gpt2_forward.1} parent=0 // pred_region
    _
  $region89: #{prompt_gpt2_forward.1} parent=0 // pred_fallthru
    _
  // Predicated region
  $region90: #{prompt_gpt2_forward.1} parent=0 // pred_check
    _
  $region91: #{prompt_gpt2_forward.1} parent=0 // pred_check_branch
    %4521 = sbr.rel (0) target = $region93
  $region92: #{prompt_gpt2_forward.1} parent=0 // pred_region
    _
  $region93: #{prompt_gpt2_forward.1} parent=0 // pred_fallthru
    _
  // Predicated region
  $region94: #{prompt_gpt2_forward.1} parent=0 // pred_check
    _
  $region95: #{prompt_gpt2_forward.1} parent=0 // pred_check_branch
    %4523 = sbr.rel (0) target = $region97
  $region96: #{prompt_gpt2_forward.1} parent=0 // pred_region
    _
  $region97: #{prompt_gpt2_forward.1} parent=0 // pred_fallthru
    _

</llo_original>
